<compile_context>
chip_gen: v5e
topology: v5e:2x2
jax: 0.10.0
libtpu: 0.0.40
codegen_flags: <defaults>
</compile_context>

<pallas_src>
import functools

import jax
import jax.numpy as jnp
from jax import lax
from jax.experimental import pallas as pl
from jax.experimental.pallas import tpu as pltpu


_LANE = 128
_VMEM_LIMIT = 48 * 1024 * 1024     # safe on v5e/v6e (128 MiB) and v7x (64 MiB)


# ---------------------------------------------------------------------------
# small helpers
# ---------------------------------------------------------------------------
def _round_up(x, m):
    return ((x + m - 1) // m) * m


def _pick_tm(m):
    # Largest row tile in {512, 256, 128} that still leaves >= 2 grid steps
    # (so v7x's two TensorCores both get work); tiny problems use one full tile.
    for tm in (512, 256, 128):
        if pl.cdiv(m, tm) >= 2:
            return tm
    return min(m, 128)


def _pad2d(a, rows, cols):
    return jnp.pad(a, ((0, rows - a.shape[0]), (0, cols - a.shape[1])))


def _pad1d(v, n):
    return jnp.pad(v, (0, n - v.shape[0]))


def _bn_affine(col_sum, col_ssq, count, gamma, beta, eps=1e-5):
    # training-mode BatchNorm (biased variance), folded to y*scale + bias
    mean = col_sum / count
    var = jnp.maximum(col_ssq / count - mean * mean, 0.0)
    scale = gamma * lax.rsqrt(var + eps)
    bias = beta - mean * scale
    return scale.reshape(1, -1), bias.reshape(1, -1)


# ---------------------------------------------------------------------------
# Kernel 1: fused (optional BN+ReLU prologue) -> bf16 matmul -> partial BN stats
# ---------------------------------------------------------------------------
def _mm_stats_kernel(x_ref, scale_ref, bias_ref, w_ref, y_ref, sum_ref, ssq_ref,
                     *, tm, m_real, prologue):
    x = x_ref[...]
    if prologue:
        x = jnp.maximum(x.astype(jnp.float32) * scale_ref[...] + bias_ref[...], 0.0)
    if m_real % tm != 0:
        # mask out-of-range rows of the (partial) last tile so stats stay exact
        rid = pl.program_id(0) * tm + lax.broadcasted_iota(jnp.int32, (tm, 1), 0)
        x = jnp.where(rid < m_real, x, jnp.zeros_like(x))
    y = jnp.dot(x.astype(jnp.bfloat16), w_ref[...],
                preferred_element_type=jnp.float32)
    y_ref[...] = y
    sum_ref[0] = jnp.sum(y, axis=0, keepdims=True)
    ssq_ref[0] = jnp.sum(y * y, axis=0, keepdims=True)


def matmul_bn_stats(x, w, prologue=None):
    """y = (relu(x*scale+bias) if prologue else x) @ w  (bf16 MXU, f32 accum)
    plus per-tile partial column sum / sum-of-squares of y for BatchNorm stats."""
    m, k = x.shape
    nc = w.shape[1]
    tm = _pick_tm(m)
    n_tiles = pl.cdiv(m, tm)
    if prologue is None:
        scale = jnp.zeros((1, k), jnp.float32)   # unread by the kernel
        bias = jnp.zeros((1, k), jnp.float32)
        use_prologue = False
    else:
        scale, bias = prologue
        use_prologue = True
    kernel = functools.partial(_mm_stats_kernel, tm=tm, m_real=m,
                               prologue=use_prologue)
    return pl.pallas_call(
        kernel,
        out_shape=(jax.ShapeDtypeStruct((m, nc), jnp.float32),
                   jax.ShapeDtypeStruct((n_tiles, 1, nc), jnp.float32),
                   jax.ShapeDtypeStruct((n_tiles, 1, nc), jnp.float32)),
        grid=(n_tiles,),
        in_specs=[pl.BlockSpec((tm, k), lambda i: (i, 0)),
                  pl.BlockSpec((1, k), lambda i: (0, 0)),
                  pl.BlockSpec((1, k), lambda i: (0, 0)),
                  # constant-index weight block (could be single-buffered once
                  # pl.Buffered(1) is validated on all target generations)
                  pl.BlockSpec((k, nc), lambda i: (0, 0))],
        out_specs=(pl.BlockSpec((tm, nc), lambda i: (i, 0)),
                   pl.BlockSpec((1, 1, nc), lambda i: (i, 0, 0)),
                   pl.BlockSpec((1, 1, nc), lambda i: (i, 0, 0))),
        compiler_params=pltpu.CompilerParams(
            dimension_semantics=("parallel",),
            vmem_limit_bytes=_VMEM_LIMIT),
    )(x, scale, bias, w)


# ---------------------------------------------------------------------------
# Kernel 2: fused BN1+ReLU prologue -> 3x3 pad-1 stride-1 conv (9 MXU taps)
#           -> per-image partial BN2 stats.   One grid step per image.
# ---------------------------------------------------------------------------
def _conv3x3_kernel(scale_ref, bias_ref, mask_ref, x_ref, w_ref,
                    o_ref, sum_ref, ssq_ref, nbuf_ref, acc_ref, *, h, w):
    wp = w + 2
    hwp = h * wp
    # BN1 affine + ReLU prologue (VPU work, overlapped with the MXU taps below)
    xn = jnp.maximum(x_ref[...] * scale_ref[...] + bias_ref[...], 0.0)
    # build the zero-padded normalized image in VMEM, flattened as (h+2) groups of wp rows
    nbuf_ref[...] = jnp.zeros(nbuf_ref.shape, nbuf_ref.dtype)
    for i in range(h):
        r0 = (i + 1) * wp + 1
        nbuf_ref[r0:r0 + w, :] = xn[i * w:(i + 1) * w, :]
    # 9-tap accumulation: each tap is one (h*wp, C) @ (C, Cout) bf16 MXU matmul
    acc_ref[...] = jnp.zeros(acc_ref.shape, acc_ref.dtype)
    for di in range(3):
        for dj in range(3):
            s0 = di * wp + dj
            lhs = nbuf_ref[s0:s0 + hwp, :].astype(jnp.bfloat16)
            acc_ref[...] += jnp.dot(lhs, w_ref[di * 3 + dj],
                                    preferred_element_type=jnp.float32)
    # per-image partial BatchNorm stats (mask out the wp-layout junk columns)
    a = acc_ref[...]
    av = a * mask_ref[...]
    sum_ref[0] = jnp.sum(av, axis=0, keepdims=True)
    ssq_ref[0] = jnp.sum(av * a, axis=0, keepdims=True)
    # compact the (h, w+2) row layout to (h, w) rows of the output block
    for i in range(h):
        o_ref[i * w:(i + 1) * w, :] = acc_ref[i * wp:i * wp + w, :]


def conv3x3_bn_stats_fused(y1, w_taps, scale1, bias1, n, h, w):
    hw = h * w
    wp = w + 2
    cp = y1.shape[1]
    cop = w_taps.shape[2]
    nbuf_rows = (h + 3) * wp                      # (h+2) padded row-groups + slack
    col = jnp.arange(h * wp, dtype=jnp.int32) % wp
    mask = (col < w).astype(jnp.float32).reshape(h * wp, 1)
    kernel = functools.partial(_conv3x3_kernel, h=h, w=w)
    return pl.pallas_call(
        kernel,
        out_shape=(jax.ShapeDtypeStruct((n * hw, cop), jnp.float32),
                   jax.ShapeDtypeStruct((n, 1, cop), jnp.float32),
                   jax.ShapeDtypeStruct((n, 1, cop), jnp.float32)),
        grid=(n,),
        in_specs=[pl.BlockSpec((1, cp), lambda i: (0, 0)),          # BN1 scale
                  pl.BlockSpec((1, cp), lambda i: (0, 0)),          # BN1 bias
                  pl.BlockSpec((h * wp, 1), lambda i: (0, 0)),      # row-validity mask
                  pl.BlockSpec((hw, cp), lambda i: (i, 0)),         # conv1 out, image i
                  pl.BlockSpec((9, cp, cop), lambda i: (0, 0, 0))], # 3x3 weights
        out_specs=(pl.BlockSpec((hw, cop), lambda i: (i, 0)),
                   pl.BlockSpec((1, 1, cop), lambda i: (i, 0, 0)),
                   pl.BlockSpec((1, 1, cop), lambda i: (i, 0, 0))),
        scratch_shapes=[pltpu.VMEM((nbuf_rows, cp), jnp.float32),
                        pltpu.VMEM((h * wp, cop), jnp.float32)],
        compiler_params=pltpu.CompilerParams(
            dimension_semantics=("parallel",),
            vmem_limit_bytes=_VMEM_LIMIT),
    )(scale1, bias1, mask, y1, w_taps)


# ---------------------------------------------------------------------------
# Kernel 3: fused dual per-channel affine (BN3 + shortcut BN) + add + ReLU
# ---------------------------------------------------------------------------
def _affine_add_relu_kernel(y_ref, s_ref, a_ref, b_ref, c_ref, d_ref, o_ref):
    o_ref[...] = jnp.maximum(
        y_ref[...] * a_ref[...] + b_ref[...]
        + s_ref[...] * c_ref[...] + d_ref[...], 0.0)


def affine_add_relu(y, s, a, b, c, d):
    m, cdim = y.shape
    tm = _pick_tm(m)
    return pl.pallas_call(
        _affine_add_relu_kernel,
        out_shape=jax.ShapeDtypeStruct((m, cdim), jnp.float32),
        grid=(pl.cdiv(m, tm),),
        in_specs=[pl.BlockSpec((tm, cdim), lambda i: (i, 0)),
                  pl.BlockSpec((tm, cdim), lambda i: (i, 0)),
                  pl.BlockSpec((1, cdim), lambda i: (0, 0)),
                  pl.BlockSpec((1, cdim), lambda i: (0, 0)),
                  pl.BlockSpec((1, cdim), lambda i: (0, 0)),
                  pl.BlockSpec((1, cdim), lambda i: (0, 0))],
        out_specs=pl.BlockSpec((tm, cdim), lambda i: (i, 0)),
        compiler_params=pltpu.CompilerParams(
            dimension_semantics=("parallel",),
            vmem_limit_bytes=_VMEM_LIMIT),
    )(y, s, a, b, c, d)


# ---------------------------------------------------------------------------
# JAX glue: im2col fallback (stride != 1 only)
# ---------------------------------------------------------------------------
def im2col_3x3(x_nhwc, stride):
    n, hh, ww, c = x_nhwc.shape
    ho = (hh - 1) // stride + 1
    wo = (ww - 1) // stride + 1
    xp = jnp.pad(x_nhwc, ((0, 0), (1, 1), (1, 1), (0, 0)))
    cols = []
    for di in range(3):
        for dj in range(3):
            cols.append(xp[:, di:di + (ho - 1) * stride + 1:stride,
                            dj:dj + (wo - 1) * stride + 1:stride, :])
    patches = jnp.stack(cols, axis=3)          # (n, ho, wo, 9, c) tap-major
    return patches.reshape(n * ho * wo, 9 * c)


# ---------------------------------------------------------------------------
# Full block forward (NCHW in / NCHW out, training-mode BatchNorm)
# ---------------------------------------------------------------------------
def bottleneck_forward(x_nchw, p, stride=1, eps=1e-5):
    x = jnp.transpose(x_nchw, (0, 2, 3, 1)).astype(jnp.float32)     # NCHW -> NHWC
    n, h, w, cin = x.shape
    cout = p["w1"].shape[0]
    cin_p = _round_up(cin, _LANE)
    c_p = _round_up(cout, _LANE)
    ho = (h - 1) // stride + 1
    wo = (w - 1) // stride + 1
    m1 = n * h * w
    m2 = n * ho * wo

    x2d = _pad2d(x.reshape(m1, cin), m1, cin_p)

    # weights: (in, out) layout, channel-padded, bf16 for the MXU
    w1 = _pad2d(p["w1"].reshape(cout, cin).T, cin_p, c_p).astype(jnp.bfloat16)
    w2_taps = p["w2"].transpose(2, 3, 1, 0).reshape(9, cout, cout)
    w2_taps = jnp.pad(w2_taps,
                      ((0, 0), (0, c_p - cout), (0, c_p - cout))).astype(jnp.bfloat16)
    w3 = _pad2d(p["w3"].reshape(cout, cout).T, c_p, c_p).astype(jnp.bfloat16)

    g1, b1 = _pad1d(p["g1"], c_p), _pad1d(p["b1"], c_p)
    g2, b2 = _pad1d(p["g2"], c_p), _pad1d(p["b2"], c_p)
    g3, b3 = _pad1d(p["g3"], c_p), _pad1d(p["b3"], c_p)

    # --- conv1 (1x1) + BN1 stats ---------------------------------------------------
    y1, s1, q1 = matmul_bn_stats(x2d, w1)
    scale1, bias1 = _bn_affine(s1.sum((0, 1)), q1.sum((0, 1)), m1, g1, b1, eps)

    # --- conv2 (3x3, pad 1) ---------------------------------------------------------
    if stride == 1 and (h * w) % 8 == 0:
        y2, s2, q2 = conv3x3_bn_stats_fused(y1, w2_taps, scale1, bias1, n, h, w)
    else:
        # TODO(synk): extend the fused halo-conv kernel to stride != 1 (strided taps);
        # fallback: apply BN1+ReLU in XLA, im2col, then the fused matmul kernel.
        h1 = jnp.maximum(y1 * scale1 + bias1, 0.0)
        patches = im2col_3x3(h1.reshape(n, h, w, c_p), stride).astype(jnp.bfloat16)
        y2, s2, q2 = matmul_bn_stats(patches, w2_taps.reshape(9 * c_p, c_p))
    scale2, bias2 = _bn_affine(s2.sum((0, 1)), q2.sum((0, 1)), m2, g2, b2, eps)

    # --- conv3 (1x1) with fused BN2+ReLU prologue + BN3 stats ----------------------
    y3, s3, q3 = matmul_bn_stats(y2, w3, prologue=(scale2, bias2))
    scale3, bias3 = _bn_affine(s3.sum((0, 1)), q3.sum((0, 1)), m2, g3, b3, eps)

    # --- shortcut -------------------------------------------------------------------
    if stride != 1 or cin != cout:
        xs = _pad2d(x[:, ::stride, ::stride, :].reshape(m2, cin), m2, cin_p)
        ws = _pad2d(p["ws"].reshape(cout, cin).T, cin_p, c_p).astype(jnp.bfloat16)
        ys, ss, qs = matmul_bn_stats(xs, ws)
        scale_s, bias_s = _bn_affine(ss.sum((0, 1)), qs.sum((0, 1)), m2,
                                     _pad1d(p["gs"], c_p), _pad1d(p["bs"], c_p), eps)
    else:
        ys = x2d
        scale_s = jnp.ones((1, c_p), jnp.float32)
        bias_s = jnp.zeros((1, c_p), jnp.float32)

    # --- fused BN3-apply + shortcut-BN-apply + residual add + ReLU ------------------
    out = affine_add_relu(y3, ys, scale3, bias3, scale_s, bias_s)
    out = out.reshape(n, ho, wo, c_p)[..., :cout]
    return jnp.transpose(out, (0, 3, 1, 2))                         # NHWC -> NCHW


def init_params(key, in_channels, out_channels):
    ks = jax.random.split(key, 12)
    cw = lambda k, co, ci, kh, kw: 0.1 * jax.random.normal(k, (co, ci, kh, kw), jnp.float32)
    gm = lambda k, c: 1.0 + 0.1 * jax.random.normal(k, (c,), jnp.float32)
    bt = lambda k, c: 0.1 * jax.random.normal(k, (c,), jnp.float32)
    return {
        "w1": cw(ks[0], out_channels, in_channels, 1, 1),
        "g1": gm(ks[1], out_channels), "b1": bt(ks[2], out_channels),
        "w2": cw(ks[3], out_channels, out_channels, 3, 3),
        "g2": gm(ks[4], out_channels), "b2": bt(ks[5], out_channels),
        "w3": cw(ks[6], out_channels, out_channels, 1, 1),
        "g3": gm(ks[7], out_channels), "b3": bt(ks[8], out_channels),
        "ws": cw(ks[9], out_channels, in_channels, 1, 1),
        "gs": gm(ks[10], out_channels), "bs": bt(ks[11], out_channels),
    }


# ---------------------------------------------------------------------------
# Pure-JAX reference (lax.conv, bf16 inputs like the kernels, f32 accumulation)
# ---------------------------------------------------------------------------
def ref_forward(x, p, stride=1, eps=1e-5):
    def conv(x_, w_, s, pad):
        return lax.conv_general_dilated(
            x_.astype(jnp.bfloat16), w_.astype(jnp.bfloat16), (s, s), pad,
            dimension_numbers=("NCHW", "OIHW", "NCHW"),
            preferred_element_type=jnp.float32)

    def bn(x_, g_, b_):
        m = jnp.mean(x_, axis=(0, 2, 3), keepdims=True)
        v = jnp.var(x_, axis=(0, 2, 3), keepdims=True)
        return ((x_ - m) / jnp.sqrt(v + eps) * g_.reshape(1, -1, 1, 1)
                + b_.reshape(1, -1, 1, 1))

    cin, cout = x.shape[1], p["w1"].shape[0]
    h = jax.nn.relu(bn(conv(x, p["w1"], 1, "VALID"), p["g1"], p["b1"]))
    h = jax.nn.relu(bn(conv(h, p["w2"], stride, ((1, 1), (1, 1))), p["g2"], p["b2"]))
    h = bn(conv(h, p["w3"], 1, "VALID"), p["g3"], p["b3"])
    if stride != 1 or cin != cout:
        s = bn(conv(x, p["ws"], stride, "VALID"), p["gs"], p["bs"])
    else:
        s = x
    return jax.nn.relu(h + s)


if __name__ == "__main__":
    key = jax.random.PRNGKey(0)
    kx, kp = jax.random.split(key)

    batch, in_ch, out_ch, hw, stride = 2, 4, 8, 16, 1
    x = jax.random.normal(kx, (batch, in_ch, hw, hw), jnp.float32)
    params = init_params(kp, in_ch, out_ch)

    fwd = jax.jit(functools.partial(bottleneck_forward, stride=stride))
    out = jax.block_until_ready(fwd(x, params))

    ref = jax.block_until_ready(
        jax.jit(functools.partial(ref_forward, stride=stride))(x, params))

    assert out.shape == ref.shape == (batch, out_ch, hw // stride, hw // stride)
    max_err = float(jnp.max(jnp.abs(out - ref)))
    # bf16 MXU inputs (mirrored in the reference) -> modest tolerance
    assert jnp.allclose(out, ref, atol=1e-2, rtol=1e-2), max_err
    print("KERNEL_OK")
</pallas_src>

<mosaic_0001>
module attributes {stable_mosaic.version = 11 : i64} {
  func.func @_mm_stats_kernel(%arg0: i32, %arg1: memref<256x128xf32, #tpu.memory_space<vmem>>, %arg2: memref<1x128xf32, #tpu.memory_space<vmem>>, %arg3: memref<1x128xf32, #tpu.memory_space<vmem>>, %arg4: memref<128x128xbf16, #tpu.memory_space<vmem>>, %arg5: memref<256x128xf32, #tpu.memory_space<vmem>>, %arg6: memref<1x1x128xf32, #tpu.memory_space<vmem>>, %arg7: memref<1x1x128xf32, #tpu.memory_space<vmem>>) attributes {dimension_semantics = [#tpu.dimension_semantics<parallel>], iteration_bounds = array<i64: 2>, scalar_prefetch = 0 : i64, scratch_operands = 0 : i64, tpu.core_type = #tpu.core_type<tc>, window_params = [{transform_indices = @transform_0, window_bounds = array<i64: 256, 128>}, {pipeline_mode = #tpu.pipeline_mode<synchronous>, transform_indices = @transform_1, window_bounds = array<i64: 1, 128>}, {pipeline_mode = #tpu.pipeline_mode<synchronous>, transform_indices = @transform_2, window_bounds = array<i64: 1, 128>}, {pipeline_mode = #tpu.pipeline_mode<synchronous>, transform_indices = @transform_3, window_bounds = array<i64: 128, 128>}, {transform_indices = @transform_4, window_bounds = array<i64: 256, 128>}, {transform_indices = @transform_5, window_bounds = array<i64: 1, 1, 128>}, {transform_indices = @transform_6, window_bounds = array<i64: 1, 1, 128>}]} {
    %c0 = arith.constant 0 : index
    %c0_0 = arith.constant 0 : index
    %0 = vector.load %arg1[%c0, %c0_0] : memref<256x128xf32, #tpu.memory_space<vmem>>, vector<256x128xf32>
    %1 = arith.truncf %0 : vector<256x128xf32> to vector<256x128xbf16>
    %c0_1 = arith.constant 0 : index
    %c0_2 = arith.constant 0 : index
    %2 = vector.load %arg4[%c0_1, %c0_2] : memref<128x128xbf16, #tpu.memory_space<vmem>>, vector<128x128xbf16>
    %cst = arith.constant dense<0.000000e+00> : vector<256x128xf32>
    %3 = tpu.matmul %1, %2, %cst {dimension_numbers = #tpu.dot_dimension_numbers<[1], [0], [0], [1], [0, 0, 1, 1], [], []>} : vector<256x128xbf16>, vector<128x128xbf16>, vector<256x128xf32> -> vector<256x128xf32>
    %c0_3 = arith.constant 0 : index
    %c0_4 = arith.constant 0 : index
    %4 = vector.load %arg5[%c0_3, %c0_4] : memref<256x128xf32, #tpu.memory_space<vmem>>, vector<256x128xf32>
    tpu.vector_store %arg5[%c0_3, %c0_4], %3 {strides = array<i32>} : memref<256x128xf32, #tpu.memory_space<vmem>>, vector<256x128xf32>,
    %cst_5 = arith.constant dense<0.000000e+00> : vector<128xf32>
    %5 = vector.multi_reduction <add>, %3, %cst_5 [0] : vector<256x128xf32> to vector<128xf32>
    %6 = vector.shape_cast %5 : vector<128xf32> to vector<1x128xf32>
    %c0_6 = arith.constant 0 : index
    %c0_7 = arith.constant 0 : index
    %c0_8 = arith.constant 0 : index
    %7 = vector.load %arg6[%c0_6, %c0_7, %c0_8] : memref<1x1x128xf32, #tpu.memory_space<vmem>>, vector<1x1x128xf32>
    %8 = vector.shape_cast %7 : vector<1x1x128xf32> to vector<1x128xf32>
    %9 = vector.shape_cast %6 : vector<1x128xf32> to vector<1x1x128xf32>
    tpu.vector_store %arg6[%c0_6, %c0_7, %c0_8], %9 {strides = array<i32>} : memref<1x1x128xf32, #tpu.memory_space<vmem>>, vector<1x1x128xf32>,
    %10 = arith.mulf %3, %3 : vector<256x128xf32>
    %cst_9 = arith.constant dense<0.000000e+00> : vector<128xf32>
    %11 = vector.multi_reduction <add>, %10, %cst_9 [0] : vector<256x128xf32> to vector<128xf32>
    %12 = vector.shape_cast %11 : vector<128xf32> to vector<1x128xf32>
    %c0_10 = arith.constant 0 : index
    %c0_11 = arith.constant 0 : index
    %c0_12 = arith.constant 0 : index
    %13 = vector.load %arg7[%c0_10, %c0_11, %c0_12] : memref<1x1x128xf32, #tpu.memory_space<vmem>>, vector<1x1x128xf32>
    %14 = vector.shape_cast %13 : vector<1x1x128xf32> to vector<1x128xf32>
    %15 = vector.shape_cast %12 : vector<1x128xf32> to vector<1x1x128xf32>
    tpu.vector_store %arg7[%c0_10, %c0_11, %c0_12], %15 {strides = array<i32>} : memref<1x1x128xf32, #tpu.memory_space<vmem>>, vector<1x1x128xf32>,
    return
  }
  func.func @transform_0(%arg0: i32) -> (i32, i32) {
    %c0_i32 = arith.constant 0 : i32
    %c0_i32_0 = arith.constant 0 : i32
    return %arg0, %c0_i32 : i32, i32
  }
  func.func @transform_1(%arg0: i32) -> (i32, i32) {
    %c0_i32 = arith.constant 0 : i32
    %c0_i32_0 = arith.constant 0 : i32
    %c0_i32_1 = arith.constant 0 : i32
    return %c0_i32, %c0_i32_0 : i32, i32
  }
  func.func @transform_2(%arg0: i32) -> (i32, i32) {
    %c0_i32 = arith.constant 0 : i32
    %c0_i32_0 = arith.constant 0 : i32
    %c0_i32_1 = arith.constant 0 : i32
    return %c0_i32, %c0_i32_0 : i32, i32
  }
  func.func @transform_3(%arg0: i32) -> (i32, i32) {
    %c0_i32 = arith.constant 0 : i32
    %c0_i32_0 = arith.constant 0 : i32
    %c0_i32_1 = arith.constant 0 : i32
    return %c0_i32, %c0_i32_0 : i32, i32
  }
  func.func @transform_4(%arg0: i32) -> (i32, i32) {
    %c0_i32 = arith.constant 0 : i32
    %c0_i32_0 = arith.constant 0 : i32
    return %arg0, %c0_i32 : i32, i32
  }
  func.func @transform_5(%arg0: i32) -> (i32, i32, i32) {
    %c0_i32 = arith.constant 0 : i32
    %c0_i32_0 = arith.constant 0 : i32
    %c0_i32_1 = arith.constant 0 : i32
    return %arg0, %c0_i32, %c0_i32_0 : i32, i32, i32
  }
  func.func @transform_6(%arg0: i32) -> (i32, i32, i32) {
    %c0_i32 = arith.constant 0 : i32
    %c0_i32_0 = arith.constant 0 : i32
    %c0_i32_1 = arith.constant 0 : i32
    return %arg0, %c0_i32, %c0_i32_0 : i32, i32, i32
  }
}

module attributes {stable_mosaic.version = 11 : i64} {
  func.func @_conv3x3_kernel(%arg0: i32, %arg1: memref<1x128xf32, #tpu.memory_space<vmem>>, %arg2: memref<1x128xf32, #tpu.memory_space<vmem>>, %arg3: memref<288x1xf32, #tpu.memory_space<vmem>>, %arg4: memref<256x128xf32, #tpu.memory_space<vmem>>, %arg5: memref<9x128x128xbf16, #tpu.memory_space<vmem>>, %arg6: memref<256x128xf32, #tpu.memory_space<vmem>>, %arg7: memref<1x1x128xf32, #tpu.memory_space<vmem>>, %arg8: memref<1x1x128xf32, #tpu.memory_space<vmem>>, %arg9: memref<342x128xf32, #tpu.memory_space<vmem>>, %arg10: memref<288x128xf32, #tpu.memory_space<vmem>>) attributes {dimension_semantics = [#tpu.dimension_semantics<parallel>], iteration_bounds = array<i64: 2>, scalar_prefetch = 0 : i64, scratch_operands = 2 : i64, tpu.core_type = #tpu.core_type<tc>, window_params = [{pipeline_mode = #tpu.pipeline_mode<synchronous>, transform_indices = @transform_0, window_bounds = array<i64: 1, 128>}, {pipeline_mode = #tpu.pipeline_mode<synchronous>, transform_indices = @transform_1, window_bounds = array<i64: 1, 128>}, {pipeline_mode = #tpu.pipeline_mode<synchronous>, transform_indices = @transform_2, window_bounds = array<i64: 288, 1>}, {transform_indices = @transform_3, window_bounds = array<i64: 256, 128>}, {pipeline_mode = #tpu.pipeline_mode<synchronous>, transform_indices = @transform_4, window_bounds = array<i64: 9, 128, 128>}, {transform_indices = @transform_5, window_bounds = array<i64: 256, 128>}, {transform_indices = @transform_6, window_bounds = array<i64: 1, 1, 128>}, {transform_indices = @transform_7, window_bounds = array<i64: 1, 1, 128>}]} {
    %c0 = arith.constant 0 : index
    %c0_0 = arith.constant 0 : index
    %0 = vector.load %arg4[%c0, %c0_0] : memref<256x128xf32, #tpu.memory_space<vmem>>, vector<256x128xf32>
    %c0_1 = arith.constant 0 : index
    %c0_2 = arith.constant 0 : index
    %1 = vector.load %arg1[%c0_1, %c0_2] : memref<1x128xf32, #tpu.memory_space<vmem>>, vector<1x128xf32>
    %2 = vector.broadcast %1 : vector<1x128xf32> to vector<256x128xf32>
    %3 = arith.mulf %0, %2 : vector<256x128xf32>
    %c0_3 = arith.constant 0 : index
    %c0_4 = arith.constant 0 : index
    %4 = vector.load %arg2[%c0_3, %c0_4] : memref<1x128xf32, #tpu.memory_space<vmem>>, vector<1x128xf32>
    %5 = vector.broadcast %4 : vector<1x128xf32> to vector<256x128xf32>
    %6 = arith.addf %3, %5 : vector<256x128xf32>
    %cst = arith.constant 0.000000e+00 : f32
    %7 = vector.broadcast %cst : f32 to vector<256x128xf32>
    %8 = arith.maximumf %6, %7 : vector<256x128xf32>
    %cst_5 = arith.constant 0.000000e+00 : f32
    %9 = vector.broadcast %cst_5 : f32 to vector<342x128xf32>
    %c0_6 = arith.constant 0 : index
    %c0_7 = arith.constant 0 : index
    %10 = vector.load %arg9[%c0_6, %c0_7] : memref<342x128xf32, #tpu.memory_space<vmem>>, vector<342x128xf32>
    tpu.vector_store %arg9[%c0_6, %c0_7], %9 {strides = array<i32>} : memref<342x128xf32, #tpu.memory_space<vmem>>, vector<342x128xf32>,
    %11 = vector.extract_strided_slice %8 {offsets = [0, 0], sizes = [16, 128], strides = [1, 1]} : vector<256x128xf32> to vector<16x128xf32>
    %c19 = arith.constant 19 : index
    %c0_8 = arith.constant 0 : index
    %12 = vector.load %arg9[%c19, %c0_8] : memref<342x128xf32, #tpu.memory_space<vmem>>, vector<16x128xf32>
    tpu.vector_store %arg9[%c19, %c0_8], %11 {strides = array<i32>} : memref<342x128xf32, #tpu.memory_space<vmem>>, vector<16x128xf32>,
    %13 = vector.extract_strided_slice %8 {offsets = [16, 0], sizes = [16, 128], strides = [1, 1]} : vector<256x128xf32> to vector<16x128xf32>
    %c37 = arith.constant 37 : index
    %c0_9 = arith.constant 0 : index
    %14 = vector.load %arg9[%c37, %c0_9] : memref<342x128xf32, #tpu.memory_space<vmem>>, vector<16x128xf32>
    tpu.vector_store %arg9[%c37, %c0_9], %13 {strides = array<i32>} : memref<342x128xf32, #tpu.memory_space<vmem>>, vector<16x128xf32>,
    %15 = vector.extract_strided_slice %8 {offsets = [32, 0], sizes = [16, 128], strides = [1, 1]} : vector<256x128xf32> to vector<16x128xf32>
    %c55 = arith.constant 55 : index
    %c0_10 = arith.constant 0 : index
    %16 = vector.load %arg9[%c55, %c0_10] : memref<342x128xf32, #tpu.memory_space<vmem>>, vector<16x128xf32>
    tpu.vector_store %arg9[%c55, %c0_10], %15 {strides = array<i32>} : memref<342x128xf32, #tpu.memory_space<vmem>>, vector<16x128xf32>,
    %17 = vector.extract_strided_slice %8 {offsets = [48, 0], sizes = [16, 128], strides = [1, 1]} : vector<256x128xf32> to vector<16x128xf32>
    %c73 = arith.constant 73 : index
    %c0_11 = arith.constant 0 : index
    %18 = vector.load %arg9[%c73, %c0_11] : memref<342x128xf32, #tpu.memory_space<vmem>>, vector<16x128xf32>
    tpu.vector_store %arg9[%c73, %c0_11], %17 {strides = array<i32>} : memref<342x128xf32, #tpu.memory_space<vmem>>, vector<16x128xf32>,
    %19 = vector.extract_strided_slice %8 {offsets = [64, 0], sizes = [16, 128], strides = [1, 1]} : vector<256x128xf32> to vector<16x128xf32>
    %c91 = arith.constant 91 : index
    %c0_12 = arith.constant 0 : index
    %20 = vector.load %arg9[%c91, %c0_12] : memref<342x128xf32, #tpu.memory_space<vmem>>, vector<16x128xf32>
    tpu.vector_store %arg9[%c91, %c0_12], %19 {strides = array<i32>} : memref<342x128xf32, #tpu.memory_space<vmem>>, vector<16x128xf32>,
    %21 = vector.extract_strided_slice %8 {offsets = [80, 0], sizes = [16, 128], strides = [1, 1]} : vector<256x128xf32> to vector<16x128xf32>
    %c109 = arith.constant 109 : index
    %c0_13 = arith.constant 0 : index
    %22 = vector.load %arg9[%c109, %c0_13] : memref<342x128xf32, #tpu.memory_space<vmem>>, vector<16x128xf32>
    tpu.vector_store %arg9[%c109, %c0_13], %21 {strides = array<i32>} : memref<342x128xf32, #tpu.memory_space<vmem>>, vector<16x128xf32>,
    %23 = vector.extract_strided_slice %8 {offsets = [96, 0], sizes = [16, 128], strides = [1, 1]} : vector<256x128xf32> to vector<16x128xf32>
    %c127 = arith.constant 127 : index
    %c0_14 = arith.constant 0 : index
    %24 = vector.load %arg9[%c127, %c0_14] : memref<342x128xf32, #tpu.memory_space<vmem>>, vector<16x128xf32>
    tpu.vector_store %arg9[%c127, %c0_14], %23 {strides = array<i32>} : memref<342x128xf32, #tpu.memory_space<vmem>>, vector<16x128xf32>,
    %25 = vector.extract_strided_slice %8 {offsets = [112, 0], sizes = [16, 128], strides = [1, 1]} : vector<256x128xf32> to vector<16x128xf32>
    %c145 = arith.constant 145 : index
    %c0_15 = arith.constant 0 : index
    %26 = vector.load %arg9[%c145, %c0_15] : memref<342x128xf32, #tpu.memory_space<vmem>>, vector<16x128xf32>
    tpu.vector_store %arg9[%c145, %c0_15], %25 {strides = array<i32>} : memref<342x128xf32, #tpu.memory_space<vmem>>, vector<16x128xf32>,
    %27 = vector.extract_strided_slice %8 {offsets = [128, 0], sizes = [16, 128], strides = [1, 1]} : vector<256x128xf32> to vector<16x128xf32>
    %c163 = arith.constant 163 : index
    %c0_16 = arith.constant 0 : index
    %28 = vector.load %arg9[%c163, %c0_16] : memref<342x128xf32, #tpu.memory_space<vmem>>, vector<16x128xf32>
    tpu.vector_store %arg9[%c163, %c0_16], %27 {strides = array<i32>} : memref<342x128xf32, #tpu.memory_space<vmem>>, vector<16x128xf32>,
    %29 = vector.extract_strided_slice %8 {offsets = [144, 0], sizes = [16, 128], strides = [1, 1]} : vector<256x128xf32> to vector<16x128xf32>
    %c181 = arith.constant 181 : index
    %c0_17 = arith.constant 0 : index
    %30 = vector.load %arg9[%c181, %c0_17] : memref<342x128xf32, #tpu.memory_space<vmem>>, vector<16x128xf32>
    tpu.vector_store %arg9[%c181, %c0_17], %29 {strides = array<i32>} : memref<342x128xf32, #tpu.memory_space<vmem>>, vector<16x128xf32>,
    %31 = vector.extract_strided_slice %8 {offsets = [160, 0], sizes = [16, 128], strides = [1, 1]} : vector<256x128xf32> to vector<16x128xf32>
    %c199 = arith.constant 199 : index
    %c0_18 = arith.constant 0 : index
    %32 = vector.load %arg9[%c199, %c0_18] : memref<342x128xf32, #tpu.memory_space<vmem>>, vector<16x128xf32>
    tpu.vector_store %arg9[%c199, %c0_18], %31 {strides = array<i32>} : memref<342x128xf32, #tpu.memory_space<vmem>>, vector<16x128xf32>,
    %33 = vector.extract_strided_slice %8 {offsets = [176, 0], sizes = [16, 128], strides = [1, 1]} : vector<256x128xf32> to vector<16x128xf32>
    %c217 = arith.constant 217 : index
    %c0_19 = arith.constant 0 : index
    %34 = vector.load %arg9[%c217, %c0_19] : memref<342x128xf32, #tpu.memory_space<vmem>>, vector<16x128xf32>
    tpu.vector_store %arg9[%c217, %c0_19], %33 {strides = array<i32>} : memref<342x128xf32, #tpu.memory_space<vmem>>, vector<16x128xf32>,
    %35 = vector.extract_strided_slice %8 {offsets = [192, 0], sizes = [16, 128], strides = [1, 1]} : vector<256x128xf32> to vector<16x128xf32>
    %c235 = arith.constant 235 : index
    %c0_20 = arith.constant 0 : index
    %36 = vector.load %arg9[%c235, %c0_20] : memref<342x128xf32, #tpu.memory_space<vmem>>, vector<16x128xf32>
    tpu.vector_store %arg9[%c235, %c0_20], %35 {strides = array<i32>} : memref<342x128xf32, #tpu.memory_space<vmem>>, vector<16x128xf32>,
    %37 = vector.extract_strided_slice %8 {offsets = [208, 0], sizes = [16, 128], strides = [1, 1]} : vector<256x128xf32> to vector<16x128xf32>
    %c253 = arith.constant 253 : index
    %c0_21 = arith.constant 0 : index
    %38 = vector.load %arg9[%c253, %c0_21] : memref<342x128xf32, #tpu.memory_space<vmem>>, vector<16x128xf32>
    tpu.vector_store %arg9[%c253, %c0_21], %37 {strides = array<i32>} : memref<342x128xf32, #tpu.memory_space<vmem>>, vector<16x128xf32>,
    %39 = vector.extract_strided_slice %8 {offsets = [224, 0], sizes = [16, 128], strides = [1, 1]} : vector<256x128xf32> to vector<16x128xf32>
    %c271 = arith.constant 271 : index
    %c0_22 = arith.constant 0 : index
    %40 = vector.load %arg9[%c271, %c0_22] : memref<342x128xf32, #tpu.memory_space<vmem>>, vector<16x128xf32>
    tpu.vector_store %arg9[%c271, %c0_22], %39 {strides = array<i32>} : memref<342x128xf32, #tpu.memory_space<vmem>>, vector<16x128xf32>,
    %41 = vector.extract_strided_slice %8 {offsets = [240, 0], sizes = [16, 128], strides = [1, 1]} : vector<256x128xf32> to vector<16x128xf32>
    %c289 = arith.constant 289 : index
    %c0_23 = arith.constant 0 : index
    %42 = vector.load %arg9[%c289, %c0_23] : memref<342x128xf32, #tpu.memory_space<vmem>>, vector<16x128xf32>
    tpu.vector_store %arg9[%c289, %c0_23], %41 {strides = array<i32>} : memref<342x128xf32, #tpu.memory_space<vmem>>, vector<16x128xf32>,
    %cst_24 = arith.constant 0.000000e+00 : f32
    %43 = vector.broadcast %cst_24 : f32 to vector<288x128xf32>
    %c0_25 = arith.constant 0 : index
    %c0_26 = arith.constant 0 : index
    %44 = vector.load %arg10[%c0_25, %c0_26] : memref<288x128xf32, #tpu.memory_space<vmem>>, vector<288x128xf32>
    tpu.vector_store %arg10[%c0_25, %c0_26], %43 {strides = array<i32>} : memref<288x128xf32, #tpu.memory_space<vmem>>, vector<288x128xf32>,
    %c0_27 = arith.constant 0 : index
    %c0_28 = arith.constant 0 : index
    %45 = vector.load %arg9[%c0_27, %c0_28] : memref<342x128xf32, #tpu.memory_space<vmem>>, vector<288x128xf32>
    %46 = arith.truncf %45 : vector<288x128xf32> to vector<288x128xbf16>
    %c0_29 = arith.constant 0 : index
    %c0_30 = arith.constant 0 : index
    %47 = vector.load %arg10[%c0_29, %c0_30] : memref<288x128xf32, #tpu.memory_space<vmem>>, vector<288x128xf32>
    %c0_31 = arith.constant 0 : index
    %c0_32 = arith.constant 0 : index
    %c0_33 = arith.constant 0 : index
    %48 = vector.load %arg5[%c0_31, %c0_32, %c0_33] : memref<9x128x128xbf16, #tpu.memory_space<vmem>>, vector<1x128x128xbf16>
    %49 = vector.shape_cast %48 : vector<1x128x128xbf16> to vector<128x128xbf16>
    %cst_34 = arith.constant dense<0.000000e+00> : vector<288x128xf32>
    %50 = tpu.matmul %46, %49, %cst_34 {dimension_numbers = #tpu.dot_dimension_numbers<[1], [0], [0], [1], [0, 0, 1, 1], [], []>} : vector<288x128xbf16>, vector<128x128xbf16>, vector<288x128xf32> -> vector<288x128xf32>
    %51 = arith.addf %47, %50 : vector<288x128xf32>
    %c0_35 = arith.constant 0 : index
    %c0_36 = arith.constant 0 : index
    %52 = vector.load %arg10[%c0_35, %c0_36] : memref<288x128xf32, #tpu.memory_space<vmem>>, vector<288x128xf32>
    tpu.vector_store %arg10[%c0_35, %c0_36], %51 {strides = array<i32>} : memref<288x128xf32, #tpu.memory_space<vmem>>, vector<288x128xf32>,
    %c1 = arith.constant 1 : index
    %c0_37 = arith.constant 0 : index
    %53 = vector.load %arg9[%c1, %c0_37] : memref<342x128xf32, #tpu.memory_space<vmem>>, vector<288x128xf32>
    %54 = arith.truncf %53 : vector<288x128xf32> to vector<288x128xbf16>
    %c0_38 = arith.constant 0 : index
    %c0_39 = arith.constant 0 : index
    %55 = vector.load %arg10[%c0_38, %c0_39] : memref<288x128xf32, #tpu.memory_space<vmem>>, vector<288x128xf32>
    %c1_40 = arith.constant 1 : index
    %c0_41 = arith.constant 0 : index
    %c0_42 = arith.constant 0 : index
    %56 = vector.load %arg5[%c1_40, %c0_41, %c0_42] : memref<9x128x128xbf16, #tpu.memory_space<vmem>>, vector<1x128x128xbf16>
    %57 = vector.shape_cast %56 : vector<1x128x128xbf16> to vector<128x128xbf16>
    %cst_43 = arith.constant dense<0.000000e+00> : vector<288x128xf32>
    %58 = tpu.matmul %54, %57, %cst_43 {dimension_numbers = #tpu.dot_dimension_numbers<[1], [0], [0], [1], [0, 0, 1, 1], [], []>} : vector<288x128xbf16>, vector<128x128xbf16>, vector<288x128xf32> -> vector<288x128xf32>
    %59 = arith.addf %55, %58 : vector<288x128xf32>
    %c0_44 = arith.constant 0 : index
    %c0_45 = arith.constant 0 : index
    %60 = vector.load %arg10[%c0_44, %c0_45] : memref<288x128xf32, #tpu.memory_space<vmem>>, vector<288x128xf32>
    tpu.vector_store %arg10[%c0_44, %c0_45], %59 {strides = array<i32>} : memref<288x128xf32, #tpu.memory_space<vmem>>, vector<288x128xf32>,
    %c2 = arith.constant 2 : index
    %c0_46 = arith.constant 0 : index
    %61 = vector.load %arg9[%c2, %c0_46] : memref<342x128xf32, #tpu.memory_space<vmem>>, vector<288x128xf32>
    %62 = arith.truncf %61 : vector<288x128xf32> to vector<288x128xbf16>
    %c0_47 = arith.constant 0 : index
    %c0_48 = arith.constant 0 : index
    %63 = vector.load %arg10[%c0_47, %c0_48] : memref<288x128xf32, #tpu.memory_space<vmem>>, vector<288x128xf32>
    %c2_49 = arith.constant 2 : index
    %c0_50 = arith.constant 0 : index
    %c0_51 = arith.constant 0 : index
    %64 = vector.load %arg5[%c2_49, %c0_50, %c0_51] : memref<9x128x128xbf16, #tpu.memory_space<vmem>>, vector<1x128x128xbf16>
    %65 = vector.shape_cast %64 : vector<1x128x128xbf16> to vector<128x128xbf16>
    %cst_52 = arith.constant dense<0.000000e+00> : vector<288x128xf32>
    %66 = tpu.matmul %62, %65, %cst_52 {dimension_numbers = #tpu.dot_dimension_numbers<[1], [0], [0], [1], [0, 0, 1, 1], [], []>} : vector<288x128xbf16>, vector<128x128xbf16>, vector<288x128xf32> -> vector<288x128xf32>
    %67 = arith.addf %63, %66 : vector<288x128xf32>
    %c0_53 = arith.constant 0 : index
    %c0_54 = arith.constant 0 : index
    %68 = vector.load %arg10[%c0_53, %c0_54] : memref<288x128xf32, #tpu.memory_space<vmem>>, vector<288x128xf32>
    tpu.vector_store %arg10[%c0_53, %c0_54], %67 {strides = array<i32>} : memref<288x128xf32, #tpu.memory_space<vmem>>, vector<288x128xf32>,
    %c18 = arith.constant 18 : index
    %c0_55 = arith.constant 0 : index
    %69 = vector.load %arg9[%c18, %c0_55] : memref<342x128xf32, #tpu.memory_space<vmem>>, vector<288x128xf32>
    %70 = arith.truncf %69 : vector<288x128xf32> to vector<288x128xbf16>
    %c0_56 = arith.constant 0 : index
    %c0_57 = arith.constant 0 : index
    %71 = vector.load %arg10[%c0_56, %c0_57] : memref<288x128xf32, #tpu.memory_space<vmem>>, vector<288x128xf32>
    %c3 = arith.constant 3 : index
    %c0_58 = arith.constant 0 : index
    %c0_59 = arith.constant 0 : index
    %72 = vector.load %arg5[%c3, %c0_58, %c0_59] : memref<9x128x128xbf16, #tpu.memory_space<vmem>>, vector<1x128x128xbf16>
    %73 = vector.shape_cast %72 : vector<1x128x128xbf16> to vector<128x128xbf16>
    %cst_60 = arith.constant dense<0.000000e+00> : vector<288x128xf32>
    %74 = tpu.matmul %70, %73, %cst_60 {dimension_numbers = #tpu.dot_dimension_numbers<[1], [0], [0], [1], [0, 0, 1, 1], [], []>} : vector<288x128xbf16>, vector<128x128xbf16>, vector<288x128xf32> -> vector<288x128xf32>
    %75 = arith.addf %71, %74 : vector<288x128xf32>
    %c0_61 = arith.constant 0 : index
    %c0_62 = arith.constant 0 : index
    %76 = vector.load %arg10[%c0_61, %c0_62] : memref<288x128xf32, #tpu.memory_space<vmem>>, vector<288x128xf32>
    tpu.vector_store %arg10[%c0_61, %c0_62], %75 {strides = array<i32>} : memref<288x128xf32, #tpu.memory_space<vmem>>, vector<288x128xf32>,
    %c19_63 = arith.constant 19 : index
    %c0_64 = arith.constant 0 : index
    %77 = vector.load %arg9[%c19_63, %c0_64] : memref<342x128xf32, #tpu.memory_space<vmem>>, vector<288x128xf32>
    %78 = arith.truncf %77 : vector<288x128xf32> to vector<288x128xbf16>
    %c0_65 = arith.constant 0 : index
    %c0_66 = arith.constant 0 : index
    %79 = vector.load %arg10[%c0_65, %c0_66] : memref<288x128xf32, #tpu.memory_space<vmem>>, vector<288x128xf32>
    %c4 = arith.constant 4 : index
    %c0_67 = arith.constant 0 : index
    %c0_68 = arith.constant 0 : index
    %80 = vector.load %arg5[%c4, %c0_67, %c0_68] : memref<9x128x128xbf16, #tpu.memory_space<vmem>>, vector<1x128x128xbf16>
    %81 = vector.shape_cast %80 : vector<1x128x128xbf16> to vector<128x128xbf16>
    %cst_69 = arith.constant dense<0.000000e+00> : vector<288x128xf32>
    %82 = tpu.matmul %78, %81, %cst_69 {dimension_numbers = #tpu.dot_dimension_numbers<[1], [0], [0], [1], [0, 0, 1, 1], [], []>} : vector<288x128xbf16>, vector<128x128xbf16>, vector<288x128xf32> -> vector<288x128xf32>
    %83 = arith.addf %79, %82 : vector<288x128xf32>
    %c0_70 = arith.constant 0 : index
    %c0_71 = arith.constant 0 : index
    %84 = vector.load %arg10[%c0_70, %c0_71] : memref<288x128xf32, #tpu.memory_space<vmem>>, vector<288x128xf32>
    tpu.vector_store %arg10[%c0_70, %c0_71], %83 {strides = array<i32>} : memref<288x128xf32, #tpu.memory_space<vmem>>, vector<288x128xf32>,
    %c20 = arith.constant 20 : index
    %c0_72 = arith.constant 0 : index
    %85 = vector.load %arg9[%c20, %c0_72] : memref<342x128xf32, #tpu.memory_space<vmem>>, vector<288x128xf32>
    %86 = arith.truncf %85 : vector<288x128xf32> to vector<288x128xbf16>
    %c0_73 = arith.constant 0 : index
    %c0_74 = arith.constant 0 : index
    %87 = vector.load %arg10[%c0_73, %c0_74] : memref<288x128xf32, #tpu.memory_space<vmem>>, vector<288x128xf32>
    %c5 = arith.constant 5 : index
    %c0_75 = arith.constant 0 : index
    %c0_76 = arith.constant 0 : index
    %88 = vector.load %arg5[%c5, %c0_75, %c0_76] : memref<9x128x128xbf16, #tpu.memory_space<vmem>>, vector<1x128x128xbf16>
    %89 = vector.shape_cast %88 : vector<1x128x128xbf16> to vector<128x128xbf16>
    %cst_77 = arith.constant dense<0.000000e+00> : vector<288x128xf32>
    %90 = tpu.matmul %86, %89, %cst_77 {dimension_numbers = #tpu.dot_dimension_numbers<[1], [0], [0], [1], [0, 0, 1, 1], [], []>} : vector<288x128xbf16>, vector<128x128xbf16>, vector<288x128xf32> -> vector<288x128xf32>
    %91 = arith.addf %87, %90 : vector<288x128xf32>
    %c0_78 = arith.constant 0 : index
    %c0_79 = arith.constant 0 : index
    %92 = vector.load %arg10[%c0_78, %c0_79] : memref<288x128xf32, #tpu.memory_space<vmem>>, vector<288x128xf32>
    tpu.vector_store %arg10[%c0_78, %c0_79], %91 {strides = array<i32>} : memref<288x128xf32, #tpu.memory_space<vmem>>, vector<288x128xf32>,
    %c36 = arith.constant 36 : index
    %c0_80 = arith.constant 0 : index
    %93 = vector.load %arg9[%c36, %c0_80] : memref<342x128xf32, #tpu.memory_space<vmem>>, vector<288x128xf32>
    %94 = arith.truncf %93 : vector<288x128xf32> to vector<288x128xbf16>
    %c0_81 = arith.constant 0 : index
    %c0_82 = arith.constant 0 : index
    %95 = vector.load %arg10[%c0_81, %c0_82] : memref<288x128xf32, #tpu.memory_space<vmem>>, vector<288x128xf32>
    %c6 = arith.constant 6 : index
    %c0_83 = arith.constant 0 : index
    %c0_84 = arith.constant 0 : index
    %96 = vector.load %arg5[%c6, %c0_83, %c0_84] : memref<9x128x128xbf16, #tpu.memory_space<vmem>>, vector<1x128x128xbf16>
    %97 = vector.shape_cast %96 : vector<1x128x128xbf16> to vector<128x128xbf16>
    %cst_85 = arith.constant dense<0.000000e+00> : vector<288x128xf32>
    %98 = tpu.matmul %94, %97, %cst_85 {dimension_numbers = #tpu.dot_dimension_numbers<[1], [0], [0], [1], [0, 0, 1, 1], [], []>} : vector<288x128xbf16>, vector<128x128xbf16>, vector<288x128xf32> -> vector<288x128xf32>
    %99 = arith.addf %95, %98 : vector<288x128xf32>
    %c0_86 = arith.constant 0 : index
    %c0_87 = arith.constant 0 : index
    %100 = vector.load %arg10[%c0_86, %c0_87] : memref<288x128xf32, #tpu.memory_space<vmem>>, vector<288x128xf32>
    tpu.vector_store %arg10[%c0_86, %c0_87], %99 {strides = array<i32>} : memref<288x128xf32, #tpu.memory_space<vmem>>, vector<288x128xf32>,
    %c37_88 = arith.constant 37 : index
    %c0_89 = arith.constant 0 : index
    %101 = vector.load %arg9[%c37_88, %c0_89] : memref<342x128xf32, #tpu.memory_space<vmem>>, vector<288x128xf32>
    %102 = arith.truncf %101 : vector<288x128xf32> to vector<288x128xbf16>
    %c0_90 = arith.constant 0 : index
    %c0_91 = arith.constant 0 : index
    %103 = vector.load %arg10[%c0_90, %c0_91] : memref<288x128xf32, #tpu.memory_space<vmem>>, vector<288x128xf32>
    %c7 = arith.constant 7 : index
    %c0_92 = arith.constant 0 : index
    %c0_93 = arith.constant 0 : index
    %104 = vector.load %arg5[%c7, %c0_92, %c0_93] : memref<9x128x128xbf16, #tpu.memory_space<vmem>>, vector<1x128x128xbf16>
    %105 = vector.shape_cast %104 : vector<1x128x128xbf16> to vector<128x128xbf16>
    %cst_94 = arith.constant dense<0.000000e+00> : vector<288x128xf32>
    %106 = tpu.matmul %102, %105, %cst_94 {dimension_numbers = #tpu.dot_dimension_numbers<[1], [0], [0], [1], [0, 0, 1, 1], [], []>} : vector<288x128xbf16>, vector<128x128xbf16>, vector<288x128xf32> -> vector<288x128xf32>
    %107 = arith.addf %103, %106 : vector<288x128xf32>
    %c0_95 = arith.constant 0 : index
    %c0_96 = arith.constant 0 : index
    %108 = vector.load %arg10[%c0_95, %c0_96] : memref<288x128xf32, #tpu.memory_space<vmem>>, vector<288x128xf32>
    tpu.vector_store %arg10[%c0_95, %c0_96], %107 {strides = array<i32>} : memref<288x128xf32, #tpu.memory_space<vmem>>, vector<288x128xf32>,
    %c38 = arith.constant 38 : index
    %c0_97 = arith.constant 0 : index
    %109 = vector.load %arg9[%c38, %c0_97] : memref<342x128xf32, #tpu.memory_space<vmem>>, vector<288x128xf32>
    %110 = arith.truncf %109 : vector<288x128xf32> to vector<288x128xbf16>
    %c0_98 = arith.constant 0 : index
    %c0_99 = arith.constant 0 : index
    %111 = vector.load %arg10[%c0_98, %c0_99] : memref<288x128xf32, #tpu.memory_space<vmem>>, vector<288x128xf32>
    %c8 = arith.constant 8 : index
    %c0_100 = arith.constant 0 : index
    %c0_101 = arith.constant 0 : index
    %112 = vector.load %arg5[%c8, %c0_100, %c0_101] : memref<9x128x128xbf16, #tpu.memory_space<vmem>>, vector<1x128x128xbf16>
    %113 = vector.shape_cast %112 : vector<1x128x128xbf16> to vector<128x128xbf16>
    %cst_102 = arith.constant dense<0.000000e+00> : vector<288x128xf32>
    %114 = tpu.matmul %110, %113, %cst_102 {dimension_numbers = #tpu.dot_dimension_numbers<[1], [0], [0], [1], [0, 0, 1, 1], [], []>} : vector<288x128xbf16>, vector<128x128xbf16>, vector<288x128xf32> -> vector<288x128xf32>
    %115 = arith.addf %111, %114 : vector<288x128xf32>
    %c0_103 = arith.constant 0 : index
    %c0_104 = arith.constant 0 : index
    %116 = vector.load %arg10[%c0_103, %c0_104] : memref<288x128xf32, #tpu.memory_space<vmem>>, vector<288x128xf32>
    tpu.vector_store %arg10[%c0_103, %c0_104], %115 {strides = array<i32>} : memref<288x128xf32, #tpu.memory_space<vmem>>, vector<288x128xf32>,
    %c0_105 = arith.constant 0 : index
    %c0_106 = arith.constant 0 : index
    %117 = vector.load %arg10[%c0_105, %c0_106] : memref<288x128xf32, #tpu.memory_space<vmem>>, vector<288x128xf32>
    %c0_107 = arith.constant 0 : index
    %c0_108 = arith.constant 0 : index
    %118 = vector.load %arg3[%c0_107, %c0_108] : memref<288x1xf32, #tpu.memory_space<vmem>>, vector<288x1xf32>
    %119 = vector.broadcast %118 : vector<288x1xf32> to vector<288x128xf32>
    %120 = arith.mulf %117, %119 : vector<288x128xf32>
    %cst_109 = arith.constant dense<0.000000e+00> : vector<128xf32>
    %121 = vector.multi_reduction <add>, %120, %cst_109 [0] : vector<288x128xf32> to vector<128xf32>
    %122 = vector.shape_cast %121 : vector<128xf32> to vector<1x128xf32>
    %c0_110 = arith.constant 0 : index
    %c0_111 = arith.constant 0 : index
    %c0_112 = arith.constant 0 : index
    %123 = vector.load %arg7[%c0_110, %c0_111, %c0_112] : memref<1x1x128xf32, #tpu.memory_space<vmem>>, vector<1x1x128xf32>
    %124 = vector.shape_cast %123 : vector<1x1x128xf32> to vector<1x128xf32>
    %125 = vector.shape_cast %122 : vector<1x128xf32> to vector<1x1x128xf32>
    tpu.vector_store %arg7[%c0_110, %c0_111, %c0_112], %125 {strides = array<i32>} : memref<1x1x128xf32, #tpu.memory_space<vmem>>, vector<1x1x128xf32>,
    %126 = arith.mulf %120, %117 : vector<288x128xf32>
    %cst_113 = arith.constant dense<0.000000e+00> : vector<128xf32>
    %127 = vector.multi_reduction <add>, %126, %cst_113 [0] : vector<288x128xf32> to vector<128xf32>
    %128 = vector.shape_cast %127 : vector<128xf32> to vector<1x128xf32>
    %c0_114 = arith.constant 0 : index
    %c0_115 = arith.constant 0 : index
    %c0_116 = arith.constant 0 : index
    %129 = vector.load %arg8[%c0_114, %c0_115, %c0_116] : memref<1x1x128xf32, #tpu.memory_space<vmem>>, vector<1x1x128xf32>
    %130 = vector.shape_cast %129 : vector<1x1x128xf32> to vector<1x128xf32>
    %131 = vector.shape_cast %128 : vector<1x128xf32> to vector<1x1x128xf32>
    tpu.vector_store %arg8[%c0_114, %c0_115, %c0_116], %131 {strides = array<i32>} : memref<1x1x128xf32, #tpu.memory_space<vmem>>, vector<1x1x128xf32>,
    %c0_117 = arith.constant 0 : index
    %c0_118 = arith.constant 0 : index
    %132 = vector.load %arg10[%c0_117, %c0_118] : memref<288x128xf32, #tpu.memory_space<vmem>>, vector<16x128xf32>
    %c0_119 = arith.constant 0 : index
    %c0_120 = arith.constant 0 : index
    %133 = vector.load %arg6[%c0_119, %c0_120] : memref<256x128xf32, #tpu.memory_space<vmem>>, vector<16x128xf32>
    tpu.vector_store %arg6[%c0_119, %c0_120], %132 {strides = array<i32>} : memref<256x128xf32, #tpu.memory_space<vmem>>, vector<16x128xf32>,
    %c18_121 = arith.constant 18 : index
    %c0_122 = arith.constant 0 : index
    %134 = vector.load %arg10[%c18_121, %c0_122] : memref<288x128xf32, #tpu.memory_space<vmem>>, vector<16x128xf32>
    %c16 = arith.constant 16 : index
    %c0_123 = arith.constant 0 : index
    %135 = vector.load %arg6[%c16, %c0_123] : memref<256x128xf32, #tpu.memory_space<vmem>>, vector<16x128xf32>
    tpu.vector_store %arg6[%c16, %c0_123], %134 {strides = array<i32>} : memref<256x128xf32, #tpu.memory_space<vmem>>, vector<16x128xf32>,
    %c36_124 = arith.constant 36 : index
    %c0_125 = arith.constant 0 : index
    %136 = vector.load %arg10[%c36_124, %c0_125] : memref<288x128xf32, #tpu.memory_space<vmem>>, vector<16x128xf32>
    %c32 = arith.constant 32 : index
    %c0_126 = arith.constant 0 : index
    %137 = vector.load %arg6[%c32, %c0_126] : memref<256x128xf32, #tpu.memory_space<vmem>>, vector<16x128xf32>
    tpu.vector_store %arg6[%c32, %c0_126], %136 {strides = array<i32>} : memref<256x128xf32, #tpu.memory_space<vmem>>, vector<16x128xf32>,
    %c54 = arith.constant 54 : index
    %c0_127 = arith.constant 0 : index
    %138 = vector.load %arg10[%c54, %c0_127] : memref<288x128xf32, #tpu.memory_space<vmem>>, vector<16x128xf32>
    %c48 = arith.constant 48 : index
    %c0_128 = arith.constant 0 : index
    %139 = vector.load %arg6[%c48, %c0_128] : memref<256x128xf32, #tpu.memory_space<vmem>>, vector<16x128xf32>
    tpu.vector_store %arg6[%c48, %c0_128], %138 {strides = array<i32>} : memref<256x128xf32, #tpu.memory_space<vmem>>, vector<16x128xf32>,
    %c72 = arith.constant 72 : index
    %c0_129 = arith.constant 0 : index
    %140 = vector.load %arg10[%c72, %c0_129] : memref<288x128xf32, #tpu.memory_space<vmem>>, vector<16x128xf32>
    %c64 = arith.constant 64 : index
    %c0_130 = arith.constant 0 : index
    %141 = vector.load %arg6[%c64, %c0_130] : memref<256x128xf32, #tpu.memory_space<vmem>>, vector<16x128xf32>
    tpu.vector_store %arg6[%c64, %c0_130], %140 {strides = array<i32>} : memref<256x128xf32, #tpu.memory_space<vmem>>, vector<16x128xf32>,
    %c90 = arith.constant 90 : index
    %c0_131 = arith.constant 0 : index
    %142 = vector.load %arg10[%c90, %c0_131] : memref<288x128xf32, #tpu.memory_space<vmem>>, vector<16x128xf32>
    %c80 = arith.constant 80 : index
    %c0_132 = arith.constant 0 : index
    %143 = vector.load %arg6[%c80, %c0_132] : memref<256x128xf32, #tpu.memory_space<vmem>>, vector<16x128xf32>
    tpu.vector_store %arg6[%c80, %c0_132], %142 {strides = array<i32>} : memref<256x128xf32, #tpu.memory_space<vmem>>, vector<16x128xf32>,
    %c108 = arith.constant 108 : index
    %c0_133 = arith.constant 0 : index
    %144 = vector.load %arg10[%c108, %c0_133] : memref<288x128xf32, #tpu.memory_space<vmem>>, vector<16x128xf32>
    %c96 = arith.constant 96 : index
    %c0_134 = arith.constant 0 : index
    %145 = vector.load %arg6[%c96, %c0_134] : memref<256x128xf32, #tpu.memory_space<vmem>>, vector<16x128xf32>
    tpu.vector_store %arg6[%c96, %c0_134], %144 {strides = array<i32>} : memref<256x128xf32, #tpu.memory_space<vmem>>, vector<16x128xf32>,
    %c126 = arith.constant 126 : index
    %c0_135 = arith.constant 0 : index
    %146 = vector.load %arg10[%c126, %c0_135] : memref<288x128xf32, #tpu.memory_space<vmem>>, vector<16x128xf32>
    %c112 = arith.constant 112 : index
    %c0_136 = arith.constant 0 : index
    %147 = vector.load %arg6[%c112, %c0_136] : memref<256x128xf32, #tpu.memory_space<vmem>>, vector<16x128xf32>
    tpu.vector_store %arg6[%c112, %c0_136], %146 {strides = array<i32>} : memref<256x128xf32, #tpu.memory_space<vmem>>, vector<16x128xf32>,
    %c144 = arith.constant 144 : index
    %c0_137 = arith.constant 0 : index
    %148 = vector.load %arg10[%c144, %c0_137] : memref<288x128xf32, #tpu.memory_space<vmem>>, vector<16x128xf32>
    %c128 = arith.constant 128 : index
    %c0_138 = arith.constant 0 : index
    %149 = vector.load %arg6[%c128, %c0_138] : memref<256x128xf32, #tpu.memory_space<vmem>>, vector<16x128xf32>
    tpu.vector_store %arg6[%c128, %c0_138], %148 {strides = array<i32>} : memref<256x128xf32, #tpu.memory_space<vmem>>, vector<16x128xf32>,
    %c162 = arith.constant 162 : index
    %c0_139 = arith.constant 0 : index
    %150 = vector.load %arg10[%c162, %c0_139] : memref<288x128xf32, #tpu.memory_space<vmem>>, vector<16x128xf32>
    %c144_140 = arith.constant 144 : index
    %c0_141 = arith.constant 0 : index
    %151 = vector.load %arg6[%c144_140, %c0_141] : memref<256x128xf32, #tpu.memory_space<vmem>>, vector<16x128xf32>
    tpu.vector_store %arg6[%c144_140, %c0_141], %150 {strides = array<i32>} : memref<256x128xf32, #tpu.memory_space<vmem>>, vector<16x128xf32>,
    %c180 = arith.constant 180 : index
    %c0_142 = arith.constant 0 : index
    %152 = vector.load %arg10[%c180, %c0_142] : memref<288x128xf32, #tpu.memory_space<vmem>>, vector<16x128xf32>
    %c160 = arith.constant 160 : index
    %c0_143 = arith.constant 0 : index
    %153 = vector.load %arg6[%c160, %c0_143] : memref<256x128xf32, #tpu.memory_space<vmem>>, vector<16x128xf32>
    tpu.vector_store %arg6[%c160, %c0_143], %152 {strides = array<i32>} : memref<256x128xf32, #tpu.memory_space<vmem>>, vector<16x128xf32>,
    %c198 = arith.constant 198 : index
    %c0_144 = arith.constant 0 : index
    %154 = vector.load %arg10[%c198, %c0_144] : memref<288x128xf32, #tpu.memory_space<vmem>>, vector<16x128xf32>
    %c176 = arith.constant 176 : index
    %c0_145 = arith.constant 0 : index
    %155 = vector.load %arg6[%c176, %c0_145] : memref<256x128xf32, #tpu.memory_space<vmem>>, vector<16x128xf32>
    tpu.vector_store %arg6[%c176, %c0_145], %154 {strides = array<i32>} : memref<256x128xf32, #tpu.memory_space<vmem>>, vector<16x128xf32>,
    %c216 = arith.constant 216 : index
    %c0_146 = arith.constant 0 : index
    %156 = vector.load %arg10[%c216, %c0_146] : memref<288x128xf32, #tpu.memory_space<vmem>>, vector<16x128xf32>
    %c192 = arith.constant 192 : index
    %c0_147 = arith.constant 0 : index
    %157 = vector.load %arg6[%c192, %c0_147] : memref<256x128xf32, #tpu.memory_space<vmem>>, vector<16x128xf32>
    tpu.vector_store %arg6[%c192, %c0_147], %156 {strides = array<i32>} : memref<256x128xf32, #tpu.memory_space<vmem>>, vector<16x128xf32>,
    %c234 = arith.constant 234 : index
    %c0_148 = arith.constant 0 : index
    %158 = vector.load %arg10[%c234, %c0_148] : memref<288x128xf32, #tpu.memory_space<vmem>>, vector<16x128xf32>
    %c208 = arith.constant 208 : index
    %c0_149 = arith.constant 0 : index
    %159 = vector.load %arg6[%c208, %c0_149] : memref<256x128xf32, #tpu.memory_space<vmem>>, vector<16x128xf32>
    tpu.vector_store %arg6[%c208, %c0_149], %158 {strides = array<i32>} : memref<256x128xf32, #tpu.memory_space<vmem>>, vector<16x128xf32>,
    %c252 = arith.constant 252 : index
    %c0_150 = arith.constant 0 : index
    %160 = vector.load %arg10[%c252, %c0_150] : memref<288x128xf32, #tpu.memory_space<vmem>>, vector<16x128xf32>
    %c224 = arith.constant 224 : index
    %c0_151 = arith.constant 0 : index
    %161 = vector.load %arg6[%c224, %c0_151] : memref<256x128xf32, #tpu.memory_space<vmem>>, vector<16x128xf32>
    tpu.vector_store %arg6[%c224, %c0_151], %160 {strides = array<i32>} : memref<256x128xf32, #tpu.memory_space<vmem>>, vector<16x128xf32>,
    %c270 = arith.constant 270 : index
    %c0_152 = arith.constant 0 : index
    %162 = vector.load %arg10[%c270, %c0_152] : memref<288x128xf32, #tpu.memory_space<vmem>>, vector<16x128xf32>
    %c240 = arith.constant 240 : index
    %c0_153 = arith.constant 0 : index
    %163 = vector.load %arg6[%c240, %c0_153] : memref<256x128xf32, #tpu.memory_space<vmem>>, vector<16x128xf32>
    tpu.vector_store %arg6[%c240, %c0_153], %162 {strides = array<i32>} : memref<256x128xf32, #tpu.memory_space<vmem>>, vector<16x128xf32>,
    return
  }
  func.func @transform_0(%arg0: i32) -> (i32, i32) {
    %c0_i32 = arith.constant 0 : i32
    %c0_i32_0 = arith.constant 0 : i32
    %c0_i32_1 = arith.constant 0 : i32
    return %c0_i32, %c0_i32_0 : i32, i32
  }
  func.func @transform_1(%arg0: i32) -> (i32, i32) {
    %c0_i32 = arith.constant 0 : i32
    %c0_i32_0 = arith.constant 0 : i32
    %c0_i32_1 = arith.constant 0 : i32
    return %c0_i32, %c0_i32_0 : i32, i32
  }
  func.func @transform_2(%arg0: i32) -> (i32, i32) {
    %c0_i32 = arith.constant 0 : i32
    %c0_i32_0 = arith.constant 0 : i32
    %c0_i32_1 = arith.constant 0 : i32
    return %c0_i32, %c0_i32_0 : i32, i32
  }
  func.func @transform_3(%arg0: i32) -> (i32, i32) {
    %c0_i32 = arith.constant 0 : i32
    %c0_i32_0 = arith.constant 0 : i32
    return %arg0, %c0_i32 : i32, i32
  }
  func.func @transform_4(%arg0: i32) -> (i32, i32, i32) {
    %c0_i32 = arith.constant 0 : i32
    %c0_i32_0 = arith.constant 0 : i32
    %c0_i32_1 = arith.constant 0 : i32
    %c0_i32_2 = arith.constant 0 : i32
    return %c0_i32, %c0_i32_0, %c0_i32_1 : i32, i32, i32
  }
  func.func @transform_5(%arg0: i32) -> (i32, i32) {
    %c0_i32 = arith.constant 0 : i32
    %c0_i32_0 = arith.constant 0 : i32
    return %arg0, %c0_i32 : i32, i32
  }
  func.func @transform_6(%arg0: i32) -> (i32, i32, i32) {
    %c0_i32 = arith.constant 0 : i32
    %c0_i32_0 = arith.constant 0 : i32
    %c0_i32_1 = arith.constant 0 : i32
    return %arg0, %c0_i32, %c0_i32_0 : i32, i32, i32
  }
  func.func @transform_7(%arg0: i32) -> (i32, i32, i32) {
    %c0_i32 = arith.constant 0 : i32
    %c0_i32_0 = arith.constant 0 : i32
    %c0_i32_1 = arith.constant 0 : i32
    return %arg0, %c0_i32, %c0_i32_0 : i32, i32, i32
  }
}

module attributes {stable_mosaic.version = 11 : i64} {
  func.func @_affine_add_relu_kernel(%arg0: i32, %arg1: memref<256x128xf32, #tpu.memory_space<vmem>>, %arg2: memref<256x128xf32, #tpu.memory_space<vmem>>, %arg3: memref<1x128xf32, #tpu.memory_space<vmem>>, %arg4: memref<1x128xf32, #tpu.memory_space<vmem>>, %arg5: memref<1x128xf32, #tpu.memory_space<vmem>>, %arg6: memref<1x128xf32, #tpu.memory_space<vmem>>, %arg7: memref<256x128xf32, #tpu.memory_space<vmem>>) attributes {dimension_semantics = [#tpu.dimension_semantics<parallel>], iteration_bounds = array<i64: 2>, scalar_prefetch = 0 : i64, scratch_operands = 0 : i64, tpu.core_type = #tpu.core_type<tc>, window_params = [{transform_indices = @transform_0, window_bounds = array<i64: 256, 128>}, {transform_indices = @transform_1, window_bounds = array<i64: 256, 128>}, {pipeline_mode = #tpu.pipeline_mode<synchronous>, transform_indices = @transform_2, window_bounds = array<i64: 1, 128>}, {pipeline_mode = #tpu.pipeline_mode<synchronous>, transform_indices = @transform_3, window_bounds = array<i64: 1, 128>}, {pipeline_mode = #tpu.pipeline_mode<synchronous>, transform_indices = @transform_4, window_bounds = array<i64: 1, 128>}, {pipeline_mode = #tpu.pipeline_mode<synchronous>, transform_indices = @transform_5, window_bounds = array<i64: 1, 128>}, {transform_indices = @transform_6, window_bounds = array<i64: 256, 128>}]} {
    %c0 = arith.constant 0 : index
    %c0_0 = arith.constant 0 : index
    %0 = vector.load %arg1[%c0, %c0_0] : memref<256x128xf32, #tpu.memory_space<vmem>>, vector<256x128xf32>
    %c0_1 = arith.constant 0 : index
    %c0_2 = arith.constant 0 : index
    %1 = vector.load %arg3[%c0_1, %c0_2] : memref<1x128xf32, #tpu.memory_space<vmem>>, vector<1x128xf32>
    %2 = vector.broadcast %1 : vector<1x128xf32> to vector<256x128xf32>
    %3 = arith.mulf %0, %2 : vector<256x128xf32>
    %c0_3 = arith.constant 0 : index
    %c0_4 = arith.constant 0 : index
    %4 = vector.load %arg4[%c0_3, %c0_4] : memref<1x128xf32, #tpu.memory_space<vmem>>, vector<1x128xf32>
    %5 = vector.broadcast %4 : vector<1x128xf32> to vector<256x128xf32>
    %6 = arith.addf %3, %5 : vector<256x128xf32>
    %c0_5 = arith.constant 0 : index
    %c0_6 = arith.constant 0 : index
    %7 = vector.load %arg2[%c0_5, %c0_6] : memref<256x128xf32, #tpu.memory_space<vmem>>, vector<256x128xf32>
    %c0_7 = arith.constant 0 : index
    %c0_8 = arith.constant 0 : index
    %8 = vector.load %arg5[%c0_7, %c0_8] : memref<1x128xf32, #tpu.memory_space<vmem>>, vector<1x128xf32>
    %9 = vector.broadcast %8 : vector<1x128xf32> to vector<256x128xf32>
    %10 = arith.mulf %7, %9 : vector<256x128xf32>
    %11 = arith.addf %6, %10 : vector<256x128xf32>
    %c0_9 = arith.constant 0 : index
    %c0_10 = arith.constant 0 : index
    %12 = vector.load %arg6[%c0_9, %c0_10] : memref<1x128xf32, #tpu.memory_space<vmem>>, vector<1x128xf32>
    %13 = vector.broadcast %12 : vector<1x128xf32> to vector<256x128xf32>
    %14 = arith.addf %11, %13 : vector<256x128xf32>
    %cst = arith.constant 0.000000e+00 : f32
    %15 = vector.broadcast %cst : f32 to vector<256x128xf32>
    %16 = arith.maximumf %14, %15 : vector<256x128xf32>
    %c0_11 = arith.constant 0 : index
    %c0_12 = arith.constant 0 : index
    %17 = vector.load %arg7[%c0_11, %c0_12] : memref<256x128xf32, #tpu.memory_space<vmem>>, vector<256x128xf32>
    tpu.vector_store %arg7[%c0_11, %c0_12], %16 {strides = array<i32>} : memref<256x128xf32, #tpu.memory_space<vmem>>, vector<256x128xf32>,
    return
  }
  func.func @transform_0(%arg0: i32) -> (i32, i32) {
    %c0_i32 = arith.constant 0 : i32
    %c0_i32_0 = arith.constant 0 : i32
    return %arg0, %c0_i32 : i32, i32
  }
  func.func @transform_1(%arg0: i32) -> (i32, i32) {
    %c0_i32 = arith.constant 0 : i32
    %c0_i32_0 = arith.constant 0 : i32
    return %arg0, %c0_i32 : i32, i32
  }
  func.func @transform_2(%arg0: i32) -> (i32, i32) {
    %c0_i32 = arith.constant 0 : i32
    %c0_i32_0 = arith.constant 0 : i32
    %c0_i32_1 = arith.constant 0 : i32
    return %c0_i32, %c0_i32_0 : i32, i32
  }
  func.func @transform_3(%arg0: i32) -> (i32, i32) {
    %c0_i32 = arith.constant 0 : i32
    %c0_i32_0 = arith.constant 0 : i32
    %c0_i32_1 = arith.constant 0 : i32
    return %c0_i32, %c0_i32_0 : i32, i32
  }
  func.func @transform_4(%arg0: i32) -> (i32, i32) {
    %c0_i32 = arith.constant 0 : i32
    %c0_i32_0 = arith.constant 0 : i32
    %c0_i32_1 = arith.constant 0 : i32
    return %c0_i32, %c0_i32_0 : i32, i32
  }
  func.func @transform_5(%arg0: i32) -> (i32, i32) {
    %c0_i32 = arith.constant 0 : i32
    %c0_i32_0 = arith.constant 0 : i32
    %c0_i32_1 = arith.constant 0 : i32
    return %c0_i32, %c0_i32_0 : i32, i32
  }
  func.func @transform_6(%arg0: i32) -> (i32, i32) {
    %c0_i32 = arith.constant 0 : i32
    %c0_i32_0 = arith.constant 0 : i32
    return %arg0, %c0_i32 : i32, i32
  }
}

module attributes {stable_mosaic.version = 11 : i64} {
  func.func @_mm_stats_kernel(%arg0: i32, %arg1: memref<256x128xf32, #tpu.memory_space<vmem>>, %arg2: memref<1x128xf32, #tpu.memory_space<vmem>>, %arg3: memref<1x128xf32, #tpu.memory_space<vmem>>, %arg4: memref<128x128xbf16, #tpu.memory_space<vmem>>, %arg5: memref<256x128xf32, #tpu.memory_space<vmem>>, %arg6: memref<1x1x128xf32, #tpu.memory_space<vmem>>, %arg7: memref<1x1x128xf32, #tpu.memory_space<vmem>>) attributes {dimension_semantics = [#tpu.dimension_semantics<parallel>], iteration_bounds = array<i64: 2>, scalar_prefetch = 0 : i64, scratch_operands = 0 : i64, tpu.core_type = #tpu.core_type<tc>, window_params = [{transform_indices = @transform_0, window_bounds = array<i64: 256, 128>}, {pipeline_mode = #tpu.pipeline_mode<synchronous>, transform_indices = @transform_1, window_bounds = array<i64: 1, 128>}, {pipeline_mode = #tpu.pipeline_mode<synchronous>, transform_indices = @transform_2, window_bounds = array<i64: 1, 128>}, {pipeline_mode = #tpu.pipeline_mode<synchronous>, transform_indices = @transform_3, window_bounds = array<i64: 128, 128>}, {transform_indices = @transform_4, window_bounds = array<i64: 256, 128>}, {transform_indices = @transform_5, window_bounds = array<i64: 1, 1, 128>}, {transform_indices = @transform_6, window_bounds = array<i64: 1, 1, 128>}]} {
    %c0 = arith.constant 0 : index
    %c0_0 = arith.constant 0 : index
    %0 = vector.load %arg1[%c0, %c0_0] : memref<256x128xf32, #tpu.memory_space<vmem>>, vector<256x128xf32>
    %c0_1 = arith.constant 0 : index
    %c0_2 = arith.constant 0 : index
    %1 = vector.load %arg2[%c0_1, %c0_2] : memref<1x128xf32, #tpu.memory_space<vmem>>, vector<1x128xf32>
    %2 = vector.broadcast %1 : vector<1x128xf32> to vector<256x128xf32>
    %3 = arith.mulf %0, %2 : vector<256x128xf32>
    %c0_3 = arith.constant 0 : index
    %c0_4 = arith.constant 0 : index
    %4 = vector.load %arg3[%c0_3, %c0_4] : memref<1x128xf32, #tpu.memory_space<vmem>>, vector<1x128xf32>
    %5 = vector.broadcast %4 : vector<1x128xf32> to vector<256x128xf32>
    %6 = arith.addf %3, %5 : vector<256x128xf32>
    %cst = arith.constant 0.000000e+00 : f32
    %7 = vector.broadcast %cst : f32 to vector<256x128xf32>
    %8 = arith.maximumf %6, %7 : vector<256x128xf32>
    %9 = arith.truncf %8 : vector<256x128xf32> to vector<256x128xbf16>
    %c0_5 = arith.constant 0 : index
    %c0_6 = arith.constant 0 : index
    %10 = vector.load %arg4[%c0_5, %c0_6] : memref<128x128xbf16, #tpu.memory_space<vmem>>, vector<128x128xbf16>
    %cst_7 = arith.constant dense<0.000000e+00> : vector<256x128xf32>
    %11 = tpu.matmul %9, %10, %cst_7 {dimension_numbers = #tpu.dot_dimension_numbers<[1], [0], [0], [1], [0, 0, 1, 1], [], []>} : vector<256x128xbf16>, vector<128x128xbf16>, vector<256x128xf32> -> vector<256x128xf32>
    %c0_8 = arith.constant 0 : index
    %c0_9 = arith.constant 0 : index
    %12 = vector.load %arg5[%c0_8, %c0_9] : memref<256x128xf32, #tpu.memory_space<vmem>>, vector<256x128xf32>
    tpu.vector_store %arg5[%c0_8, %c0_9], %11 {strides = array<i32>} : memref<256x128xf32, #tpu.memory_space<vmem>>, vector<256x128xf32>,
    %cst_10 = arith.constant dense<0.000000e+00> : vector<128xf32>
    %13 = vector.multi_reduction <add>, %11, %cst_10 [0] : vector<256x128xf32> to vector<128xf32>
    %14 = vector.shape_cast %13 : vector<128xf32> to vector<1x128xf32>
    %c0_11 = arith.constant 0 : index
    %c0_12 = arith.constant 0 : index
    %c0_13 = arith.constant 0 : index
    %15 = vector.load %arg6[%c0_11, %c0_12, %c0_13] : memref<1x1x128xf32, #tpu.memory_space<vmem>>, vector<1x1x128xf32>
    %16 = vector.shape_cast %15 : vector<1x1x128xf32> to vector<1x128xf32>
    %17 = vector.shape_cast %14 : vector<1x128xf32> to vector<1x1x128xf32>
    tpu.vector_store %arg6[%c0_11, %c0_12, %c0_13], %17 {strides = array<i32>} : memref<1x1x128xf32, #tpu.memory_space<vmem>>, vector<1x1x128xf32>,
    %18 = arith.mulf %11, %11 : vector<256x128xf32>
    %cst_14 = arith.constant dense<0.000000e+00> : vector<128xf32>
    %19 = vector.multi_reduction <add>, %18, %cst_14 [0] : vector<256x128xf32> to vector<128xf32>
    %20 = vector.shape_cast %19 : vector<128xf32> to vector<1x128xf32>
    %c0_15 = arith.constant 0 : index
    %c0_16 = arith.constant 0 : index
    %c0_17 = arith.constant 0 : index
    %21 = vector.load %arg7[%c0_15, %c0_16, %c0_17] : memref<1x1x128xf32, #tpu.memory_space<vmem>>, vector<1x1x128xf32>
    %22 = vector.shape_cast %21 : vector<1x1x128xf32> to vector<1x128xf32>
    %23 = vector.shape_cast %20 : vector<1x128xf32> to vector<1x1x128xf32>
    tpu.vector_store %arg7[%c0_15, %c0_16, %c0_17], %23 {strides = array<i32>} : memref<1x1x128xf32, #tpu.memory_space<vmem>>, vector<1x1x128xf32>,
    return
  }
  func.func @transform_0(%arg0: i32) -> (i32, i32) {
    %c0_i32 = arith.constant 0 : i32
    %c0_i32_0 = arith.constant 0 : i32
    return %arg0, %c0_i32 : i32, i32
  }
  func.func @transform_1(%arg0: i32) -> (i32, i32) {
    %c0_i32 = arith.constant 0 : i32
    %c0_i32_0 = arith.constant 0 : i32
    %c0_i32_1 = arith.constant 0 : i32
    return %c0_i32, %c0_i32_0 : i32, i32
  }
  func.func @transform_2(%arg0: i32) -> (i32, i32) {
    %c0_i32 = arith.constant 0 : i32
    %c0_i32_0 = arith.constant 0 : i32
    %c0_i32_1 = arith.constant 0 : i32
    return %c0_i32, %c0_i32_0 : i32, i32
  }
  func.func @transform_3(%arg0: i32) -> (i32, i32) {
    %c0_i32 = arith.constant 0 : i32
    %c0_i32_0 = arith.constant 0 : i32
    %c0_i32_1 = arith.constant 0 : i32
    return %c0_i32, %c0_i32_0 : i32, i32
  }
  func.func @transform_4(%arg0: i32) -> (i32, i32) {
    %c0_i32 = arith.constant 0 : i32
    %c0_i32_0 = arith.constant 0 : i32
    return %arg0, %c0_i32 : i32, i32
  }
  func.func @transform_5(%arg0: i32) -> (i32, i32, i32) {
    %c0_i32 = arith.constant 0 : i32
    %c0_i32_0 = arith.constant 0 : i32
    %c0_i32_1 = arith.constant 0 : i32
    return %arg0, %c0_i32, %c0_i32_0 : i32, i32, i32
  }
  func.func @transform_6(%arg0: i32) -> (i32, i32, i32) {
    %c0_i32 = arith.constant 0 : i32
    %c0_i32_0 = arith.constant 0 : i32
    %c0_i32_1 = arith.constant 0 : i32
    return %arg0, %c0_i32, %c0_i32_0 : i32, i32, i32
  }
}

</mosaic_0001>

<llo_original>
// kernel: bottleneck_forward.9
$region0: #{bottleneck_forward.9}
  #allocation0 [shape = 'u32[]', space=smem, size = 0x4, offset = 0x4, fixed_abs, tag = 'smem constant byte address 0x4 - core index']
  #allocation1 [shape = 'u32[72,128]{1,0:T(1,128)}', space=vmem, size = 0x9000, scoped, tag = 'internal scratch']
  %s0 = inlined_call_operand.vmem [shape: f32[512,128], index: 0, kind: input, shape index: {}]
  %s1 = inlined_call_operand.vmem [shape: f32[512,128], index: 1, kind: input, shape index: {}]
  %s2 = inlined_call_operand.vmem [shape: f32[1,128], index: 2, kind: input, shape index: {}]
  %s3 = inlined_call_operand.vmem [shape: f32[1,128], index: 3, kind: input, shape index: {}]
  %s4 = inlined_call_operand.vmem [shape: f32[1,128], index: 4, kind: input, shape index: {}]
  %s5 = inlined_call_operand.vmem [shape: f32[1,128], index: 5, kind: input, shape index: {}]
  %s6 = inlined_call_operand.vmem [shape: f32[512,128], index: 6, kind: output, shape index: {}]
  %s7 = sld [smem:[#allocation0]]
  $region57: #{bottleneck_forward.9} parent=0
    _
  %s9 = ssub.s32 1, %s7
  %s10 = scalar_select 0, %s9, %s7
  loop: start=0, step=1, limit=4
  $region2: #{bottleneck_forward.9} parent=0 // loop_pre_header
    _
  $region3: #{bottleneck_forward.9} parent=0 // loop_header
    %s12 = sphi 0, %s16
    %p13 = scmp.ge.s32.totalorder %s12, 4
    %s22 = sphi 0, %s24
    %s25 = sphi 0, %s22
    %s26 = sphi 0, %s25
    %s42 = sphi 0, %s26
    %s48 = sphi 0, %s50
    %s51 = sphi 0, %s48
    %s52 = sphi 0, %s51
    %s68 = sphi 0, %s52
    %s72 = sphi 0, %s72
    %s74 = sphi 0, %s72
    %s75 = sphi 0, %s74
    %s89 = sphi 0, %s75
    %s93 = sphi 0, %s93
    %s95 = sphi 0, %s93
    %s96 = sphi 0, %s95
    %s110 = sphi 0, %s96
    %s114 = sphi 0, %s114
    %s116 = sphi 0, %s114
    %s117 = sphi 0, %s116
    %s131 = sphi 0, %s117
    %s135 = sphi 0, %s135
    %s137 = sphi 0, %s135
    %s138 = sphi 0, %s137
    %s152 = sphi 0, %s138
    %s158 = sphi 0, %s160
    %s161 = sphi 0, %s158
    %s162 = sphi 0, %s161
    %s178 = sphi 0, %s162
  $region4: #{bottleneck_forward.9} parent=0 // loop_header_branch
    %15 = sbr.rel (%p13) target = $region8
  $region5: #{bottleneck_forward.9} parent=0 // loop_body
    %s17 = ssub.s32 %s12, 1
    %s18 = ssub.s32 %s12, 2
    %s19 = sadd.s32 %s12, 1
    %s20 = ssub.s32 %s12, %s19
    %p21 = scmp.eq.s32.totalorder %s20, 0
    %s23 = sadd.s32 %s22, 1
    %s24 = scalar_select %p21, %s22, %s23
    %p27 = pneg %p21
    %p28 = scmp.eq.s32.totalorder %s12, 1
    %p29 = por %p27, %p28
    %p30 = scmp.ne.s32.totalorder %s22, %s25
    %p31 = scmp.eq.s32.totalorder %s12, 0
    %p32 = por %p30, %p31
    %p33 = scmp.ne.s32.totalorder %s22, %s25
    %p34 = scmp.eq.s32.totalorder %s17, 1
    %p35 = por %p33, %p34
    %p36 = scmp.ne.s32.totalorder %s25, %s26
    %p37 = scmp.eq.s32.totalorder %s17, 0
    %p38 = por %p36, %p37
    %p39 = scmp.ne.s32.totalorder %s25, %s26
    %p40 = scmp.eq.s32.totalorder %s18, 1
    %p41 = por %p39, %p40
    %p43 = scmp.ne.s32.totalorder %s26, %s42
    %p44 = scmp.eq.s32.totalorder %s18, 0
    %p45 = por %p43, %p44
    %s46 = ssub.s32 %s12, %s19
    %p47 = scmp.eq.s32.totalorder %s46, 0
    %s49 = sadd.s32 %s48, 1
    %s50 = scalar_select %p47, %s48, %s49
    %p53 = pneg %p47
    %p54 = scmp.eq.s32.totalorder %s12, 1
    %p55 = por %p53, %p54
    %p56 = scmp.ne.s32.totalorder %s48, %s51
    %p57 = scmp.eq.s32.totalorder %s12, 0
    %p58 = por %p56, %p57
    %p59 = scmp.ne.s32.totalorder %s48, %s51
    %p60 = scmp.eq.s32.totalorder %s17, 1
    %p61 = por %p59, %p60
    %p62 = scmp.ne.s32.totalorder %s51, %s52
    %p63 = scmp.eq.s32.totalorder %s17, 0
    %p64 = por %p62, %p63
    %p65 = scmp.ne.s32.totalorder %s51, %s52
    %p66 = scmp.eq.s32.totalorder %s18, 1
    %p67 = por %p65, %p66
    %p69 = scmp.ne.s32.totalorder %s52, %s68
    %p70 = scmp.eq.s32.totalorder %s18, 0
    %p71 = por %p69, %p70
    %s73 = sadd.s32 %s72, 1
    %p76 = scmp.eq.s32.totalorder %s12, 1
    %p77 = scmp.ne.s32.totalorder %s72, %s74
    %p78 = scmp.eq.s32.totalorder %s12, 0
    %p79 = por %p77, %p78
    %p80 = scmp.ne.s32.totalorder %s72, %s74
    %p81 = scmp.eq.s32.totalorder %s17, 1
    %p82 = por %p80, %p81
    %p83 = scmp.ne.s32.totalorder %s74, %s75
    %p84 = scmp.eq.s32.totalorder %s17, 0
    %p85 = por %p83, %p84
    %p86 = scmp.ne.s32.totalorder %s74, %s75
    %p87 = scmp.eq.s32.totalorder %s18, 1
    %p88 = por %p86, %p87
    %p90 = scmp.ne.s32.totalorder %s75, %s89
    %p91 = scmp.eq.s32.totalorder %s18, 0
    %p92 = por %p90, %p91
    %s94 = sadd.s32 %s93, 1
    %p97 = scmp.eq.s32.totalorder %s12, 1
    %p98 = scmp.ne.s32.totalorder %s93, %s95
    %p99 = scmp.eq.s32.totalorder %s12, 0
    %p100 = por %p98, %p99
    %p101 = scmp.ne.s32.totalorder %s93, %s95
    %p102 = scmp.eq.s32.totalorder %s17, 1
    %p103 = por %p101, %p102
    %p104 = scmp.ne.s32.totalorder %s95, %s96
    %p105 = scmp.eq.s32.totalorder %s17, 0
    %p106 = por %p104, %p105
    %p107 = scmp.ne.s32.totalorder %s95, %s96
    %p108 = scmp.eq.s32.totalorder %s18, 1
    %p109 = por %p107, %p108
    %p111 = scmp.ne.s32.totalorder %s96, %s110
    %p112 = scmp.eq.s32.totalorder %s18, 0
    %p113 = por %p111, %p112
    %s115 = sadd.s32 %s114, 1
    %p118 = scmp.eq.s32.totalorder %s12, 1
    %p119 = scmp.ne.s32.totalorder %s114, %s116
    %p120 = scmp.eq.s32.totalorder %s12, 0
    %p121 = por %p119, %p120
    %p122 = scmp.ne.s32.totalorder %s114, %s116
    %p123 = scmp.eq.s32.totalorder %s17, 1
    %p124 = por %p122, %p123
    %p125 = scmp.ne.s32.totalorder %s116, %s117
    %p126 = scmp.eq.s32.totalorder %s17, 0
    %p127 = por %p125, %p126
    %p128 = scmp.ne.s32.totalorder %s116, %s117
    %p129 = scmp.eq.s32.totalorder %s18, 1
    %p130 = por %p128, %p129
    %p132 = scmp.ne.s32.totalorder %s117, %s131
    %p133 = scmp.eq.s32.totalorder %s18, 0
    %p134 = por %p132, %p133
    %s136 = sadd.s32 %s135, 1
    %p139 = scmp.eq.s32.totalorder %s12, 1
    %p140 = scmp.ne.s32.totalorder %s135, %s137
    %p141 = scmp.eq.s32.totalorder %s12, 0
    %p142 = por %p140, %p141
    %p143 = scmp.ne.s32.totalorder %s135, %s137
    %p144 = scmp.eq.s32.totalorder %s17, 1
    %p145 = por %p143, %p144
    %p146 = scmp.ne.s32.totalorder %s137, %s138
    %p147 = scmp.eq.s32.totalorder %s17, 0
    %p148 = por %p146, %p147
    %p149 = scmp.ne.s32.totalorder %s137, %s138
    %p150 = scmp.eq.s32.totalorder %s18, 1
    %p151 = por %p149, %p150
    %p153 = scmp.ne.s32.totalorder %s138, %s152
    %p154 = scmp.eq.s32.totalorder %s18, 0
    %p155 = por %p153, %p154
    %s156 = ssub.s32 %s12, %s19
    %p157 = scmp.eq.s32.totalorder %s156, 0
    %s159 = sadd.s32 %s158, 1
    %s160 = scalar_select %p157, %s158, %s159
    %p163 = pneg %p157
    %p164 = scmp.eq.s32.totalorder %s12, 1
    %p165 = por %p163, %p164
    %p166 = scmp.ne.s32.totalorder %s158, %s161
    %p167 = scmp.eq.s32.totalorder %s12, 0
    %p168 = por %p166, %p167
    %p169 = scmp.ne.s32.totalorder %s158, %s161
    %p170 = scmp.eq.s32.totalorder %s17, 1
    %p171 = por %p169, %p170
    %p172 = scmp.ne.s32.totalorder %s161, %s162
    %p173 = scmp.eq.s32.totalorder %s17, 0
    %p174 = por %p172, %p173
    %p175 = scmp.ne.s32.totalorder %s161, %s162
    %p176 = scmp.eq.s32.totalorder %s18, 1
    %p177 = por %p175, %p176
    %p179 = scmp.ne.s32.totalorder %s162, %s178
    %p180 = scmp.eq.s32.totalorder %s18, 0
    %p181 = por %p179, %p180
    %p182 = scmp.le.s32.totalorder 1, %s12
    %p183 = scmp.lt.s32.totalorder %s12, 3
    %p184 = pnand %p182, %p183
    %p185 = pneg %p184
    // Predicated region
    $region9: #{bottleneck_forward.9} parent=5 // pred_check
      _
    $region10: #{bottleneck_forward.9} parent=5 // pred_check_branch
      %187 = sbr.rel (%p184) target = $region12
    $region11: #{bottleneck_forward.9} parent=5 // pred_region
      %s188 = ssub.s32 %s12, 1
      // Predicated region
      $region13: #{bottleneck_forward.9} parent=11 // pred_check
        %p189 = pneg %p85
      $region14: #{bottleneck_forward.9} parent=11 // pred_check_branch
        %191 = sbr.rel (%p189) target = $region16
      $region15: #{bottleneck_forward.9} parent=11 // pred_region
        _
      $region16: #{bottleneck_forward.9} parent=11 // pred_fallthru
        _
      // Predicated region
      $region17: #{bottleneck_forward.9} parent=11 // pred_check
        %p192 = pneg %p106
      $region18: #{bottleneck_forward.9} parent=11 // pred_check_branch
        %194 = sbr.rel (%p192) target = $region20
      $region19: #{bottleneck_forward.9} parent=11 // pred_region
        _
      $region20: #{bottleneck_forward.9} parent=11 // pred_fallthru
        _
      // Predicated region
      $region21: #{bottleneck_forward.9} parent=11 // pred_check
        %p195 = pneg %p127
      $region22: #{bottleneck_forward.9} parent=11 // pred_check_branch
        %197 = sbr.rel (%p195) target = $region24
      $region23: #{bottleneck_forward.9} parent=11 // pred_region
        _
      $region24: #{bottleneck_forward.9} parent=11 // pred_fallthru
        _
      // Predicated region
      $region25: #{bottleneck_forward.9} parent=11 // pred_check
        %p198 = pneg %p148
      $region26: #{bottleneck_forward.9} parent=11 // pred_check_branch
        %200 = sbr.rel (%p198) target = $region28
      $region27: #{bottleneck_forward.9} parent=11 // pred_region
        _
      $region28: #{bottleneck_forward.9} parent=11 // pred_fallthru
        _
    $region12: #{bottleneck_forward.9} parent=5 // pred_fallthru
      _
    %p201 = scmp.lt.s32.totalorder %s12, 2
    // Predicated region
    $region29: #{bottleneck_forward.9} parent=5 // pred_check
      %p202 = pneg %p201
    $region30: #{bottleneck_forward.9} parent=5 // pred_check_branch
      %204 = sbr.rel (%p202) target = $region32
    $region31: #{bottleneck_forward.9} parent=5 // pred_region
      // Predicated region
      $region33: #{bottleneck_forward.9} parent=31 // pred_check
        %p205 = pneg %p32
      $region34: #{bottleneck_forward.9} parent=31 // pred_check_branch
        %207 = sbr.rel (%p205) target = $region36
      $region35: #{bottleneck_forward.9} parent=31 // pred_region
        %s208 = smul.u32 32, %s12
        %p209 = scmp.lt.s32.totalorder %s208, 63
        %s210 = scalar_select %p209, %s208, 63
        %s211 = smul.addr %s210, 8
        %s212 = scalar_lea.vmem %s0, %s211
        %s213 = smul.u32 32, %s12
      $region36: #{bottleneck_forward.9} parent=31 // pred_fallthru
        _
      // Predicated region
      $region37: #{bottleneck_forward.9} parent=31 // pred_check
        %p214 = pneg %p58
      $region38: #{bottleneck_forward.9} parent=31 // pred_check_branch
        %216 = sbr.rel (%p214) target = $region40
      $region39: #{bottleneck_forward.9} parent=31 // pred_region
        %s217 = smul.u32 32, %s12
        %p218 = scmp.lt.s32.totalorder %s217, 63
        %s219 = scalar_select %p218, %s217, 63
        %s220 = smul.addr %s219, 8
        %s221 = scalar_lea.vmem %s1, %s220
        %s222 = smul.u32 32, %s12
      $region40: #{bottleneck_forward.9} parent=31 // pred_fallthru
        _
    $region32: #{bottleneck_forward.9} parent=5 // pred_fallthru
      _
    %p223 = scmp.le.s32.totalorder 1, %s12
    %p224 = scmp.lt.s32.totalorder %s12, 3
    %p225 = pnand %p223, %p224
    %p226 = pneg %p225
    // Predicated region
    $region41: #{bottleneck_forward.9} parent=5 // pred_check
      _
    $region42: #{bottleneck_forward.9} parent=5 // pred_check_branch
      %228 = sbr.rel (%p225) target = $region44
    $region43: #{bottleneck_forward.9} parent=5 // pred_region
      %s229 = ssub.s32 %s12, 1
      %s230 = smul.u32 32, %s17
      %p231 = scmp.lt.s32.totalorder %s230, 63
      %s232 = scalar_select %p231, %s230, 63
      %s233 = smul.addr %s232, 8
      %s234 = scalar_lea.vmem %s0, %s233
      %p235 = pneg %p38
      %p236 = pneg %p35
      %s237 = smul.u32 32, %s17
      %p238 = scmp.lt.s32.totalorder %s237, 63
      %s239 = scalar_select %p238, %s237, 63
      %s240 = smul.addr %s239, 8
      %s241 = scalar_lea.vmem %s1, %s240
      %p242 = pneg %p64
      %p243 = pneg %p61
      %p244 = pneg %p85
      %p245 = pneg %p82
      %p246 = pneg %p106
      %p247 = pneg %p103
      %p248 = pneg %p127
      %p249 = pneg %p124
      %p250 = pneg %p148
      %p251 = pneg %p145
      %p252 = pneg %p174
      %p253 = pneg %p171
      %s254 = smul.u32 32, %s17
      %p255 = scmp.lt.s32.totalorder %s254, 63
      %s256 = scalar_select %p255, %s254, 63
      %s257 = smul.addr %s256, 8
      %s258 = scalar_lea.vmem %s6, %s257
      %s259 = smul.u32 32, %s17
      %p260 = scmp.lt.s32.totalorder %s259, 63
      %s261 = scalar_select %p260, %s259, 63
      %s262 = smul.addr %s261, 8
      %s263 = scalar_lea.vmem %s0, %s262
      %s264 = smul.u32 32, %s17
      %s265 = smul.u32 32, %s17
      %p266 = scmp.lt.s32.totalorder %s265, 63
      %s267 = scalar_select %p266, %s265, 63
      %s268 = smul.addr %s267, 8
      %s269 = scalar_lea.vmem %s1, %s268
      %s270 = smul.u32 32, %s17
      %s271 = smul.u32 32, %s17
      %p272 = scmp.lt.s32.totalorder %s271, 63
      %s273 = scalar_select %p272, %s271, 63
      %s274 = smul.addr %s273, 8
      %s275 = scalar_lea.vmem %s6, %s274
      %s276 = smul.u32 32, %s17
      %v277 = vld [vmem:[%s263] sm:$0xff]
      %v278 = vld [vmem:[%s263 + $0x8] sm:$0xff]
      %v279 = vld [vmem:[%s263 + $0x10] sm:$0xff]
      %v280 = vld [vmem:[%s263 + $0x18] sm:$0xff]
      %v281 = vld [vmem:[%s263 + $0x20] sm:$0xff]
      %v282 = vld [vmem:[%s263 + $0x28] sm:$0xff]
      %v283 = vld [vmem:[%s263 + $0x30] sm:$0xff]
      %v284 = vld [vmem:[%s263 + $0x38] sm:$0xff]
      %v285 = vld [vmem:[%s263 + $0x40] sm:$0xff]
      %v286 = vld [vmem:[%s263 + $0x48] sm:$0xff]
      %v287 = vld [vmem:[%s263 + $0x50] sm:$0xff]
      %v288 = vld [vmem:[%s263 + $0x58] sm:$0xff]
      %v289 = vld [vmem:[%s263 + $0x60] sm:$0xff]
      %v290 = vld [vmem:[%s263 + $0x68] sm:$0xff]
      %v291 = vld [vmem:[%s263 + $0x70] sm:$0xff]
      %v292 = vld [vmem:[%s263 + $0x78] sm:$0xff]
      %v293 = vld [vmem:[%s263 + $0x80] sm:$0xff]
      %v294 = vld [vmem:[%s263 + $0x88] sm:$0xff]
      %v295 = vld [vmem:[%s263 + $0x90] sm:$0xff]
      %v296 = vld [vmem:[%s263 + $0x98] sm:$0xff]
      %v297 = vld [vmem:[%s263 + $0xa0] sm:$0xff]
      %v298 = vld [vmem:[%s263 + $0xa8] sm:$0xff]
      %v299 = vld [vmem:[%s263 + $0xb0] sm:$0xff]
      %v300 = vld [vmem:[%s263 + $0xb8] sm:$0xff]
      %v301 = vld [vmem:[%s263 + $0xc0] sm:$0xff]
      %v302 = vld [vmem:[%s263 + $0xc8] sm:$0xff]
      %v303 = vld [vmem:[%s263 + $0xd0] sm:$0xff]
      %v304 = vld [vmem:[%s263 + $0xd8] sm:$0xff]
      %v305 = vld [vmem:[%s263 + $0xe0] sm:$0xff]
      %v306 = vld [vmem:[%s263 + $0xe8] sm:$0xff]
      %v307 = vld [vmem:[%s263 + $0xf0] sm:$0xff]
      %v308 = vld [vmem:[%s263 + $0xf8] sm:$0xff]
      %v309 = vld [vmem:[%s2] sm:$0x1]
      %v311 = vperm.slane %v309, 0
      %v313 = vmul.f32 %v277, %v311
      %v314 = vmul.f32 %v278, %v311
      %v315 = vmul.f32 %v279, %v311
      %v316 = vmul.f32 %v280, %v311
      %v317 = vmul.f32 %v281, %v311
      %v318 = vmul.f32 %v282, %v311
      %v319 = vmul.f32 %v283, %v311
      %v320 = vmul.f32 %v284, %v311
      %v321 = vmul.f32 %v285, %v311
      %v322 = vmul.f32 %v286, %v311
      %v323 = vmul.f32 %v287, %v311
      %v324 = vmul.f32 %v288, %v311
      %v325 = vmul.f32 %v289, %v311
      %v326 = vmul.f32 %v290, %v311
      %v327 = vmul.f32 %v291, %v311
      %v328 = vmul.f32 %v292, %v311
      %v329 = vmul.f32 %v293, %v311
      %v330 = vmul.f32 %v294, %v311
      %v331 = vmul.f32 %v295, %v311
      %v332 = vmul.f32 %v296, %v311
      %v333 = vmul.f32 %v297, %v311
      %v334 = vmul.f32 %v298, %v311
      %v335 = vmul.f32 %v299, %v311
      %v336 = vmul.f32 %v300, %v311
      %v337 = vmul.f32 %v301, %v311
      %v338 = vmul.f32 %v302, %v311
      %v339 = vmul.f32 %v303, %v311
      %v340 = vmul.f32 %v304, %v311
      %v341 = vmul.f32 %v305, %v311
      %v342 = vmul.f32 %v306, %v311
      %v343 = vmul.f32 %v307, %v311
      %v344 = vmul.f32 %v308, %v311
      %v345 = vld [vmem:[%s3] sm:$0x1]
      %v347 = vperm.slane %v345, 0
      %v349 = vadd.f32 %v313, %v347
      %v350 = vadd.f32 %v314, %v347
      %v351 = vadd.f32 %v315, %v347
      %v352 = vadd.f32 %v316, %v347
      %v353 = vadd.f32 %v317, %v347
      %v354 = vadd.f32 %v318, %v347
      %v355 = vadd.f32 %v319, %v347
      %v356 = vadd.f32 %v320, %v347
      %v357 = vadd.f32 %v321, %v347
      %v358 = vadd.f32 %v322, %v347
      %v359 = vadd.f32 %v323, %v347
      %v360 = vadd.f32 %v324, %v347
      %v361 = vadd.f32 %v325, %v347
      %v362 = vadd.f32 %v326, %v347
      %v363 = vadd.f32 %v327, %v347
      %v364 = vadd.f32 %v328, %v347
      %v365 = vadd.f32 %v329, %v347
      %v366 = vadd.f32 %v330, %v347
      %v367 = vadd.f32 %v331, %v347
      %v368 = vadd.f32 %v332, %v347
      %v369 = vadd.f32 %v333, %v347
      %v370 = vadd.f32 %v334, %v347
      %v371 = vadd.f32 %v335, %v347
      %v372 = vadd.f32 %v336, %v347
      %v373 = vadd.f32 %v337, %v347
      %v374 = vadd.f32 %v338, %v347
      %v375 = vadd.f32 %v339, %v347
      %v376 = vadd.f32 %v340, %v347
      %v377 = vadd.f32 %v341, %v347
      %v378 = vadd.f32 %v342, %v347
      %v379 = vadd.f32 %v343, %v347
      %v380 = vadd.f32 %v344, %v347
      %v381 = vld [vmem:[%s269] sm:$0xff]
      %v382 = vld [vmem:[%s269 + $0x8] sm:$0xff]
      %v383 = vld [vmem:[%s269 + $0x10] sm:$0xff]
      %v384 = vld [vmem:[%s269 + $0x18] sm:$0xff]
      %v385 = vld [vmem:[%s269 + $0x20] sm:$0xff]
      %v386 = vld [vmem:[%s269 + $0x28] sm:$0xff]
      %v387 = vld [vmem:[%s269 + $0x30] sm:$0xff]
      %v388 = vld [vmem:[%s269 + $0x38] sm:$0xff]
      %v389 = vld [vmem:[%s269 + $0x40] sm:$0xff]
      %v390 = vld [vmem:[%s269 + $0x48] sm:$0xff]
      %v391 = vld [vmem:[%s269 + $0x50] sm:$0xff]
      %v392 = vld [vmem:[%s269 + $0x58] sm:$0xff]
      %v393 = vld [vmem:[%s269 + $0x60] sm:$0xff]
      %v394 = vld [vmem:[%s269 + $0x68] sm:$0xff]
      %v395 = vld [vmem:[%s269 + $0x70] sm:$0xff]
      %v396 = vld [vmem:[%s269 + $0x78] sm:$0xff]
      %v397 = vld [vmem:[%s269 + $0x80] sm:$0xff]
      %v398 = vld [vmem:[%s269 + $0x88] sm:$0xff]
      %v399 = vld [vmem:[%s269 + $0x90] sm:$0xff]
      %v400 = vld [vmem:[%s269 + $0x98] sm:$0xff]
      %v401 = vld [vmem:[%s269 + $0xa0] sm:$0xff]
      %v402 = vld [vmem:[%s269 + $0xa8] sm:$0xff]
      %v403 = vld [vmem:[%s269 + $0xb0] sm:$0xff]
      %v404 = vld [vmem:[%s269 + $0xb8] sm:$0xff]
      %v405 = vld [vmem:[%s269 + $0xc0] sm:$0xff]
      %v406 = vld [vmem:[%s269 + $0xc8] sm:$0xff]
      %v407 = vld [vmem:[%s269 + $0xd0] sm:$0xff]
      %v408 = vld [vmem:[%s269 + $0xd8] sm:$0xff]
      %v409 = vld [vmem:[%s269 + $0xe0] sm:$0xff]
      %v410 = vld [vmem:[%s269 + $0xe8] sm:$0xff]
      %v411 = vld [vmem:[%s269 + $0xf0] sm:$0xff]
      %v412 = vld [vmem:[%s269 + $0xf8] sm:$0xff]
      %v413 = vld [vmem:[%s4] sm:$0x1]
      %v415 = vperm.slane %v413, 0
      %v417 = vmul.f32 %v381, %v415
      %v418 = vmul.f32 %v382, %v415
      %v419 = vmul.f32 %v383, %v415
      %v420 = vmul.f32 %v384, %v415
      %v421 = vmul.f32 %v385, %v415
      %v422 = vmul.f32 %v386, %v415
      %v423 = vmul.f32 %v387, %v415
      %v424 = vmul.f32 %v388, %v415
      %v425 = vmul.f32 %v389, %v415
      %v426 = vmul.f32 %v390, %v415
      %v427 = vmul.f32 %v391, %v415
      %v428 = vmul.f32 %v392, %v415
      %v429 = vmul.f32 %v393, %v415
      %v430 = vmul.f32 %v394, %v415
      %v431 = vmul.f32 %v395, %v415
      %v432 = vmul.f32 %v396, %v415
      %v433 = vmul.f32 %v397, %v415
      %v434 = vmul.f32 %v398, %v415
      %v435 = vmul.f32 %v399, %v415
      %v436 = vmul.f32 %v400, %v415
      %v437 = vmul.f32 %v401, %v415
      %v438 = vmul.f32 %v402, %v415
      %v439 = vmul.f32 %v403, %v415
      %v440 = vmul.f32 %v404, %v415
      %v441 = vmul.f32 %v405, %v415
      %v442 = vmul.f32 %v406, %v415
      %v443 = vmul.f32 %v407, %v415
      %v444 = vmul.f32 %v408, %v415
      %v445 = vmul.f32 %v409, %v415
      %v446 = vmul.f32 %v410, %v415
      %v447 = vmul.f32 %v411, %v415
      %v448 = vmul.f32 %v412, %v415
      %v449 = vadd.f32 %v349, %v417
      %v450 = vadd.f32 %v350, %v418
      %v451 = vadd.f32 %v351, %v419
      %v452 = vadd.f32 %v352, %v420
      %v453 = vadd.f32 %v353, %v421
      %v454 = vadd.f32 %v354, %v422
      %v455 = vadd.f32 %v355, %v423
      %v456 = vadd.f32 %v356, %v424
      %v457 = vadd.f32 %v357, %v425
      %v458 = vadd.f32 %v358, %v426
      %v459 = vadd.f32 %v359, %v427
      %v460 = vadd.f32 %v360, %v428
      %v461 = vadd.f32 %v361, %v429
      %v462 = vadd.f32 %v362, %v430
      %v463 = vadd.f32 %v363, %v431
      %v464 = vadd.f32 %v364, %v432
      %v465 = vadd.f32 %v365, %v433
      %v466 = vadd.f32 %v366, %v434
      %v467 = vadd.f32 %v367, %v435
      %v468 = vadd.f32 %v368, %v436
      %v469 = vadd.f32 %v369, %v437
      %v470 = vadd.f32 %v370, %v438
      %v471 = vadd.f32 %v371, %v439
      %v472 = vadd.f32 %v372, %v440
      %v473 = vadd.f32 %v373, %v441
      %v474 = vadd.f32 %v374, %v442
      %v475 = vadd.f32 %v375, %v443
      %v476 = vadd.f32 %v376, %v444
      %v477 = vadd.f32 %v377, %v445
      %v478 = vadd.f32 %v378, %v446
      %v479 = vadd.f32 %v379, %v447
      %v480 = vadd.f32 %v380, %v448
      %v481 = vld [vmem:[%s5] sm:$0x1]
      %v483 = vperm.slane %v481, 0
      %v485 = vadd.f32 %v449, %v483
      %v486 = vadd.f32 %v450, %v483
      %v487 = vadd.f32 %v451, %v483
      %v488 = vadd.f32 %v452, %v483
      %v489 = vadd.f32 %v453, %v483
      %v490 = vadd.f32 %v454, %v483
      %v491 = vadd.f32 %v455, %v483
      %v492 = vadd.f32 %v456, %v483
      %v493 = vadd.f32 %v457, %v483
      %v494 = vadd.f32 %v458, %v483
      %v495 = vadd.f32 %v459, %v483
      %v496 = vadd.f32 %v460, %v483
      %v497 = vadd.f32 %v461, %v483
      %v498 = vadd.f32 %v462, %v483
      %v499 = vadd.f32 %v463, %v483
      %v500 = vadd.f32 %v464, %v483
      %v501 = vadd.f32 %v465, %v483
      %v502 = vadd.f32 %v466, %v483
      %v503 = vadd.f32 %v467, %v483
      %v504 = vadd.f32 %v468, %v483
      %v505 = vadd.f32 %v469, %v483
      %v506 = vadd.f32 %v470, %v483
      %v507 = vadd.f32 %v471, %v483
      %v508 = vadd.f32 %v472, %v483
      %v509 = vadd.f32 %v473, %v483
      %v510 = vadd.f32 %v474, %v483
      %v511 = vadd.f32 %v475, %v483
      %v512 = vadd.f32 %v476, %v483
      %v513 = vadd.f32 %v477, %v483
      %v514 = vadd.f32 %v478, %v483
      %v515 = vadd.f32 %v479, %v483
      %v516 = vadd.f32 %v480, %v483
      %v517 = vmax.f32 %v485, 0.0
      %v518 = vmax.f32 %v486, 0.0
      %v519 = vmax.f32 %v487, 0.0
      %v520 = vmax.f32 %v488, 0.0
      %v521 = vmax.f32 %v489, 0.0
      %v522 = vmax.f32 %v490, 0.0
      %v523 = vmax.f32 %v491, 0.0
      %v524 = vmax.f32 %v492, 0.0
      %v525 = vmax.f32 %v493, 0.0
      %v526 = vmax.f32 %v494, 0.0
      %v527 = vmax.f32 %v495, 0.0
      %v528 = vmax.f32 %v496, 0.0
      %v529 = vmax.f32 %v497, 0.0
      %v530 = vmax.f32 %v498, 0.0
      %v531 = vmax.f32 %v499, 0.0
      %v532 = vmax.f32 %v500, 0.0
      %v533 = vmax.f32 %v501, 0.0
      %v534 = vmax.f32 %v502, 0.0
      %v535 = vmax.f32 %v503, 0.0
      %v536 = vmax.f32 %v504, 0.0
      %v537 = vmax.f32 %v505, 0.0
      %v538 = vmax.f32 %v506, 0.0
      %v539 = vmax.f32 %v507, 0.0
      %v540 = vmax.f32 %v508, 0.0
      %v541 = vmax.f32 %v509, 0.0
      %v542 = vmax.f32 %v510, 0.0
      %v543 = vmax.f32 %v511, 0.0
      %v544 = vmax.f32 %v512, 0.0
      %v545 = vmax.f32 %v513, 0.0
      %v546 = vmax.f32 %v514, 0.0
      %v547 = vmax.f32 %v515, 0.0
      %v548 = vmax.f32 %v516, 0.0
      %549 = vst [vmem:[%s275] sm:$0xff] %v517
      %550 = vst [vmem:[%s275 + $0x8] sm:$0xff] %v518
      %551 = vst [vmem:[%s275 + $0x10] sm:$0xff] %v519
      %552 = vst [vmem:[%s275 + $0x18] sm:$0xff] %v520
      %553 = vst [vmem:[%s275 + $0x20] sm:$0xff] %v521
      %554 = vst [vmem:[%s275 + $0x28] sm:$0xff] %v522
      %555 = vst [vmem:[%s275 + $0x30] sm:$0xff] %v523
      %556 = vst [vmem:[%s275 + $0x38] sm:$0xff] %v524
      %557 = vst [vmem:[%s275 + $0x40] sm:$0xff] %v525
      %558 = vst [vmem:[%s275 + $0x48] sm:$0xff] %v526
      %559 = vst [vmem:[%s275 + $0x50] sm:$0xff] %v527
      %560 = vst [vmem:[%s275 + $0x58] sm:$0xff] %v528
      %561 = vst [vmem:[%s275 + $0x60] sm:$0xff] %v529
      %562 = vst [vmem:[%s275 + $0x68] sm:$0xff] %v530
      %563 = vst [vmem:[%s275 + $0x70] sm:$0xff] %v531
      %564 = vst [vmem:[%s275 + $0x78] sm:$0xff] %v532
      %565 = vst [vmem:[%s275 + $0x80] sm:$0xff] %v533
      %566 = vst [vmem:[%s275 + $0x88] sm:$0xff] %v534
      %567 = vst [vmem:[%s275 + $0x90] sm:$0xff] %v535
      %568 = vst [vmem:[%s275 + $0x98] sm:$0xff] %v536
      %569 = vst [vmem:[%s275 + $0xa0] sm:$0xff] %v537
      %570 = vst [vmem:[%s275 + $0xa8] sm:$0xff] %v538
      %571 = vst [vmem:[%s275 + $0xb0] sm:$0xff] %v539
      %572 = vst [vmem:[%s275 + $0xb8] sm:$0xff] %v540
      %573 = vst [vmem:[%s275 + $0xc0] sm:$0xff] %v541
      %574 = vst [vmem:[%s275 + $0xc8] sm:$0xff] %v542
      %575 = vst [vmem:[%s275 + $0xd0] sm:$0xff] %v543
      %576 = vst [vmem:[%s275 + $0xd8] sm:$0xff] %v544
      %577 = vst [vmem:[%s275 + $0xe0] sm:$0xff] %v545
      %578 = vst [vmem:[%s275 + $0xe8] sm:$0xff] %v546
      %579 = vst [vmem:[%s275 + $0xf0] sm:$0xff] %v547
      %580 = vst [vmem:[%s275 + $0xf8] sm:$0xff] %v548
      %s581 = smul.u32 32, %s17
      %p582 = scmp.lt.s32.totalorder %s581, 63
      %s583 = scalar_select %p582, %s581, 63
      %s584 = smul.addr %s583, 8
      %s585 = scalar_lea.vmem %s6, %s584
      // Predicated region
      $region45: #{bottleneck_forward.9} parent=43 // pred_check
        %p586 = pneg %p171
      $region46: #{bottleneck_forward.9} parent=43 // pred_check_branch
        %588 = sbr.rel (%p586) target = $region48
      $region47: #{bottleneck_forward.9} parent=43 // pred_region
        %s589 = smul.u32 32, %s17
      $region48: #{bottleneck_forward.9} parent=43 // pred_fallthru
        _
    $region44: #{bottleneck_forward.9} parent=5 // pred_fallthru
      _
    %p590 = scmp.le.s32.totalorder 2, %s12
    // Predicated region
    $region49: #{bottleneck_forward.9} parent=5 // pred_check
      %p591 = pneg %p590
    $region50: #{bottleneck_forward.9} parent=5 // pred_check_branch
      %593 = sbr.rel (%p591) target = $region52
    $region51: #{bottleneck_forward.9} parent=5 // pred_region
      %s594 = ssub.s32 %s12, 2
      // Predicated region
      $region53: #{bottleneck_forward.9} parent=51 // pred_check
        %p595 = pneg %p177
      $region54: #{bottleneck_forward.9} parent=51 // pred_check_branch
        %597 = sbr.rel (%p595) target = $region56
      $region55: #{bottleneck_forward.9} parent=51 // pred_region
        %s598 = smul.u32 32, %s18
        %p599 = scmp.lt.s32.totalorder %s598, 63
        %s600 = scalar_select %p599, %s598, 63
        %s601 = smul.addr %s600, 8
        %s602 = scalar_lea.vmem %s6, %s601
      $region56: #{bottleneck_forward.9} parent=51 // pred_fallthru
        _
    $region52: #{bottleneck_forward.9} parent=5 // pred_fallthru
      _
  $region6: #{bottleneck_forward.9} parent=0 // loop_footer
    %s16 = sadd.s32 1, %s12
  $region7: #{bottleneck_forward.9} parent=0 // loop_footer_branch
    %11 = sbr.rel target = $region3
  $region8: #{bottleneck_forward.9} parent=0 // loop_exit
    _

// kernel: bottleneck_forward.5
$region0: #{bottleneck_forward.5}
  #allocation0 [shape = 'u32[]', space=smem, size = 0x4, offset = 0x4, fixed_abs, tag = 'smem constant byte address 0x4 - core index']
  #allocation1 [shape = 'u32[72,128]{1,0:T(1,128)}', space=vmem, size = 0x9000, scoped, tag = 'internal scratch']
  %s0 = inlined_call_operand.vmem [shape: f32[512,128], index: 0, kind: input, shape index: {}]
  %s1 = inlined_call_operand.vmem [shape: f32[1,128], index: 1, kind: input, shape index: {}, may-alias: {1,2}]
  %s2 = inlined_call_operand.vmem [shape: f32[1,128], index: 2, kind: input, shape index: {}, may-alias: {1,2}]
  %s3 = inlined_call_operand.vmem [shape: bf16[128,128], index: 3, kind: input, shape index: {}]
  %s4 = inlined_call_operand.vmem [shape: f32[512,128], index: 4, kind: output, shape index: {0}]
  %s5 = inlined_call_operand.vmem [shape: f32[2,1,128], index: 5, kind: output, shape index: {1}]
  %s6 = inlined_call_operand.vmem [shape: f32[2,1,128], index: 6, kind: output, shape index: {2}]
  %7 = xla_tuple %s4, %s5, %s6
  %s8 = sld [smem:[#allocation0]]
  $region65: #{bottleneck_forward.5} parent=0
    _
  %s10 = ssub.s32 1, %s8
  %s11 = scalar_select 0, %s10, %s8
  loop: start=0, step=1, limit=4
  $region2: #{bottleneck_forward.5} parent=0 // loop_pre_header
    _
  $region3: #{bottleneck_forward.5} parent=0 // loop_header
    %s13 = sphi 0, %s17
    %p14 = scmp.ge.s32.totalorder %s13, 4
    %s23 = sphi 0, %s25
    %s26 = sphi 0, %s23
    %s27 = sphi 0, %s26
    %s43 = sphi 0, %s27
    %s47 = sphi 0, %s47
    %s49 = sphi 0, %s47
    %s50 = sphi 0, %s49
    %s64 = sphi 0, %s50
    %s68 = sphi 0, %s68
    %s70 = sphi 0, %s68
    %s71 = sphi 0, %s70
    %s85 = sphi 0, %s71
    %s89 = sphi 0, %s89
    %s91 = sphi 0, %s89
    %s92 = sphi 0, %s91
    %s106 = sphi 0, %s92
    %s112 = sphi 0, %s114
    %s115 = sphi 0, %s112
    %s116 = sphi 0, %s115
    %s132 = sphi 0, %s116
    %s138 = sphi 0, %s140
    %s141 = sphi 0, %s138
    %s142 = sphi 0, %s141
    %s158 = sphi 0, %s142
    %s164 = sphi 0, %s166
    %s167 = sphi 0, %s164
    %s168 = sphi 0, %s167
    %s184 = sphi 0, %s168
  $region4: #{bottleneck_forward.5} parent=0 // loop_header_branch
    %16 = sbr.rel (%p14) target = $region8
  $region5: #{bottleneck_forward.5} parent=0 // loop_body
    %s18 = ssub.s32 %s13, 1
    %s19 = ssub.s32 %s13, 2
    %s20 = sadd.s32 %s13, 1
    %s21 = ssub.s32 %s13, %s20
    %p22 = scmp.eq.s32.totalorder %s21, 0
    %s24 = sadd.s32 %s23, 1
    %s25 = scalar_select %p22, %s23, %s24
    %p28 = pneg %p22
    %p29 = scmp.eq.s32.totalorder %s13, 1
    %p30 = por %p28, %p29
    %p31 = scmp.ne.s32.totalorder %s23, %s26
    %p32 = scmp.eq.s32.totalorder %s13, 0
    %p33 = por %p31, %p32
    %p34 = scmp.ne.s32.totalorder %s23, %s26
    %p35 = scmp.eq.s32.totalorder %s18, 1
    %p36 = por %p34, %p35
    %p37 = scmp.ne.s32.totalorder %s26, %s27
    %p38 = scmp.eq.s32.totalorder %s18, 0
    %p39 = por %p37, %p38
    %p40 = scmp.ne.s32.totalorder %s26, %s27
    %p41 = scmp.eq.s32.totalorder %s19, 1
    %p42 = por %p40, %p41
    %p44 = scmp.ne.s32.totalorder %s27, %s43
    %p45 = scmp.eq.s32.totalorder %s19, 0
    %p46 = por %p44, %p45
    %s48 = sadd.s32 %s47, 1
    %p51 = scmp.eq.s32.totalorder %s13, 1
    %p52 = scmp.ne.s32.totalorder %s47, %s49
    %p53 = scmp.eq.s32.totalorder %s13, 0
    %p54 = por %p52, %p53
    %p55 = scmp.ne.s32.totalorder %s47, %s49
    %p56 = scmp.eq.s32.totalorder %s18, 1
    %p57 = por %p55, %p56
    %p58 = scmp.ne.s32.totalorder %s49, %s50
    %p59 = scmp.eq.s32.totalorder %s18, 0
    %p60 = por %p58, %p59
    %p61 = scmp.ne.s32.totalorder %s49, %s50
    %p62 = scmp.eq.s32.totalorder %s19, 1
    %p63 = por %p61, %p62
    %p65 = scmp.ne.s32.totalorder %s50, %s64
    %p66 = scmp.eq.s32.totalorder %s19, 0
    %p67 = por %p65, %p66
    %s69 = sadd.s32 %s68, 1
    %p72 = scmp.eq.s32.totalorder %s13, 1
    %p73 = scmp.ne.s32.totalorder %s68, %s70
    %p74 = scmp.eq.s32.totalorder %s13, 0
    %p75 = por %p73, %p74
    %p76 = scmp.ne.s32.totalorder %s68, %s70
    %p77 = scmp.eq.s32.totalorder %s18, 1
    %p78 = por %p76, %p77
    %p79 = scmp.ne.s32.totalorder %s70, %s71
    %p80 = scmp.eq.s32.totalorder %s18, 0
    %p81 = por %p79, %p80
    %p82 = scmp.ne.s32.totalorder %s70, %s71
    %p83 = scmp.eq.s32.totalorder %s19, 1
    %p84 = por %p82, %p83
    %p86 = scmp.ne.s32.totalorder %s71, %s85
    %p87 = scmp.eq.s32.totalorder %s19, 0
    %p88 = por %p86, %p87
    %s90 = sadd.s32 %s89, 1
    %p93 = scmp.eq.s32.totalorder %s13, 1
    %p94 = scmp.ne.s32.totalorder %s89, %s91
    %p95 = scmp.eq.s32.totalorder %s13, 0
    %p96 = por %p94, %p95
    %p97 = scmp.ne.s32.totalorder %s89, %s91
    %p98 = scmp.eq.s32.totalorder %s18, 1
    %p99 = por %p97, %p98
    %p100 = scmp.ne.s32.totalorder %s91, %s92
    %p101 = scmp.eq.s32.totalorder %s18, 0
    %p102 = por %p100, %p101
    %p103 = scmp.ne.s32.totalorder %s91, %s92
    %p104 = scmp.eq.s32.totalorder %s19, 1
    %p105 = por %p103, %p104
    %p107 = scmp.ne.s32.totalorder %s92, %s106
    %p108 = scmp.eq.s32.totalorder %s19, 0
    %p109 = por %p107, %p108
    %s110 = ssub.s32 %s13, %s20
    %p111 = scmp.eq.s32.totalorder %s110, 0
    %s113 = sadd.s32 %s112, 1
    %s114 = scalar_select %p111, %s112, %s113
    %p117 = pneg %p111
    %p118 = scmp.eq.s32.totalorder %s13, 1
    %p119 = por %p117, %p118
    %p120 = scmp.ne.s32.totalorder %s112, %s115
    %p121 = scmp.eq.s32.totalorder %s13, 0
    %p122 = por %p120, %p121
    %p123 = scmp.ne.s32.totalorder %s112, %s115
    %p124 = scmp.eq.s32.totalorder %s18, 1
    %p125 = por %p123, %p124
    %p126 = scmp.ne.s32.totalorder %s115, %s116
    %p127 = scmp.eq.s32.totalorder %s18, 0
    %p128 = por %p126, %p127
    %p129 = scmp.ne.s32.totalorder %s115, %s116
    %p130 = scmp.eq.s32.totalorder %s19, 1
    %p131 = por %p129, %p130
    %p133 = scmp.ne.s32.totalorder %s116, %s132
    %p134 = scmp.eq.s32.totalorder %s19, 0
    %p135 = por %p133, %p134
    %s136 = ssub.s32 %s13, %s20
    %p137 = scmp.eq.s32.totalorder %s136, 0
    %s139 = sadd.s32 %s138, 1
    %s140 = scalar_select %p137, %s138, %s139
    %p143 = pneg %p137
    %p144 = scmp.eq.s32.totalorder %s13, 1
    %p145 = por %p143, %p144
    %p146 = scmp.ne.s32.totalorder %s138, %s141
    %p147 = scmp.eq.s32.totalorder %s13, 0
    %p148 = por %p146, %p147
    %p149 = scmp.ne.s32.totalorder %s138, %s141
    %p150 = scmp.eq.s32.totalorder %s18, 1
    %p151 = por %p149, %p150
    %p152 = scmp.ne.s32.totalorder %s141, %s142
    %p153 = scmp.eq.s32.totalorder %s18, 0
    %p154 = por %p152, %p153
    %p155 = scmp.ne.s32.totalorder %s141, %s142
    %p156 = scmp.eq.s32.totalorder %s19, 1
    %p157 = por %p155, %p156
    %p159 = scmp.ne.s32.totalorder %s142, %s158
    %p160 = scmp.eq.s32.totalorder %s19, 0
    %p161 = por %p159, %p160
    %s162 = ssub.s32 %s13, %s20
    %p163 = scmp.eq.s32.totalorder %s162, 0
    %s165 = sadd.s32 %s164, 1
    %s166 = scalar_select %p163, %s164, %s165
    %p169 = pneg %p163
    %p170 = scmp.eq.s32.totalorder %s13, 1
    %p171 = por %p169, %p170
    %p172 = scmp.ne.s32.totalorder %s164, %s167
    %p173 = scmp.eq.s32.totalorder %s13, 0
    %p174 = por %p172, %p173
    %p175 = scmp.ne.s32.totalorder %s164, %s167
    %p176 = scmp.eq.s32.totalorder %s18, 1
    %p177 = por %p175, %p176
    %p178 = scmp.ne.s32.totalorder %s167, %s168
    %p179 = scmp.eq.s32.totalorder %s18, 0
    %p180 = por %p178, %p179
    %p181 = scmp.ne.s32.totalorder %s167, %s168
    %p182 = scmp.eq.s32.totalorder %s19, 1
    %p183 = por %p181, %p182
    %p185 = scmp.ne.s32.totalorder %s168, %s184
    %p186 = scmp.eq.s32.totalorder %s19, 0
    %p187 = por %p185, %p186
    %p188 = scmp.le.s32.totalorder 1, %s13
    %p189 = scmp.lt.s32.totalorder %s13, 3
    %p190 = pnand %p188, %p189
    %p191 = pneg %p190
    // Predicated region
    $region9: #{bottleneck_forward.5} parent=5 // pred_check
      _
    $region10: #{bottleneck_forward.5} parent=5 // pred_check_branch
      %193 = sbr.rel (%p190) target = $region12
    $region11: #{bottleneck_forward.5} parent=5 // pred_region
      %s194 = ssub.s32 %s13, 1
      // Predicated region
      $region13: #{bottleneck_forward.5} parent=11 // pred_check
        %p195 = pneg %p60
      $region14: #{bottleneck_forward.5} parent=11 // pred_check_branch
        %197 = sbr.rel (%p195) target = $region16
      $region15: #{bottleneck_forward.5} parent=11 // pred_region
        _
      $region16: #{bottleneck_forward.5} parent=11 // pred_fallthru
        _
      // Predicated region
      $region17: #{bottleneck_forward.5} parent=11 // pred_check
        %p198 = pneg %p81
      $region18: #{bottleneck_forward.5} parent=11 // pred_check_branch
        %200 = sbr.rel (%p198) target = $region20
      $region19: #{bottleneck_forward.5} parent=11 // pred_region
        _
      $region20: #{bottleneck_forward.5} parent=11 // pred_fallthru
        _
      // Predicated region
      $region21: #{bottleneck_forward.5} parent=11 // pred_check
        %p201 = pneg %p102
      $region22: #{bottleneck_forward.5} parent=11 // pred_check_branch
        %203 = sbr.rel (%p201) target = $region24
      $region23: #{bottleneck_forward.5} parent=11 // pred_region
        _
      $region24: #{bottleneck_forward.5} parent=11 // pred_fallthru
        _
    $region12: #{bottleneck_forward.5} parent=5 // pred_fallthru
      _
    %p204 = scmp.lt.s32.totalorder %s13, 2
    // Predicated region
    $region25: #{bottleneck_forward.5} parent=5 // pred_check
      %p205 = pneg %p204
    $region26: #{bottleneck_forward.5} parent=5 // pred_check_branch
      %207 = sbr.rel (%p205) target = $region28
    $region27: #{bottleneck_forward.5} parent=5 // pred_region
      // Predicated region
      $region29: #{bottleneck_forward.5} parent=27 // pred_check
        %p208 = pneg %p33
      $region30: #{bottleneck_forward.5} parent=27 // pred_check_branch
        %210 = sbr.rel (%p208) target = $region32
      $region31: #{bottleneck_forward.5} parent=27 // pred_region
        %s211 = smul.u32 32, %s13
        %p212 = scmp.lt.s32.totalorder %s211, 63
        %s213 = scalar_select %p212, %s211, 63
        %s214 = smul.addr %s213, 8
        %s215 = scalar_lea.vmem %s0, %s214
        %s216 = smul.u32 32, %s13
      $region32: #{bottleneck_forward.5} parent=27 // pred_fallthru
        _
    $region28: #{bottleneck_forward.5} parent=5 // pred_fallthru
      _
    %p217 = scmp.le.s32.totalorder 1, %s13
    %p218 = scmp.lt.s32.totalorder %s13, 3
    %p219 = pnand %p217, %p218
    %p220 = pneg %p219
    // Predicated region
    $region33: #{bottleneck_forward.5} parent=5 // pred_check
      _
    $region34: #{bottleneck_forward.5} parent=5 // pred_check_branch
      %222 = sbr.rel (%p219) target = $region36
    $region35: #{bottleneck_forward.5} parent=5 // pred_region
      %s223 = ssub.s32 %s13, 1
      %s224 = smul.u32 32, %s18
      %p225 = scmp.lt.s32.totalorder %s224, 63
      %s226 = scalar_select %p225, %s224, 63
      %s227 = smul.addr %s226, 8
      %s228 = scalar_lea.vmem %s0, %s227
      %p229 = pneg %p39
      %p230 = pneg %p36
      %p231 = pneg %p60
      %p232 = pneg %p57
      %p233 = pneg %p81
      %p234 = pneg %p78
      %p235 = pneg %p102
      %p236 = pneg %p99
      %p237 = pneg %p128
      %p238 = pneg %p125
      %s239 = smul.u32 32, %s18
      %p240 = scmp.lt.s32.totalorder %s239, 63
      %s241 = scalar_select %p240, %s239, 63
      %s242 = smul.addr %s241, 8
      %s243 = scalar_lea.vmem %s4, %s242
      %p244 = pneg %p154
      %p245 = pneg %p151
      %p246 = scmp.lt.s32.totalorder %s18, 1
      %s247 = scalar_select %p246, %s18, 1
      %s248 = scalar_lea.vmem %s5, %s247
      %p249 = pneg %p180
      %p250 = pneg %p177
      %p251 = scmp.lt.s32.totalorder %s18, 1
      %s252 = scalar_select %p251, %s18, 1
      %s253 = scalar_lea.vmem %s6, %s252
      %s254 = smul.u32 32, %s18
      %p255 = scmp.lt.s32.totalorder %s254, 63
      %s256 = scalar_select %p255, %s254, 63
      %s257 = smul.addr %s256, 8
      %s258 = scalar_lea.vmem %s0, %s257
      %s259 = smul.u32 32, %s18
      %s260 = smul.u32 32, %s18
      %p261 = scmp.lt.s32.totalorder %s260, 63
      %s262 = scalar_select %p261, %s260, 63
      %s263 = smul.addr %s262, 8
      %s264 = scalar_lea.vmem %s4, %s263
      %s265 = smul.u32 32, %s18
      %p266 = scmp.lt.s32.totalorder %s18, 1
      %s267 = scalar_select %p266, %s18, 1
      %s268 = scalar_lea.vmem %s5, %s267
      %p269 = scmp.lt.s32.totalorder %s18, 1
      %s270 = scalar_select %p269, %s18, 1
      %s271 = scalar_lea.vmem %s6, %s270
      %v272 = vld [vmem:[%s258] sm:$0xff]
      %v273 = vld [vmem:[%s258 + $0x8] sm:$0xff]
      %v274 = vld [vmem:[%s258 + $0x10] sm:$0xff]
      %v275 = vld [vmem:[%s258 + $0x18] sm:$0xff]
      %v276 = vld [vmem:[%s258 + $0x20] sm:$0xff]
      %v277 = vld [vmem:[%s258 + $0x28] sm:$0xff]
      %v278 = vld [vmem:[%s258 + $0x30] sm:$0xff]
      %v279 = vld [vmem:[%s258 + $0x38] sm:$0xff]
      %v280 = vld [vmem:[%s258 + $0x40] sm:$0xff]
      %v281 = vld [vmem:[%s258 + $0x48] sm:$0xff]
      %v282 = vld [vmem:[%s258 + $0x50] sm:$0xff]
      %v283 = vld [vmem:[%s258 + $0x58] sm:$0xff]
      %v284 = vld [vmem:[%s258 + $0x60] sm:$0xff]
      %v285 = vld [vmem:[%s258 + $0x68] sm:$0xff]
      %v286 = vld [vmem:[%s258 + $0x70] sm:$0xff]
      %v287 = vld [vmem:[%s258 + $0x78] sm:$0xff]
      %v288 = vld [vmem:[%s258 + $0x80] sm:$0xff]
      %v289 = vld [vmem:[%s258 + $0x88] sm:$0xff]
      %v290 = vld [vmem:[%s258 + $0x90] sm:$0xff]
      %v291 = vld [vmem:[%s258 + $0x98] sm:$0xff]
      %v292 = vld [vmem:[%s258 + $0xa0] sm:$0xff]
      %v293 = vld [vmem:[%s258 + $0xa8] sm:$0xff]
      %v294 = vld [vmem:[%s258 + $0xb0] sm:$0xff]
      %v295 = vld [vmem:[%s258 + $0xb8] sm:$0xff]
      %v296 = vld [vmem:[%s258 + $0xc0] sm:$0xff]
      %v297 = vld [vmem:[%s258 + $0xc8] sm:$0xff]
      %v298 = vld [vmem:[%s258 + $0xd0] sm:$0xff]
      %v299 = vld [vmem:[%s258 + $0xd8] sm:$0xff]
      %v300 = vld [vmem:[%s258 + $0xe0] sm:$0xff]
      %v301 = vld [vmem:[%s258 + $0xe8] sm:$0xff]
      %v302 = vld [vmem:[%s258 + $0xf0] sm:$0xff]
      %v303 = vld [vmem:[%s258 + $0xf8] sm:$0xff]
      %v304 = vpack.c.bf16 %v273, %v272
      %v305 = vpack.c.bf16 %v275, %v274
      %v306 = vpack.c.bf16 %v277, %v276
      %v307 = vpack.c.bf16 %v279, %v278
      %v308 = vpack.c.bf16 %v281, %v280
      %v309 = vpack.c.bf16 %v283, %v282
      %v310 = vpack.c.bf16 %v285, %v284
      %v311 = vpack.c.bf16 %v287, %v286
      %v312 = vpack.c.bf16 %v289, %v288
      %v313 = vpack.c.bf16 %v291, %v290
      %v314 = vpack.c.bf16 %v293, %v292
      %v315 = vpack.c.bf16 %v295, %v294
      %v316 = vpack.c.bf16 %v297, %v296
      %v317 = vpack.c.bf16 %v299, %v298
      %v318 = vpack.c.bf16 %v301, %v300
      %v319 = vpack.c.bf16 %v303, %v302
      %v320 = vld [vmem:[%s3] sm:$0xf]
      %v321 = vld [vmem:[%s3 + $0x4] sm:$0xf]
      %v322 = vld [vmem:[%s3 + $0x8] sm:$0xf]
      %v323 = vld [vmem:[%s3 + $0xc] sm:$0xf]
      %v324 = vld [vmem:[%s3 + $0x10] sm:$0xf]
      %v325 = vld [vmem:[%s3 + $0x14] sm:$0xf]
      %v326 = vld [vmem:[%s3 + $0x18] sm:$0xf]
      %v327 = vld [vmem:[%s3 + $0x1c] sm:$0xf]
      %v328 = vld [vmem:[%s3 + $0x20] sm:$0xf]
      %v329 = vld [vmem:[%s3 + $0x24] sm:$0xf]
      %v330 = vld [vmem:[%s3 + $0x28] sm:$0xf]
      %v331 = vld [vmem:[%s3 + $0x2c] sm:$0xf]
      %v332 = vld [vmem:[%s3 + $0x30] sm:$0xf]
      %v333 = vld [vmem:[%s3 + $0x34] sm:$0xf]
      %v334 = vld [vmem:[%s3 + $0x38] sm:$0xf]
      %v335 = vld [vmem:[%s3 + $0x3c] sm:$0xf]
      %v352 = vunpack.c.l.b16 %v320
      %v353 = vunpack.c.l.b16 %v321
      %v354 = vunpack.c.l.b16 %v322
      %v355 = vunpack.c.l.b16 %v323
      %v356 = vunpack.c.l.b16 %v324
      %v357 = vunpack.c.l.b16 %v325
      %v358 = vunpack.c.l.b16 %v326
      %v359 = vunpack.c.l.b16 %v327
      %v360 = vunpack.c.l.b16 %v328
      %v361 = vunpack.c.l.b16 %v329
      %v362 = vunpack.c.l.b16 %v330
      %v363 = vunpack.c.l.b16 %v331
      %v364 = vunpack.c.l.b16 %v332
      %v365 = vunpack.c.l.b16 %v333
      %v366 = vunpack.c.l.b16 %v334
      %v367 = vunpack.c.l.b16 %v335
      %v368 = vpack.c.b16 %v353, %v352
      %v369 = vpack.c.b16 %v355, %v354
      %v370 = vpack.c.b16 %v357, %v356
      %v371 = vpack.c.b16 %v359, %v358
      %v372 = vpack.c.b16 %v361, %v360
      %v373 = vpack.c.b16 %v363, %v362
      %v374 = vpack.c.b16 %v365, %v364
      %v375 = vpack.c.b16 %v367, %v366
      %384 = vmatpush.bf16.msra.mxu0 %v375
      %385 = vmatpush.bf16.msra.mxu0 %v374
      %386 = vmatpush.bf16.msra.mxu0 %v373
      %387 = vmatpush.bf16.msra.mxu0 %v372
      %388 = vmatpush.bf16.msra.mxu0 %v371
      %389 = vmatpush.bf16.msra.mxu0 %v370
      %390 = vmatpush.bf16.msra.mxu0 %v369
      %391 = vmatpush.bf16.msra.mxu0 %v368
      %392 = vmatmul.bf16.gmra.mxu0 %v304
      %v393 = vpop.f32.mrf.mxu0
      %v394 = vadd.f32 0.0, %v393
      %v395 = vpop.f32.mrf.mxu0
      %v396 = vadd.f32 0.0, %v395
      %397 = vmatmul.bf16.gmra.mxu0 %v305
      %v398 = vpop.f32.mrf.mxu0
      %v399 = vadd.f32 0.0, %v398
      %v400 = vpop.f32.mrf.mxu0
      %v401 = vadd.f32 0.0, %v400
      %402 = vmatmul.bf16.gmra.mxu0 %v306
      %v403 = vpop.f32.mrf.mxu0
      %v404 = vadd.f32 0.0, %v403
      %v405 = vpop.f32.mrf.mxu0
      %v406 = vadd.f32 0.0, %v405
      %407 = vmatmul.bf16.gmra.mxu0 %v307
      %v408 = vpop.f32.mrf.mxu0
      %v409 = vadd.f32 0.0, %v408
      %v410 = vpop.f32.mrf.mxu0
      %v411 = vadd.f32 0.0, %v410
      %412 = vmatmul.bf16.gmra.mxu0 %v308
      %v413 = vpop.f32.mrf.mxu0
      %v414 = vadd.f32 0.0, %v413
      %v415 = vpop.f32.mrf.mxu0
      %v416 = vadd.f32 0.0, %v415
      %417 = vmatmul.bf16.gmra.mxu0 %v309
      %v418 = vpop.f32.mrf.mxu0
      %v419 = vadd.f32 0.0, %v418
      %v420 = vpop.f32.mrf.mxu0
      %v421 = vadd.f32 0.0, %v420
      %422 = vmatmul.bf16.gmra.mxu0 %v310
      %v423 = vpop.f32.mrf.mxu0
      %v424 = vadd.f32 0.0, %v423
      %v425 = vpop.f32.mrf.mxu0
      %v426 = vadd.f32 0.0, %v425
      %427 = vmatmul.bf16.gmra.mxu0 %v311
      %v428 = vpop.f32.mrf.mxu0
      %v429 = vadd.f32 0.0, %v428
      %v430 = vpop.f32.mrf.mxu0
      %v431 = vadd.f32 0.0, %v430
      %432 = vmatmul.bf16.gmra.mxu0 %v312
      %v433 = vpop.f32.mrf.mxu0
      %v434 = vadd.f32 0.0, %v433
      %v435 = vpop.f32.mrf.mxu0
      %v436 = vadd.f32 0.0, %v435
      %437 = vmatmul.bf16.gmra.mxu0 %v313
      %v438 = vpop.f32.mrf.mxu0
      %v439 = vadd.f32 0.0, %v438
      %v440 = vpop.f32.mrf.mxu0
      %v441 = vadd.f32 0.0, %v440
      %442 = vmatmul.bf16.gmra.mxu0 %v314
      %v443 = vpop.f32.mrf.mxu0
      %v444 = vadd.f32 0.0, %v443
      %v445 = vpop.f32.mrf.mxu0
      %v446 = vadd.f32 0.0, %v445
      %447 = vmatmul.bf16.gmra.mxu0 %v315
      %v448 = vpop.f32.mrf.mxu0
      %v449 = vadd.f32 0.0, %v448
      %v450 = vpop.f32.mrf.mxu0
      %v451 = vadd.f32 0.0, %v450
      %452 = vmatmul.bf16.gmra.mxu0 %v316
      %v453 = vpop.f32.mrf.mxu0
      %v454 = vadd.f32 0.0, %v453
      %v455 = vpop.f32.mrf.mxu0
      %v456 = vadd.f32 0.0, %v455
      %457 = vmatmul.bf16.gmra.mxu0 %v317
      %v458 = vpop.f32.mrf.mxu0
      %v459 = vadd.f32 0.0, %v458
      %v460 = vpop.f32.mrf.mxu0
      %v461 = vadd.f32 0.0, %v460
      %462 = vmatmul.bf16.gmra.mxu0 %v318
      %v463 = vpop.f32.mrf.mxu0
      %v464 = vadd.f32 0.0, %v463
      %v465 = vpop.f32.mrf.mxu0
      %v466 = vadd.f32 0.0, %v465
      %467 = vmatmul.bf16.gmra.mxu0 %v319
      %v468 = vpop.f32.mrf.mxu0
      %v469 = vadd.f32 0.0, %v468
      %v470 = vpop.f32.mrf.mxu0
      %v471 = vadd.f32 0.0, %v470
      %472 = vdwg.mxu0
      %473 = vst [vmem:[%s264] sm:$0xff] %v394
      %474 = vst [vmem:[%s264 + $0x8] sm:$0xff] %v396
      %475 = vst [vmem:[%s264 + $0x10] sm:$0xff] %v399
      %476 = vst [vmem:[%s264 + $0x18] sm:$0xff] %v401
      %477 = vst [vmem:[%s264 + $0x20] sm:$0xff] %v404
      %478 = vst [vmem:[%s264 + $0x28] sm:$0xff] %v406
      %479 = vst [vmem:[%s264 + $0x30] sm:$0xff] %v409
      %480 = vst [vmem:[%s264 + $0x38] sm:$0xff] %v411
      %481 = vst [vmem:[%s264 + $0x40] sm:$0xff] %v414
      %482 = vst [vmem:[%s264 + $0x48] sm:$0xff] %v416
      %483 = vst [vmem:[%s264 + $0x50] sm:$0xff] %v419
      %484 = vst [vmem:[%s264 + $0x58] sm:$0xff] %v421
      %485 = vst [vmem:[%s264 + $0x60] sm:$0xff] %v424
      %486 = vst [vmem:[%s264 + $0x68] sm:$0xff] %v426
      %487 = vst [vmem:[%s264 + $0x70] sm:$0xff] %v429
      %488 = vst [vmem:[%s264 + $0x78] sm:$0xff] %v431
      %489 = vst [vmem:[%s264 + $0x80] sm:$0xff] %v434
      %490 = vst [vmem:[%s264 + $0x88] sm:$0xff] %v436
      %491 = vst [vmem:[%s264 + $0x90] sm:$0xff] %v439
      %492 = vst [vmem:[%s264 + $0x98] sm:$0xff] %v441
      %493 = vst [vmem:[%s264 + $0xa0] sm:$0xff] %v444
      %494 = vst [vmem:[%s264 + $0xa8] sm:$0xff] %v446
      %495 = vst [vmem:[%s264 + $0xb0] sm:$0xff] %v449
      %496 = vst [vmem:[%s264 + $0xb8] sm:$0xff] %v451
      %497 = vst [vmem:[%s264 + $0xc0] sm:$0xff] %v454
      %498 = vst [vmem:[%s264 + $0xc8] sm:$0xff] %v456
      %499 = vst [vmem:[%s264 + $0xd0] sm:$0xff] %v459
      %500 = vst [vmem:[%s264 + $0xd8] sm:$0xff] %v461
      %501 = vst [vmem:[%s264 + $0xe0] sm:$0xff] %v464
      %502 = vst [vmem:[%s264 + $0xe8] sm:$0xff] %v466
      %503 = vst [vmem:[%s264 + $0xf0] sm:$0xff] %v469
      %504 = vst [vmem:[%s264 + $0xf8] sm:$0xff] %v471
      %v505 = vadd.f32 %v394, %v396
      %v506 = vadd.f32 %v505, %v399
      %v507 = vadd.f32 %v506, %v401
      %v508 = vadd.f32 %v507, %v404
      %v509 = vadd.f32 %v508, %v406
      %v510 = vadd.f32 %v509, %v409
      %v511 = vadd.f32 %v510, %v411
      %v512 = vadd.f32 %v511, %v414
      %v513 = vadd.f32 %v512, %v416
      %v514 = vadd.f32 %v513, %v419
      %v515 = vadd.f32 %v514, %v421
      %v516 = vadd.f32 %v515, %v424
      %v517 = vadd.f32 %v516, %v426
      %v518 = vadd.f32 %v517, %v429
      %v519 = vadd.f32 %v518, %v431
      %v520 = vadd.f32 %v519, %v434
      %v521 = vadd.f32 %v520, %v436
      %v522 = vadd.f32 %v521, %v439
      %v523 = vadd.f32 %v522, %v441
      %v524 = vadd.f32 %v523, %v444
      %v525 = vadd.f32 %v524, %v446
      %v526 = vadd.f32 %v525, %v449
      %v527 = vadd.f32 %v526, %v451
      %v528 = vadd.f32 %v527, %v454
      %v529 = vadd.f32 %v528, %v456
      %v530 = vadd.f32 %v529, %v459
      %v531 = vadd.f32 %v530, %v461
      %v532 = vadd.f32 %v531, %v464
      %v533 = vadd.f32 %v532, %v466
      %v534 = vadd.f32 %v533, %v469
      %v535 = vadd.f32 %v534, %v471
      %v536 = vrot.slane %v535, 4
      %v537 = vadd.f32 %v535, %v536
      %v538 = vrot.slane %v537, 2
      %v539 = vadd.f32 %v537, %v538
      %v540 = vrot.slane %v539, 1
      %v541 = vadd.f32 %v539, %v540
      %542 = vst [vmem:[%s268] sm:$0x1] %v541
      %v543 = vmul.f32 %v394, %v394
      %v544 = vmul.f32 %v396, %v396
      %v545 = vmul.f32 %v399, %v399
      %v546 = vmul.f32 %v401, %v401
      %v547 = vmul.f32 %v404, %v404
      %v548 = vmul.f32 %v406, %v406
      %v549 = vmul.f32 %v409, %v409
      %v550 = vmul.f32 %v411, %v411
      %v551 = vmul.f32 %v414, %v414
      %v552 = vmul.f32 %v416, %v416
      %v553 = vmul.f32 %v419, %v419
      %v554 = vmul.f32 %v421, %v421
      %v555 = vmul.f32 %v424, %v424
      %v556 = vmul.f32 %v426, %v426
      %v557 = vmul.f32 %v429, %v429
      %v558 = vmul.f32 %v431, %v431
      %v559 = vmul.f32 %v434, %v434
      %v560 = vmul.f32 %v436, %v436
      %v561 = vmul.f32 %v439, %v439
      %v562 = vmul.f32 %v441, %v441
      %v563 = vmul.f32 %v444, %v444
      %v564 = vmul.f32 %v446, %v446
      %v565 = vmul.f32 %v449, %v449
      %v566 = vmul.f32 %v451, %v451
      %v567 = vmul.f32 %v454, %v454
      %v568 = vmul.f32 %v456, %v456
      %v569 = vmul.f32 %v459, %v459
      %v570 = vmul.f32 %v461, %v461
      %v571 = vmul.f32 %v464, %v464
      %v572 = vmul.f32 %v466, %v466
      %v573 = vmul.f32 %v469, %v469
      %v574 = vmul.f32 %v471, %v471
      %v575 = vadd.f32 %v543, %v544
      %v576 = vadd.f32 %v575, %v545
      %v577 = vadd.f32 %v576, %v546
      %v578 = vadd.f32 %v577, %v547
      %v579 = vadd.f32 %v578, %v548
      %v580 = vadd.f32 %v579, %v549
      %v581 = vadd.f32 %v580, %v550
      %v582 = vadd.f32 %v581, %v551
      %v583 = vadd.f32 %v582, %v552
      %v584 = vadd.f32 %v583, %v553
      %v585 = vadd.f32 %v584, %v554
      %v586 = vadd.f32 %v585, %v555
      %v587 = vadd.f32 %v586, %v556
      %v588 = vadd.f32 %v587, %v557
      %v589 = vadd.f32 %v588, %v558
      %v590 = vadd.f32 %v589, %v559
      %v591 = vadd.f32 %v590, %v560
      %v592 = vadd.f32 %v591, %v561
      %v593 = vadd.f32 %v592, %v562
      %v594 = vadd.f32 %v593, %v563
      %v595 = vadd.f32 %v594, %v564
      %v596 = vadd.f32 %v595, %v565
      %v597 = vadd.f32 %v596, %v566
      %v598 = vadd.f32 %v597, %v567
      %v599 = vadd.f32 %v598, %v568
      %v600 = vadd.f32 %v599, %v569
      %v601 = vadd.f32 %v600, %v570
      %v602 = vadd.f32 %v601, %v571
      %v603 = vadd.f32 %v602, %v572
      %v604 = vadd.f32 %v603, %v573
      %v605 = vadd.f32 %v604, %v574
      %v606 = vrot.slane %v605, 4
      %v607 = vadd.f32 %v605, %v606
      %v608 = vrot.slane %v607, 2
      %v609 = vadd.f32 %v607, %v608
      %v610 = vrot.slane %v609, 1
      %v611 = vadd.f32 %v609, %v610
      %612 = vst [vmem:[%s271] sm:$0x1] %v611
      %s613 = smul.u32 32, %s18
      %p614 = scmp.lt.s32.totalorder %s613, 63
      %s615 = scalar_select %p614, %s613, 63
      %s616 = smul.addr %s615, 8
      %s617 = scalar_lea.vmem %s4, %s616
      %p618 = scmp.lt.s32.totalorder %s18, 1
      %s619 = scalar_select %p618, %s18, 1
      %s620 = scalar_lea.vmem %s5, %s619
      %p621 = scmp.lt.s32.totalorder %s18, 1
      %s622 = scalar_select %p621, %s18, 1
      %s623 = scalar_lea.vmem %s6, %s622
      // Predicated region
      $region37: #{bottleneck_forward.5} parent=35 // pred_check
        %p624 = pneg %p125
      $region38: #{bottleneck_forward.5} parent=35 // pred_check_branch
        %626 = sbr.rel (%p624) target = $region40
      $region39: #{bottleneck_forward.5} parent=35 // pred_region
        %s627 = smul.u32 32, %s18
      $region40: #{bottleneck_forward.5} parent=35 // pred_fallthru
        _
      // Predicated region
      $region41: #{bottleneck_forward.5} parent=35 // pred_check
        %p628 = pneg %p151
      $region42: #{bottleneck_forward.5} parent=35 // pred_check_branch
        %630 = sbr.rel (%p628) target = $region44
      $region43: #{bottleneck_forward.5} parent=35 // pred_region
        _
      $region44: #{bottleneck_forward.5} parent=35 // pred_fallthru
        _
      // Predicated region
      $region45: #{bottleneck_forward.5} parent=35 // pred_check
        %p631 = pneg %p177
      $region46: #{bottleneck_forward.5} parent=35 // pred_check_branch
        %633 = sbr.rel (%p631) target = $region48
      $region47: #{bottleneck_forward.5} parent=35 // pred_region
        _
      $region48: #{bottleneck_forward.5} parent=35 // pred_fallthru
        _
    $region36: #{bottleneck_forward.5} parent=5 // pred_fallthru
      _
    %p634 = scmp.le.s32.totalorder 2, %s13
    // Predicated region
    $region49: #{bottleneck_forward.5} parent=5 // pred_check
      %p635 = pneg %p634
    $region50: #{bottleneck_forward.5} parent=5 // pred_check_branch
      %637 = sbr.rel (%p635) target = $region52
    $region51: #{bottleneck_forward.5} parent=5 // pred_region
      %s638 = ssub.s32 %s13, 2
      // Predicated region
      $region53: #{bottleneck_forward.5} parent=51 // pred_check
        %p639 = pneg %p131
      $region54: #{bottleneck_forward.5} parent=51 // pred_check_branch
        %641 = sbr.rel (%p639) target = $region56
      $region55: #{bottleneck_forward.5} parent=51 // pred_region
        %s642 = smul.u32 32, %s19
        %p643 = scmp.lt.s32.totalorder %s642, 63
        %s644 = scalar_select %p643, %s642, 63
        %s645 = smul.addr %s644, 8
        %s646 = scalar_lea.vmem %s4, %s645
      $region56: #{bottleneck_forward.5} parent=51 // pred_fallthru
        _
      // Predicated region
      $region57: #{bottleneck_forward.5} parent=51 // pred_check
        %p647 = pneg %p157
      $region58: #{bottleneck_forward.5} parent=51 // pred_check_branch
        %649 = sbr.rel (%p647) target = $region60
      $region59: #{bottleneck_forward.5} parent=51 // pred_region
        %p650 = scmp.lt.s32.totalorder %s19, 1
        %s651 = scalar_select %p650, %s19, 1
        %s652 = scalar_lea.vmem %s5, %s651
      $region60: #{bottleneck_forward.5} parent=51 // pred_fallthru
        _
      // Predicated region
      $region61: #{bottleneck_forward.5} parent=51 // pred_check
        %p653 = pneg %p183
      $region62: #{bottleneck_forward.5} parent=51 // pred_check_branch
        %655 = sbr.rel (%p653) target = $region64
      $region63: #{bottleneck_forward.5} parent=51 // pred_region
        %p656 = scmp.lt.s32.totalorder %s19, 1
        %s657 = scalar_select %p656, %s19, 1
        %s658 = scalar_lea.vmem %s6, %s657
      $region64: #{bottleneck_forward.5} parent=51 // pred_fallthru
        _
    $region52: #{bottleneck_forward.5} parent=5 // pred_fallthru
      _
  $region6: #{bottleneck_forward.5} parent=0 // loop_footer
    %s17 = sadd.s32 1, %s13
  $region7: #{bottleneck_forward.5} parent=0 // loop_footer_branch
    %12 = sbr.rel target = $region3
  $region8: #{bottleneck_forward.5} parent=0 // loop_exit
    _

// kernel: bottleneck_forward.7
$region0: #{bottleneck_forward.7}
  #allocation0 [shape = 'u32[]', space=smem, size = 0x4, offset = 0x4, fixed_abs, tag = 'smem constant byte address 0x4 - core index']
  #allocation1 [shape = 'u32[72,128]{1,0:T(1,128)}', space=vmem, size = 0x9000, scoped, tag = 'internal scratch']
  %s0 = inlined_call_operand.vmem [shape: f32[512,128], index: 0, kind: input, shape index: {}]
  %s1 = inlined_call_operand.vmem [shape: f32[1,128], index: 1, kind: input, shape index: {}]
  %s2 = inlined_call_operand.vmem [shape: f32[1,128], index: 2, kind: input, shape index: {}]
  %s3 = inlined_call_operand.vmem [shape: bf16[128,128], index: 3, kind: input, shape index: {}]
  %s4 = inlined_call_operand.vmem [shape: f32[512,128], index: 4, kind: output, shape index: {0}]
  %s5 = inlined_call_operand.vmem [shape: f32[2,1,128], index: 5, kind: output, shape index: {1}]
  %s6 = inlined_call_operand.vmem [shape: f32[2,1,128], index: 6, kind: output, shape index: {2}]
  %7 = xla_tuple %s4, %s5, %s6
  %s8 = sld [smem:[#allocation0]]
  $region65: #{bottleneck_forward.7} parent=0
    _
  %s10 = ssub.s32 1, %s8
  %s11 = scalar_select 0, %s10, %s8
  loop: start=0, step=1, limit=4
  $region2: #{bottleneck_forward.7} parent=0 // loop_pre_header
    _
  $region3: #{bottleneck_forward.7} parent=0 // loop_header
    %s13 = sphi 0, %s17
    %p14 = scmp.ge.s32.totalorder %s13, 4
    %s23 = sphi 0, %s25
    %s26 = sphi 0, %s23
    %s27 = sphi 0, %s26
    %s43 = sphi 0, %s27
    %s47 = sphi 0, %s47
    %s49 = sphi 0, %s47
    %s50 = sphi 0, %s49
    %s64 = sphi 0, %s50
    %s68 = sphi 0, %s68
    %s70 = sphi 0, %s68
    %s71 = sphi 0, %s70
    %s85 = sphi 0, %s71
    %s89 = sphi 0, %s89
    %s91 = sphi 0, %s89
    %s92 = sphi 0, %s91
    %s106 = sphi 0, %s92
    %s112 = sphi 0, %s114
    %s115 = sphi 0, %s112
    %s116 = sphi 0, %s115
    %s132 = sphi 0, %s116
    %s138 = sphi 0, %s140
    %s141 = sphi 0, %s138
    %s142 = sphi 0, %s141
    %s158 = sphi 0, %s142
    %s164 = sphi 0, %s166
    %s167 = sphi 0, %s164
    %s168 = sphi 0, %s167
    %s184 = sphi 0, %s168
  $region4: #{bottleneck_forward.7} parent=0 // loop_header_branch
    %16 = sbr.rel (%p14) target = $region8
  $region5: #{bottleneck_forward.7} parent=0 // loop_body
    %s18 = ssub.s32 %s13, 1
    %s19 = ssub.s32 %s13, 2
    %s20 = sadd.s32 %s13, 1
    %s21 = ssub.s32 %s13, %s20
    %p22 = scmp.eq.s32.totalorder %s21, 0
    %s24 = sadd.s32 %s23, 1
    %s25 = scalar_select %p22, %s23, %s24
    %p28 = pneg %p22
    %p29 = scmp.eq.s32.totalorder %s13, 1
    %p30 = por %p28, %p29
    %p31 = scmp.ne.s32.totalorder %s23, %s26
    %p32 = scmp.eq.s32.totalorder %s13, 0
    %p33 = por %p31, %p32
    %p34 = scmp.ne.s32.totalorder %s23, %s26
    %p35 = scmp.eq.s32.totalorder %s18, 1
    %p36 = por %p34, %p35
    %p37 = scmp.ne.s32.totalorder %s26, %s27
    %p38 = scmp.eq.s32.totalorder %s18, 0
    %p39 = por %p37, %p38
    %p40 = scmp.ne.s32.totalorder %s26, %s27
    %p41 = scmp.eq.s32.totalorder %s19, 1
    %p42 = por %p40, %p41
    %p44 = scmp.ne.s32.totalorder %s27, %s43
    %p45 = scmp.eq.s32.totalorder %s19, 0
    %p46 = por %p44, %p45
    %s48 = sadd.s32 %s47, 1
    %p51 = scmp.eq.s32.totalorder %s13, 1
    %p52 = scmp.ne.s32.totalorder %s47, %s49
    %p53 = scmp.eq.s32.totalorder %s13, 0
    %p54 = por %p52, %p53
    %p55 = scmp.ne.s32.totalorder %s47, %s49
    %p56 = scmp.eq.s32.totalorder %s18, 1
    %p57 = por %p55, %p56
    %p58 = scmp.ne.s32.totalorder %s49, %s50
    %p59 = scmp.eq.s32.totalorder %s18, 0
    %p60 = por %p58, %p59
    %p61 = scmp.ne.s32.totalorder %s49, %s50
    %p62 = scmp.eq.s32.totalorder %s19, 1
    %p63 = por %p61, %p62
    %p65 = scmp.ne.s32.totalorder %s50, %s64
    %p66 = scmp.eq.s32.totalorder %s19, 0
    %p67 = por %p65, %p66
    %s69 = sadd.s32 %s68, 1
    %p72 = scmp.eq.s32.totalorder %s13, 1
    %p73 = scmp.ne.s32.totalorder %s68, %s70
    %p74 = scmp.eq.s32.totalorder %s13, 0
    %p75 = por %p73, %p74
    %p76 = scmp.ne.s32.totalorder %s68, %s70
    %p77 = scmp.eq.s32.totalorder %s18, 1
    %p78 = por %p76, %p77
    %p79 = scmp.ne.s32.totalorder %s70, %s71
    %p80 = scmp.eq.s32.totalorder %s18, 0
    %p81 = por %p79, %p80
    %p82 = scmp.ne.s32.totalorder %s70, %s71
    %p83 = scmp.eq.s32.totalorder %s19, 1
    %p84 = por %p82, %p83
    %p86 = scmp.ne.s32.totalorder %s71, %s85
    %p87 = scmp.eq.s32.totalorder %s19, 0
    %p88 = por %p86, %p87
    %s90 = sadd.s32 %s89, 1
    %p93 = scmp.eq.s32.totalorder %s13, 1
    %p94 = scmp.ne.s32.totalorder %s89, %s91
    %p95 = scmp.eq.s32.totalorder %s13, 0
    %p96 = por %p94, %p95
    %p97 = scmp.ne.s32.totalorder %s89, %s91
    %p98 = scmp.eq.s32.totalorder %s18, 1
    %p99 = por %p97, %p98
    %p100 = scmp.ne.s32.totalorder %s91, %s92
    %p101 = scmp.eq.s32.totalorder %s18, 0
    %p102 = por %p100, %p101
    %p103 = scmp.ne.s32.totalorder %s91, %s92
    %p104 = scmp.eq.s32.totalorder %s19, 1
    %p105 = por %p103, %p104
    %p107 = scmp.ne.s32.totalorder %s92, %s106
    %p108 = scmp.eq.s32.totalorder %s19, 0
    %p109 = por %p107, %p108
    %s110 = ssub.s32 %s13, %s20
    %p111 = scmp.eq.s32.totalorder %s110, 0
    %s113 = sadd.s32 %s112, 1
    %s114 = scalar_select %p111, %s112, %s113
    %p117 = pneg %p111
    %p118 = scmp.eq.s32.totalorder %s13, 1
    %p119 = por %p117, %p118
    %p120 = scmp.ne.s32.totalorder %s112, %s115
    %p121 = scmp.eq.s32.totalorder %s13, 0
    %p122 = por %p120, %p121
    %p123 = scmp.ne.s32.totalorder %s112, %s115
    %p124 = scmp.eq.s32.totalorder %s18, 1
    %p125 = por %p123, %p124
    %p126 = scmp.ne.s32.totalorder %s115, %s116
    %p127 = scmp.eq.s32.totalorder %s18, 0
    %p128 = por %p126, %p127
    %p129 = scmp.ne.s32.totalorder %s115, %s116
    %p130 = scmp.eq.s32.totalorder %s19, 1
    %p131 = por %p129, %p130
    %p133 = scmp.ne.s32.totalorder %s116, %s132
    %p134 = scmp.eq.s32.totalorder %s19, 0
    %p135 = por %p133, %p134
    %s136 = ssub.s32 %s13, %s20
    %p137 = scmp.eq.s32.totalorder %s136, 0
    %s139 = sadd.s32 %s138, 1
    %s140 = scalar_select %p137, %s138, %s139
    %p143 = pneg %p137
    %p144 = scmp.eq.s32.totalorder %s13, 1
    %p145 = por %p143, %p144
    %p146 = scmp.ne.s32.totalorder %s138, %s141
    %p147 = scmp.eq.s32.totalorder %s13, 0
    %p148 = por %p146, %p147
    %p149 = scmp.ne.s32.totalorder %s138, %s141
    %p150 = scmp.eq.s32.totalorder %s18, 1
    %p151 = por %p149, %p150
    %p152 = scmp.ne.s32.totalorder %s141, %s142
    %p153 = scmp.eq.s32.totalorder %s18, 0
    %p154 = por %p152, %p153
    %p155 = scmp.ne.s32.totalorder %s141, %s142
    %p156 = scmp.eq.s32.totalorder %s19, 1
    %p157 = por %p155, %p156
    %p159 = scmp.ne.s32.totalorder %s142, %s158
    %p160 = scmp.eq.s32.totalorder %s19, 0
    %p161 = por %p159, %p160
    %s162 = ssub.s32 %s13, %s20
    %p163 = scmp.eq.s32.totalorder %s162, 0
    %s165 = sadd.s32 %s164, 1
    %s166 = scalar_select %p163, %s164, %s165
    %p169 = pneg %p163
    %p170 = scmp.eq.s32.totalorder %s13, 1
    %p171 = por %p169, %p170
    %p172 = scmp.ne.s32.totalorder %s164, %s167
    %p173 = scmp.eq.s32.totalorder %s13, 0
    %p174 = por %p172, %p173
    %p175 = scmp.ne.s32.totalorder %s164, %s167
    %p176 = scmp.eq.s32.totalorder %s18, 1
    %p177 = por %p175, %p176
    %p178 = scmp.ne.s32.totalorder %s167, %s168
    %p179 = scmp.eq.s32.totalorder %s18, 0
    %p180 = por %p178, %p179
    %p181 = scmp.ne.s32.totalorder %s167, %s168
    %p182 = scmp.eq.s32.totalorder %s19, 1
    %p183 = por %p181, %p182
    %p185 = scmp.ne.s32.totalorder %s168, %s184
    %p186 = scmp.eq.s32.totalorder %s19, 0
    %p187 = por %p185, %p186
    %p188 = scmp.le.s32.totalorder 1, %s13
    %p189 = scmp.lt.s32.totalorder %s13, 3
    %p190 = pnand %p188, %p189
    %p191 = pneg %p190
    // Predicated region
    $region9: #{bottleneck_forward.7} parent=5 // pred_check
      _
    $region10: #{bottleneck_forward.7} parent=5 // pred_check_branch
      %193 = sbr.rel (%p190) target = $region12
    $region11: #{bottleneck_forward.7} parent=5 // pred_region
      %s194 = ssub.s32 %s13, 1
      // Predicated region
      $region13: #{bottleneck_forward.7} parent=11 // pred_check
        %p195 = pneg %p60
      $region14: #{bottleneck_forward.7} parent=11 // pred_check_branch
        %197 = sbr.rel (%p195) target = $region16
      $region15: #{bottleneck_forward.7} parent=11 // pred_region
        _
      $region16: #{bottleneck_forward.7} parent=11 // pred_fallthru
        _
      // Predicated region
      $region17: #{bottleneck_forward.7} parent=11 // pred_check
        %p198 = pneg %p81
      $region18: #{bottleneck_forward.7} parent=11 // pred_check_branch
        %200 = sbr.rel (%p198) target = $region20
      $region19: #{bottleneck_forward.7} parent=11 // pred_region
        _
      $region20: #{bottleneck_forward.7} parent=11 // pred_fallthru
        _
      // Predicated region
      $region21: #{bottleneck_forward.7} parent=11 // pred_check
        %p201 = pneg %p102
      $region22: #{bottleneck_forward.7} parent=11 // pred_check_branch
        %203 = sbr.rel (%p201) target = $region24
      $region23: #{bottleneck_forward.7} parent=11 // pred_region
        _
      $region24: #{bottleneck_forward.7} parent=11 // pred_fallthru
        _
    $region12: #{bottleneck_forward.7} parent=5 // pred_fallthru
      _
    %p204 = scmp.lt.s32.totalorder %s13, 2
    // Predicated region
    $region25: #{bottleneck_forward.7} parent=5 // pred_check
      %p205 = pneg %p204
    $region26: #{bottleneck_forward.7} parent=5 // pred_check_branch
      %207 = sbr.rel (%p205) target = $region28
    $region27: #{bottleneck_forward.7} parent=5 // pred_region
      // Predicated region
      $region29: #{bottleneck_forward.7} parent=27 // pred_check
        %p208 = pneg %p33
      $region30: #{bottleneck_forward.7} parent=27 // pred_check_branch
        %210 = sbr.rel (%p208) target = $region32
      $region31: #{bottleneck_forward.7} parent=27 // pred_region
        %s211 = smul.u32 32, %s13
        %p212 = scmp.lt.s32.totalorder %s211, 63
        %s213 = scalar_select %p212, %s211, 63
        %s214 = smul.addr %s213, 8
        %s215 = scalar_lea.vmem %s0, %s214
        %s216 = smul.u32 32, %s13
      $region32: #{bottleneck_forward.7} parent=27 // pred_fallthru
        _
    $region28: #{bottleneck_forward.7} parent=5 // pred_fallthru
      _
    %p217 = scmp.le.s32.totalorder 1, %s13
    %p218 = scmp.lt.s32.totalorder %s13, 3
    %p219 = pnand %p217, %p218
    %p220 = pneg %p219
    // Predicated region
    $region33: #{bottleneck_forward.7} parent=5 // pred_check
      _
    $region34: #{bottleneck_forward.7} parent=5 // pred_check_branch
      %222 = sbr.rel (%p219) target = $region36
    $region35: #{bottleneck_forward.7} parent=5 // pred_region
      %s223 = ssub.s32 %s13, 1
      %s224 = smul.u32 32, %s18
      %p225 = scmp.lt.s32.totalorder %s224, 63
      %s226 = scalar_select %p225, %s224, 63
      %s227 = smul.addr %s226, 8
      %s228 = scalar_lea.vmem %s0, %s227
      %p229 = pneg %p39
      %p230 = pneg %p36
      %p231 = pneg %p60
      %p232 = pneg %p57
      %p233 = pneg %p81
      %p234 = pneg %p78
      %p235 = pneg %p102
      %p236 = pneg %p99
      %p237 = pneg %p128
      %p238 = pneg %p125
      %s239 = smul.u32 32, %s18
      %p240 = scmp.lt.s32.totalorder %s239, 63
      %s241 = scalar_select %p240, %s239, 63
      %s242 = smul.addr %s241, 8
      %s243 = scalar_lea.vmem %s4, %s242
      %p244 = pneg %p154
      %p245 = pneg %p151
      %p246 = scmp.lt.s32.totalorder %s18, 1
      %s247 = scalar_select %p246, %s18, 1
      %s248 = scalar_lea.vmem %s5, %s247
      %p249 = pneg %p180
      %p250 = pneg %p177
      %p251 = scmp.lt.s32.totalorder %s18, 1
      %s252 = scalar_select %p251, %s18, 1
      %s253 = scalar_lea.vmem %s6, %s252
      %s254 = smul.u32 32, %s18
      %p255 = scmp.lt.s32.totalorder %s254, 63
      %s256 = scalar_select %p255, %s254, 63
      %s257 = smul.addr %s256, 8
      %s258 = scalar_lea.vmem %s0, %s257
      %s259 = smul.u32 32, %s18
      %s260 = smul.u32 32, %s18
      %p261 = scmp.lt.s32.totalorder %s260, 63
      %s262 = scalar_select %p261, %s260, 63
      %s263 = smul.addr %s262, 8
      %s264 = scalar_lea.vmem %s4, %s263
      %s265 = smul.u32 32, %s18
      %p266 = scmp.lt.s32.totalorder %s18, 1
      %s267 = scalar_select %p266, %s18, 1
      %s268 = scalar_lea.vmem %s5, %s267
      %p269 = scmp.lt.s32.totalorder %s18, 1
      %s270 = scalar_select %p269, %s18, 1
      %s271 = scalar_lea.vmem %s6, %s270
      %v272 = vld [vmem:[%s258] sm:$0xff]
      %v273 = vld [vmem:[%s258 + $0x8] sm:$0xff]
      %v274 = vld [vmem:[%s258 + $0x10] sm:$0xff]
      %v275 = vld [vmem:[%s258 + $0x18] sm:$0xff]
      %v276 = vld [vmem:[%s258 + $0x20] sm:$0xff]
      %v277 = vld [vmem:[%s258 + $0x28] sm:$0xff]
      %v278 = vld [vmem:[%s258 + $0x30] sm:$0xff]
      %v279 = vld [vmem:[%s258 + $0x38] sm:$0xff]
      %v280 = vld [vmem:[%s258 + $0x40] sm:$0xff]
      %v281 = vld [vmem:[%s258 + $0x48] sm:$0xff]
      %v282 = vld [vmem:[%s258 + $0x50] sm:$0xff]
      %v283 = vld [vmem:[%s258 + $0x58] sm:$0xff]
      %v284 = vld [vmem:[%s258 + $0x60] sm:$0xff]
      %v285 = vld [vmem:[%s258 + $0x68] sm:$0xff]
      %v286 = vld [vmem:[%s258 + $0x70] sm:$0xff]
      %v287 = vld [vmem:[%s258 + $0x78] sm:$0xff]
      %v288 = vld [vmem:[%s258 + $0x80] sm:$0xff]
      %v289 = vld [vmem:[%s258 + $0x88] sm:$0xff]
      %v290 = vld [vmem:[%s258 + $0x90] sm:$0xff]
      %v291 = vld [vmem:[%s258 + $0x98] sm:$0xff]
      %v292 = vld [vmem:[%s258 + $0xa0] sm:$0xff]
      %v293 = vld [vmem:[%s258 + $0xa8] sm:$0xff]
      %v294 = vld [vmem:[%s258 + $0xb0] sm:$0xff]
      %v295 = vld [vmem:[%s258 + $0xb8] sm:$0xff]
      %v296 = vld [vmem:[%s258 + $0xc0] sm:$0xff]
      %v297 = vld [vmem:[%s258 + $0xc8] sm:$0xff]
      %v298 = vld [vmem:[%s258 + $0xd0] sm:$0xff]
      %v299 = vld [vmem:[%s258 + $0xd8] sm:$0xff]
      %v300 = vld [vmem:[%s258 + $0xe0] sm:$0xff]
      %v301 = vld [vmem:[%s258 + $0xe8] sm:$0xff]
      %v302 = vld [vmem:[%s258 + $0xf0] sm:$0xff]
      %v303 = vld [vmem:[%s258 + $0xf8] sm:$0xff]
      %v304 = vld [vmem:[%s1] sm:$0x1]
      %v306 = vperm.slane %v304, 0
      %v308 = vmul.f32 %v272, %v306
      %v309 = vmul.f32 %v273, %v306
      %v310 = vmul.f32 %v274, %v306
      %v311 = vmul.f32 %v275, %v306
      %v312 = vmul.f32 %v276, %v306
      %v313 = vmul.f32 %v277, %v306
      %v314 = vmul.f32 %v278, %v306
      %v315 = vmul.f32 %v279, %v306
      %v316 = vmul.f32 %v280, %v306
      %v317 = vmul.f32 %v281, %v306
      %v318 = vmul.f32 %v282, %v306
      %v319 = vmul.f32 %v283, %v306
      %v320 = vmul.f32 %v284, %v306
      %v321 = vmul.f32 %v285, %v306
      %v322 = vmul.f32 %v286, %v306
      %v323 = vmul.f32 %v287, %v306
      %v324 = vmul.f32 %v288, %v306
      %v325 = vmul.f32 %v289, %v306
      %v326 = vmul.f32 %v290, %v306
      %v327 = vmul.f32 %v291, %v306
      %v328 = vmul.f32 %v292, %v306
      %v329 = vmul.f32 %v293, %v306
      %v330 = vmul.f32 %v294, %v306
      %v331 = vmul.f32 %v295, %v306
      %v332 = vmul.f32 %v296, %v306
      %v333 = vmul.f32 %v297, %v306
      %v334 = vmul.f32 %v298, %v306
      %v335 = vmul.f32 %v299, %v306
      %v336 = vmul.f32 %v300, %v306
      %v337 = vmul.f32 %v301, %v306
      %v338 = vmul.f32 %v302, %v306
      %v339 = vmul.f32 %v303, %v306
      %v340 = vld [vmem:[%s2] sm:$0x1]
      %v342 = vperm.slane %v340, 0
      %v344 = vadd.f32 %v308, %v342
      %v345 = vadd.f32 %v309, %v342
      %v346 = vadd.f32 %v310, %v342
      %v347 = vadd.f32 %v311, %v342
      %v348 = vadd.f32 %v312, %v342
      %v349 = vadd.f32 %v313, %v342
      %v350 = vadd.f32 %v314, %v342
      %v351 = vadd.f32 %v315, %v342
      %v352 = vadd.f32 %v316, %v342
      %v353 = vadd.f32 %v317, %v342
      %v354 = vadd.f32 %v318, %v342
      %v355 = vadd.f32 %v319, %v342
      %v356 = vadd.f32 %v320, %v342
      %v357 = vadd.f32 %v321, %v342
      %v358 = vadd.f32 %v322, %v342
      %v359 = vadd.f32 %v323, %v342
      %v360 = vadd.f32 %v324, %v342
      %v361 = vadd.f32 %v325, %v342
      %v362 = vadd.f32 %v326, %v342
      %v363 = vadd.f32 %v327, %v342
      %v364 = vadd.f32 %v328, %v342
      %v365 = vadd.f32 %v329, %v342
      %v366 = vadd.f32 %v330, %v342
      %v367 = vadd.f32 %v331, %v342
      %v368 = vadd.f32 %v332, %v342
      %v369 = vadd.f32 %v333, %v342
      %v370 = vadd.f32 %v334, %v342
      %v371 = vadd.f32 %v335, %v342
      %v372 = vadd.f32 %v336, %v342
      %v373 = vadd.f32 %v337, %v342
      %v374 = vadd.f32 %v338, %v342
      %v375 = vadd.f32 %v339, %v342
      %v376 = vmax.f32 %v344, 0.0
      %v377 = vmax.f32 %v345, 0.0
      %v378 = vmax.f32 %v346, 0.0
      %v379 = vmax.f32 %v347, 0.0
      %v380 = vmax.f32 %v348, 0.0
      %v381 = vmax.f32 %v349, 0.0
      %v382 = vmax.f32 %v350, 0.0
      %v383 = vmax.f32 %v351, 0.0
      %v384 = vmax.f32 %v352, 0.0
      %v385 = vmax.f32 %v353, 0.0
      %v386 = vmax.f32 %v354, 0.0
      %v387 = vmax.f32 %v355, 0.0
      %v388 = vmax.f32 %v356, 0.0
      %v389 = vmax.f32 %v357, 0.0
      %v390 = vmax.f32 %v358, 0.0
      %v391 = vmax.f32 %v359, 0.0
      %v392 = vmax.f32 %v360, 0.0
      %v393 = vmax.f32 %v361, 0.0
      %v394 = vmax.f32 %v362, 0.0
      %v395 = vmax.f32 %v363, 0.0
      %v396 = vmax.f32 %v364, 0.0
      %v397 = vmax.f32 %v365, 0.0
      %v398 = vmax.f32 %v366, 0.0
      %v399 = vmax.f32 %v367, 0.0
      %v400 = vmax.f32 %v368, 0.0
      %v401 = vmax.f32 %v369, 0.0
      %v402 = vmax.f32 %v370, 0.0
      %v403 = vmax.f32 %v371, 0.0
      %v404 = vmax.f32 %v372, 0.0
      %v405 = vmax.f32 %v373, 0.0
      %v406 = vmax.f32 %v374, 0.0
      %v407 = vmax.f32 %v375, 0.0
      %v408 = vpack.c.bf16 %v377, %v376
      %v409 = vpack.c.bf16 %v379, %v378
      %v410 = vpack.c.bf16 %v381, %v380
      %v411 = vpack.c.bf16 %v383, %v382
      %v412 = vpack.c.bf16 %v385, %v384
      %v413 = vpack.c.bf16 %v387, %v386
      %v414 = vpack.c.bf16 %v389, %v388
      %v415 = vpack.c.bf16 %v391, %v390
      %v416 = vpack.c.bf16 %v393, %v392
      %v417 = vpack.c.bf16 %v395, %v394
      %v418 = vpack.c.bf16 %v397, %v396
      %v419 = vpack.c.bf16 %v399, %v398
      %v420 = vpack.c.bf16 %v401, %v400
      %v421 = vpack.c.bf16 %v403, %v402
      %v422 = vpack.c.bf16 %v405, %v404
      %v423 = vpack.c.bf16 %v407, %v406
      %v424 = vld [vmem:[%s3] sm:$0xf]
      %v425 = vld [vmem:[%s3 + $0x4] sm:$0xf]
      %v426 = vld [vmem:[%s3 + $0x8] sm:$0xf]
      %v427 = vld [vmem:[%s3 + $0xc] sm:$0xf]
      %v428 = vld [vmem:[%s3 + $0x10] sm:$0xf]
      %v429 = vld [vmem:[%s3 + $0x14] sm:$0xf]
      %v430 = vld [vmem:[%s3 + $0x18] sm:$0xf]
      %v431 = vld [vmem:[%s3 + $0x1c] sm:$0xf]
      %v432 = vld [vmem:[%s3 + $0x20] sm:$0xf]
      %v433 = vld [vmem:[%s3 + $0x24] sm:$0xf]
      %v434 = vld [vmem:[%s3 + $0x28] sm:$0xf]
      %v435 = vld [vmem:[%s3 + $0x2c] sm:$0xf]
      %v436 = vld [vmem:[%s3 + $0x30] sm:$0xf]
      %v437 = vld [vmem:[%s3 + $0x34] sm:$0xf]
      %v438 = vld [vmem:[%s3 + $0x38] sm:$0xf]
      %v439 = vld [vmem:[%s3 + $0x3c] sm:$0xf]
      %v456 = vunpack.c.l.b16 %v424
      %v457 = vunpack.c.l.b16 %v425
      %v458 = vunpack.c.l.b16 %v426
      %v459 = vunpack.c.l.b16 %v427
      %v460 = vunpack.c.l.b16 %v428
      %v461 = vunpack.c.l.b16 %v429
      %v462 = vunpack.c.l.b16 %v430
      %v463 = vunpack.c.l.b16 %v431
      %v464 = vunpack.c.l.b16 %v432
      %v465 = vunpack.c.l.b16 %v433
      %v466 = vunpack.c.l.b16 %v434
      %v467 = vunpack.c.l.b16 %v435
      %v468 = vunpack.c.l.b16 %v436
      %v469 = vunpack.c.l.b16 %v437
      %v470 = vunpack.c.l.b16 %v438
      %v471 = vunpack.c.l.b16 %v439
      %v472 = vpack.c.b16 %v457, %v456
      %v473 = vpack.c.b16 %v459, %v458
      %v474 = vpack.c.b16 %v461, %v460
      %v475 = vpack.c.b16 %v463, %v462
      %v476 = vpack.c.b16 %v465, %v464
      %v477 = vpack.c.b16 %v467, %v466
      %v478 = vpack.c.b16 %v469, %v468
      %v479 = vpack.c.b16 %v471, %v470
      %488 = vmatpush.bf16.msra.mxu0 %v479
      %489 = vmatpush.bf16.msra.mxu0 %v478
      %490 = vmatpush.bf16.msra.mxu0 %v477
      %491 = vmatpush.bf16.msra.mxu0 %v476
      %492 = vmatpush.bf16.msra.mxu0 %v475
      %493 = vmatpush.bf16.msra.mxu0 %v474
      %494 = vmatpush.bf16.msra.mxu0 %v473
      %495 = vmatpush.bf16.msra.mxu0 %v472
      %496 = vmatmul.bf16.gmra.mxu0 %v408
      %v497 = vpop.f32.mrf.mxu0
      %v498 = vadd.f32 0.0, %v497
      %v499 = vpop.f32.mrf.mxu0
      %v500 = vadd.f32 0.0, %v499
      %501 = vmatmul.bf16.gmra.mxu0 %v409
      %v502 = vpop.f32.mrf.mxu0
      %v503 = vadd.f32 0.0, %v502
      %v504 = vpop.f32.mrf.mxu0
      %v505 = vadd.f32 0.0, %v504
      %506 = vmatmul.bf16.gmra.mxu0 %v410
      %v507 = vpop.f32.mrf.mxu0
      %v508 = vadd.f32 0.0, %v507
      %v509 = vpop.f32.mrf.mxu0
      %v510 = vadd.f32 0.0, %v509
      %511 = vmatmul.bf16.gmra.mxu0 %v411
      %v512 = vpop.f32.mrf.mxu0
      %v513 = vadd.f32 0.0, %v512
      %v514 = vpop.f32.mrf.mxu0
      %v515 = vadd.f32 0.0, %v514
      %516 = vmatmul.bf16.gmra.mxu0 %v412
      %v517 = vpop.f32.mrf.mxu0
      %v518 = vadd.f32 0.0, %v517
      %v519 = vpop.f32.mrf.mxu0
      %v520 = vadd.f32 0.0, %v519
      %521 = vmatmul.bf16.gmra.mxu0 %v413
      %v522 = vpop.f32.mrf.mxu0
      %v523 = vadd.f32 0.0, %v522
      %v524 = vpop.f32.mrf.mxu0
      %v525 = vadd.f32 0.0, %v524
      %526 = vmatmul.bf16.gmra.mxu0 %v414
      %v527 = vpop.f32.mrf.mxu0
      %v528 = vadd.f32 0.0, %v527
      %v529 = vpop.f32.mrf.mxu0
      %v530 = vadd.f32 0.0, %v529
      %531 = vmatmul.bf16.gmra.mxu0 %v415
      %v532 = vpop.f32.mrf.mxu0
      %v533 = vadd.f32 0.0, %v532
      %v534 = vpop.f32.mrf.mxu0
      %v535 = vadd.f32 0.0, %v534
      %536 = vmatmul.bf16.gmra.mxu0 %v416
      %v537 = vpop.f32.mrf.mxu0
      %v538 = vadd.f32 0.0, %v537
      %v539 = vpop.f32.mrf.mxu0
      %v540 = vadd.f32 0.0, %v539
      %541 = vmatmul.bf16.gmra.mxu0 %v417
      %v542 = vpop.f32.mrf.mxu0
      %v543 = vadd.f32 0.0, %v542
      %v544 = vpop.f32.mrf.mxu0
      %v545 = vadd.f32 0.0, %v544
      %546 = vmatmul.bf16.gmra.mxu0 %v418
      %v547 = vpop.f32.mrf.mxu0
      %v548 = vadd.f32 0.0, %v547
      %v549 = vpop.f32.mrf.mxu0
      %v550 = vadd.f32 0.0, %v549
      %551 = vmatmul.bf16.gmra.mxu0 %v419
      %v552 = vpop.f32.mrf.mxu0
      %v553 = vadd.f32 0.0, %v552
      %v554 = vpop.f32.mrf.mxu0
      %v555 = vadd.f32 0.0, %v554
      %556 = vmatmul.bf16.gmra.mxu0 %v420
      %v557 = vpop.f32.mrf.mxu0
      %v558 = vadd.f32 0.0, %v557
      %v559 = vpop.f32.mrf.mxu0
      %v560 = vadd.f32 0.0, %v559
      %561 = vmatmul.bf16.gmra.mxu0 %v421
      %v562 = vpop.f32.mrf.mxu0
      %v563 = vadd.f32 0.0, %v562
      %v564 = vpop.f32.mrf.mxu0
      %v565 = vadd.f32 0.0, %v564
      %566 = vmatmul.bf16.gmra.mxu0 %v422
      %v567 = vpop.f32.mrf.mxu0
      %v568 = vadd.f32 0.0, %v567
      %v569 = vpop.f32.mrf.mxu0
      %v570 = vadd.f32 0.0, %v569
      %571 = vmatmul.bf16.gmra.mxu0 %v423
      %v572 = vpop.f32.mrf.mxu0
      %v573 = vadd.f32 0.0, %v572
      %v574 = vpop.f32.mrf.mxu0
      %v575 = vadd.f32 0.0, %v574
      %576 = vdwg.mxu0
      %577 = vst [vmem:[%s264] sm:$0xff] %v498
      %578 = vst [vmem:[%s264 + $0x8] sm:$0xff] %v500
      %579 = vst [vmem:[%s264 + $0x10] sm:$0xff] %v503
      %580 = vst [vmem:[%s264 + $0x18] sm:$0xff] %v505
      %581 = vst [vmem:[%s264 + $0x20] sm:$0xff] %v508
      %582 = vst [vmem:[%s264 + $0x28] sm:$0xff] %v510
      %583 = vst [vmem:[%s264 + $0x30] sm:$0xff] %v513
      %584 = vst [vmem:[%s264 + $0x38] sm:$0xff] %v515
      %585 = vst [vmem:[%s264 + $0x40] sm:$0xff] %v518
      %586 = vst [vmem:[%s264 + $0x48] sm:$0xff] %v520
      %587 = vst [vmem:[%s264 + $0x50] sm:$0xff] %v523
      %588 = vst [vmem:[%s264 + $0x58] sm:$0xff] %v525
      %589 = vst [vmem:[%s264 + $0x60] sm:$0xff] %v528
      %590 = vst [vmem:[%s264 + $0x68] sm:$0xff] %v530
      %591 = vst [vmem:[%s264 + $0x70] sm:$0xff] %v533
      %592 = vst [vmem:[%s264 + $0x78] sm:$0xff] %v535
      %593 = vst [vmem:[%s264 + $0x80] sm:$0xff] %v538
      %594 = vst [vmem:[%s264 + $0x88] sm:$0xff] %v540
      %595 = vst [vmem:[%s264 + $0x90] sm:$0xff] %v543
      %596 = vst [vmem:[%s264 + $0x98] sm:$0xff] %v545
      %597 = vst [vmem:[%s264 + $0xa0] sm:$0xff] %v548
      %598 = vst [vmem:[%s264 + $0xa8] sm:$0xff] %v550
      %599 = vst [vmem:[%s264 + $0xb0] sm:$0xff] %v553
      %600 = vst [vmem:[%s264 + $0xb8] sm:$0xff] %v555
      %601 = vst [vmem:[%s264 + $0xc0] sm:$0xff] %v558
      %602 = vst [vmem:[%s264 + $0xc8] sm:$0xff] %v560
      %603 = vst [vmem:[%s264 + $0xd0] sm:$0xff] %v563
      %604 = vst [vmem:[%s264 + $0xd8] sm:$0xff] %v565
      %605 = vst [vmem:[%s264 + $0xe0] sm:$0xff] %v568
      %606 = vst [vmem:[%s264 + $0xe8] sm:$0xff] %v570
      %607 = vst [vmem:[%s264 + $0xf0] sm:$0xff] %v573
      %608 = vst [vmem:[%s264 + $0xf8] sm:$0xff] %v575
      %v609 = vadd.f32 %v498, %v500
      %v610 = vadd.f32 %v609, %v503
      %v611 = vadd.f32 %v610, %v505
      %v612 = vadd.f32 %v611, %v508
      %v613 = vadd.f32 %v612, %v510
      %v614 = vadd.f32 %v613, %v513
      %v615 = vadd.f32 %v614, %v515
      %v616 = vadd.f32 %v615, %v518
      %v617 = vadd.f32 %v616, %v520
      %v618 = vadd.f32 %v617, %v523
      %v619 = vadd.f32 %v618, %v525
      %v620 = vadd.f32 %v619, %v528
      %v621 = vadd.f32 %v620, %v530
      %v622 = vadd.f32 %v621, %v533
      %v623 = vadd.f32 %v622, %v535
      %v624 = vadd.f32 %v623, %v538
      %v625 = vadd.f32 %v624, %v540
      %v626 = vadd.f32 %v625, %v543
      %v627 = vadd.f32 %v626, %v545
      %v628 = vadd.f32 %v627, %v548
      %v629 = vadd.f32 %v628, %v550
      %v630 = vadd.f32 %v629, %v553
      %v631 = vadd.f32 %v630, %v555
      %v632 = vadd.f32 %v631, %v558
      %v633 = vadd.f32 %v632, %v560
      %v634 = vadd.f32 %v633, %v563
      %v635 = vadd.f32 %v634, %v565
      %v636 = vadd.f32 %v635, %v568
      %v637 = vadd.f32 %v636, %v570
      %v638 = vadd.f32 %v637, %v573
      %v639 = vadd.f32 %v638, %v575
      %v640 = vrot.slane %v639, 4
      %v641 = vadd.f32 %v639, %v640
      %v642 = vrot.slane %v641, 2
      %v643 = vadd.f32 %v641, %v642
      %v644 = vrot.slane %v643, 1
      %v645 = vadd.f32 %v643, %v644
      %646 = vst [vmem:[%s268] sm:$0x1] %v645
      %v647 = vmul.f32 %v498, %v498
      %v648 = vmul.f32 %v500, %v500
      %v649 = vmul.f32 %v503, %v503
      %v650 = vmul.f32 %v505, %v505
      %v651 = vmul.f32 %v508, %v508
      %v652 = vmul.f32 %v510, %v510
      %v653 = vmul.f32 %v513, %v513
      %v654 = vmul.f32 %v515, %v515
      %v655 = vmul.f32 %v518, %v518
      %v656 = vmul.f32 %v520, %v520
      %v657 = vmul.f32 %v523, %v523
      %v658 = vmul.f32 %v525, %v525
      %v659 = vmul.f32 %v528, %v528
      %v660 = vmul.f32 %v530, %v530
      %v661 = vmul.f32 %v533, %v533
      %v662 = vmul.f32 %v535, %v535
      %v663 = vmul.f32 %v538, %v538
      %v664 = vmul.f32 %v540, %v540
      %v665 = vmul.f32 %v543, %v543
      %v666 = vmul.f32 %v545, %v545
      %v667 = vmul.f32 %v548, %v548
      %v668 = vmul.f32 %v550, %v550
      %v669 = vmul.f32 %v553, %v553
      %v670 = vmul.f32 %v555, %v555
      %v671 = vmul.f32 %v558, %v558
      %v672 = vmul.f32 %v560, %v560
      %v673 = vmul.f32 %v563, %v563
      %v674 = vmul.f32 %v565, %v565
      %v675 = vmul.f32 %v568, %v568
      %v676 = vmul.f32 %v570, %v570
      %v677 = vmul.f32 %v573, %v573
      %v678 = vmul.f32 %v575, %v575
      %v679 = vadd.f32 %v647, %v648
      %v680 = vadd.f32 %v679, %v649
      %v681 = vadd.f32 %v680, %v650
      %v682 = vadd.f32 %v681, %v651
      %v683 = vadd.f32 %v682, %v652
      %v684 = vadd.f32 %v683, %v653
      %v685 = vadd.f32 %v684, %v654
      %v686 = vadd.f32 %v685, %v655
      %v687 = vadd.f32 %v686, %v656
      %v688 = vadd.f32 %v687, %v657
      %v689 = vadd.f32 %v688, %v658
      %v690 = vadd.f32 %v689, %v659
      %v691 = vadd.f32 %v690, %v660
      %v692 = vadd.f32 %v691, %v661
      %v693 = vadd.f32 %v692, %v662
      %v694 = vadd.f32 %v693, %v663
      %v695 = vadd.f32 %v694, %v664
      %v696 = vadd.f32 %v695, %v665
      %v697 = vadd.f32 %v696, %v666
      %v698 = vadd.f32 %v697, %v667
      %v699 = vadd.f32 %v698, %v668
      %v700 = vadd.f32 %v699, %v669
      %v701 = vadd.f32 %v700, %v670
      %v702 = vadd.f32 %v701, %v671
      %v703 = vadd.f32 %v702, %v672
      %v704 = vadd.f32 %v703, %v673
      %v705 = vadd.f32 %v704, %v674
      %v706 = vadd.f32 %v705, %v675
      %v707 = vadd.f32 %v706, %v676
      %v708 = vadd.f32 %v707, %v677
      %v709 = vadd.f32 %v708, %v678
      %v710 = vrot.slane %v709, 4
      %v711 = vadd.f32 %v709, %v710
      %v712 = vrot.slane %v711, 2
      %v713 = vadd.f32 %v711, %v712
      %v714 = vrot.slane %v713, 1
      %v715 = vadd.f32 %v713, %v714
      %716 = vst [vmem:[%s271] sm:$0x1] %v715
      %s717 = smul.u32 32, %s18
      %p718 = scmp.lt.s32.totalorder %s717, 63
      %s719 = scalar_select %p718, %s717, 63
      %s720 = smul.addr %s719, 8
      %s721 = scalar_lea.vmem %s4, %s720
      %p722 = scmp.lt.s32.totalorder %s18, 1
      %s723 = scalar_select %p722, %s18, 1
      %s724 = scalar_lea.vmem %s5, %s723
      %p725 = scmp.lt.s32.totalorder %s18, 1
      %s726 = scalar_select %p725, %s18, 1
      %s727 = scalar_lea.vmem %s6, %s726
      // Predicated region
      $region37: #{bottleneck_forward.7} parent=35 // pred_check
        %p728 = pneg %p125
      $region38: #{bottleneck_forward.7} parent=35 // pred_check_branch
        %730 = sbr.rel (%p728) target = $region40
      $region39: #{bottleneck_forward.7} parent=35 // pred_region
        %s731 = smul.u32 32, %s18
      $region40: #{bottleneck_forward.7} parent=35 // pred_fallthru
        _
      // Predicated region
      $region41: #{bottleneck_forward.7} parent=35 // pred_check
        %p732 = pneg %p151
      $region42: #{bottleneck_forward.7} parent=35 // pred_check_branch
        %734 = sbr.rel (%p732) target = $region44
      $region43: #{bottleneck_forward.7} parent=35 // pred_region
        _
      $region44: #{bottleneck_forward.7} parent=35 // pred_fallthru
        _
      // Predicated region
      $region45: #{bottleneck_forward.7} parent=35 // pred_check
        %p735 = pneg %p177
      $region46: #{bottleneck_forward.7} parent=35 // pred_check_branch
        %737 = sbr.rel (%p735) target = $region48
      $region47: #{bottleneck_forward.7} parent=35 // pred_region
        _
      $region48: #{bottleneck_forward.7} parent=35 // pred_fallthru
        _
    $region36: #{bottleneck_forward.7} parent=5 // pred_fallthru
      _
    %p738 = scmp.le.s32.totalorder 2, %s13
    // Predicated region
    $region49: #{bottleneck_forward.7} parent=5 // pred_check
      %p739 = pneg %p738
    $region50: #{bottleneck_forward.7} parent=5 // pred_check_branch
      %741 = sbr.rel (%p739) target = $region52
    $region51: #{bottleneck_forward.7} parent=5 // pred_region
      %s742 = ssub.s32 %s13, 2
      // Predicated region
      $region53: #{bottleneck_forward.7} parent=51 // pred_check
        %p743 = pneg %p131
      $region54: #{bottleneck_forward.7} parent=51 // pred_check_branch
        %745 = sbr.rel (%p743) target = $region56
      $region55: #{bottleneck_forward.7} parent=51 // pred_region
        %s746 = smul.u32 32, %s19
        %p747 = scmp.lt.s32.totalorder %s746, 63
        %s748 = scalar_select %p747, %s746, 63
        %s749 = smul.addr %s748, 8
        %s750 = scalar_lea.vmem %s4, %s749
      $region56: #{bottleneck_forward.7} parent=51 // pred_fallthru
        _
      // Predicated region
      $region57: #{bottleneck_forward.7} parent=51 // pred_check
        %p751 = pneg %p157
      $region58: #{bottleneck_forward.7} parent=51 // pred_check_branch
        %753 = sbr.rel (%p751) target = $region60
      $region59: #{bottleneck_forward.7} parent=51 // pred_region
        %p754 = scmp.lt.s32.totalorder %s19, 1
        %s755 = scalar_select %p754, %s19, 1
        %s756 = scalar_lea.vmem %s5, %s755
      $region60: #{bottleneck_forward.7} parent=51 // pred_fallthru
        _
      // Predicated region
      $region61: #{bottleneck_forward.7} parent=51 // pred_check
        %p757 = pneg %p183
      $region62: #{bottleneck_forward.7} parent=51 // pred_check_branch
        %759 = sbr.rel (%p757) target = $region64
      $region63: #{bottleneck_forward.7} parent=51 // pred_region
        %p760 = scmp.lt.s32.totalorder %s19, 1
        %s761 = scalar_select %p760, %s19, 1
        %s762 = scalar_lea.vmem %s6, %s761
      $region64: #{bottleneck_forward.7} parent=51 // pred_fallthru
        _
    $region52: #{bottleneck_forward.7} parent=5 // pred_fallthru
      _
  $region6: #{bottleneck_forward.7} parent=0 // loop_footer
    %s17 = sadd.s32 1, %s13
  $region7: #{bottleneck_forward.7} parent=0 // loop_footer_branch
    %12 = sbr.rel target = $region3
  $region8: #{bottleneck_forward.7} parent=0 // loop_exit
    _

// kernel: bottleneck_forward.6
$region0: #{bottleneck_forward.6}
  #allocation0 [shape = 'u32[]', space=smem, size = 0x4, offset = 0x4, fixed_abs, tag = 'smem constant byte address 0x4 - core index']
  #allocation1 [shape = 'u32[72,128]{1,0:T(1,128)}', space=vmem, size = 0x9000, scoped, tag = 'internal scratch']
  #allocation2 [shape = 'f32[342,128]{1,0:T(8,128)}', space=vmem, size = 0x2b000, scoped, tag = 'scratch operand']
  #allocation3 [shape = 'f32[288,128]{1,0:T(8,128)}', space=vmem, size = 0x24000, scoped, tag = 'scratch operand']
  %s0 = inlined_call_operand.vmem [shape: f32[1,128], index: 0, kind: input, shape index: {}]
  %s1 = inlined_call_operand.vmem [shape: f32[1,128], index: 1, kind: input, shape index: {}]
  %s2 = inlined_call_operand.vmem [shape: f32[288,1], index: 2, kind: input, shape index: {}]
  %s3 = inlined_call_operand.vmem [shape: f32[512,128], index: 3, kind: input, shape index: {}]
  %s4 = inlined_call_operand.vmem [shape: bf16[9,128,128], index: 4, kind: input, shape index: {}]
  %s5 = inlined_call_operand.vmem [shape: f32[512,128], index: 5, kind: output, shape index: {0}]
  %s6 = inlined_call_operand.vmem [shape: f32[2,1,128], index: 6, kind: output, shape index: {1}]
  %s7 = inlined_call_operand.vmem [shape: f32[2,1,128], index: 7, kind: output, shape index: {2}]
  %8 = xla_tuple %s5, %s6, %s7
  %s9 = sld [smem:[#allocation0]]
  $region69: #{bottleneck_forward.6} parent=0
    _
  %s11 = ssub.s32 1, %s9
  %s12 = scalar_select 0, %s11, %s9
  loop: start=0, step=1, limit=4
  $region2: #{bottleneck_forward.6} parent=0 // loop_pre_header
    _
  $region3: #{bottleneck_forward.6} parent=0 // loop_header
    %s14 = sphi 0, %s18
    %p15 = scmp.ge.s32.totalorder %s14, 4
    %s22 = sphi 0, %s22
    %s24 = sphi 0, %s22
    %s25 = sphi 0, %s24
    %s39 = sphi 0, %s25
    %s43 = sphi 0, %s43
    %s45 = sphi 0, %s43
    %s46 = sphi 0, %s45
    %s60 = sphi 0, %s46
    %s64 = sphi 0, %s64
    %s66 = sphi 0, %s64
    %s67 = sphi 0, %s66
    %s81 = sphi 0, %s67
    %s87 = sphi 0, %s89
    %s90 = sphi 0, %s87
    %s91 = sphi 0, %s90
    %s107 = sphi 0, %s91
    %s111 = sphi 0, %s111
    %s113 = sphi 0, %s111
    %s114 = sphi 0, %s113
    %s128 = sphi 0, %s114
    %s134 = sphi 0, %s136
    %s137 = sphi 0, %s134
    %s138 = sphi 0, %s137
    %s154 = sphi 0, %s138
    %s160 = sphi 0, %s162
    %s163 = sphi 0, %s160
    %s164 = sphi 0, %s163
    %s180 = sphi 0, %s164
    %s186 = sphi 0, %s188
    %s189 = sphi 0, %s186
    %s190 = sphi 0, %s189
    %s206 = sphi 0, %s190
  $region4: #{bottleneck_forward.6} parent=0 // loop_header_branch
    %17 = sbr.rel (%p15) target = $region8
  $region5: #{bottleneck_forward.6} parent=0 // loop_body
    %s19 = ssub.s32 %s14, 1
    %s20 = ssub.s32 %s14, 2
    %s21 = sadd.s32 %s14, 1
    %s23 = sadd.s32 %s22, 1
    %p26 = scmp.eq.s32.totalorder %s14, 1
    %p27 = scmp.ne.s32.totalorder %s22, %s24
    %p28 = scmp.eq.s32.totalorder %s14, 0
    %p29 = por %p27, %p28
    %p30 = scmp.ne.s32.totalorder %s22, %s24
    %p31 = scmp.eq.s32.totalorder %s19, 1
    %p32 = por %p30, %p31
    %p33 = scmp.ne.s32.totalorder %s24, %s25
    %p34 = scmp.eq.s32.totalorder %s19, 0
    %p35 = por %p33, %p34
    %p36 = scmp.ne.s32.totalorder %s24, %s25
    %p37 = scmp.eq.s32.totalorder %s20, 1
    %p38 = por %p36, %p37
    %p40 = scmp.ne.s32.totalorder %s25, %s39
    %p41 = scmp.eq.s32.totalorder %s20, 0
    %p42 = por %p40, %p41
    %s44 = sadd.s32 %s43, 1
    %p47 = scmp.eq.s32.totalorder %s14, 1
    %p48 = scmp.ne.s32.totalorder %s43, %s45
    %p49 = scmp.eq.s32.totalorder %s14, 0
    %p50 = por %p48, %p49
    %p51 = scmp.ne.s32.totalorder %s43, %s45
    %p52 = scmp.eq.s32.totalorder %s19, 1
    %p53 = por %p51, %p52
    %p54 = scmp.ne.s32.totalorder %s45, %s46
    %p55 = scmp.eq.s32.totalorder %s19, 0
    %p56 = por %p54, %p55
    %p57 = scmp.ne.s32.totalorder %s45, %s46
    %p58 = scmp.eq.s32.totalorder %s20, 1
    %p59 = por %p57, %p58
    %p61 = scmp.ne.s32.totalorder %s46, %s60
    %p62 = scmp.eq.s32.totalorder %s20, 0
    %p63 = por %p61, %p62
    %s65 = sadd.s32 %s64, 1
    %p68 = scmp.eq.s32.totalorder %s14, 1
    %p69 = scmp.ne.s32.totalorder %s64, %s66
    %p70 = scmp.eq.s32.totalorder %s14, 0
    %p71 = por %p69, %p70
    %p72 = scmp.ne.s32.totalorder %s64, %s66
    %p73 = scmp.eq.s32.totalorder %s19, 1
    %p74 = por %p72, %p73
    %p75 = scmp.ne.s32.totalorder %s66, %s67
    %p76 = scmp.eq.s32.totalorder %s19, 0
    %p77 = por %p75, %p76
    %p78 = scmp.ne.s32.totalorder %s66, %s67
    %p79 = scmp.eq.s32.totalorder %s20, 1
    %p80 = por %p78, %p79
    %p82 = scmp.ne.s32.totalorder %s67, %s81
    %p83 = scmp.eq.s32.totalorder %s20, 0
    %p84 = por %p82, %p83
    %s85 = ssub.s32 %s14, %s21
    %p86 = scmp.eq.s32.totalorder %s85, 0
    %s88 = sadd.s32 %s87, 1
    %s89 = scalar_select %p86, %s87, %s88
    %p92 = pneg %p86
    %p93 = scmp.eq.s32.totalorder %s14, 1
    %p94 = por %p92, %p93
    %p95 = scmp.ne.s32.totalorder %s87, %s90
    %p96 = scmp.eq.s32.totalorder %s14, 0
    %p97 = por %p95, %p96
    %p98 = scmp.ne.s32.totalorder %s87, %s90
    %p99 = scmp.eq.s32.totalorder %s19, 1
    %p100 = por %p98, %p99
    %p101 = scmp.ne.s32.totalorder %s90, %s91
    %p102 = scmp.eq.s32.totalorder %s19, 0
    %p103 = por %p101, %p102
    %p104 = scmp.ne.s32.totalorder %s90, %s91
    %p105 = scmp.eq.s32.totalorder %s20, 1
    %p106 = por %p104, %p105
    %p108 = scmp.ne.s32.totalorder %s91, %s107
    %p109 = scmp.eq.s32.totalorder %s20, 0
    %p110 = por %p108, %p109
    %s112 = sadd.s32 %s111, 1
    %p115 = scmp.eq.s32.totalorder %s14, 1
    %p116 = scmp.ne.s32.totalorder %s111, %s113
    %p117 = scmp.eq.s32.totalorder %s14, 0
    %p118 = por %p116, %p117
    %p119 = scmp.ne.s32.totalorder %s111, %s113
    %p120 = scmp.eq.s32.totalorder %s19, 1
    %p121 = por %p119, %p120
    %p122 = scmp.ne.s32.totalorder %s113, %s114
    %p123 = scmp.eq.s32.totalorder %s19, 0
    %p124 = por %p122, %p123
    %p125 = scmp.ne.s32.totalorder %s113, %s114
    %p126 = scmp.eq.s32.totalorder %s20, 1
    %p127 = por %p125, %p126
    %p129 = scmp.ne.s32.totalorder %s114, %s128
    %p130 = scmp.eq.s32.totalorder %s20, 0
    %p131 = por %p129, %p130
    %s132 = ssub.s32 %s14, %s21
    %p133 = scmp.eq.s32.totalorder %s132, 0
    %s135 = sadd.s32 %s134, 1
    %s136 = scalar_select %p133, %s134, %s135
    %p139 = pneg %p133
    %p140 = scmp.eq.s32.totalorder %s14, 1
    %p141 = por %p139, %p140
    %p142 = scmp.ne.s32.totalorder %s134, %s137
    %p143 = scmp.eq.s32.totalorder %s14, 0
    %p144 = por %p142, %p143
    %p145 = scmp.ne.s32.totalorder %s134, %s137
    %p146 = scmp.eq.s32.totalorder %s19, 1
    %p147 = por %p145, %p146
    %p148 = scmp.ne.s32.totalorder %s137, %s138
    %p149 = scmp.eq.s32.totalorder %s19, 0
    %p150 = por %p148, %p149
    %p151 = scmp.ne.s32.totalorder %s137, %s138
    %p152 = scmp.eq.s32.totalorder %s20, 1
    %p153 = por %p151, %p152
    %p155 = scmp.ne.s32.totalorder %s138, %s154
    %p156 = scmp.eq.s32.totalorder %s20, 0
    %p157 = por %p155, %p156
    %s158 = ssub.s32 %s14, %s21
    %p159 = scmp.eq.s32.totalorder %s158, 0
    %s161 = sadd.s32 %s160, 1
    %s162 = scalar_select %p159, %s160, %s161
    %p165 = pneg %p159
    %p166 = scmp.eq.s32.totalorder %s14, 1
    %p167 = por %p165, %p166
    %p168 = scmp.ne.s32.totalorder %s160, %s163
    %p169 = scmp.eq.s32.totalorder %s14, 0
    %p170 = por %p168, %p169
    %p171 = scmp.ne.s32.totalorder %s160, %s163
    %p172 = scmp.eq.s32.totalorder %s19, 1
    %p173 = por %p171, %p172
    %p174 = scmp.ne.s32.totalorder %s163, %s164
    %p175 = scmp.eq.s32.totalorder %s19, 0
    %p176 = por %p174, %p175
    %p177 = scmp.ne.s32.totalorder %s163, %s164
    %p178 = scmp.eq.s32.totalorder %s20, 1
    %p179 = por %p177, %p178
    %p181 = scmp.ne.s32.totalorder %s164, %s180
    %p182 = scmp.eq.s32.totalorder %s20, 0
    %p183 = por %p181, %p182
    %s184 = ssub.s32 %s14, %s21
    %p185 = scmp.eq.s32.totalorder %s184, 0
    %s187 = sadd.s32 %s186, 1
    %s188 = scalar_select %p185, %s186, %s187
    %p191 = pneg %p185
    %p192 = scmp.eq.s32.totalorder %s14, 1
    %p193 = por %p191, %p192
    %p194 = scmp.ne.s32.totalorder %s186, %s189
    %p195 = scmp.eq.s32.totalorder %s14, 0
    %p196 = por %p194, %p195
    %p197 = scmp.ne.s32.totalorder %s186, %s189
    %p198 = scmp.eq.s32.totalorder %s19, 1
    %p199 = por %p197, %p198
    %p200 = scmp.ne.s32.totalorder %s189, %s190
    %p201 = scmp.eq.s32.totalorder %s19, 0
    %p202 = por %p200, %p201
    %p203 = scmp.ne.s32.totalorder %s189, %s190
    %p204 = scmp.eq.s32.totalorder %s20, 1
    %p205 = por %p203, %p204
    %p207 = scmp.ne.s32.totalorder %s190, %s206
    %p208 = scmp.eq.s32.totalorder %s20, 0
    %p209 = por %p207, %p208
    %p210 = scmp.le.s32.totalorder 1, %s14
    %p211 = scmp.lt.s32.totalorder %s14, 3
    %p212 = pnand %p210, %p211
    %p213 = pneg %p212
    // Predicated region
    $region9: #{bottleneck_forward.6} parent=5 // pred_check
      _
    $region10: #{bottleneck_forward.6} parent=5 // pred_check_branch
      %215 = sbr.rel (%p212) target = $region12
    $region11: #{bottleneck_forward.6} parent=5 // pred_region
      %s216 = ssub.s32 %s14, 1
      // Predicated region
      $region13: #{bottleneck_forward.6} parent=11 // pred_check
        %p217 = pneg %p35
      $region14: #{bottleneck_forward.6} parent=11 // pred_check_branch
        %219 = sbr.rel (%p217) target = $region16
      $region15: #{bottleneck_forward.6} parent=11 // pred_region
        _
      $region16: #{bottleneck_forward.6} parent=11 // pred_fallthru
        _
      // Predicated region
      $region17: #{bottleneck_forward.6} parent=11 // pred_check
        %p220 = pneg %p56
      $region18: #{bottleneck_forward.6} parent=11 // pred_check_branch
        %222 = sbr.rel (%p220) target = $region20
      $region19: #{bottleneck_forward.6} parent=11 // pred_region
        _
      $region20: #{bottleneck_forward.6} parent=11 // pred_fallthru
        _
      // Predicated region
      $region21: #{bottleneck_forward.6} parent=11 // pred_check
        %p223 = pneg %p77
      $region22: #{bottleneck_forward.6} parent=11 // pred_check_branch
        %225 = sbr.rel (%p223) target = $region24
      $region23: #{bottleneck_forward.6} parent=11 // pred_region
        _
      $region24: #{bottleneck_forward.6} parent=11 // pred_fallthru
        _
      // Predicated region
      $region25: #{bottleneck_forward.6} parent=11 // pred_check
        %p226 = pneg %p124
      $region26: #{bottleneck_forward.6} parent=11 // pred_check_branch
        %228 = sbr.rel (%p226) target = $region28
      $region27: #{bottleneck_forward.6} parent=11 // pred_region
        _
      $region28: #{bottleneck_forward.6} parent=11 // pred_fallthru
        _
    $region12: #{bottleneck_forward.6} parent=5 // pred_fallthru
      _
    %p229 = scmp.lt.s32.totalorder %s14, 2
    // Predicated region
    $region29: #{bottleneck_forward.6} parent=5 // pred_check
      %p230 = pneg %p229
    $region30: #{bottleneck_forward.6} parent=5 // pred_check_branch
      %232 = sbr.rel (%p230) target = $region32
    $region31: #{bottleneck_forward.6} parent=5 // pred_region
      // Predicated region
      $region33: #{bottleneck_forward.6} parent=31 // pred_check
        %p233 = pneg %p97
      $region34: #{bottleneck_forward.6} parent=31 // pred_check_branch
        %235 = sbr.rel (%p233) target = $region36
      $region35: #{bottleneck_forward.6} parent=31 // pred_region
        %s236 = smul.u32 32, %s14
        %p237 = scmp.lt.s32.totalorder %s236, 63
        %s238 = scalar_select %p237, %s236, 63
        %s239 = smul.addr %s238, 8
        %s240 = scalar_lea.vmem %s3, %s239
        %s241 = smul.u32 32, %s14
      $region36: #{bottleneck_forward.6} parent=31 // pred_fallthru
        _
    $region32: #{bottleneck_forward.6} parent=5 // pred_fallthru
      _
    %p242 = scmp.le.s32.totalorder 1, %s14
    %p243 = scmp.lt.s32.totalorder %s14, 3
    %p244 = pnand %p242, %p243
    %p245 = pneg %p244
    // Predicated region
    $region37: #{bottleneck_forward.6} parent=5 // pred_check
      _
    $region38: #{bottleneck_forward.6} parent=5 // pred_check_branch
      %247 = sbr.rel (%p244) target = $region40
    $region39: #{bottleneck_forward.6} parent=5 // pred_region
      %s248 = ssub.s32 %s14, 1
      %p249 = pneg %p35
      %p250 = pneg %p32
      %p251 = pneg %p56
      %p252 = pneg %p53
      %p253 = pneg %p77
      %p254 = pneg %p74
      %s255 = smul.u32 32, %s19
      %p256 = scmp.lt.s32.totalorder %s255, 63
      %s257 = scalar_select %p256, %s255, 63
      %s258 = smul.addr %s257, 8
      %s259 = scalar_lea.vmem %s3, %s258
      %p260 = pneg %p103
      %p261 = pneg %p100
      %p262 = pneg %p124
      %p263 = pneg %p121
      %p264 = pneg %p150
      %p265 = pneg %p147
      %s266 = smul.u32 32, %s19
      %p267 = scmp.lt.s32.totalorder %s266, 63
      %s268 = scalar_select %p267, %s266, 63
      %s269 = smul.addr %s268, 8
      %s270 = scalar_lea.vmem %s5, %s269
      %p271 = pneg %p176
      %p272 = pneg %p173
      %p273 = scmp.lt.s32.totalorder %s19, 1
      %s274 = scalar_select %p273, %s19, 1
      %s275 = scalar_lea.vmem %s6, %s274
      %p276 = pneg %p202
      %p277 = pneg %p199
      %p278 = scmp.lt.s32.totalorder %s19, 1
      %s279 = scalar_select %p278, %s19, 1
      %s280 = scalar_lea.vmem %s7, %s279
      %s281 = smul.u32 32, %s19
      %p282 = scmp.lt.s32.totalorder %s281, 63
      %s283 = scalar_select %p282, %s281, 63
      %s284 = smul.addr %s283, 8
      %s285 = scalar_lea.vmem %s3, %s284
      %s286 = smul.u32 32, %s19
      %s287 = smul.u32 32, %s19
      %p288 = scmp.lt.s32.totalorder %s287, 63
      %s289 = scalar_select %p288, %s287, 63
      %s290 = smul.addr %s289, 8
      %s291 = scalar_lea.vmem %s5, %s290
      %s292 = smul.u32 32, %s19
      %p293 = scmp.lt.s32.totalorder %s19, 1
      %s294 = scalar_select %p293, %s19, 1
      %s295 = scalar_lea.vmem %s6, %s294
      %p296 = scmp.lt.s32.totalorder %s19, 1
      %s297 = scalar_select %p296, %s19, 1
      %s298 = scalar_lea.vmem %s7, %s297
      %v299 = vld [vmem:[%s285] sm:$0xff]
      %v300 = vld [vmem:[%s285 + $0x8] sm:$0xff]
      %v301 = vld [vmem:[%s285 + $0x10] sm:$0xff]
      %v302 = vld [vmem:[%s285 + $0x18] sm:$0xff]
      %v303 = vld [vmem:[%s285 + $0x20] sm:$0xff]
      %v304 = vld [vmem:[%s285 + $0x28] sm:$0xff]
      %v305 = vld [vmem:[%s285 + $0x30] sm:$0xff]
      %v306 = vld [vmem:[%s285 + $0x38] sm:$0xff]
      %v307 = vld [vmem:[%s285 + $0x40] sm:$0xff]
      %v308 = vld [vmem:[%s285 + $0x48] sm:$0xff]
      %v309 = vld [vmem:[%s285 + $0x50] sm:$0xff]
      %v310 = vld [vmem:[%s285 + $0x58] sm:$0xff]
      %v311 = vld [vmem:[%s285 + $0x60] sm:$0xff]
      %v312 = vld [vmem:[%s285 + $0x68] sm:$0xff]
      %v313 = vld [vmem:[%s285 + $0x70] sm:$0xff]
      %v314 = vld [vmem:[%s285 + $0x78] sm:$0xff]
      %v315 = vld [vmem:[%s285 + $0x80] sm:$0xff]
      %v316 = vld [vmem:[%s285 + $0x88] sm:$0xff]
      %v317 = vld [vmem:[%s285 + $0x90] sm:$0xff]
      %v318 = vld [vmem:[%s285 + $0x98] sm:$0xff]
      %v319 = vld [vmem:[%s285 + $0xa0] sm:$0xff]
      %v320 = vld [vmem:[%s285 + $0xa8] sm:$0xff]
      %v321 = vld [vmem:[%s285 + $0xb0] sm:$0xff]
      %v322 = vld [vmem:[%s285 + $0xb8] sm:$0xff]
      %v323 = vld [vmem:[%s285 + $0xc0] sm:$0xff]
      %v324 = vld [vmem:[%s285 + $0xc8] sm:$0xff]
      %v325 = vld [vmem:[%s285 + $0xd0] sm:$0xff]
      %v326 = vld [vmem:[%s285 + $0xd8] sm:$0xff]
      %v327 = vld [vmem:[%s285 + $0xe0] sm:$0xff]
      %v328 = vld [vmem:[%s285 + $0xe8] sm:$0xff]
      %v329 = vld [vmem:[%s285 + $0xf0] sm:$0xff]
      %v330 = vld [vmem:[%s285 + $0xf8] sm:$0xff]
      %v331 = vld [vmem:[%s0] sm:$0x1]
      %v333 = vperm.slane %v331, 0
      %v335 = vmul.f32 %v299, %v333
      %v336 = vmul.f32 %v300, %v333
      %v337 = vmul.f32 %v301, %v333
      %v338 = vmul.f32 %v302, %v333
      %v339 = vmul.f32 %v303, %v333
      %v340 = vmul.f32 %v304, %v333
      %v341 = vmul.f32 %v305, %v333
      %v342 = vmul.f32 %v306, %v333
      %v343 = vmul.f32 %v307, %v333
      %v344 = vmul.f32 %v308, %v333
      %v345 = vmul.f32 %v309, %v333
      %v346 = vmul.f32 %v310, %v333
      %v347 = vmul.f32 %v311, %v333
      %v348 = vmul.f32 %v312, %v333
      %v349 = vmul.f32 %v313, %v333
      %v350 = vmul.f32 %v314, %v333
      %v351 = vmul.f32 %v315, %v333
      %v352 = vmul.f32 %v316, %v333
      %v353 = vmul.f32 %v317, %v333
      %v354 = vmul.f32 %v318, %v333
      %v355 = vmul.f32 %v319, %v333
      %v356 = vmul.f32 %v320, %v333
      %v357 = vmul.f32 %v321, %v333
      %v358 = vmul.f32 %v322, %v333
      %v359 = vmul.f32 %v323, %v333
      %v360 = vmul.f32 %v324, %v333
      %v361 = vmul.f32 %v325, %v333
      %v362 = vmul.f32 %v326, %v333
      %v363 = vmul.f32 %v327, %v333
      %v364 = vmul.f32 %v328, %v333
      %v365 = vmul.f32 %v329, %v333
      %v366 = vmul.f32 %v330, %v333
      %v367 = vld [vmem:[%s1] sm:$0x1]
      %v369 = vperm.slane %v367, 0
      %v371 = vadd.f32 %v335, %v369
      %v372 = vadd.f32 %v336, %v369
      %v373 = vadd.f32 %v337, %v369
      %v374 = vadd.f32 %v338, %v369
      %v375 = vadd.f32 %v339, %v369
      %v376 = vadd.f32 %v340, %v369
      %v377 = vadd.f32 %v341, %v369
      %v378 = vadd.f32 %v342, %v369
      %v379 = vadd.f32 %v343, %v369
      %v380 = vadd.f32 %v344, %v369
      %v381 = vadd.f32 %v345, %v369
      %v382 = vadd.f32 %v346, %v369
      %v383 = vadd.f32 %v347, %v369
      %v384 = vadd.f32 %v348, %v369
      %v385 = vadd.f32 %v349, %v369
      %v386 = vadd.f32 %v350, %v369
      %v387 = vadd.f32 %v351, %v369
      %v388 = vadd.f32 %v352, %v369
      %v389 = vadd.f32 %v353, %v369
      %v390 = vadd.f32 %v354, %v369
      %v391 = vadd.f32 %v355, %v369
      %v392 = vadd.f32 %v356, %v369
      %v393 = vadd.f32 %v357, %v369
      %v394 = vadd.f32 %v358, %v369
      %v395 = vadd.f32 %v359, %v369
      %v396 = vadd.f32 %v360, %v369
      %v397 = vadd.f32 %v361, %v369
      %v398 = vadd.f32 %v362, %v369
      %v399 = vadd.f32 %v363, %v369
      %v400 = vadd.f32 %v364, %v369
      %v401 = vadd.f32 %v365, %v369
      %v402 = vadd.f32 %v366, %v369
      %v403 = vmax.f32 %v371, 0.0
      %v404 = vmax.f32 %v372, 0.0
      %v405 = vmax.f32 %v373, 0.0
      %v406 = vmax.f32 %v374, 0.0
      %v407 = vmax.f32 %v375, 0.0
      %v408 = vmax.f32 %v376, 0.0
      %v409 = vmax.f32 %v377, 0.0
      %v410 = vmax.f32 %v378, 0.0
      %v411 = vmax.f32 %v379, 0.0
      %v412 = vmax.f32 %v380, 0.0
      %v413 = vmax.f32 %v381, 0.0
      %v414 = vmax.f32 %v382, 0.0
      %v415 = vmax.f32 %v383, 0.0
      %v416 = vmax.f32 %v384, 0.0
      %v417 = vmax.f32 %v385, 0.0
      %v418 = vmax.f32 %v386, 0.0
      %v419 = vmax.f32 %v387, 0.0
      %v420 = vmax.f32 %v388, 0.0
      %v421 = vmax.f32 %v389, 0.0
      %v422 = vmax.f32 %v390, 0.0
      %v423 = vmax.f32 %v391, 0.0
      %v424 = vmax.f32 %v392, 0.0
      %v425 = vmax.f32 %v393, 0.0
      %v426 = vmax.f32 %v394, 0.0
      %v427 = vmax.f32 %v395, 0.0
      %v428 = vmax.f32 %v396, 0.0
      %v429 = vmax.f32 %v397, 0.0
      %v430 = vmax.f32 %v398, 0.0
      %v431 = vmax.f32 %v399, 0.0
      %v432 = vmax.f32 %v400, 0.0
      %v433 = vmax.f32 %v401, 0.0
      %v434 = vmax.f32 %v402, 0.0
      %435 = vst [vmem:[#allocation2] sm:$0xff] 0.0
      %436 = vst [vmem:[#allocation2 + $0x8] sm:$0xff] 0.0
      %437 = vst [vmem:[#allocation2 + $0x10] sm:$0xff] 0.0
      %438 = vst [vmem:[#allocation2 + $0x18] sm:$0xff] 0.0
      %439 = vst [vmem:[#allocation2 + $0x20] sm:$0xff] 0.0
      %440 = vst [vmem:[#allocation2 + $0x28] sm:$0xff] 0.0
      %441 = vst [vmem:[#allocation2 + $0x30] sm:$0xff] 0.0
      %442 = vst [vmem:[#allocation2 + $0x38] sm:$0xff] 0.0
      %443 = vst [vmem:[#allocation2 + $0x40] sm:$0xff] 0.0
      %444 = vst [vmem:[#allocation2 + $0x48] sm:$0xff] 0.0
      %445 = vst [vmem:[#allocation2 + $0x50] sm:$0xff] 0.0
      %446 = vst [vmem:[#allocation2 + $0x58] sm:$0xff] 0.0
      %447 = vst [vmem:[#allocation2 + $0x60] sm:$0xff] 0.0
      %448 = vst [vmem:[#allocation2 + $0x68] sm:$0xff] 0.0
      %449 = vst [vmem:[#allocation2 + $0x70] sm:$0xff] 0.0
      %450 = vst [vmem:[#allocation2 + $0x78] sm:$0xff] 0.0
      %451 = vst [vmem:[#allocation2 + $0x80] sm:$0xff] 0.0
      %452 = vst [vmem:[#allocation2 + $0x88] sm:$0xff] 0.0
      %453 = vst [vmem:[#allocation2 + $0x90] sm:$0xff] 0.0
      %454 = vst [vmem:[#allocation2 + $0x98] sm:$0xff] 0.0
      %455 = vst [vmem:[#allocation2 + $0xa0] sm:$0xff] 0.0
      %456 = vst [vmem:[#allocation2 + $0xa8] sm:$0xff] 0.0
      %457 = vst [vmem:[#allocation2 + $0xb0] sm:$0xff] 0.0
      %458 = vst [vmem:[#allocation2 + $0xb8] sm:$0xff] 0.0
      %459 = vst [vmem:[#allocation2 + $0xc0] sm:$0xff] 0.0
      %460 = vst [vmem:[#allocation2 + $0xc8] sm:$0xff] 0.0
      %461 = vst [vmem:[#allocation2 + $0xd0] sm:$0xff] 0.0
      %462 = vst [vmem:[#allocation2 + $0xd8] sm:$0xff] 0.0
      %463 = vst [vmem:[#allocation2 + $0xe0] sm:$0xff] 0.0
      %464 = vst [vmem:[#allocation2 + $0xe8] sm:$0xff] 0.0
      %465 = vst [vmem:[#allocation2 + $0xf0] sm:$0xff] 0.0
      %466 = vst [vmem:[#allocation2 + $0xf8] sm:$0xff] 0.0
      %467 = vst [vmem:[#allocation2 + $0x100] sm:$0xff] 0.0
      %468 = vst [vmem:[#allocation2 + $0x108] sm:$0xff] 0.0
      %469 = vst [vmem:[#allocation2 + $0x110] sm:$0xff] 0.0
      %470 = vst [vmem:[#allocation2 + $0x118] sm:$0xff] 0.0
      %471 = vst [vmem:[#allocation2 + $0x120] sm:$0xff] 0.0
      %472 = vst [vmem:[#allocation2 + $0x128] sm:$0xff] 0.0
      %473 = vst [vmem:[#allocation2 + $0x130] sm:$0xff] 0.0
      %474 = vst [vmem:[#allocation2 + $0x138] sm:$0xff] 0.0
      %475 = vst [vmem:[#allocation2 + $0x140] sm:$0xff] 0.0
      %476 = vst [vmem:[#allocation2 + $0x148] sm:$0xff] 0.0
      %477 = vst [vmem:[#allocation2 + $0x150] sm:$0x3f] 0.0
      %478 = vst [vmem:[#allocation2 + $0x13] sm:$0xff] %v403
      %479 = vst [vmem:[#allocation2 + $0x1b] sm:$0xff] %v404
      %480 = vst [vmem:[#allocation2 + $0x25] sm:$0xff] %v405
      %481 = vst [vmem:[#allocation2 + $0x2d] sm:$0xff] %v406
      %482 = vst [vmem:[#allocation2 + $0x37] sm:$0xff] %v407
      %483 = vst [vmem:[#allocation2 + $0x3f] sm:$0xff] %v408
      %484 = vst [vmem:[#allocation2 + $0x49] sm:$0xff] %v409
      %485 = vst [vmem:[#allocation2 + $0x51] sm:$0xff] %v410
      %486 = vst [vmem:[#allocation2 + $0x5b] sm:$0xff] %v411
      %487 = vst [vmem:[#allocation2 + $0x63] sm:$0xff] %v412
      %488 = vst [vmem:[#allocation2 + $0x6d] sm:$0xff] %v413
      %489 = vst [vmem:[#allocation2 + $0x75] sm:$0xff] %v414
      %490 = vst [vmem:[#allocation2 + $0x7f] sm:$0xff] %v415
      %491 = vst [vmem:[#allocation2 + $0x87] sm:$0xff] %v416
      %492 = vst [vmem:[#allocation2 + $0x91] sm:$0xff] %v417
      %493 = vst [vmem:[#allocation2 + $0x99] sm:$0xff] %v418
      %494 = vst [vmem:[#allocation2 + $0xa3] sm:$0xff] %v419
      %495 = vst [vmem:[#allocation2 + $0xab] sm:$0xff] %v420
      %496 = vst [vmem:[#allocation2 + $0xb5] sm:$0xff] %v421
      %497 = vst [vmem:[#allocation2 + $0xbd] sm:$0xff] %v422
      %498 = vst [vmem:[#allocation2 + $0xc7] sm:$0xff] %v423
      %499 = vst [vmem:[#allocation2 + $0xcf] sm:$0xff] %v424
      %500 = vst [vmem:[#allocation2 + $0xd9] sm:$0xff] %v425
      %501 = vst [vmem:[#allocation2 + $0xe1] sm:$0xff] %v426
      %502 = vst [vmem:[#allocation2 + $0xeb] sm:$0xff] %v427
      %503 = vst [vmem:[#allocation2 + $0xf3] sm:$0xff] %v428
      %504 = vst [vmem:[#allocation2 + $0xfd] sm:$0xff] %v429
      %505 = vst [vmem:[#allocation2 + $0x105] sm:$0xff] %v430
      %506 = vst [vmem:[#allocation2 + $0x10f] sm:$0xff] %v431
      %507 = vst [vmem:[#allocation2 + $0x117] sm:$0xff] %v432
      %508 = vst [vmem:[#allocation2 + $0x121] sm:$0xff] %v433
      %509 = vst [vmem:[#allocation2 + $0x129] sm:$0xff] %v434
      %510 = vst [vmem:[#allocation3] sm:$0xff] 0.0
      %511 = vst [vmem:[#allocation3 + $0x8] sm:$0xff] 0.0
      %512 = vst [vmem:[#allocation3 + $0x10] sm:$0xff] 0.0
      %513 = vst [vmem:[#allocation3 + $0x18] sm:$0xff] 0.0
      %514 = vst [vmem:[#allocation3 + $0x20] sm:$0xff] 0.0
      %515 = vst [vmem:[#allocation3 + $0x28] sm:$0xff] 0.0
      %516 = vst [vmem:[#allocation3 + $0x30] sm:$0xff] 0.0
      %517 = vst [vmem:[#allocation3 + $0x38] sm:$0xff] 0.0
      %518 = vst [vmem:[#allocation3 + $0x40] sm:$0xff] 0.0
      %519 = vst [vmem:[#allocation3 + $0x48] sm:$0xff] 0.0
      %520 = vst [vmem:[#allocation3 + $0x50] sm:$0xff] 0.0
      %521 = vst [vmem:[#allocation3 + $0x58] sm:$0xff] 0.0
      %522 = vst [vmem:[#allocation3 + $0x60] sm:$0xff] 0.0
      %523 = vst [vmem:[#allocation3 + $0x68] sm:$0xff] 0.0
      %524 = vst [vmem:[#allocation3 + $0x70] sm:$0xff] 0.0
      %525 = vst [vmem:[#allocation3 + $0x78] sm:$0xff] 0.0
      %526 = vst [vmem:[#allocation3 + $0x80] sm:$0xff] 0.0
      %527 = vst [vmem:[#allocation3 + $0x88] sm:$0xff] 0.0
      %528 = vst [vmem:[#allocation3 + $0x90] sm:$0xff] 0.0
      %529 = vst [vmem:[#allocation3 + $0x98] sm:$0xff] 0.0
      %530 = vst [vmem:[#allocation3 + $0xa0] sm:$0xff] 0.0
      %531 = vst [vmem:[#allocation3 + $0xa8] sm:$0xff] 0.0
      %532 = vst [vmem:[#allocation3 + $0xb0] sm:$0xff] 0.0
      %533 = vst [vmem:[#allocation3 + $0xb8] sm:$0xff] 0.0
      %534 = vst [vmem:[#allocation3 + $0xc0] sm:$0xff] 0.0
      %535 = vst [vmem:[#allocation3 + $0xc8] sm:$0xff] 0.0
      %536 = vst [vmem:[#allocation3 + $0xd0] sm:$0xff] 0.0
      %537 = vst [vmem:[#allocation3 + $0xd8] sm:$0xff] 0.0
      %538 = vst [vmem:[#allocation3 + $0xe0] sm:$0xff] 0.0
      %539 = vst [vmem:[#allocation3 + $0xe8] sm:$0xff] 0.0
      %540 = vst [vmem:[#allocation3 + $0xf0] sm:$0xff] 0.0
      %541 = vst [vmem:[#allocation3 + $0xf8] sm:$0xff] 0.0
      %542 = vst [vmem:[#allocation3 + $0x100] sm:$0xff] 0.0
      %543 = vst [vmem:[#allocation3 + $0x108] sm:$0xff] 0.0
      %544 = vst [vmem:[#allocation3 + $0x110] sm:$0xff] 0.0
      %545 = vst [vmem:[#allocation3 + $0x118] sm:$0xff] 0.0
      %v546 = vld [vmem:[#allocation2] sm:$0xff]
      %v547 = vld [vmem:[#allocation2 + $0x8] sm:$0xff]
      %v548 = vld [vmem:[#allocation2 + $0x10] sm:$0xff]
      %v549 = vld [vmem:[#allocation2 + $0x18] sm:$0xff]
      %v550 = vld [vmem:[#allocation2 + $0x20] sm:$0xff]
      %v551 = vld [vmem:[#allocation2 + $0x28] sm:$0xff]
      %v552 = vld [vmem:[#allocation2 + $0x30] sm:$0xff]
      %v553 = vld [vmem:[#allocation2 + $0x38] sm:$0xff]
      %v554 = vld [vmem:[#allocation2 + $0x40] sm:$0xff]
      %v555 = vld [vmem:[#allocation2 + $0x48] sm:$0xff]
      %v556 = vld [vmem:[#allocation2 + $0x50] sm:$0xff]
      %v557 = vld [vmem:[#allocation2 + $0x58] sm:$0xff]
      %v558 = vld [vmem:[#allocation2 + $0x60] sm:$0xff]
      %v559 = vld [vmem:[#allocation2 + $0x68] sm:$0xff]
      %v560 = vld [vmem:[#allocation2 + $0x70] sm:$0xff]
      %v561 = vld [vmem:[#allocation2 + $0x78] sm:$0xff]
      %v562 = vld [vmem:[#allocation2 + $0x80] sm:$0xff]
      %v563 = vld [vmem:[#allocation2 + $0x88] sm:$0xff]
      %v564 = vld [vmem:[#allocation2 + $0x90] sm:$0xff]
      %v565 = vld [vmem:[#allocation2 + $0x98] sm:$0xff]
      %v566 = vld [vmem:[#allocation2 + $0xa0] sm:$0xff]
      %v567 = vld [vmem:[#allocation2 + $0xa8] sm:$0xff]
      %v568 = vld [vmem:[#allocation2 + $0xb0] sm:$0xff]
      %v569 = vld [vmem:[#allocation2 + $0xb8] sm:$0xff]
      %v570 = vld [vmem:[#allocation2 + $0xc0] sm:$0xff]
      %v571 = vld [vmem:[#allocation2 + $0xc8] sm:$0xff]
      %v572 = vld [vmem:[#allocation2 + $0xd0] sm:$0xff]
      %v573 = vld [vmem:[#allocation2 + $0xd8] sm:$0xff]
      %v574 = vld [vmem:[#allocation2 + $0xe0] sm:$0xff]
      %v575 = vld [vmem:[#allocation2 + $0xe8] sm:$0xff]
      %v576 = vld [vmem:[#allocation2 + $0xf0] sm:$0xff]
      %v577 = vld [vmem:[#allocation2 + $0xf8] sm:$0xff]
      %v578 = vld [vmem:[#allocation2 + $0x100] sm:$0xff]
      %v579 = vld [vmem:[#allocation2 + $0x108] sm:$0xff]
      %v580 = vld [vmem:[#allocation2 + $0x110] sm:$0xff]
      %v581 = vld [vmem:[#allocation2 + $0x118] sm:$0xff]
      %v582 = vpack.c.bf16 %v547, %v546
      %v583 = vpack.c.bf16 %v549, %v548
      %v584 = vpack.c.bf16 %v551, %v550
      %v585 = vpack.c.bf16 %v553, %v552
      %v586 = vpack.c.bf16 %v555, %v554
      %v587 = vpack.c.bf16 %v557, %v556
      %v588 = vpack.c.bf16 %v559, %v558
      %v589 = vpack.c.bf16 %v561, %v560
      %v590 = vpack.c.bf16 %v563, %v562
      %v591 = vpack.c.bf16 %v565, %v564
      %v592 = vpack.c.bf16 %v567, %v566
      %v593 = vpack.c.bf16 %v569, %v568
      %v594 = vpack.c.bf16 %v571, %v570
      %v595 = vpack.c.bf16 %v573, %v572
      %v596 = vpack.c.bf16 %v575, %v574
      %v597 = vpack.c.bf16 %v577, %v576
      %v598 = vpack.c.bf16 %v579, %v578
      %v599 = vpack.c.bf16 %v581, %v580
      %v600 = vld [vmem:[#allocation3] sm:$0xff]
      %v601 = vld [vmem:[#allocation3 + $0x8] sm:$0xff]
      %v602 = vld [vmem:[#allocation3 + $0x10] sm:$0xff]
      %v603 = vld [vmem:[#allocation3 + $0x18] sm:$0xff]
      %v604 = vld [vmem:[#allocation3 + $0x20] sm:$0xff]
      %v605 = vld [vmem:[#allocation3 + $0x28] sm:$0xff]
      %v606 = vld [vmem:[#allocation3 + $0x30] sm:$0xff]
      %v607 = vld [vmem:[#allocation3 + $0x38] sm:$0xff]
      %v608 = vld [vmem:[#allocation3 + $0x40] sm:$0xff]
      %v609 = vld [vmem:[#allocation3 + $0x48] sm:$0xff]
      %v610 = vld [vmem:[#allocation3 + $0x50] sm:$0xff]
      %v611 = vld [vmem:[#allocation3 + $0x58] sm:$0xff]
      %v612 = vld [vmem:[#allocation3 + $0x60] sm:$0xff]
      %v613 = vld [vmem:[#allocation3 + $0x68] sm:$0xff]
      %v614 = vld [vmem:[#allocation3 + $0x70] sm:$0xff]
      %v615 = vld [vmem:[#allocation3 + $0x78] sm:$0xff]
      %v616 = vld [vmem:[#allocation3 + $0x80] sm:$0xff]
      %v617 = vld [vmem:[#allocation3 + $0x88] sm:$0xff]
      %v618 = vld [vmem:[#allocation3 + $0x90] sm:$0xff]
      %v619 = vld [vmem:[#allocation3 + $0x98] sm:$0xff]
      %v620 = vld [vmem:[#allocation3 + $0xa0] sm:$0xff]
      %v621 = vld [vmem:[#allocation3 + $0xa8] sm:$0xff]
      %v622 = vld [vmem:[#allocation3 + $0xb0] sm:$0xff]
      %v623 = vld [vmem:[#allocation3 + $0xb8] sm:$0xff]
      %v624 = vld [vmem:[#allocation3 + $0xc0] sm:$0xff]
      %v625 = vld [vmem:[#allocation3 + $0xc8] sm:$0xff]
      %v626 = vld [vmem:[#allocation3 + $0xd0] sm:$0xff]
      %v627 = vld [vmem:[#allocation3 + $0xd8] sm:$0xff]
      %v628 = vld [vmem:[#allocation3 + $0xe0] sm:$0xff]
      %v629 = vld [vmem:[#allocation3 + $0xe8] sm:$0xff]
      %v630 = vld [vmem:[#allocation3 + $0xf0] sm:$0xff]
      %v631 = vld [vmem:[#allocation3 + $0xf8] sm:$0xff]
      %v632 = vld [vmem:[#allocation3 + $0x100] sm:$0xff]
      %v633 = vld [vmem:[#allocation3 + $0x108] sm:$0xff]
      %v634 = vld [vmem:[#allocation3 + $0x110] sm:$0xff]
      %v635 = vld [vmem:[#allocation3 + $0x118] sm:$0xff]
      %v636 = vld [vmem:[%s4] sm:$0xf]
      %v637 = vld [vmem:[%s4 + $0x4] sm:$0xf]
      %v638 = vld [vmem:[%s4 + $0x8] sm:$0xf]
      %v639 = vld [vmem:[%s4 + $0xc] sm:$0xf]
      %v640 = vld [vmem:[%s4 + $0x10] sm:$0xf]
      %v641 = vld [vmem:[%s4 + $0x14] sm:$0xf]
      %v642 = vld [vmem:[%s4 + $0x18] sm:$0xf]
      %v643 = vld [vmem:[%s4 + $0x1c] sm:$0xf]
      %v644 = vld [vmem:[%s4 + $0x20] sm:$0xf]
      %v645 = vld [vmem:[%s4 + $0x24] sm:$0xf]
      %v646 = vld [vmem:[%s4 + $0x28] sm:$0xf]
      %v647 = vld [vmem:[%s4 + $0x2c] sm:$0xf]
      %v648 = vld [vmem:[%s4 + $0x30] sm:$0xf]
      %v649 = vld [vmem:[%s4 + $0x34] sm:$0xf]
      %v650 = vld [vmem:[%s4 + $0x38] sm:$0xf]
      %v651 = vld [vmem:[%s4 + $0x3c] sm:$0xf]
      %v668 = vunpack.c.l.b16 %v636
      %v669 = vunpack.c.l.b16 %v637
      %v670 = vunpack.c.l.b16 %v638
      %v671 = vunpack.c.l.b16 %v639
      %v672 = vunpack.c.l.b16 %v640
      %v673 = vunpack.c.l.b16 %v641
      %v674 = vunpack.c.l.b16 %v642
      %v675 = vunpack.c.l.b16 %v643
      %v676 = vunpack.c.l.b16 %v644
      %v677 = vunpack.c.l.b16 %v645
      %v678 = vunpack.c.l.b16 %v646
      %v679 = vunpack.c.l.b16 %v647
      %v680 = vunpack.c.l.b16 %v648
      %v681 = vunpack.c.l.b16 %v649
      %v682 = vunpack.c.l.b16 %v650
      %v683 = vunpack.c.l.b16 %v651
      %v684 = vpack.c.b16 %v669, %v668
      %v685 = vpack.c.b16 %v671, %v670
      %v686 = vpack.c.b16 %v673, %v672
      %v687 = vpack.c.b16 %v675, %v674
      %v688 = vpack.c.b16 %v677, %v676
      %v689 = vpack.c.b16 %v679, %v678
      %v690 = vpack.c.b16 %v681, %v680
      %v691 = vpack.c.b16 %v683, %v682
      %700 = vmatpush.bf16.msra.mxu0 %v691
      %701 = vmatpush.bf16.msra.mxu0 %v690
      %702 = vmatpush.bf16.msra.mxu0 %v689
      %703 = vmatpush.bf16.msra.mxu0 %v688
      %704 = vmatpush.bf16.msra.mxu0 %v687
      %705 = vmatpush.bf16.msra.mxu0 %v686
      %706 = vmatpush.bf16.msra.mxu0 %v685
      %707 = vmatpush.bf16.msra.mxu0 %v684
      %708 = vmatmul.bf16.gmra.mxu0 %v582
      %v709 = vpop.f32.mrf.mxu0
      %v710 = vadd.f32 0.0, %v709
      %v711 = vpop.f32.mrf.mxu0
      %v712 = vadd.f32 0.0, %v711
      %713 = vmatmul.bf16.gmra.mxu0 %v583
      %v714 = vpop.f32.mrf.mxu0
      %v715 = vadd.f32 0.0, %v714
      %v716 = vpop.f32.mrf.mxu0
      %v717 = vadd.f32 0.0, %v716
      %718 = vmatmul.bf16.gmra.mxu0 %v584
      %v719 = vpop.f32.mrf.mxu0
      %v720 = vadd.f32 0.0, %v719
      %v721 = vpop.f32.mrf.mxu0
      %v722 = vadd.f32 0.0, %v721
      %723 = vmatmul.bf16.gmra.mxu0 %v585
      %v724 = vpop.f32.mrf.mxu0
      %v725 = vadd.f32 0.0, %v724
      %v726 = vpop.f32.mrf.mxu0
      %v727 = vadd.f32 0.0, %v726
      %728 = vmatmul.bf16.gmra.mxu0 %v586
      %v729 = vpop.f32.mrf.mxu0
      %v730 = vadd.f32 0.0, %v729
      %v731 = vpop.f32.mrf.mxu0
      %v732 = vadd.f32 0.0, %v731
      %733 = vmatmul.bf16.gmra.mxu0 %v587
      %v734 = vpop.f32.mrf.mxu0
      %v735 = vadd.f32 0.0, %v734
      %v736 = vpop.f32.mrf.mxu0
      %v737 = vadd.f32 0.0, %v736
      %738 = vmatmul.bf16.gmra.mxu0 %v588
      %v739 = vpop.f32.mrf.mxu0
      %v740 = vadd.f32 0.0, %v739
      %v741 = vpop.f32.mrf.mxu0
      %v742 = vadd.f32 0.0, %v741
      %743 = vmatmul.bf16.gmra.mxu0 %v589
      %v744 = vpop.f32.mrf.mxu0
      %v745 = vadd.f32 0.0, %v744
      %v746 = vpop.f32.mrf.mxu0
      %v747 = vadd.f32 0.0, %v746
      %748 = vmatmul.bf16.gmra.mxu0 %v590
      %v749 = vpop.f32.mrf.mxu0
      %v750 = vadd.f32 0.0, %v749
      %v751 = vpop.f32.mrf.mxu0
      %v752 = vadd.f32 0.0, %v751
      %753 = vmatmul.bf16.gmra.mxu0 %v591
      %v754 = vpop.f32.mrf.mxu0
      %v755 = vadd.f32 0.0, %v754
      %v756 = vpop.f32.mrf.mxu0
      %v757 = vadd.f32 0.0, %v756
      %758 = vmatmul.bf16.gmra.mxu0 %v592
      %v759 = vpop.f32.mrf.mxu0
      %v760 = vadd.f32 0.0, %v759
      %v761 = vpop.f32.mrf.mxu0
      %v762 = vadd.f32 0.0, %v761
      %763 = vmatmul.bf16.gmra.mxu0 %v593
      %v764 = vpop.f32.mrf.mxu0
      %v765 = vadd.f32 0.0, %v764
      %v766 = vpop.f32.mrf.mxu0
      %v767 = vadd.f32 0.0, %v766
      %768 = vmatmul.bf16.gmra.mxu0 %v594
      %v769 = vpop.f32.mrf.mxu0
      %v770 = vadd.f32 0.0, %v769
      %v771 = vpop.f32.mrf.mxu0
      %v772 = vadd.f32 0.0, %v771
      %773 = vmatmul.bf16.gmra.mxu0 %v595
      %v774 = vpop.f32.mrf.mxu0
      %v775 = vadd.f32 0.0, %v774
      %v776 = vpop.f32.mrf.mxu0
      %v777 = vadd.f32 0.0, %v776
      %778 = vmatmul.bf16.gmra.mxu0 %v596
      %v779 = vpop.f32.mrf.mxu0
      %v780 = vadd.f32 0.0, %v779
      %v781 = vpop.f32.mrf.mxu0
      %v782 = vadd.f32 0.0, %v781
      %783 = vmatmul.bf16.gmra.mxu0 %v597
      %v784 = vpop.f32.mrf.mxu0
      %v785 = vadd.f32 0.0, %v784
      %v786 = vpop.f32.mrf.mxu0
      %v787 = vadd.f32 0.0, %v786
      %788 = vmatmul.bf16.gmra.mxu0 %v598
      %v789 = vpop.f32.mrf.mxu0
      %v790 = vadd.f32 0.0, %v789
      %v791 = vpop.f32.mrf.mxu0
      %v792 = vadd.f32 0.0, %v791
      %793 = vmatmul.bf16.gmra.mxu0 %v599
      %v794 = vpop.f32.mrf.mxu0
      %v795 = vadd.f32 0.0, %v794
      %v796 = vpop.f32.mrf.mxu0
      %v797 = vadd.f32 0.0, %v796
      %798 = vdwg.mxu0
      %v799 = vadd.f32 %v600, %v710
      %v800 = vadd.f32 %v601, %v712
      %v801 = vadd.f32 %v602, %v715
      %v802 = vadd.f32 %v603, %v717
      %v803 = vadd.f32 %v604, %v720
      %v804 = vadd.f32 %v605, %v722
      %v805 = vadd.f32 %v606, %v725
      %v806 = vadd.f32 %v607, %v727
      %v807 = vadd.f32 %v608, %v730
      %v808 = vadd.f32 %v609, %v732
      %v809 = vadd.f32 %v610, %v735
      %v810 = vadd.f32 %v611, %v737
      %v811 = vadd.f32 %v612, %v740
      %v812 = vadd.f32 %v613, %v742
      %v813 = vadd.f32 %v614, %v745
      %v814 = vadd.f32 %v615, %v747
      %v815 = vadd.f32 %v616, %v750
      %v816 = vadd.f32 %v617, %v752
      %v817 = vadd.f32 %v618, %v755
      %v818 = vadd.f32 %v619, %v757
      %v819 = vadd.f32 %v620, %v760
      %v820 = vadd.f32 %v621, %v762
      %v821 = vadd.f32 %v622, %v765
      %v822 = vadd.f32 %v623, %v767
      %v823 = vadd.f32 %v624, %v770
      %v824 = vadd.f32 %v625, %v772
      %v825 = vadd.f32 %v626, %v775
      %v826 = vadd.f32 %v627, %v777
      %v827 = vadd.f32 %v628, %v780
      %v828 = vadd.f32 %v629, %v782
      %v829 = vadd.f32 %v630, %v785
      %v830 = vadd.f32 %v631, %v787
      %v831 = vadd.f32 %v632, %v790
      %v832 = vadd.f32 %v633, %v792
      %v833 = vadd.f32 %v634, %v795
      %v834 = vadd.f32 %v635, %v797
      %835 = vst [vmem:[#allocation3] sm:$0xff] %v799
      %836 = vst [vmem:[#allocation3 + $0x8] sm:$0xff] %v800
      %837 = vst [vmem:[#allocation3 + $0x10] sm:$0xff] %v801
      %838 = vst [vmem:[#allocation3 + $0x18] sm:$0xff] %v802
      %839 = vst [vmem:[#allocation3 + $0x20] sm:$0xff] %v803
      %840 = vst [vmem:[#allocation3 + $0x28] sm:$0xff] %v804
      %841 = vst [vmem:[#allocation3 + $0x30] sm:$0xff] %v805
      %842 = vst [vmem:[#allocation3 + $0x38] sm:$0xff] %v806
      %843 = vst [vmem:[#allocation3 + $0x40] sm:$0xff] %v807
      %844 = vst [vmem:[#allocation3 + $0x48] sm:$0xff] %v808
      %845 = vst [vmem:[#allocation3 + $0x50] sm:$0xff] %v809
      %846 = vst [vmem:[#allocation3 + $0x58] sm:$0xff] %v810
      %847 = vst [vmem:[#allocation3 + $0x60] sm:$0xff] %v811
      %848 = vst [vmem:[#allocation3 + $0x68] sm:$0xff] %v812
      %849 = vst [vmem:[#allocation3 + $0x70] sm:$0xff] %v813
      %850 = vst [vmem:[#allocation3 + $0x78] sm:$0xff] %v814
      %851 = vst [vmem:[#allocation3 + $0x80] sm:$0xff] %v815
      %852 = vst [vmem:[#allocation3 + $0x88] sm:$0xff] %v816
      %853 = vst [vmem:[#allocation3 + $0x90] sm:$0xff] %v817
      %854 = vst [vmem:[#allocation3 + $0x98] sm:$0xff] %v818
      %855 = vst [vmem:[#allocation3 + $0xa0] sm:$0xff] %v819
      %856 = vst [vmem:[#allocation3 + $0xa8] sm:$0xff] %v820
      %857 = vst [vmem:[#allocation3 + $0xb0] sm:$0xff] %v821
      %858 = vst [vmem:[#allocation3 + $0xb8] sm:$0xff] %v822
      %859 = vst [vmem:[#allocation3 + $0xc0] sm:$0xff] %v823
      %860 = vst [vmem:[#allocation3 + $0xc8] sm:$0xff] %v824
      %861 = vst [vmem:[#allocation3 + $0xd0] sm:$0xff] %v825
      %862 = vst [vmem:[#allocation3 + $0xd8] sm:$0xff] %v826
      %863 = vst [vmem:[#allocation3 + $0xe0] sm:$0xff] %v827
      %864 = vst [vmem:[#allocation3 + $0xe8] sm:$0xff] %v828
      %865 = vst [vmem:[#allocation3 + $0xf0] sm:$0xff] %v829
      %866 = vst [vmem:[#allocation3 + $0xf8] sm:$0xff] %v830
      %867 = vst [vmem:[#allocation3 + $0x100] sm:$0xff] %v831
      %868 = vst [vmem:[#allocation3 + $0x108] sm:$0xff] %v832
      %869 = vst [vmem:[#allocation3 + $0x110] sm:$0xff] %v833
      %870 = vst [vmem:[#allocation3 + $0x118] sm:$0xff] %v834
      %v871 = vld [vmem:[#allocation2 + $0x1] sm:$0xff]
      %v872 = vld [vmem:[#allocation2 + $0x9] sm:$0xff]
      %v873 = vld [vmem:[#allocation2 + $0x11] sm:$0xff]
      %v874 = vld [vmem:[#allocation2 + $0x19] sm:$0xff]
      %v875 = vld [vmem:[#allocation2 + $0x21] sm:$0xff]
      %v876 = vld [vmem:[#allocation2 + $0x29] sm:$0xff]
      %v877 = vld [vmem:[#allocation2 + $0x31] sm:$0xff]
      %v878 = vld [vmem:[#allocation2 + $0x39] sm:$0xff]
      %v879 = vld [vmem:[#allocation2 + $0x41] sm:$0xff]
      %v880 = vld [vmem:[#allocation2 + $0x49] sm:$0xff]
      %v881 = vld [vmem:[#allocation2 + $0x51] sm:$0xff]
      %v882 = vld [vmem:[#allocation2 + $0x59] sm:$0xff]
      %v883 = vld [vmem:[#allocation2 + $0x61] sm:$0xff]
      %v884 = vld [vmem:[#allocation2 + $0x69] sm:$0xff]
      %v885 = vld [vmem:[#allocation2 + $0x71] sm:$0xff]
      %v886 = vld [vmem:[#allocation2 + $0x79] sm:$0xff]
      %v887 = vld [vmem:[#allocation2 + $0x81] sm:$0xff]
      %v888 = vld [vmem:[#allocation2 + $0x89] sm:$0xff]
      %v889 = vld [vmem:[#allocation2 + $0x91] sm:$0xff]
      %v890 = vld [vmem:[#allocation2 + $0x99] sm:$0xff]
      %v891 = vld [vmem:[#allocation2 + $0xa1] sm:$0xff]
      %v892 = vld [vmem:[#allocation2 + $0xa9] sm:$0xff]
      %v893 = vld [vmem:[#allocation2 + $0xb1] sm:$0xff]
      %v894 = vld [vmem:[#allocation2 + $0xb9] sm:$0xff]
      %v895 = vld [vmem:[#allocation2 + $0xc1] sm:$0xff]
      %v896 = vld [vmem:[#allocation2 + $0xc9] sm:$0xff]
      %v897 = vld [vmem:[#allocation2 + $0xd1] sm:$0xff]
      %v898 = vld [vmem:[#allocation2 + $0xd9] sm:$0xff]
      %v899 = vld [vmem:[#allocation2 + $0xe1] sm:$0xff]
      %v900 = vld [vmem:[#allocation2 + $0xe9] sm:$0xff]
      %v901 = vld [vmem:[#allocation2 + $0xf1] sm:$0xff]
      %v902 = vld [vmem:[#allocation2 + $0xf9] sm:$0xff]
      %v903 = vld [vmem:[#allocation2 + $0x101] sm:$0xff]
      %v904 = vld [vmem:[#allocation2 + $0x109] sm:$0xff]
      %v905 = vld [vmem:[#allocation2 + $0x111] sm:$0xff]
      %v906 = vld [vmem:[#allocation2 + $0x119] sm:$0xff]
      %v907 = vpack.c.bf16 %v872, %v871
      %v908 = vpack.c.bf16 %v874, %v873
      %v909 = vpack.c.bf16 %v876, %v875
      %v910 = vpack.c.bf16 %v878, %v877
      %v911 = vpack.c.bf16 %v880, %v879
      %v912 = vpack.c.bf16 %v882, %v881
      %v913 = vpack.c.bf16 %v884, %v883
      %v914 = vpack.c.bf16 %v886, %v885
      %v915 = vpack.c.bf16 %v888, %v887
      %v916 = vpack.c.bf16 %v890, %v889
      %v917 = vpack.c.bf16 %v892, %v891
      %v918 = vpack.c.bf16 %v894, %v893
      %v919 = vpack.c.bf16 %v896, %v895
      %v920 = vpack.c.bf16 %v898, %v897
      %v921 = vpack.c.bf16 %v900, %v899
      %v922 = vpack.c.bf16 %v902, %v901
      %v923 = vpack.c.bf16 %v904, %v903
      %v924 = vpack.c.bf16 %v906, %v905
      %v925 = vld [vmem:[#allocation3] sm:$0xff]
      %v926 = vld [vmem:[#allocation3 + $0x8] sm:$0xff]
      %v927 = vld [vmem:[#allocation3 + $0x10] sm:$0xff]
      %v928 = vld [vmem:[#allocation3 + $0x18] sm:$0xff]
      %v929 = vld [vmem:[#allocation3 + $0x20] sm:$0xff]
      %v930 = vld [vmem:[#allocation3 + $0x28] sm:$0xff]
      %v931 = vld [vmem:[#allocation3 + $0x30] sm:$0xff]
      %v932 = vld [vmem:[#allocation3 + $0x38] sm:$0xff]
      %v933 = vld [vmem:[#allocation3 + $0x40] sm:$0xff]
      %v934 = vld [vmem:[#allocation3 + $0x48] sm:$0xff]
      %v935 = vld [vmem:[#allocation3 + $0x50] sm:$0xff]
      %v936 = vld [vmem:[#allocation3 + $0x58] sm:$0xff]
      %v937 = vld [vmem:[#allocation3 + $0x60] sm:$0xff]
      %v938 = vld [vmem:[#allocation3 + $0x68] sm:$0xff]
      %v939 = vld [vmem:[#allocation3 + $0x70] sm:$0xff]
      %v940 = vld [vmem:[#allocation3 + $0x78] sm:$0xff]
      %v941 = vld [vmem:[#allocation3 + $0x80] sm:$0xff]
      %v942 = vld [vmem:[#allocation3 + $0x88] sm:$0xff]
      %v943 = vld [vmem:[#allocation3 + $0x90] sm:$0xff]
      %v944 = vld [vmem:[#allocation3 + $0x98] sm:$0xff]
      %v945 = vld [vmem:[#allocation3 + $0xa0] sm:$0xff]
      %v946 = vld [vmem:[#allocation3 + $0xa8] sm:$0xff]
      %v947 = vld [vmem:[#allocation3 + $0xb0] sm:$0xff]
      %v948 = vld [vmem:[#allocation3 + $0xb8] sm:$0xff]
      %v949 = vld [vmem:[#allocation3 + $0xc0] sm:$0xff]
      %v950 = vld [vmem:[#allocation3 + $0xc8] sm:$0xff]
      %v951 = vld [vmem:[#allocation3 + $0xd0] sm:$0xff]
      %v952 = vld [vmem:[#allocation3 + $0xd8] sm:$0xff]
      %v953 = vld [vmem:[#allocation3 + $0xe0] sm:$0xff]
      %v954 = vld [vmem:[#allocation3 + $0xe8] sm:$0xff]
      %v955 = vld [vmem:[#allocation3 + $0xf0] sm:$0xff]
      %v956 = vld [vmem:[#allocation3 + $0xf8] sm:$0xff]
      %v957 = vld [vmem:[#allocation3 + $0x100] sm:$0xff]
      %v958 = vld [vmem:[#allocation3 + $0x108] sm:$0xff]
      %v959 = vld [vmem:[#allocation3 + $0x110] sm:$0xff]
      %v960 = vld [vmem:[#allocation3 + $0x118] sm:$0xff]
      %s961 = scalar_lea.vmem %s4, 64
      %v962 = vld [vmem:[%s961] sm:$0xf]
      %v963 = vld [vmem:[%s961 + $0x4] sm:$0xf]
      %v964 = vld [vmem:[%s961 + $0x8] sm:$0xf]
      %v965 = vld [vmem:[%s961 + $0xc] sm:$0xf]
      %v966 = vld [vmem:[%s961 + $0x10] sm:$0xf]
      %v967 = vld [vmem:[%s961 + $0x14] sm:$0xf]
      %v968 = vld [vmem:[%s961 + $0x18] sm:$0xf]
      %v969 = vld [vmem:[%s961 + $0x1c] sm:$0xf]
      %v970 = vld [vmem:[%s961 + $0x20] sm:$0xf]
      %v971 = vld [vmem:[%s961 + $0x24] sm:$0xf]
      %v972 = vld [vmem:[%s961 + $0x28] sm:$0xf]
      %v973 = vld [vmem:[%s961 + $0x2c] sm:$0xf]
      %v974 = vld [vmem:[%s961 + $0x30] sm:$0xf]
      %v975 = vld [vmem:[%s961 + $0x34] sm:$0xf]
      %v976 = vld [vmem:[%s961 + $0x38] sm:$0xf]
      %v977 = vld [vmem:[%s961 + $0x3c] sm:$0xf]
      %v994 = vunpack.c.l.b16 %v962
      %v995 = vunpack.c.l.b16 %v963
      %v996 = vunpack.c.l.b16 %v964
      %v997 = vunpack.c.l.b16 %v965
      %v998 = vunpack.c.l.b16 %v966
      %v999 = vunpack.c.l.b16 %v967
      %v1000 = vunpack.c.l.b16 %v968
      %v1001 = vunpack.c.l.b16 %v969
      %v1002 = vunpack.c.l.b16 %v970
      %v1003 = vunpack.c.l.b16 %v971
      %v1004 = vunpack.c.l.b16 %v972
      %v1005 = vunpack.c.l.b16 %v973
      %v1006 = vunpack.c.l.b16 %v974
      %v1007 = vunpack.c.l.b16 %v975
      %v1008 = vunpack.c.l.b16 %v976
      %v1009 = vunpack.c.l.b16 %v977
      %v1010 = vpack.c.b16 %v995, %v994
      %v1011 = vpack.c.b16 %v997, %v996
      %v1012 = vpack.c.b16 %v999, %v998
      %v1013 = vpack.c.b16 %v1001, %v1000
      %v1014 = vpack.c.b16 %v1003, %v1002
      %v1015 = vpack.c.b16 %v1005, %v1004
      %v1016 = vpack.c.b16 %v1007, %v1006
      %v1017 = vpack.c.b16 %v1009, %v1008
      %1026 = vmatpush.bf16.msra.mxu0 %v1017
      %1027 = vmatpush.bf16.msra.mxu0 %v1016
      %1028 = vmatpush.bf16.msra.mxu0 %v1015
      %1029 = vmatpush.bf16.msra.mxu0 %v1014
      %1030 = vmatpush.bf16.msra.mxu0 %v1013
      %1031 = vmatpush.bf16.msra.mxu0 %v1012
      %1032 = vmatpush.bf16.msra.mxu0 %v1011
      %1033 = vmatpush.bf16.msra.mxu0 %v1010
      %1034 = vmatmul.bf16.gmra.mxu0 %v907
      %v1035 = vpop.f32.mrf.mxu0
      %v1036 = vadd.f32 0.0, %v1035
      %v1037 = vpop.f32.mrf.mxu0
      %v1038 = vadd.f32 0.0, %v1037
      %1039 = vmatmul.bf16.gmra.mxu0 %v908
      %v1040 = vpop.f32.mrf.mxu0
      %v1041 = vadd.f32 0.0, %v1040
      %v1042 = vpop.f32.mrf.mxu0
      %v1043 = vadd.f32 0.0, %v1042
      %1044 = vmatmul.bf16.gmra.mxu0 %v909
      %v1045 = vpop.f32.mrf.mxu0
      %v1046 = vadd.f32 0.0, %v1045
      %v1047 = vpop.f32.mrf.mxu0
      %v1048 = vadd.f32 0.0, %v1047
      %1049 = vmatmul.bf16.gmra.mxu0 %v910
      %v1050 = vpop.f32.mrf.mxu0
      %v1051 = vadd.f32 0.0, %v1050
      %v1052 = vpop.f32.mrf.mxu0
      %v1053 = vadd.f32 0.0, %v1052
      %1054 = vmatmul.bf16.gmra.mxu0 %v911
      %v1055 = vpop.f32.mrf.mxu0
      %v1056 = vadd.f32 0.0, %v1055
      %v1057 = vpop.f32.mrf.mxu0
      %v1058 = vadd.f32 0.0, %v1057
      %1059 = vmatmul.bf16.gmra.mxu0 %v912
      %v1060 = vpop.f32.mrf.mxu0
      %v1061 = vadd.f32 0.0, %v1060
      %v1062 = vpop.f32.mrf.mxu0
      %v1063 = vadd.f32 0.0, %v1062
      %1064 = vmatmul.bf16.gmra.mxu0 %v913
      %v1065 = vpop.f32.mrf.mxu0
      %v1066 = vadd.f32 0.0, %v1065
      %v1067 = vpop.f32.mrf.mxu0
      %v1068 = vadd.f32 0.0, %v1067
      %1069 = vmatmul.bf16.gmra.mxu0 %v914
      %v1070 = vpop.f32.mrf.mxu0
      %v1071 = vadd.f32 0.0, %v1070
      %v1072 = vpop.f32.mrf.mxu0
      %v1073 = vadd.f32 0.0, %v1072
      %1074 = vmatmul.bf16.gmra.mxu0 %v915
      %v1075 = vpop.f32.mrf.mxu0
      %v1076 = vadd.f32 0.0, %v1075
      %v1077 = vpop.f32.mrf.mxu0
      %v1078 = vadd.f32 0.0, %v1077
      %1079 = vmatmul.bf16.gmra.mxu0 %v916
      %v1080 = vpop.f32.mrf.mxu0
      %v1081 = vadd.f32 0.0, %v1080
      %v1082 = vpop.f32.mrf.mxu0
      %v1083 = vadd.f32 0.0, %v1082
      %1084 = vmatmul.bf16.gmra.mxu0 %v917
      %v1085 = vpop.f32.mrf.mxu0
      %v1086 = vadd.f32 0.0, %v1085
      %v1087 = vpop.f32.mrf.mxu0
      %v1088 = vadd.f32 0.0, %v1087
      %1089 = vmatmul.bf16.gmra.mxu0 %v918
      %v1090 = vpop.f32.mrf.mxu0
      %v1091 = vadd.f32 0.0, %v1090
      %v1092 = vpop.f32.mrf.mxu0
      %v1093 = vadd.f32 0.0, %v1092
      %1094 = vmatmul.bf16.gmra.mxu0 %v919
      %v1095 = vpop.f32.mrf.mxu0
      %v1096 = vadd.f32 0.0, %v1095
      %v1097 = vpop.f32.mrf.mxu0
      %v1098 = vadd.f32 0.0, %v1097
      %1099 = vmatmul.bf16.gmra.mxu0 %v920
      %v1100 = vpop.f32.mrf.mxu0
      %v1101 = vadd.f32 0.0, %v1100
      %v1102 = vpop.f32.mrf.mxu0
      %v1103 = vadd.f32 0.0, %v1102
      %1104 = vmatmul.bf16.gmra.mxu0 %v921
      %v1105 = vpop.f32.mrf.mxu0
      %v1106 = vadd.f32 0.0, %v1105
      %v1107 = vpop.f32.mrf.mxu0
      %v1108 = vadd.f32 0.0, %v1107
      %1109 = vmatmul.bf16.gmra.mxu0 %v922
      %v1110 = vpop.f32.mrf.mxu0
      %v1111 = vadd.f32 0.0, %v1110
      %v1112 = vpop.f32.mrf.mxu0
      %v1113 = vadd.f32 0.0, %v1112
      %1114 = vmatmul.bf16.gmra.mxu0 %v923
      %v1115 = vpop.f32.mrf.mxu0
      %v1116 = vadd.f32 0.0, %v1115
      %v1117 = vpop.f32.mrf.mxu0
      %v1118 = vadd.f32 0.0, %v1117
      %1119 = vmatmul.bf16.gmra.mxu0 %v924
      %v1120 = vpop.f32.mrf.mxu0
      %v1121 = vadd.f32 0.0, %v1120
      %v1122 = vpop.f32.mrf.mxu0
      %v1123 = vadd.f32 0.0, %v1122
      %1124 = vdwg.mxu0
      %v1125 = vadd.f32 %v925, %v1036
      %v1126 = vadd.f32 %v926, %v1038
      %v1127 = vadd.f32 %v927, %v1041
      %v1128 = vadd.f32 %v928, %v1043
      %v1129 = vadd.f32 %v929, %v1046
      %v1130 = vadd.f32 %v930, %v1048
      %v1131 = vadd.f32 %v931, %v1051
      %v1132 = vadd.f32 %v932, %v1053
      %v1133 = vadd.f32 %v933, %v1056
      %v1134 = vadd.f32 %v934, %v1058
      %v1135 = vadd.f32 %v935, %v1061
      %v1136 = vadd.f32 %v936, %v1063
      %v1137 = vadd.f32 %v937, %v1066
      %v1138 = vadd.f32 %v938, %v1068
      %v1139 = vadd.f32 %v939, %v1071
      %v1140 = vadd.f32 %v940, %v1073
      %v1141 = vadd.f32 %v941, %v1076
      %v1142 = vadd.f32 %v942, %v1078
      %v1143 = vadd.f32 %v943, %v1081
      %v1144 = vadd.f32 %v944, %v1083
      %v1145 = vadd.f32 %v945, %v1086
      %v1146 = vadd.f32 %v946, %v1088
      %v1147 = vadd.f32 %v947, %v1091
      %v1148 = vadd.f32 %v948, %v1093
      %v1149 = vadd.f32 %v949, %v1096
      %v1150 = vadd.f32 %v950, %v1098
      %v1151 = vadd.f32 %v951, %v1101
      %v1152 = vadd.f32 %v952, %v1103
      %v1153 = vadd.f32 %v953, %v1106
      %v1154 = vadd.f32 %v954, %v1108
      %v1155 = vadd.f32 %v955, %v1111
      %v1156 = vadd.f32 %v956, %v1113
      %v1157 = vadd.f32 %v957, %v1116
      %v1158 = vadd.f32 %v958, %v1118
      %v1159 = vadd.f32 %v959, %v1121
      %v1160 = vadd.f32 %v960, %v1123
      %1161 = vst [vmem:[#allocation3] sm:$0xff] %v1125
      %1162 = vst [vmem:[#allocation3 + $0x8] sm:$0xff] %v1126
      %1163 = vst [vmem:[#allocation3 + $0x10] sm:$0xff] %v1127
      %1164 = vst [vmem:[#allocation3 + $0x18] sm:$0xff] %v1128
      %1165 = vst [vmem:[#allocation3 + $0x20] sm:$0xff] %v1129
      %1166 = vst [vmem:[#allocation3 + $0x28] sm:$0xff] %v1130
      %1167 = vst [vmem:[#allocation3 + $0x30] sm:$0xff] %v1131
      %1168 = vst [vmem:[#allocation3 + $0x38] sm:$0xff] %v1132
      %1169 = vst [vmem:[#allocation3 + $0x40] sm:$0xff] %v1133
      %1170 = vst [vmem:[#allocation3 + $0x48] sm:$0xff] %v1134
      %1171 = vst [vmem:[#allocation3 + $0x50] sm:$0xff] %v1135
      %1172 = vst [vmem:[#allocation3 + $0x58] sm:$0xff] %v1136
      %1173 = vst [vmem:[#allocation3 + $0x60] sm:$0xff] %v1137
      %1174 = vst [vmem:[#allocation3 + $0x68] sm:$0xff] %v1138
      %1175 = vst [vmem:[#allocation3 + $0x70] sm:$0xff] %v1139
      %1176 = vst [vmem:[#allocation3 + $0x78] sm:$0xff] %v1140
      %1177 = vst [vmem:[#allocation3 + $0x80] sm:$0xff] %v1141
      %1178 = vst [vmem:[#allocation3 + $0x88] sm:$0xff] %v1142
      %1179 = vst [vmem:[#allocation3 + $0x90] sm:$0xff] %v1143
      %1180 = vst [vmem:[#allocation3 + $0x98] sm:$0xff] %v1144
      %1181 = vst [vmem:[#allocation3 + $0xa0] sm:$0xff] %v1145
      %1182 = vst [vmem:[#allocation3 + $0xa8] sm:$0xff] %v1146
      %1183 = vst [vmem:[#allocation3 + $0xb0] sm:$0xff] %v1147
      %1184 = vst [vmem:[#allocation3 + $0xb8] sm:$0xff] %v1148
      %1185 = vst [vmem:[#allocation3 + $0xc0] sm:$0xff] %v1149
      %1186 = vst [vmem:[#allocation3 + $0xc8] sm:$0xff] %v1150
      %1187 = vst [vmem:[#allocation3 + $0xd0] sm:$0xff] %v1151
      %1188 = vst [vmem:[#allocation3 + $0xd8] sm:$0xff] %v1152
      %1189 = vst [vmem:[#allocation3 + $0xe0] sm:$0xff] %v1153
      %1190 = vst [vmem:[#allocation3 + $0xe8] sm:$0xff] %v1154
      %1191 = vst [vmem:[#allocation3 + $0xf0] sm:$0xff] %v1155
      %1192 = vst [vmem:[#allocation3 + $0xf8] sm:$0xff] %v1156
      %1193 = vst [vmem:[#allocation3 + $0x100] sm:$0xff] %v1157
      %1194 = vst [vmem:[#allocation3 + $0x108] sm:$0xff] %v1158
      %1195 = vst [vmem:[#allocation3 + $0x110] sm:$0xff] %v1159
      %1196 = vst [vmem:[#allocation3 + $0x118] sm:$0xff] %v1160
      %v1197 = vld [vmem:[#allocation2 + $0x2] sm:$0xff]
      %v1198 = vld [vmem:[#allocation2 + $0xa] sm:$0xff]
      %v1199 = vld [vmem:[#allocation2 + $0x12] sm:$0xff]
      %v1200 = vld [vmem:[#allocation2 + $0x1a] sm:$0xff]
      %v1201 = vld [vmem:[#allocation2 + $0x22] sm:$0xff]
      %v1202 = vld [vmem:[#allocation2 + $0x2a] sm:$0xff]
      %v1203 = vld [vmem:[#allocation2 + $0x32] sm:$0xff]
      %v1204 = vld [vmem:[#allocation2 + $0x3a] sm:$0xff]
      %v1205 = vld [vmem:[#allocation2 + $0x42] sm:$0xff]
      %v1206 = vld [vmem:[#allocation2 + $0x4a] sm:$0xff]
      %v1207 = vld [vmem:[#allocation2 + $0x52] sm:$0xff]
      %v1208 = vld [vmem:[#allocation2 + $0x5a] sm:$0xff]
      %v1209 = vld [vmem:[#allocation2 + $0x62] sm:$0xff]
      %v1210 = vld [vmem:[#allocation2 + $0x6a] sm:$0xff]
      %v1211 = vld [vmem:[#allocation2 + $0x72] sm:$0xff]
      %v1212 = vld [vmem:[#allocation2 + $0x7a] sm:$0xff]
      %v1213 = vld [vmem:[#allocation2 + $0x82] sm:$0xff]
      %v1214 = vld [vmem:[#allocation2 + $0x8a] sm:$0xff]
      %v1215 = vld [vmem:[#allocation2 + $0x92] sm:$0xff]
      %v1216 = vld [vmem:[#allocation2 + $0x9a] sm:$0xff]
      %v1217 = vld [vmem:[#allocation2 + $0xa2] sm:$0xff]
      %v1218 = vld [vmem:[#allocation2 + $0xaa] sm:$0xff]
      %v1219 = vld [vmem:[#allocation2 + $0xb2] sm:$0xff]
      %v1220 = vld [vmem:[#allocation2 + $0xba] sm:$0xff]
      %v1221 = vld [vmem:[#allocation2 + $0xc2] sm:$0xff]
      %v1222 = vld [vmem:[#allocation2 + $0xca] sm:$0xff]
      %v1223 = vld [vmem:[#allocation2 + $0xd2] sm:$0xff]
      %v1224 = vld [vmem:[#allocation2 + $0xda] sm:$0xff]
      %v1225 = vld [vmem:[#allocation2 + $0xe2] sm:$0xff]
      %v1226 = vld [vmem:[#allocation2 + $0xea] sm:$0xff]
      %v1227 = vld [vmem:[#allocation2 + $0xf2] sm:$0xff]
      %v1228 = vld [vmem:[#allocation2 + $0xfa] sm:$0xff]
      %v1229 = vld [vmem:[#allocation2 + $0x102] sm:$0xff]
      %v1230 = vld [vmem:[#allocation2 + $0x10a] sm:$0xff]
      %v1231 = vld [vmem:[#allocation2 + $0x112] sm:$0xff]
      %v1232 = vld [vmem:[#allocation2 + $0x11a] sm:$0xff]
      %v1233 = vpack.c.bf16 %v1198, %v1197
      %v1234 = vpack.c.bf16 %v1200, %v1199
      %v1235 = vpack.c.bf16 %v1202, %v1201
      %v1236 = vpack.c.bf16 %v1204, %v1203
      %v1237 = vpack.c.bf16 %v1206, %v1205
      %v1238 = vpack.c.bf16 %v1208, %v1207
      %v1239 = vpack.c.bf16 %v1210, %v1209
      %v1240 = vpack.c.bf16 %v1212, %v1211
      %v1241 = vpack.c.bf16 %v1214, %v1213
      %v1242 = vpack.c.bf16 %v1216, %v1215
      %v1243 = vpack.c.bf16 %v1218, %v1217
      %v1244 = vpack.c.bf16 %v1220, %v1219
      %v1245 = vpack.c.bf16 %v1222, %v1221
      %v1246 = vpack.c.bf16 %v1224, %v1223
      %v1247 = vpack.c.bf16 %v1226, %v1225
      %v1248 = vpack.c.bf16 %v1228, %v1227
      %v1249 = vpack.c.bf16 %v1230, %v1229
      %v1250 = vpack.c.bf16 %v1232, %v1231
      %v1251 = vld [vmem:[#allocation3] sm:$0xff]
      %v1252 = vld [vmem:[#allocation3 + $0x8] sm:$0xff]
      %v1253 = vld [vmem:[#allocation3 + $0x10] sm:$0xff]
      %v1254 = vld [vmem:[#allocation3 + $0x18] sm:$0xff]
      %v1255 = vld [vmem:[#allocation3 + $0x20] sm:$0xff]
      %v1256 = vld [vmem:[#allocation3 + $0x28] sm:$0xff]
      %v1257 = vld [vmem:[#allocation3 + $0x30] sm:$0xff]
      %v1258 = vld [vmem:[#allocation3 + $0x38] sm:$0xff]
      %v1259 = vld [vmem:[#allocation3 + $0x40] sm:$0xff]
      %v1260 = vld [vmem:[#allocation3 + $0x48] sm:$0xff]
      %v1261 = vld [vmem:[#allocation3 + $0x50] sm:$0xff]
      %v1262 = vld [vmem:[#allocation3 + $0x58] sm:$0xff]
      %v1263 = vld [vmem:[#allocation3 + $0x60] sm:$0xff]
      %v1264 = vld [vmem:[#allocation3 + $0x68] sm:$0xff]
      %v1265 = vld [vmem:[#allocation3 + $0x70] sm:$0xff]
      %v1266 = vld [vmem:[#allocation3 + $0x78] sm:$0xff]
      %v1267 = vld [vmem:[#allocation3 + $0x80] sm:$0xff]
      %v1268 = vld [vmem:[#allocation3 + $0x88] sm:$0xff]
      %v1269 = vld [vmem:[#allocation3 + $0x90] sm:$0xff]
      %v1270 = vld [vmem:[#allocation3 + $0x98] sm:$0xff]
      %v1271 = vld [vmem:[#allocation3 + $0xa0] sm:$0xff]
      %v1272 = vld [vmem:[#allocation3 + $0xa8] sm:$0xff]
      %v1273 = vld [vmem:[#allocation3 + $0xb0] sm:$0xff]
      %v1274 = vld [vmem:[#allocation3 + $0xb8] sm:$0xff]
      %v1275 = vld [vmem:[#allocation3 + $0xc0] sm:$0xff]
      %v1276 = vld [vmem:[#allocation3 + $0xc8] sm:$0xff]
      %v1277 = vld [vmem:[#allocation3 + $0xd0] sm:$0xff]
      %v1278 = vld [vmem:[#allocation3 + $0xd8] sm:$0xff]
      %v1279 = vld [vmem:[#allocation3 + $0xe0] sm:$0xff]
      %v1280 = vld [vmem:[#allocation3 + $0xe8] sm:$0xff]
      %v1281 = vld [vmem:[#allocation3 + $0xf0] sm:$0xff]
      %v1282 = vld [vmem:[#allocation3 + $0xf8] sm:$0xff]
      %v1283 = vld [vmem:[#allocation3 + $0x100] sm:$0xff]
      %v1284 = vld [vmem:[#allocation3 + $0x108] sm:$0xff]
      %v1285 = vld [vmem:[#allocation3 + $0x110] sm:$0xff]
      %v1286 = vld [vmem:[#allocation3 + $0x118] sm:$0xff]
      %s1287 = scalar_lea.vmem %s4, 128
      %v1288 = vld [vmem:[%s1287] sm:$0xf]
      %v1289 = vld [vmem:[%s1287 + $0x4] sm:$0xf]
      %v1290 = vld [vmem:[%s1287 + $0x8] sm:$0xf]
      %v1291 = vld [vmem:[%s1287 + $0xc] sm:$0xf]
      %v1292 = vld [vmem:[%s1287 + $0x10] sm:$0xf]
      %v1293 = vld [vmem:[%s1287 + $0x14] sm:$0xf]
      %v1294 = vld [vmem:[%s1287 + $0x18] sm:$0xf]
      %v1295 = vld [vmem:[%s1287 + $0x1c] sm:$0xf]
      %v1296 = vld [vmem:[%s1287 + $0x20] sm:$0xf]
      %v1297 = vld [vmem:[%s1287 + $0x24] sm:$0xf]
      %v1298 = vld [vmem:[%s1287 + $0x28] sm:$0xf]
      %v1299 = vld [vmem:[%s1287 + $0x2c] sm:$0xf]
      %v1300 = vld [vmem:[%s1287 + $0x30] sm:$0xf]
      %v1301 = vld [vmem:[%s1287 + $0x34] sm:$0xf]
      %v1302 = vld [vmem:[%s1287 + $0x38] sm:$0xf]
      %v1303 = vld [vmem:[%s1287 + $0x3c] sm:$0xf]
      %v1320 = vunpack.c.l.b16 %v1288
      %v1321 = vunpack.c.l.b16 %v1289
      %v1322 = vunpack.c.l.b16 %v1290
      %v1323 = vunpack.c.l.b16 %v1291
      %v1324 = vunpack.c.l.b16 %v1292
      %v1325 = vunpack.c.l.b16 %v1293
      %v1326 = vunpack.c.l.b16 %v1294
      %v1327 = vunpack.c.l.b16 %v1295
      %v1328 = vunpack.c.l.b16 %v1296
      %v1329 = vunpack.c.l.b16 %v1297
      %v1330 = vunpack.c.l.b16 %v1298
      %v1331 = vunpack.c.l.b16 %v1299
      %v1332 = vunpack.c.l.b16 %v1300
      %v1333 = vunpack.c.l.b16 %v1301
      %v1334 = vunpack.c.l.b16 %v1302
      %v1335 = vunpack.c.l.b16 %v1303
      %v1336 = vpack.c.b16 %v1321, %v1320
      %v1337 = vpack.c.b16 %v1323, %v1322
      %v1338 = vpack.c.b16 %v1325, %v1324
      %v1339 = vpack.c.b16 %v1327, %v1326
      %v1340 = vpack.c.b16 %v1329, %v1328
      %v1341 = vpack.c.b16 %v1331, %v1330
      %v1342 = vpack.c.b16 %v1333, %v1332
      %v1343 = vpack.c.b16 %v1335, %v1334
      %1352 = vmatpush.bf16.msra.mxu0 %v1343
      %1353 = vmatpush.bf16.msra.mxu0 %v1342
      %1354 = vmatpush.bf16.msra.mxu0 %v1341
      %1355 = vmatpush.bf16.msra.mxu0 %v1340
      %1356 = vmatpush.bf16.msra.mxu0 %v1339
      %1357 = vmatpush.bf16.msra.mxu0 %v1338
      %1358 = vmatpush.bf16.msra.mxu0 %v1337
      %1359 = vmatpush.bf16.msra.mxu0 %v1336
      %1360 = vmatmul.bf16.gmra.mxu0 %v1233
      %v1361 = vpop.f32.mrf.mxu0
      %v1362 = vadd.f32 0.0, %v1361
      %v1363 = vpop.f32.mrf.mxu0
      %v1364 = vadd.f32 0.0, %v1363
      %1365 = vmatmul.bf16.gmra.mxu0 %v1234
      %v1366 = vpop.f32.mrf.mxu0
      %v1367 = vadd.f32 0.0, %v1366
      %v1368 = vpop.f32.mrf.mxu0
      %v1369 = vadd.f32 0.0, %v1368
      %1370 = vmatmul.bf16.gmra.mxu0 %v1235
      %v1371 = vpop.f32.mrf.mxu0
      %v1372 = vadd.f32 0.0, %v1371
      %v1373 = vpop.f32.mrf.mxu0
      %v1374 = vadd.f32 0.0, %v1373
      %1375 = vmatmul.bf16.gmra.mxu0 %v1236
      %v1376 = vpop.f32.mrf.mxu0
      %v1377 = vadd.f32 0.0, %v1376
      %v1378 = vpop.f32.mrf.mxu0
      %v1379 = vadd.f32 0.0, %v1378
      %1380 = vmatmul.bf16.gmra.mxu0 %v1237
      %v1381 = vpop.f32.mrf.mxu0
      %v1382 = vadd.f32 0.0, %v1381
      %v1383 = vpop.f32.mrf.mxu0
      %v1384 = vadd.f32 0.0, %v1383
      %1385 = vmatmul.bf16.gmra.mxu0 %v1238
      %v1386 = vpop.f32.mrf.mxu0
      %v1387 = vadd.f32 0.0, %v1386
      %v1388 = vpop.f32.mrf.mxu0
      %v1389 = vadd.f32 0.0, %v1388
      %1390 = vmatmul.bf16.gmra.mxu0 %v1239
      %v1391 = vpop.f32.mrf.mxu0
      %v1392 = vadd.f32 0.0, %v1391
      %v1393 = vpop.f32.mrf.mxu0
      %v1394 = vadd.f32 0.0, %v1393
      %1395 = vmatmul.bf16.gmra.mxu0 %v1240
      %v1396 = vpop.f32.mrf.mxu0
      %v1397 = vadd.f32 0.0, %v1396
      %v1398 = vpop.f32.mrf.mxu0
      %v1399 = vadd.f32 0.0, %v1398
      %1400 = vmatmul.bf16.gmra.mxu0 %v1241
      %v1401 = vpop.f32.mrf.mxu0
      %v1402 = vadd.f32 0.0, %v1401
      %v1403 = vpop.f32.mrf.mxu0
      %v1404 = vadd.f32 0.0, %v1403
      %1405 = vmatmul.bf16.gmra.mxu0 %v1242
      %v1406 = vpop.f32.mrf.mxu0
      %v1407 = vadd.f32 0.0, %v1406
      %v1408 = vpop.f32.mrf.mxu0
      %v1409 = vadd.f32 0.0, %v1408
      %1410 = vmatmul.bf16.gmra.mxu0 %v1243
      %v1411 = vpop.f32.mrf.mxu0
      %v1412 = vadd.f32 0.0, %v1411
      %v1413 = vpop.f32.mrf.mxu0
      %v1414 = vadd.f32 0.0, %v1413
      %1415 = vmatmul.bf16.gmra.mxu0 %v1244
      %v1416 = vpop.f32.mrf.mxu0
      %v1417 = vadd.f32 0.0, %v1416
      %v1418 = vpop.f32.mrf.mxu0
      %v1419 = vadd.f32 0.0, %v1418
      %1420 = vmatmul.bf16.gmra.mxu0 %v1245
      %v1421 = vpop.f32.mrf.mxu0
      %v1422 = vadd.f32 0.0, %v1421
      %v1423 = vpop.f32.mrf.mxu0
      %v1424 = vadd.f32 0.0, %v1423
      %1425 = vmatmul.bf16.gmra.mxu0 %v1246
      %v1426 = vpop.f32.mrf.mxu0
      %v1427 = vadd.f32 0.0, %v1426
      %v1428 = vpop.f32.mrf.mxu0
      %v1429 = vadd.f32 0.0, %v1428
      %1430 = vmatmul.bf16.gmra.mxu0 %v1247
      %v1431 = vpop.f32.mrf.mxu0
      %v1432 = vadd.f32 0.0, %v1431
      %v1433 = vpop.f32.mrf.mxu0
      %v1434 = vadd.f32 0.0, %v1433
      %1435 = vmatmul.bf16.gmra.mxu0 %v1248
      %v1436 = vpop.f32.mrf.mxu0
      %v1437 = vadd.f32 0.0, %v1436
      %v1438 = vpop.f32.mrf.mxu0
      %v1439 = vadd.f32 0.0, %v1438
      %1440 = vmatmul.bf16.gmra.mxu0 %v1249
      %v1441 = vpop.f32.mrf.mxu0
      %v1442 = vadd.f32 0.0, %v1441
      %v1443 = vpop.f32.mrf.mxu0
      %v1444 = vadd.f32 0.0, %v1443
      %1445 = vmatmul.bf16.gmra.mxu0 %v1250
      %v1446 = vpop.f32.mrf.mxu0
      %v1447 = vadd.f32 0.0, %v1446
      %v1448 = vpop.f32.mrf.mxu0
      %v1449 = vadd.f32 0.0, %v1448
      %1450 = vdwg.mxu0
      %v1451 = vadd.f32 %v1251, %v1362
      %v1452 = vadd.f32 %v1252, %v1364
      %v1453 = vadd.f32 %v1253, %v1367
      %v1454 = vadd.f32 %v1254, %v1369
      %v1455 = vadd.f32 %v1255, %v1372
      %v1456 = vadd.f32 %v1256, %v1374
      %v1457 = vadd.f32 %v1257, %v1377
      %v1458 = vadd.f32 %v1258, %v1379
      %v1459 = vadd.f32 %v1259, %v1382
      %v1460 = vadd.f32 %v1260, %v1384
      %v1461 = vadd.f32 %v1261, %v1387
      %v1462 = vadd.f32 %v1262, %v1389
      %v1463 = vadd.f32 %v1263, %v1392
      %v1464 = vadd.f32 %v1264, %v1394
      %v1465 = vadd.f32 %v1265, %v1397
      %v1466 = vadd.f32 %v1266, %v1399
      %v1467 = vadd.f32 %v1267, %v1402
      %v1468 = vadd.f32 %v1268, %v1404
      %v1469 = vadd.f32 %v1269, %v1407
      %v1470 = vadd.f32 %v1270, %v1409
      %v1471 = vadd.f32 %v1271, %v1412
      %v1472 = vadd.f32 %v1272, %v1414
      %v1473 = vadd.f32 %v1273, %v1417
      %v1474 = vadd.f32 %v1274, %v1419
      %v1475 = vadd.f32 %v1275, %v1422
      %v1476 = vadd.f32 %v1276, %v1424
      %v1477 = vadd.f32 %v1277, %v1427
      %v1478 = vadd.f32 %v1278, %v1429
      %v1479 = vadd.f32 %v1279, %v1432
      %v1480 = vadd.f32 %v1280, %v1434
      %v1481 = vadd.f32 %v1281, %v1437
      %v1482 = vadd.f32 %v1282, %v1439
      %v1483 = vadd.f32 %v1283, %v1442
      %v1484 = vadd.f32 %v1284, %v1444
      %v1485 = vadd.f32 %v1285, %v1447
      %v1486 = vadd.f32 %v1286, %v1449
      %1487 = vst [vmem:[#allocation3] sm:$0xff] %v1451
      %1488 = vst [vmem:[#allocation3 + $0x8] sm:$0xff] %v1452
      %1489 = vst [vmem:[#allocation3 + $0x10] sm:$0xff] %v1453
      %1490 = vst [vmem:[#allocation3 + $0x18] sm:$0xff] %v1454
      %1491 = vst [vmem:[#allocation3 + $0x20] sm:$0xff] %v1455
      %1492 = vst [vmem:[#allocation3 + $0x28] sm:$0xff] %v1456
      %1493 = vst [vmem:[#allocation3 + $0x30] sm:$0xff] %v1457
      %1494 = vst [vmem:[#allocation3 + $0x38] sm:$0xff] %v1458
      %1495 = vst [vmem:[#allocation3 + $0x40] sm:$0xff] %v1459
      %1496 = vst [vmem:[#allocation3 + $0x48] sm:$0xff] %v1460
      %1497 = vst [vmem:[#allocation3 + $0x50] sm:$0xff] %v1461
      %1498 = vst [vmem:[#allocation3 + $0x58] sm:$0xff] %v1462
      %1499 = vst [vmem:[#allocation3 + $0x60] sm:$0xff] %v1463
      %1500 = vst [vmem:[#allocation3 + $0x68] sm:$0xff] %v1464
      %1501 = vst [vmem:[#allocation3 + $0x70] sm:$0xff] %v1465
      %1502 = vst [vmem:[#allocation3 + $0x78] sm:$0xff] %v1466
      %1503 = vst [vmem:[#allocation3 + $0x80] sm:$0xff] %v1467
      %1504 = vst [vmem:[#allocation3 + $0x88] sm:$0xff] %v1468
      %1505 = vst [vmem:[#allocation3 + $0x90] sm:$0xff] %v1469
      %1506 = vst [vmem:[#allocation3 + $0x98] sm:$0xff] %v1470
      %1507 = vst [vmem:[#allocation3 + $0xa0] sm:$0xff] %v1471
      %1508 = vst [vmem:[#allocation3 + $0xa8] sm:$0xff] %v1472
      %1509 = vst [vmem:[#allocation3 + $0xb0] sm:$0xff] %v1473
      %1510 = vst [vmem:[#allocation3 + $0xb8] sm:$0xff] %v1474
      %1511 = vst [vmem:[#allocation3 + $0xc0] sm:$0xff] %v1475
      %1512 = vst [vmem:[#allocation3 + $0xc8] sm:$0xff] %v1476
      %1513 = vst [vmem:[#allocation3 + $0xd0] sm:$0xff] %v1477
      %1514 = vst [vmem:[#allocation3 + $0xd8] sm:$0xff] %v1478
      %1515 = vst [vmem:[#allocation3 + $0xe0] sm:$0xff] %v1479
      %1516 = vst [vmem:[#allocation3 + $0xe8] sm:$0xff] %v1480
      %1517 = vst [vmem:[#allocation3 + $0xf0] sm:$0xff] %v1481
      %1518 = vst [vmem:[#allocation3 + $0xf8] sm:$0xff] %v1482
      %1519 = vst [vmem:[#allocation3 + $0x100] sm:$0xff] %v1483
      %1520 = vst [vmem:[#allocation3 + $0x108] sm:$0xff] %v1484
      %1521 = vst [vmem:[#allocation3 + $0x110] sm:$0xff] %v1485
      %1522 = vst [vmem:[#allocation3 + $0x118] sm:$0xff] %v1486
      %v1523 = vld [vmem:[#allocation2 + $0x12] sm:$0xff]
      %v1524 = vld [vmem:[#allocation2 + $0x1a] sm:$0xff]
      %v1525 = vld [vmem:[#allocation2 + $0x22] sm:$0xff]
      %v1526 = vld [vmem:[#allocation2 + $0x2a] sm:$0xff]
      %v1527 = vld [vmem:[#allocation2 + $0x32] sm:$0xff]
      %v1528 = vld [vmem:[#allocation2 + $0x3a] sm:$0xff]
      %v1529 = vld [vmem:[#allocation2 + $0x42] sm:$0xff]
      %v1530 = vld [vmem:[#allocation2 + $0x4a] sm:$0xff]
      %v1531 = vld [vmem:[#allocation2 + $0x52] sm:$0xff]
      %v1532 = vld [vmem:[#allocation2 + $0x5a] sm:$0xff]
      %v1533 = vld [vmem:[#allocation2 + $0x62] sm:$0xff]
      %v1534 = vld [vmem:[#allocation2 + $0x6a] sm:$0xff]
      %v1535 = vld [vmem:[#allocation2 + $0x72] sm:$0xff]
      %v1536 = vld [vmem:[#allocation2 + $0x7a] sm:$0xff]
      %v1537 = vld [vmem:[#allocation2 + $0x82] sm:$0xff]
      %v1538 = vld [vmem:[#allocation2 + $0x8a] sm:$0xff]
      %v1539 = vld [vmem:[#allocation2 + $0x92] sm:$0xff]
      %v1540 = vld [vmem:[#allocation2 + $0x9a] sm:$0xff]
      %v1541 = vld [vmem:[#allocation2 + $0xa2] sm:$0xff]
      %v1542 = vld [vmem:[#allocation2 + $0xaa] sm:$0xff]
      %v1543 = vld [vmem:[#allocation2 + $0xb2] sm:$0xff]
      %v1544 = vld [vmem:[#allocation2 + $0xba] sm:$0xff]
      %v1545 = vld [vmem:[#allocation2 + $0xc2] sm:$0xff]
      %v1546 = vld [vmem:[#allocation2 + $0xca] sm:$0xff]
      %v1547 = vld [vmem:[#allocation2 + $0xd2] sm:$0xff]
      %v1548 = vld [vmem:[#allocation2 + $0xda] sm:$0xff]
      %v1549 = vld [vmem:[#allocation2 + $0xe2] sm:$0xff]
      %v1550 = vld [vmem:[#allocation2 + $0xea] sm:$0xff]
      %v1551 = vld [vmem:[#allocation2 + $0xf2] sm:$0xff]
      %v1552 = vld [vmem:[#allocation2 + $0xfa] sm:$0xff]
      %v1553 = vld [vmem:[#allocation2 + $0x102] sm:$0xff]
      %v1554 = vld [vmem:[#allocation2 + $0x10a] sm:$0xff]
      %v1555 = vld [vmem:[#allocation2 + $0x112] sm:$0xff]
      %v1556 = vld [vmem:[#allocation2 + $0x11a] sm:$0xff]
      %v1557 = vld [vmem:[#allocation2 + $0x122] sm:$0xff]
      %v1558 = vld [vmem:[#allocation2 + $0x12a] sm:$0xff]
      %v1559 = vpack.c.bf16 %v1524, %v1523
      %v1560 = vpack.c.bf16 %v1526, %v1525
      %v1561 = vpack.c.bf16 %v1528, %v1527
      %v1562 = vpack.c.bf16 %v1530, %v1529
      %v1563 = vpack.c.bf16 %v1532, %v1531
      %v1564 = vpack.c.bf16 %v1534, %v1533
      %v1565 = vpack.c.bf16 %v1536, %v1535
      %v1566 = vpack.c.bf16 %v1538, %v1537
      %v1567 = vpack.c.bf16 %v1540, %v1539
      %v1568 = vpack.c.bf16 %v1542, %v1541
      %v1569 = vpack.c.bf16 %v1544, %v1543
      %v1570 = vpack.c.bf16 %v1546, %v1545
      %v1571 = vpack.c.bf16 %v1548, %v1547
      %v1572 = vpack.c.bf16 %v1550, %v1549
      %v1573 = vpack.c.bf16 %v1552, %v1551
      %v1574 = vpack.c.bf16 %v1554, %v1553
      %v1575 = vpack.c.bf16 %v1556, %v1555
      %v1576 = vpack.c.bf16 %v1558, %v1557
      %v1577 = vld [vmem:[#allocation3] sm:$0xff]
      %v1578 = vld [vmem:[#allocation3 + $0x8] sm:$0xff]
      %v1579 = vld [vmem:[#allocation3 + $0x10] sm:$0xff]
      %v1580 = vld [vmem:[#allocation3 + $0x18] sm:$0xff]
      %v1581 = vld [vmem:[#allocation3 + $0x20] sm:$0xff]
      %v1582 = vld [vmem:[#allocation3 + $0x28] sm:$0xff]
      %v1583 = vld [vmem:[#allocation3 + $0x30] sm:$0xff]
      %v1584 = vld [vmem:[#allocation3 + $0x38] sm:$0xff]
      %v1585 = vld [vmem:[#allocation3 + $0x40] sm:$0xff]
      %v1586 = vld [vmem:[#allocation3 + $0x48] sm:$0xff]
      %v1587 = vld [vmem:[#allocation3 + $0x50] sm:$0xff]
      %v1588 = vld [vmem:[#allocation3 + $0x58] sm:$0xff]
      %v1589 = vld [vmem:[#allocation3 + $0x60] sm:$0xff]
      %v1590 = vld [vmem:[#allocation3 + $0x68] sm:$0xff]
      %v1591 = vld [vmem:[#allocation3 + $0x70] sm:$0xff]
      %v1592 = vld [vmem:[#allocation3 + $0x78] sm:$0xff]
      %v1593 = vld [vmem:[#allocation3 + $0x80] sm:$0xff]
      %v1594 = vld [vmem:[#allocation3 + $0x88] sm:$0xff]
      %v1595 = vld [vmem:[#allocation3 + $0x90] sm:$0xff]
      %v1596 = vld [vmem:[#allocation3 + $0x98] sm:$0xff]
      %v1597 = vld [vmem:[#allocation3 + $0xa0] sm:$0xff]
      %v1598 = vld [vmem:[#allocation3 + $0xa8] sm:$0xff]
      %v1599 = vld [vmem:[#allocation3 + $0xb0] sm:$0xff]
      %v1600 = vld [vmem:[#allocation3 + $0xb8] sm:$0xff]
      %v1601 = vld [vmem:[#allocation3 + $0xc0] sm:$0xff]
      %v1602 = vld [vmem:[#allocation3 + $0xc8] sm:$0xff]
      %v1603 = vld [vmem:[#allocation3 + $0xd0] sm:$0xff]
      %v1604 = vld [vmem:[#allocation3 + $0xd8] sm:$0xff]
      %v1605 = vld [vmem:[#allocation3 + $0xe0] sm:$0xff]
      %v1606 = vld [vmem:[#allocation3 + $0xe8] sm:$0xff]
      %v1607 = vld [vmem:[#allocation3 + $0xf0] sm:$0xff]
      %v1608 = vld [vmem:[#allocation3 + $0xf8] sm:$0xff]
      %v1609 = vld [vmem:[#allocation3 + $0x100] sm:$0xff]
      %v1610 = vld [vmem:[#allocation3 + $0x108] sm:$0xff]
      %v1611 = vld [vmem:[#allocation3 + $0x110] sm:$0xff]
      %v1612 = vld [vmem:[#allocation3 + $0x118] sm:$0xff]
      %s1613 = scalar_lea.vmem %s4, 192
      %v1614 = vld [vmem:[%s1613] sm:$0xf]
      %v1615 = vld [vmem:[%s1613 + $0x4] sm:$0xf]
      %v1616 = vld [vmem:[%s1613 + $0x8] sm:$0xf]
      %v1617 = vld [vmem:[%s1613 + $0xc] sm:$0xf]
      %v1618 = vld [vmem:[%s1613 + $0x10] sm:$0xf]
      %v1619 = vld [vmem:[%s1613 + $0x14] sm:$0xf]
      %v1620 = vld [vmem:[%s1613 + $0x18] sm:$0xf]
      %v1621 = vld [vmem:[%s1613 + $0x1c] sm:$0xf]
      %v1622 = vld [vmem:[%s1613 + $0x20] sm:$0xf]
      %v1623 = vld [vmem:[%s1613 + $0x24] sm:$0xf]
      %v1624 = vld [vmem:[%s1613 + $0x28] sm:$0xf]
      %v1625 = vld [vmem:[%s1613 + $0x2c] sm:$0xf]
      %v1626 = vld [vmem:[%s1613 + $0x30] sm:$0xf]
      %v1627 = vld [vmem:[%s1613 + $0x34] sm:$0xf]
      %v1628 = vld [vmem:[%s1613 + $0x38] sm:$0xf]
      %v1629 = vld [vmem:[%s1613 + $0x3c] sm:$0xf]
      %v1646 = vunpack.c.l.b16 %v1614
      %v1647 = vunpack.c.l.b16 %v1615
      %v1648 = vunpack.c.l.b16 %v1616
      %v1649 = vunpack.c.l.b16 %v1617
      %v1650 = vunpack.c.l.b16 %v1618
      %v1651 = vunpack.c.l.b16 %v1619
      %v1652 = vunpack.c.l.b16 %v1620
      %v1653 = vunpack.c.l.b16 %v1621
      %v1654 = vunpack.c.l.b16 %v1622
      %v1655 = vunpack.c.l.b16 %v1623
      %v1656 = vunpack.c.l.b16 %v1624
      %v1657 = vunpack.c.l.b16 %v1625
      %v1658 = vunpack.c.l.b16 %v1626
      %v1659 = vunpack.c.l.b16 %v1627
      %v1660 = vunpack.c.l.b16 %v1628
      %v1661 = vunpack.c.l.b16 %v1629
      %v1662 = vpack.c.b16 %v1647, %v1646
      %v1663 = vpack.c.b16 %v1649, %v1648
      %v1664 = vpack.c.b16 %v1651, %v1650
      %v1665 = vpack.c.b16 %v1653, %v1652
      %v1666 = vpack.c.b16 %v1655, %v1654
      %v1667 = vpack.c.b16 %v1657, %v1656
      %v1668 = vpack.c.b16 %v1659, %v1658
      %v1669 = vpack.c.b16 %v1661, %v1660
      %1678 = vmatpush.bf16.msra.mxu0 %v1669
      %1679 = vmatpush.bf16.msra.mxu0 %v1668
      %1680 = vmatpush.bf16.msra.mxu0 %v1667
      %1681 = vmatpush.bf16.msra.mxu0 %v1666
      %1682 = vmatpush.bf16.msra.mxu0 %v1665
      %1683 = vmatpush.bf16.msra.mxu0 %v1664
      %1684 = vmatpush.bf16.msra.mxu0 %v1663
      %1685 = vmatpush.bf16.msra.mxu0 %v1662
      %1686 = vmatmul.bf16.gmra.mxu0 %v1559
      %v1687 = vpop.f32.mrf.mxu0
      %v1688 = vadd.f32 0.0, %v1687
      %v1689 = vpop.f32.mrf.mxu0
      %v1690 = vadd.f32 0.0, %v1689
      %1691 = vmatmul.bf16.gmra.mxu0 %v1560
      %v1692 = vpop.f32.mrf.mxu0
      %v1693 = vadd.f32 0.0, %v1692
      %v1694 = vpop.f32.mrf.mxu0
      %v1695 = vadd.f32 0.0, %v1694
      %1696 = vmatmul.bf16.gmra.mxu0 %v1561
      %v1697 = vpop.f32.mrf.mxu0
      %v1698 = vadd.f32 0.0, %v1697
      %v1699 = vpop.f32.mrf.mxu0
      %v1700 = vadd.f32 0.0, %v1699
      %1701 = vmatmul.bf16.gmra.mxu0 %v1562
      %v1702 = vpop.f32.mrf.mxu0
      %v1703 = vadd.f32 0.0, %v1702
      %v1704 = vpop.f32.mrf.mxu0
      %v1705 = vadd.f32 0.0, %v1704
      %1706 = vmatmul.bf16.gmra.mxu0 %v1563
      %v1707 = vpop.f32.mrf.mxu0
      %v1708 = vadd.f32 0.0, %v1707
      %v1709 = vpop.f32.mrf.mxu0
      %v1710 = vadd.f32 0.0, %v1709
      %1711 = vmatmul.bf16.gmra.mxu0 %v1564
      %v1712 = vpop.f32.mrf.mxu0
      %v1713 = vadd.f32 0.0, %v1712
      %v1714 = vpop.f32.mrf.mxu0
      %v1715 = vadd.f32 0.0, %v1714
      %1716 = vmatmul.bf16.gmra.mxu0 %v1565
      %v1717 = vpop.f32.mrf.mxu0
      %v1718 = vadd.f32 0.0, %v1717
      %v1719 = vpop.f32.mrf.mxu0
      %v1720 = vadd.f32 0.0, %v1719
      %1721 = vmatmul.bf16.gmra.mxu0 %v1566
      %v1722 = vpop.f32.mrf.mxu0
      %v1723 = vadd.f32 0.0, %v1722
      %v1724 = vpop.f32.mrf.mxu0
      %v1725 = vadd.f32 0.0, %v1724
      %1726 = vmatmul.bf16.gmra.mxu0 %v1567
      %v1727 = vpop.f32.mrf.mxu0
      %v1728 = vadd.f32 0.0, %v1727
      %v1729 = vpop.f32.mrf.mxu0
      %v1730 = vadd.f32 0.0, %v1729
      %1731 = vmatmul.bf16.gmra.mxu0 %v1568
      %v1732 = vpop.f32.mrf.mxu0
      %v1733 = vadd.f32 0.0, %v1732
      %v1734 = vpop.f32.mrf.mxu0
      %v1735 = vadd.f32 0.0, %v1734
      %1736 = vmatmul.bf16.gmra.mxu0 %v1569
      %v1737 = vpop.f32.mrf.mxu0
      %v1738 = vadd.f32 0.0, %v1737
      %v1739 = vpop.f32.mrf.mxu0
      %v1740 = vadd.f32 0.0, %v1739
      %1741 = vmatmul.bf16.gmra.mxu0 %v1570
      %v1742 = vpop.f32.mrf.mxu0
      %v1743 = vadd.f32 0.0, %v1742
      %v1744 = vpop.f32.mrf.mxu0
      %v1745 = vadd.f32 0.0, %v1744
      %1746 = vmatmul.bf16.gmra.mxu0 %v1571
      %v1747 = vpop.f32.mrf.mxu0
      %v1748 = vadd.f32 0.0, %v1747
      %v1749 = vpop.f32.mrf.mxu0
      %v1750 = vadd.f32 0.0, %v1749
      %1751 = vmatmul.bf16.gmra.mxu0 %v1572
      %v1752 = vpop.f32.mrf.mxu0
      %v1753 = vadd.f32 0.0, %v1752
      %v1754 = vpop.f32.mrf.mxu0
      %v1755 = vadd.f32 0.0, %v1754
      %1756 = vmatmul.bf16.gmra.mxu0 %v1573
      %v1757 = vpop.f32.mrf.mxu0
      %v1758 = vadd.f32 0.0, %v1757
      %v1759 = vpop.f32.mrf.mxu0
      %v1760 = vadd.f32 0.0, %v1759
      %1761 = vmatmul.bf16.gmra.mxu0 %v1574
      %v1762 = vpop.f32.mrf.mxu0
      %v1763 = vadd.f32 0.0, %v1762
      %v1764 = vpop.f32.mrf.mxu0
      %v1765 = vadd.f32 0.0, %v1764
      %1766 = vmatmul.bf16.gmra.mxu0 %v1575
      %v1767 = vpop.f32.mrf.mxu0
      %v1768 = vadd.f32 0.0, %v1767
      %v1769 = vpop.f32.mrf.mxu0
      %v1770 = vadd.f32 0.0, %v1769
      %1771 = vmatmul.bf16.gmra.mxu0 %v1576
      %v1772 = vpop.f32.mrf.mxu0
      %v1773 = vadd.f32 0.0, %v1772
      %v1774 = vpop.f32.mrf.mxu0
      %v1775 = vadd.f32 0.0, %v1774
      %1776 = vdwg.mxu0
      %v1777 = vadd.f32 %v1577, %v1688
      %v1778 = vadd.f32 %v1578, %v1690
      %v1779 = vadd.f32 %v1579, %v1693
      %v1780 = vadd.f32 %v1580, %v1695
      %v1781 = vadd.f32 %v1581, %v1698
      %v1782 = vadd.f32 %v1582, %v1700
      %v1783 = vadd.f32 %v1583, %v1703
      %v1784 = vadd.f32 %v1584, %v1705
      %v1785 = vadd.f32 %v1585, %v1708
      %v1786 = vadd.f32 %v1586, %v1710
      %v1787 = vadd.f32 %v1587, %v1713
      %v1788 = vadd.f32 %v1588, %v1715
      %v1789 = vadd.f32 %v1589, %v1718
      %v1790 = vadd.f32 %v1590, %v1720
      %v1791 = vadd.f32 %v1591, %v1723
      %v1792 = vadd.f32 %v1592, %v1725
      %v1793 = vadd.f32 %v1593, %v1728
      %v1794 = vadd.f32 %v1594, %v1730
      %v1795 = vadd.f32 %v1595, %v1733
      %v1796 = vadd.f32 %v1596, %v1735
      %v1797 = vadd.f32 %v1597, %v1738
      %v1798 = vadd.f32 %v1598, %v1740
      %v1799 = vadd.f32 %v1599, %v1743
      %v1800 = vadd.f32 %v1600, %v1745
      %v1801 = vadd.f32 %v1601, %v1748
      %v1802 = vadd.f32 %v1602, %v1750
      %v1803 = vadd.f32 %v1603, %v1753
      %v1804 = vadd.f32 %v1604, %v1755
      %v1805 = vadd.f32 %v1605, %v1758
      %v1806 = vadd.f32 %v1606, %v1760
      %v1807 = vadd.f32 %v1607, %v1763
      %v1808 = vadd.f32 %v1608, %v1765
      %v1809 = vadd.f32 %v1609, %v1768
      %v1810 = vadd.f32 %v1610, %v1770
      %v1811 = vadd.f32 %v1611, %v1773
      %v1812 = vadd.f32 %v1612, %v1775
      %1813 = vst [vmem:[#allocation3] sm:$0xff] %v1777
      %1814 = vst [vmem:[#allocation3 + $0x8] sm:$0xff] %v1778
      %1815 = vst [vmem:[#allocation3 + $0x10] sm:$0xff] %v1779
      %1816 = vst [vmem:[#allocation3 + $0x18] sm:$0xff] %v1780
      %1817 = vst [vmem:[#allocation3 + $0x20] sm:$0xff] %v1781
      %1818 = vst [vmem:[#allocation3 + $0x28] sm:$0xff] %v1782
      %1819 = vst [vmem:[#allocation3 + $0x30] sm:$0xff] %v1783
      %1820 = vst [vmem:[#allocation3 + $0x38] sm:$0xff] %v1784
      %1821 = vst [vmem:[#allocation3 + $0x40] sm:$0xff] %v1785
      %1822 = vst [vmem:[#allocation3 + $0x48] sm:$0xff] %v1786
      %1823 = vst [vmem:[#allocation3 + $0x50] sm:$0xff] %v1787
      %1824 = vst [vmem:[#allocation3 + $0x58] sm:$0xff] %v1788
      %1825 = vst [vmem:[#allocation3 + $0x60] sm:$0xff] %v1789
      %1826 = vst [vmem:[#allocation3 + $0x68] sm:$0xff] %v1790
      %1827 = vst [vmem:[#allocation3 + $0x70] sm:$0xff] %v1791
      %1828 = vst [vmem:[#allocation3 + $0x78] sm:$0xff] %v1792
      %1829 = vst [vmem:[#allocation3 + $0x80] sm:$0xff] %v1793
      %1830 = vst [vmem:[#allocation3 + $0x88] sm:$0xff] %v1794
      %1831 = vst [vmem:[#allocation3 + $0x90] sm:$0xff] %v1795
      %1832 = vst [vmem:[#allocation3 + $0x98] sm:$0xff] %v1796
      %1833 = vst [vmem:[#allocation3 + $0xa0] sm:$0xff] %v1797
      %1834 = vst [vmem:[#allocation3 + $0xa8] sm:$0xff] %v1798
      %1835 = vst [vmem:[#allocation3 + $0xb0] sm:$0xff] %v1799
      %1836 = vst [vmem:[#allocation3 + $0xb8] sm:$0xff] %v1800
      %1837 = vst [vmem:[#allocation3 + $0xc0] sm:$0xff] %v1801
      %1838 = vst [vmem:[#allocation3 + $0xc8] sm:$0xff] %v1802
      %1839 = vst [vmem:[#allocation3 + $0xd0] sm:$0xff] %v1803
      %1840 = vst [vmem:[#allocation3 + $0xd8] sm:$0xff] %v1804
      %1841 = vst [vmem:[#allocation3 + $0xe0] sm:$0xff] %v1805
      %1842 = vst [vmem:[#allocation3 + $0xe8] sm:$0xff] %v1806
      %1843 = vst [vmem:[#allocation3 + $0xf0] sm:$0xff] %v1807
      %1844 = vst [vmem:[#allocation3 + $0xf8] sm:$0xff] %v1808
      %1845 = vst [vmem:[#allocation3 + $0x100] sm:$0xff] %v1809
      %1846 = vst [vmem:[#allocation3 + $0x108] sm:$0xff] %v1810
      %1847 = vst [vmem:[#allocation3 + $0x110] sm:$0xff] %v1811
      %1848 = vst [vmem:[#allocation3 + $0x118] sm:$0xff] %v1812
      %v1849 = vld [vmem:[#allocation2 + $0x13] sm:$0xff]
      %v1850 = vld [vmem:[#allocation2 + $0x1b] sm:$0xff]
      %v1851 = vld [vmem:[#allocation2 + $0x23] sm:$0xff]
      %v1852 = vld [vmem:[#allocation2 + $0x2b] sm:$0xff]
      %v1853 = vld [vmem:[#allocation2 + $0x33] sm:$0xff]
      %v1854 = vld [vmem:[#allocation2 + $0x3b] sm:$0xff]
      %v1855 = vld [vmem:[#allocation2 + $0x43] sm:$0xff]
      %v1856 = vld [vmem:[#allocation2 + $0x4b] sm:$0xff]
      %v1857 = vld [vmem:[#allocation2 + $0x53] sm:$0xff]
      %v1858 = vld [vmem:[#allocation2 + $0x5b] sm:$0xff]
      %v1859 = vld [vmem:[#allocation2 + $0x63] sm:$0xff]
      %v1860 = vld [vmem:[#allocation2 + $0x6b] sm:$0xff]
      %v1861 = vld [vmem:[#allocation2 + $0x73] sm:$0xff]
      %v1862 = vld [vmem:[#allocation2 + $0x7b] sm:$0xff]
      %v1863 = vld [vmem:[#allocation2 + $0x83] sm:$0xff]
      %v1864 = vld [vmem:[#allocation2 + $0x8b] sm:$0xff]
      %v1865 = vld [vmem:[#allocation2 + $0x93] sm:$0xff]
      %v1866 = vld [vmem:[#allocation2 + $0x9b] sm:$0xff]
      %v1867 = vld [vmem:[#allocation2 + $0xa3] sm:$0xff]
      %v1868 = vld [vmem:[#allocation2 + $0xab] sm:$0xff]
      %v1869 = vld [vmem:[#allocation2 + $0xb3] sm:$0xff]
      %v1870 = vld [vmem:[#allocation2 + $0xbb] sm:$0xff]
      %v1871 = vld [vmem:[#allocation2 + $0xc3] sm:$0xff]
      %v1872 = vld [vmem:[#allocation2 + $0xcb] sm:$0xff]
      %v1873 = vld [vmem:[#allocation2 + $0xd3] sm:$0xff]
      %v1874 = vld [vmem:[#allocation2 + $0xdb] sm:$0xff]
      %v1875 = vld [vmem:[#allocation2 + $0xe3] sm:$0xff]
      %v1876 = vld [vmem:[#allocation2 + $0xeb] sm:$0xff]
      %v1877 = vld [vmem:[#allocation2 + $0xf3] sm:$0xff]
      %v1878 = vld [vmem:[#allocation2 + $0xfb] sm:$0xff]
      %v1879 = vld [vmem:[#allocation2 + $0x103] sm:$0xff]
      %v1880 = vld [vmem:[#allocation2 + $0x10b] sm:$0xff]
      %v1881 = vld [vmem:[#allocation2 + $0x113] sm:$0xff]
      %v1882 = vld [vmem:[#allocation2 + $0x11b] sm:$0xff]
      %v1883 = vld [vmem:[#allocation2 + $0x123] sm:$0xff]
      %v1884 = vld [vmem:[#allocation2 + $0x12b] sm:$0xff]
      %v1885 = vpack.c.bf16 %v1850, %v1849
      %v1886 = vpack.c.bf16 %v1852, %v1851
      %v1887 = vpack.c.bf16 %v1854, %v1853
      %v1888 = vpack.c.bf16 %v1856, %v1855
      %v1889 = vpack.c.bf16 %v1858, %v1857
      %v1890 = vpack.c.bf16 %v1860, %v1859
      %v1891 = vpack.c.bf16 %v1862, %v1861
      %v1892 = vpack.c.bf16 %v1864, %v1863
      %v1893 = vpack.c.bf16 %v1866, %v1865
      %v1894 = vpack.c.bf16 %v1868, %v1867
      %v1895 = vpack.c.bf16 %v1870, %v1869
      %v1896 = vpack.c.bf16 %v1872, %v1871
      %v1897 = vpack.c.bf16 %v1874, %v1873
      %v1898 = vpack.c.bf16 %v1876, %v1875
      %v1899 = vpack.c.bf16 %v1878, %v1877
      %v1900 = vpack.c.bf16 %v1880, %v1879
      %v1901 = vpack.c.bf16 %v1882, %v1881
      %v1902 = vpack.c.bf16 %v1884, %v1883
      %v1903 = vld [vmem:[#allocation3] sm:$0xff]
      %v1904 = vld [vmem:[#allocation3 + $0x8] sm:$0xff]
      %v1905 = vld [vmem:[#allocation3 + $0x10] sm:$0xff]
      %v1906 = vld [vmem:[#allocation3 + $0x18] sm:$0xff]
      %v1907 = vld [vmem:[#allocation3 + $0x20] sm:$0xff]
      %v1908 = vld [vmem:[#allocation3 + $0x28] sm:$0xff]
      %v1909 = vld [vmem:[#allocation3 + $0x30] sm:$0xff]
      %v1910 = vld [vmem:[#allocation3 + $0x38] sm:$0xff]
      %v1911 = vld [vmem:[#allocation3 + $0x40] sm:$0xff]
      %v1912 = vld [vmem:[#allocation3 + $0x48] sm:$0xff]
      %v1913 = vld [vmem:[#allocation3 + $0x50] sm:$0xff]
      %v1914 = vld [vmem:[#allocation3 + $0x58] sm:$0xff]
      %v1915 = vld [vmem:[#allocation3 + $0x60] sm:$0xff]
      %v1916 = vld [vmem:[#allocation3 + $0x68] sm:$0xff]
      %v1917 = vld [vmem:[#allocation3 + $0x70] sm:$0xff]
      %v1918 = vld [vmem:[#allocation3 + $0x78] sm:$0xff]
      %v1919 = vld [vmem:[#allocation3 + $0x80] sm:$0xff]
      %v1920 = vld [vmem:[#allocation3 + $0x88] sm:$0xff]
      %v1921 = vld [vmem:[#allocation3 + $0x90] sm:$0xff]
      %v1922 = vld [vmem:[#allocation3 + $0x98] sm:$0xff]
      %v1923 = vld [vmem:[#allocation3 + $0xa0] sm:$0xff]
      %v1924 = vld [vmem:[#allocation3 + $0xa8] sm:$0xff]
      %v1925 = vld [vmem:[#allocation3 + $0xb0] sm:$0xff]
      %v1926 = vld [vmem:[#allocation3 + $0xb8] sm:$0xff]
      %v1927 = vld [vmem:[#allocation3 + $0xc0] sm:$0xff]
      %v1928 = vld [vmem:[#allocation3 + $0xc8] sm:$0xff]
      %v1929 = vld [vmem:[#allocation3 + $0xd0] sm:$0xff]
      %v1930 = vld [vmem:[#allocation3 + $0xd8] sm:$0xff]
      %v1931 = vld [vmem:[#allocation3 + $0xe0] sm:$0xff]
      %v1932 = vld [vmem:[#allocation3 + $0xe8] sm:$0xff]
      %v1933 = vld [vmem:[#allocation3 + $0xf0] sm:$0xff]
      %v1934 = vld [vmem:[#allocation3 + $0xf8] sm:$0xff]
      %v1935 = vld [vmem:[#allocation3 + $0x100] sm:$0xff]
      %v1936 = vld [vmem:[#allocation3 + $0x108] sm:$0xff]
      %v1937 = vld [vmem:[#allocation3 + $0x110] sm:$0xff]
      %v1938 = vld [vmem:[#allocation3 + $0x118] sm:$0xff]
      %s1939 = scalar_lea.vmem %s4, 256
      %v1940 = vld [vmem:[%s1939] sm:$0xf]
      %v1941 = vld [vmem:[%s1939 + $0x4] sm:$0xf]
      %v1942 = vld [vmem:[%s1939 + $0x8] sm:$0xf]
      %v1943 = vld [vmem:[%s1939 + $0xc] sm:$0xf]
      %v1944 = vld [vmem:[%s1939 + $0x10] sm:$0xf]
      %v1945 = vld [vmem:[%s1939 + $0x14] sm:$0xf]
      %v1946 = vld [vmem:[%s1939 + $0x18] sm:$0xf]
      %v1947 = vld [vmem:[%s1939 + $0x1c] sm:$0xf]
      %v1948 = vld [vmem:[%s1939 + $0x20] sm:$0xf]
      %v1949 = vld [vmem:[%s1939 + $0x24] sm:$0xf]
      %v1950 = vld [vmem:[%s1939 + $0x28] sm:$0xf]
      %v1951 = vld [vmem:[%s1939 + $0x2c] sm:$0xf]
      %v1952 = vld [vmem:[%s1939 + $0x30] sm:$0xf]
      %v1953 = vld [vmem:[%s1939 + $0x34] sm:$0xf]
      %v1954 = vld [vmem:[%s1939 + $0x38] sm:$0xf]
      %v1955 = vld [vmem:[%s1939 + $0x3c] sm:$0xf]
      %v1972 = vunpack.c.l.b16 %v1940
      %v1973 = vunpack.c.l.b16 %v1941
      %v1974 = vunpack.c.l.b16 %v1942
      %v1975 = vunpack.c.l.b16 %v1943
      %v1976 = vunpack.c.l.b16 %v1944
      %v1977 = vunpack.c.l.b16 %v1945
      %v1978 = vunpack.c.l.b16 %v1946
      %v1979 = vunpack.c.l.b16 %v1947
      %v1980 = vunpack.c.l.b16 %v1948
      %v1981 = vunpack.c.l.b16 %v1949
      %v1982 = vunpack.c.l.b16 %v1950
      %v1983 = vunpack.c.l.b16 %v1951
      %v1984 = vunpack.c.l.b16 %v1952
      %v1985 = vunpack.c.l.b16 %v1953
      %v1986 = vunpack.c.l.b16 %v1954
      %v1987 = vunpack.c.l.b16 %v1955
      %v1988 = vpack.c.b16 %v1973, %v1972
      %v1989 = vpack.c.b16 %v1975, %v1974
      %v1990 = vpack.c.b16 %v1977, %v1976
      %v1991 = vpack.c.b16 %v1979, %v1978
      %v1992 = vpack.c.b16 %v1981, %v1980
      %v1993 = vpack.c.b16 %v1983, %v1982
      %v1994 = vpack.c.b16 %v1985, %v1984
      %v1995 = vpack.c.b16 %v1987, %v1986
      %2004 = vmatpush.bf16.msra.mxu0 %v1995
      %2005 = vmatpush.bf16.msra.mxu0 %v1994
      %2006 = vmatpush.bf16.msra.mxu0 %v1993
      %2007 = vmatpush.bf16.msra.mxu0 %v1992
      %2008 = vmatpush.bf16.msra.mxu0 %v1991
      %2009 = vmatpush.bf16.msra.mxu0 %v1990
      %2010 = vmatpush.bf16.msra.mxu0 %v1989
      %2011 = vmatpush.bf16.msra.mxu0 %v1988
      %2012 = vmatmul.bf16.gmra.mxu0 %v1885
      %v2013 = vpop.f32.mrf.mxu0
      %v2014 = vadd.f32 0.0, %v2013
      %v2015 = vpop.f32.mrf.mxu0
      %v2016 = vadd.f32 0.0, %v2015
      %2017 = vmatmul.bf16.gmra.mxu0 %v1886
      %v2018 = vpop.f32.mrf.mxu0
      %v2019 = vadd.f32 0.0, %v2018
      %v2020 = vpop.f32.mrf.mxu0
      %v2021 = vadd.f32 0.0, %v2020
      %2022 = vmatmul.bf16.gmra.mxu0 %v1887
      %v2023 = vpop.f32.mrf.mxu0
      %v2024 = vadd.f32 0.0, %v2023
      %v2025 = vpop.f32.mrf.mxu0
      %v2026 = vadd.f32 0.0, %v2025
      %2027 = vmatmul.bf16.gmra.mxu0 %v1888
      %v2028 = vpop.f32.mrf.mxu0
      %v2029 = vadd.f32 0.0, %v2028
      %v2030 = vpop.f32.mrf.mxu0
      %v2031 = vadd.f32 0.0, %v2030
      %2032 = vmatmul.bf16.gmra.mxu0 %v1889
      %v2033 = vpop.f32.mrf.mxu0
      %v2034 = vadd.f32 0.0, %v2033
      %v2035 = vpop.f32.mrf.mxu0
      %v2036 = vadd.f32 0.0, %v2035
      %2037 = vmatmul.bf16.gmra.mxu0 %v1890
      %v2038 = vpop.f32.mrf.mxu0
      %v2039 = vadd.f32 0.0, %v2038
      %v2040 = vpop.f32.mrf.mxu0
      %v2041 = vadd.f32 0.0, %v2040
      %2042 = vmatmul.bf16.gmra.mxu0 %v1891
      %v2043 = vpop.f32.mrf.mxu0
      %v2044 = vadd.f32 0.0, %v2043
      %v2045 = vpop.f32.mrf.mxu0
      %v2046 = vadd.f32 0.0, %v2045
      %2047 = vmatmul.bf16.gmra.mxu0 %v1892
      %v2048 = vpop.f32.mrf.mxu0
      %v2049 = vadd.f32 0.0, %v2048
      %v2050 = vpop.f32.mrf.mxu0
      %v2051 = vadd.f32 0.0, %v2050
      %2052 = vmatmul.bf16.gmra.mxu0 %v1893
      %v2053 = vpop.f32.mrf.mxu0
      %v2054 = vadd.f32 0.0, %v2053
      %v2055 = vpop.f32.mrf.mxu0
      %v2056 = vadd.f32 0.0, %v2055
      %2057 = vmatmul.bf16.gmra.mxu0 %v1894
      %v2058 = vpop.f32.mrf.mxu0
      %v2059 = vadd.f32 0.0, %v2058
      %v2060 = vpop.f32.mrf.mxu0
      %v2061 = vadd.f32 0.0, %v2060
      %2062 = vmatmul.bf16.gmra.mxu0 %v1895
      %v2063 = vpop.f32.mrf.mxu0
      %v2064 = vadd.f32 0.0, %v2063
      %v2065 = vpop.f32.mrf.mxu0
      %v2066 = vadd.f32 0.0, %v2065
      %2067 = vmatmul.bf16.gmra.mxu0 %v1896
      %v2068 = vpop.f32.mrf.mxu0
      %v2069 = vadd.f32 0.0, %v2068
      %v2070 = vpop.f32.mrf.mxu0
      %v2071 = vadd.f32 0.0, %v2070
      %2072 = vmatmul.bf16.gmra.mxu0 %v1897
      %v2073 = vpop.f32.mrf.mxu0
      %v2074 = vadd.f32 0.0, %v2073
      %v2075 = vpop.f32.mrf.mxu0
      %v2076 = vadd.f32 0.0, %v2075
      %2077 = vmatmul.bf16.gmra.mxu0 %v1898
      %v2078 = vpop.f32.mrf.mxu0
      %v2079 = vadd.f32 0.0, %v2078
      %v2080 = vpop.f32.mrf.mxu0
      %v2081 = vadd.f32 0.0, %v2080
      %2082 = vmatmul.bf16.gmra.mxu0 %v1899
      %v2083 = vpop.f32.mrf.mxu0
      %v2084 = vadd.f32 0.0, %v2083
      %v2085 = vpop.f32.mrf.mxu0
      %v2086 = vadd.f32 0.0, %v2085
      %2087 = vmatmul.bf16.gmra.mxu0 %v1900
      %v2088 = vpop.f32.mrf.mxu0
      %v2089 = vadd.f32 0.0, %v2088
      %v2090 = vpop.f32.mrf.mxu0
      %v2091 = vadd.f32 0.0, %v2090
      %2092 = vmatmul.bf16.gmra.mxu0 %v1901
      %v2093 = vpop.f32.mrf.mxu0
      %v2094 = vadd.f32 0.0, %v2093
      %v2095 = vpop.f32.mrf.mxu0
      %v2096 = vadd.f32 0.0, %v2095
      %2097 = vmatmul.bf16.gmra.mxu0 %v1902
      %v2098 = vpop.f32.mrf.mxu0
      %v2099 = vadd.f32 0.0, %v2098
      %v2100 = vpop.f32.mrf.mxu0
      %v2101 = vadd.f32 0.0, %v2100
      %2102 = vdwg.mxu0
      %v2103 = vadd.f32 %v1903, %v2014
      %v2104 = vadd.f32 %v1904, %v2016
      %v2105 = vadd.f32 %v1905, %v2019
      %v2106 = vadd.f32 %v1906, %v2021
      %v2107 = vadd.f32 %v1907, %v2024
      %v2108 = vadd.f32 %v1908, %v2026
      %v2109 = vadd.f32 %v1909, %v2029
      %v2110 = vadd.f32 %v1910, %v2031
      %v2111 = vadd.f32 %v1911, %v2034
      %v2112 = vadd.f32 %v1912, %v2036
      %v2113 = vadd.f32 %v1913, %v2039
      %v2114 = vadd.f32 %v1914, %v2041
      %v2115 = vadd.f32 %v1915, %v2044
      %v2116 = vadd.f32 %v1916, %v2046
      %v2117 = vadd.f32 %v1917, %v2049
      %v2118 = vadd.f32 %v1918, %v2051
      %v2119 = vadd.f32 %v1919, %v2054
      %v2120 = vadd.f32 %v1920, %v2056
      %v2121 = vadd.f32 %v1921, %v2059
      %v2122 = vadd.f32 %v1922, %v2061
      %v2123 = vadd.f32 %v1923, %v2064
      %v2124 = vadd.f32 %v1924, %v2066
      %v2125 = vadd.f32 %v1925, %v2069
      %v2126 = vadd.f32 %v1926, %v2071
      %v2127 = vadd.f32 %v1927, %v2074
      %v2128 = vadd.f32 %v1928, %v2076
      %v2129 = vadd.f32 %v1929, %v2079
      %v2130 = vadd.f32 %v1930, %v2081
      %v2131 = vadd.f32 %v1931, %v2084
      %v2132 = vadd.f32 %v1932, %v2086
      %v2133 = vadd.f32 %v1933, %v2089
      %v2134 = vadd.f32 %v1934, %v2091
      %v2135 = vadd.f32 %v1935, %v2094
      %v2136 = vadd.f32 %v1936, %v2096
      %v2137 = vadd.f32 %v1937, %v2099
      %v2138 = vadd.f32 %v1938, %v2101
      %2139 = vst [vmem:[#allocation3] sm:$0xff] %v2103
      %2140 = vst [vmem:[#allocation3 + $0x8] sm:$0xff] %v2104
      %2141 = vst [vmem:[#allocation3 + $0x10] sm:$0xff] %v2105
      %2142 = vst [vmem:[#allocation3 + $0x18] sm:$0xff] %v2106
      %2143 = vst [vmem:[#allocation3 + $0x20] sm:$0xff] %v2107
      %2144 = vst [vmem:[#allocation3 + $0x28] sm:$0xff] %v2108
      %2145 = vst [vmem:[#allocation3 + $0x30] sm:$0xff] %v2109
      %2146 = vst [vmem:[#allocation3 + $0x38] sm:$0xff] %v2110
      %2147 = vst [vmem:[#allocation3 + $0x40] sm:$0xff] %v2111
      %2148 = vst [vmem:[#allocation3 + $0x48] sm:$0xff] %v2112
      %2149 = vst [vmem:[#allocation3 + $0x50] sm:$0xff] %v2113
      %2150 = vst [vmem:[#allocation3 + $0x58] sm:$0xff] %v2114
      %2151 = vst [vmem:[#allocation3 + $0x60] sm:$0xff] %v2115
      %2152 = vst [vmem:[#allocation3 + $0x68] sm:$0xff] %v2116
      %2153 = vst [vmem:[#allocation3 + $0x70] sm:$0xff] %v2117
      %2154 = vst [vmem:[#allocation3 + $0x78] sm:$0xff] %v2118
      %2155 = vst [vmem:[#allocation3 + $0x80] sm:$0xff] %v2119
      %2156 = vst [vmem:[#allocation3 + $0x88] sm:$0xff] %v2120
      %2157 = vst [vmem:[#allocation3 + $0x90] sm:$0xff] %v2121
      %2158 = vst [vmem:[#allocation3 + $0x98] sm:$0xff] %v2122
      %2159 = vst [vmem:[#allocation3 + $0xa0] sm:$0xff] %v2123
      %2160 = vst [vmem:[#allocation3 + $0xa8] sm:$0xff] %v2124
      %2161 = vst [vmem:[#allocation3 + $0xb0] sm:$0xff] %v2125
      %2162 = vst [vmem:[#allocation3 + $0xb8] sm:$0xff] %v2126
      %2163 = vst [vmem:[#allocation3 + $0xc0] sm:$0xff] %v2127
      %2164 = vst [vmem:[#allocation3 + $0xc8] sm:$0xff] %v2128
      %2165 = vst [vmem:[#allocation3 + $0xd0] sm:$0xff] %v2129
      %2166 = vst [vmem:[#allocation3 + $0xd8] sm:$0xff] %v2130
      %2167 = vst [vmem:[#allocation3 + $0xe0] sm:$0xff] %v2131
      %2168 = vst [vmem:[#allocation3 + $0xe8] sm:$0xff] %v2132
      %2169 = vst [vmem:[#allocation3 + $0xf0] sm:$0xff] %v2133
      %2170 = vst [vmem:[#allocation3 + $0xf8] sm:$0xff] %v2134
      %2171 = vst [vmem:[#allocation3 + $0x100] sm:$0xff] %v2135
      %2172 = vst [vmem:[#allocation3 + $0x108] sm:$0xff] %v2136
      %2173 = vst [vmem:[#allocation3 + $0x110] sm:$0xff] %v2137
      %2174 = vst [vmem:[#allocation3 + $0x118] sm:$0xff] %v2138
      %v2175 = vld [vmem:[#allocation2 + $0x14] sm:$0xff]
      %v2176 = vld [vmem:[#allocation2 + $0x1c] sm:$0xff]
      %v2177 = vld [vmem:[#allocation2 + $0x24] sm:$0xff]
      %v2178 = vld [vmem:[#allocation2 + $0x2c] sm:$0xff]
      %v2179 = vld [vmem:[#allocation2 + $0x34] sm:$0xff]
      %v2180 = vld [vmem:[#allocation2 + $0x3c] sm:$0xff]
      %v2181 = vld [vmem:[#allocation2 + $0x44] sm:$0xff]
      %v2182 = vld [vmem:[#allocation2 + $0x4c] sm:$0xff]
      %v2183 = vld [vmem:[#allocation2 + $0x54] sm:$0xff]
      %v2184 = vld [vmem:[#allocation2 + $0x5c] sm:$0xff]
      %v2185 = vld [vmem:[#allocation2 + $0x64] sm:$0xff]
      %v2186 = vld [vmem:[#allocation2 + $0x6c] sm:$0xff]
      %v2187 = vld [vmem:[#allocation2 + $0x74] sm:$0xff]
      %v2188 = vld [vmem:[#allocation2 + $0x7c] sm:$0xff]
      %v2189 = vld [vmem:[#allocation2 + $0x84] sm:$0xff]
      %v2190 = vld [vmem:[#allocation2 + $0x8c] sm:$0xff]
      %v2191 = vld [vmem:[#allocation2 + $0x94] sm:$0xff]
      %v2192 = vld [vmem:[#allocation2 + $0x9c] sm:$0xff]
      %v2193 = vld [vmem:[#allocation2 + $0xa4] sm:$0xff]
      %v2194 = vld [vmem:[#allocation2 + $0xac] sm:$0xff]
      %v2195 = vld [vmem:[#allocation2 + $0xb4] sm:$0xff]
      %v2196 = vld [vmem:[#allocation2 + $0xbc] sm:$0xff]
      %v2197 = vld [vmem:[#allocation2 + $0xc4] sm:$0xff]
      %v2198 = vld [vmem:[#allocation2 + $0xcc] sm:$0xff]
      %v2199 = vld [vmem:[#allocation2 + $0xd4] sm:$0xff]
      %v2200 = vld [vmem:[#allocation2 + $0xdc] sm:$0xff]
      %v2201 = vld [vmem:[#allocation2 + $0xe4] sm:$0xff]
      %v2202 = vld [vmem:[#allocation2 + $0xec] sm:$0xff]
      %v2203 = vld [vmem:[#allocation2 + $0xf4] sm:$0xff]
      %v2204 = vld [vmem:[#allocation2 + $0xfc] sm:$0xff]
      %v2205 = vld [vmem:[#allocation2 + $0x104] sm:$0xff]
      %v2206 = vld [vmem:[#allocation2 + $0x10c] sm:$0xff]
      %v2207 = vld [vmem:[#allocation2 + $0x114] sm:$0xff]
      %v2208 = vld [vmem:[#allocation2 + $0x11c] sm:$0xff]
      %v2209 = vld [vmem:[#allocation2 + $0x124] sm:$0xff]
      %v2210 = vld [vmem:[#allocation2 + $0x12c] sm:$0xff]
      %v2211 = vpack.c.bf16 %v2176, %v2175
      %v2212 = vpack.c.bf16 %v2178, %v2177
      %v2213 = vpack.c.bf16 %v2180, %v2179
      %v2214 = vpack.c.bf16 %v2182, %v2181
      %v2215 = vpack.c.bf16 %v2184, %v2183
      %v2216 = vpack.c.bf16 %v2186, %v2185
      %v2217 = vpack.c.bf16 %v2188, %v2187
      %v2218 = vpack.c.bf16 %v2190, %v2189
      %v2219 = vpack.c.bf16 %v2192, %v2191
      %v2220 = vpack.c.bf16 %v2194, %v2193
      %v2221 = vpack.c.bf16 %v2196, %v2195
      %v2222 = vpack.c.bf16 %v2198, %v2197
      %v2223 = vpack.c.bf16 %v2200, %v2199
      %v2224 = vpack.c.bf16 %v2202, %v2201
      %v2225 = vpack.c.bf16 %v2204, %v2203
      %v2226 = vpack.c.bf16 %v2206, %v2205
      %v2227 = vpack.c.bf16 %v2208, %v2207
      %v2228 = vpack.c.bf16 %v2210, %v2209
      %v2229 = vld [vmem:[#allocation3] sm:$0xff]
      %v2230 = vld [vmem:[#allocation3 + $0x8] sm:$0xff]
      %v2231 = vld [vmem:[#allocation3 + $0x10] sm:$0xff]
      %v2232 = vld [vmem:[#allocation3 + $0x18] sm:$0xff]
      %v2233 = vld [vmem:[#allocation3 + $0x20] sm:$0xff]
      %v2234 = vld [vmem:[#allocation3 + $0x28] sm:$0xff]
      %v2235 = vld [vmem:[#allocation3 + $0x30] sm:$0xff]
      %v2236 = vld [vmem:[#allocation3 + $0x38] sm:$0xff]
      %v2237 = vld [vmem:[#allocation3 + $0x40] sm:$0xff]
      %v2238 = vld [vmem:[#allocation3 + $0x48] sm:$0xff]
      %v2239 = vld [vmem:[#allocation3 + $0x50] sm:$0xff]
      %v2240 = vld [vmem:[#allocation3 + $0x58] sm:$0xff]
      %v2241 = vld [vmem:[#allocation3 + $0x60] sm:$0xff]
      %v2242 = vld [vmem:[#allocation3 + $0x68] sm:$0xff]
      %v2243 = vld [vmem:[#allocation3 + $0x70] sm:$0xff]
      %v2244 = vld [vmem:[#allocation3 + $0x78] sm:$0xff]
      %v2245 = vld [vmem:[#allocation3 + $0x80] sm:$0xff]
      %v2246 = vld [vmem:[#allocation3 + $0x88] sm:$0xff]
      %v2247 = vld [vmem:[#allocation3 + $0x90] sm:$0xff]
      %v2248 = vld [vmem:[#allocation3 + $0x98] sm:$0xff]
      %v2249 = vld [vmem:[#allocation3 + $0xa0] sm:$0xff]
      %v2250 = vld [vmem:[#allocation3 + $0xa8] sm:$0xff]
      %v2251 = vld [vmem:[#allocation3 + $0xb0] sm:$0xff]
      %v2252 = vld [vmem:[#allocation3 + $0xb8] sm:$0xff]
      %v2253 = vld [vmem:[#allocation3 + $0xc0] sm:$0xff]
      %v2254 = vld [vmem:[#allocation3 + $0xc8] sm:$0xff]
      %v2255 = vld [vmem:[#allocation3 + $0xd0] sm:$0xff]
      %v2256 = vld [vmem:[#allocation3 + $0xd8] sm:$0xff]
      %v2257 = vld [vmem:[#allocation3 + $0xe0] sm:$0xff]
      %v2258 = vld [vmem:[#allocation3 + $0xe8] sm:$0xff]
      %v2259 = vld [vmem:[#allocation3 + $0xf0] sm:$0xff]
      %v2260 = vld [vmem:[#allocation3 + $0xf8] sm:$0xff]
      %v2261 = vld [vmem:[#allocation3 + $0x100] sm:$0xff]
      %v2262 = vld [vmem:[#allocation3 + $0x108] sm:$0xff]
      %v2263 = vld [vmem:[#allocation3 + $0x110] sm:$0xff]
      %v2264 = vld [vmem:[#allocation3 + $0x118] sm:$0xff]
      %s2265 = scalar_lea.vmem %s4, 320
      %v2266 = vld [vmem:[%s2265] sm:$0xf]
      %v2267 = vld [vmem:[%s2265 + $0x4] sm:$0xf]
      %v2268 = vld [vmem:[%s2265 + $0x8] sm:$0xf]
      %v2269 = vld [vmem:[%s2265 + $0xc] sm:$0xf]
      %v2270 = vld [vmem:[%s2265 + $0x10] sm:$0xf]
      %v2271 = vld [vmem:[%s2265 + $0x14] sm:$0xf]
      %v2272 = vld [vmem:[%s2265 + $0x18] sm:$0xf]
      %v2273 = vld [vmem:[%s2265 + $0x1c] sm:$0xf]
      %v2274 = vld [vmem:[%s2265 + $0x20] sm:$0xf]
      %v2275 = vld [vmem:[%s2265 + $0x24] sm:$0xf]
      %v2276 = vld [vmem:[%s2265 + $0x28] sm:$0xf]
      %v2277 = vld [vmem:[%s2265 + $0x2c] sm:$0xf]
      %v2278 = vld [vmem:[%s2265 + $0x30] sm:$0xf]
      %v2279 = vld [vmem:[%s2265 + $0x34] sm:$0xf]
      %v2280 = vld [vmem:[%s2265 + $0x38] sm:$0xf]
      %v2281 = vld [vmem:[%s2265 + $0x3c] sm:$0xf]
      %v2298 = vunpack.c.l.b16 %v2266
      %v2299 = vunpack.c.l.b16 %v2267
      %v2300 = vunpack.c.l.b16 %v2268
      %v2301 = vunpack.c.l.b16 %v2269
      %v2302 = vunpack.c.l.b16 %v2270
      %v2303 = vunpack.c.l.b16 %v2271
      %v2304 = vunpack.c.l.b16 %v2272
      %v2305 = vunpack.c.l.b16 %v2273
      %v2306 = vunpack.c.l.b16 %v2274
      %v2307 = vunpack.c.l.b16 %v2275
      %v2308 = vunpack.c.l.b16 %v2276
      %v2309 = vunpack.c.l.b16 %v2277
      %v2310 = vunpack.c.l.b16 %v2278
      %v2311 = vunpack.c.l.b16 %v2279
      %v2312 = vunpack.c.l.b16 %v2280
      %v2313 = vunpack.c.l.b16 %v2281
      %v2314 = vpack.c.b16 %v2299, %v2298
      %v2315 = vpack.c.b16 %v2301, %v2300
      %v2316 = vpack.c.b16 %v2303, %v2302
      %v2317 = vpack.c.b16 %v2305, %v2304
      %v2318 = vpack.c.b16 %v2307, %v2306
      %v2319 = vpack.c.b16 %v2309, %v2308
      %v2320 = vpack.c.b16 %v2311, %v2310
      %v2321 = vpack.c.b16 %v2313, %v2312
      %2330 = vmatpush.bf16.msra.mxu0 %v2321
      %2331 = vmatpush.bf16.msra.mxu0 %v2320
      %2332 = vmatpush.bf16.msra.mxu0 %v2319
      %2333 = vmatpush.bf16.msra.mxu0 %v2318
      %2334 = vmatpush.bf16.msra.mxu0 %v2317
      %2335 = vmatpush.bf16.msra.mxu0 %v2316
      %2336 = vmatpush.bf16.msra.mxu0 %v2315
      %2337 = vmatpush.bf16.msra.mxu0 %v2314
      %2338 = vmatmul.bf16.gmra.mxu0 %v2211
      %v2339 = vpop.f32.mrf.mxu0
      %v2340 = vadd.f32 0.0, %v2339
      %v2341 = vpop.f32.mrf.mxu0
      %v2342 = vadd.f32 0.0, %v2341
      %2343 = vmatmul.bf16.gmra.mxu0 %v2212
      %v2344 = vpop.f32.mrf.mxu0
      %v2345 = vadd.f32 0.0, %v2344
      %v2346 = vpop.f32.mrf.mxu0
      %v2347 = vadd.f32 0.0, %v2346
      %2348 = vmatmul.bf16.gmra.mxu0 %v2213
      %v2349 = vpop.f32.mrf.mxu0
      %v2350 = vadd.f32 0.0, %v2349
      %v2351 = vpop.f32.mrf.mxu0
      %v2352 = vadd.f32 0.0, %v2351
      %2353 = vmatmul.bf16.gmra.mxu0 %v2214
      %v2354 = vpop.f32.mrf.mxu0
      %v2355 = vadd.f32 0.0, %v2354
      %v2356 = vpop.f32.mrf.mxu0
      %v2357 = vadd.f32 0.0, %v2356
      %2358 = vmatmul.bf16.gmra.mxu0 %v2215
      %v2359 = vpop.f32.mrf.mxu0
      %v2360 = vadd.f32 0.0, %v2359
      %v2361 = vpop.f32.mrf.mxu0
      %v2362 = vadd.f32 0.0, %v2361
      %2363 = vmatmul.bf16.gmra.mxu0 %v2216
      %v2364 = vpop.f32.mrf.mxu0
      %v2365 = vadd.f32 0.0, %v2364
      %v2366 = vpop.f32.mrf.mxu0
      %v2367 = vadd.f32 0.0, %v2366
      %2368 = vmatmul.bf16.gmra.mxu0 %v2217
      %v2369 = vpop.f32.mrf.mxu0
      %v2370 = vadd.f32 0.0, %v2369
      %v2371 = vpop.f32.mrf.mxu0
      %v2372 = vadd.f32 0.0, %v2371
      %2373 = vmatmul.bf16.gmra.mxu0 %v2218
      %v2374 = vpop.f32.mrf.mxu0
      %v2375 = vadd.f32 0.0, %v2374
      %v2376 = vpop.f32.mrf.mxu0
      %v2377 = vadd.f32 0.0, %v2376
      %2378 = vmatmul.bf16.gmra.mxu0 %v2219
      %v2379 = vpop.f32.mrf.mxu0
      %v2380 = vadd.f32 0.0, %v2379
      %v2381 = vpop.f32.mrf.mxu0
      %v2382 = vadd.f32 0.0, %v2381
      %2383 = vmatmul.bf16.gmra.mxu0 %v2220
      %v2384 = vpop.f32.mrf.mxu0
      %v2385 = vadd.f32 0.0, %v2384
      %v2386 = vpop.f32.mrf.mxu0
      %v2387 = vadd.f32 0.0, %v2386
      %2388 = vmatmul.bf16.gmra.mxu0 %v2221
      %v2389 = vpop.f32.mrf.mxu0
      %v2390 = vadd.f32 0.0, %v2389
      %v2391 = vpop.f32.mrf.mxu0
      %v2392 = vadd.f32 0.0, %v2391
      %2393 = vmatmul.bf16.gmra.mxu0 %v2222
      %v2394 = vpop.f32.mrf.mxu0
      %v2395 = vadd.f32 0.0, %v2394
      %v2396 = vpop.f32.mrf.mxu0
      %v2397 = vadd.f32 0.0, %v2396
      %2398 = vmatmul.bf16.gmra.mxu0 %v2223
      %v2399 = vpop.f32.mrf.mxu0
      %v2400 = vadd.f32 0.0, %v2399
      %v2401 = vpop.f32.mrf.mxu0
      %v2402 = vadd.f32 0.0, %v2401
      %2403 = vmatmul.bf16.gmra.mxu0 %v2224
      %v2404 = vpop.f32.mrf.mxu0
      %v2405 = vadd.f32 0.0, %v2404
      %v2406 = vpop.f32.mrf.mxu0
      %v2407 = vadd.f32 0.0, %v2406
      %2408 = vmatmul.bf16.gmra.mxu0 %v2225
      %v2409 = vpop.f32.mrf.mxu0
      %v2410 = vadd.f32 0.0, %v2409
      %v2411 = vpop.f32.mrf.mxu0
      %v2412 = vadd.f32 0.0, %v2411
      %2413 = vmatmul.bf16.gmra.mxu0 %v2226
      %v2414 = vpop.f32.mrf.mxu0
      %v2415 = vadd.f32 0.0, %v2414
      %v2416 = vpop.f32.mrf.mxu0
      %v2417 = vadd.f32 0.0, %v2416
      %2418 = vmatmul.bf16.gmra.mxu0 %v2227
      %v2419 = vpop.f32.mrf.mxu0
      %v2420 = vadd.f32 0.0, %v2419
      %v2421 = vpop.f32.mrf.mxu0
      %v2422 = vadd.f32 0.0, %v2421
      %2423 = vmatmul.bf16.gmra.mxu0 %v2228
      %v2424 = vpop.f32.mrf.mxu0
      %v2425 = vadd.f32 0.0, %v2424
      %v2426 = vpop.f32.mrf.mxu0
      %v2427 = vadd.f32 0.0, %v2426
      %2428 = vdwg.mxu0
      %v2429 = vadd.f32 %v2229, %v2340
      %v2430 = vadd.f32 %v2230, %v2342
      %v2431 = vadd.f32 %v2231, %v2345
      %v2432 = vadd.f32 %v2232, %v2347
      %v2433 = vadd.f32 %v2233, %v2350
      %v2434 = vadd.f32 %v2234, %v2352
      %v2435 = vadd.f32 %v2235, %v2355
      %v2436 = vadd.f32 %v2236, %v2357
      %v2437 = vadd.f32 %v2237, %v2360
      %v2438 = vadd.f32 %v2238, %v2362
      %v2439 = vadd.f32 %v2239, %v2365
      %v2440 = vadd.f32 %v2240, %v2367
      %v2441 = vadd.f32 %v2241, %v2370
      %v2442 = vadd.f32 %v2242, %v2372
      %v2443 = vadd.f32 %v2243, %v2375
      %v2444 = vadd.f32 %v2244, %v2377
      %v2445 = vadd.f32 %v2245, %v2380
      %v2446 = vadd.f32 %v2246, %v2382
      %v2447 = vadd.f32 %v2247, %v2385
      %v2448 = vadd.f32 %v2248, %v2387
      %v2449 = vadd.f32 %v2249, %v2390
      %v2450 = vadd.f32 %v2250, %v2392
      %v2451 = vadd.f32 %v2251, %v2395
      %v2452 = vadd.f32 %v2252, %v2397
      %v2453 = vadd.f32 %v2253, %v2400
      %v2454 = vadd.f32 %v2254, %v2402
      %v2455 = vadd.f32 %v2255, %v2405
      %v2456 = vadd.f32 %v2256, %v2407
      %v2457 = vadd.f32 %v2257, %v2410
      %v2458 = vadd.f32 %v2258, %v2412
      %v2459 = vadd.f32 %v2259, %v2415
      %v2460 = vadd.f32 %v2260, %v2417
      %v2461 = vadd.f32 %v2261, %v2420
      %v2462 = vadd.f32 %v2262, %v2422
      %v2463 = vadd.f32 %v2263, %v2425
      %v2464 = vadd.f32 %v2264, %v2427
      %2465 = vst [vmem:[#allocation3] sm:$0xff] %v2429
      %2466 = vst [vmem:[#allocation3 + $0x8] sm:$0xff] %v2430
      %2467 = vst [vmem:[#allocation3 + $0x10] sm:$0xff] %v2431
      %2468 = vst [vmem:[#allocation3 + $0x18] sm:$0xff] %v2432
      %2469 = vst [vmem:[#allocation3 + $0x20] sm:$0xff] %v2433
      %2470 = vst [vmem:[#allocation3 + $0x28] sm:$0xff] %v2434
      %2471 = vst [vmem:[#allocation3 + $0x30] sm:$0xff] %v2435
      %2472 = vst [vmem:[#allocation3 + $0x38] sm:$0xff] %v2436
      %2473 = vst [vmem:[#allocation3 + $0x40] sm:$0xff] %v2437
      %2474 = vst [vmem:[#allocation3 + $0x48] sm:$0xff] %v2438
      %2475 = vst [vmem:[#allocation3 + $0x50] sm:$0xff] %v2439
      %2476 = vst [vmem:[#allocation3 + $0x58] sm:$0xff] %v2440
      %2477 = vst [vmem:[#allocation3 + $0x60] sm:$0xff] %v2441
      %2478 = vst [vmem:[#allocation3 + $0x68] sm:$0xff] %v2442
      %2479 = vst [vmem:[#allocation3 + $0x70] sm:$0xff] %v2443
      %2480 = vst [vmem:[#allocation3 + $0x78] sm:$0xff] %v2444
      %2481 = vst [vmem:[#allocation3 + $0x80] sm:$0xff] %v2445
      %2482 = vst [vmem:[#allocation3 + $0x88] sm:$0xff] %v2446
      %2483 = vst [vmem:[#allocation3 + $0x90] sm:$0xff] %v2447
      %2484 = vst [vmem:[#allocation3 + $0x98] sm:$0xff] %v2448
      %2485 = vst [vmem:[#allocation3 + $0xa0] sm:$0xff] %v2449
      %2486 = vst [vmem:[#allocation3 + $0xa8] sm:$0xff] %v2450
      %2487 = vst [vmem:[#allocation3 + $0xb0] sm:$0xff] %v2451
      %2488 = vst [vmem:[#allocation3 + $0xb8] sm:$0xff] %v2452
      %2489 = vst [vmem:[#allocation3 + $0xc0] sm:$0xff] %v2453
      %2490 = vst [vmem:[#allocation3 + $0xc8] sm:$0xff] %v2454
      %2491 = vst [vmem:[#allocation3 + $0xd0] sm:$0xff] %v2455
      %2492 = vst [vmem:[#allocation3 + $0xd8] sm:$0xff] %v2456
      %2493 = vst [vmem:[#allocation3 + $0xe0] sm:$0xff] %v2457
      %2494 = vst [vmem:[#allocation3 + $0xe8] sm:$0xff] %v2458
      %2495 = vst [vmem:[#allocation3 + $0xf0] sm:$0xff] %v2459
      %2496 = vst [vmem:[#allocation3 + $0xf8] sm:$0xff] %v2460
      %2497 = vst [vmem:[#allocation3 + $0x100] sm:$0xff] %v2461
      %2498 = vst [vmem:[#allocation3 + $0x108] sm:$0xff] %v2462
      %2499 = vst [vmem:[#allocation3 + $0x110] sm:$0xff] %v2463
      %2500 = vst [vmem:[#allocation3 + $0x118] sm:$0xff] %v2464
      %v2501 = vld [vmem:[#allocation2 + $0x24] sm:$0xff]
      %v2502 = vld [vmem:[#allocation2 + $0x2c] sm:$0xff]
      %v2503 = vld [vmem:[#allocation2 + $0x34] sm:$0xff]
      %v2504 = vld [vmem:[#allocation2 + $0x3c] sm:$0xff]
      %v2505 = vld [vmem:[#allocation2 + $0x44] sm:$0xff]
      %v2506 = vld [vmem:[#allocation2 + $0x4c] sm:$0xff]
      %v2507 = vld [vmem:[#allocation2 + $0x54] sm:$0xff]
      %v2508 = vld [vmem:[#allocation2 + $0x5c] sm:$0xff]
      %v2509 = vld [vmem:[#allocation2 + $0x64] sm:$0xff]
      %v2510 = vld [vmem:[#allocation2 + $0x6c] sm:$0xff]
      %v2511 = vld [vmem:[#allocation2 + $0x74] sm:$0xff]
      %v2512 = vld [vmem:[#allocation2 + $0x7c] sm:$0xff]
      %v2513 = vld [vmem:[#allocation2 + $0x84] sm:$0xff]
      %v2514 = vld [vmem:[#allocation2 + $0x8c] sm:$0xff]
      %v2515 = vld [vmem:[#allocation2 + $0x94] sm:$0xff]
      %v2516 = vld [vmem:[#allocation2 + $0x9c] sm:$0xff]
      %v2517 = vld [vmem:[#allocation2 + $0xa4] sm:$0xff]
      %v2518 = vld [vmem:[#allocation2 + $0xac] sm:$0xff]
      %v2519 = vld [vmem:[#allocation2 + $0xb4] sm:$0xff]
      %v2520 = vld [vmem:[#allocation2 + $0xbc] sm:$0xff]
      %v2521 = vld [vmem:[#allocation2 + $0xc4] sm:$0xff]
      %v2522 = vld [vmem:[#allocation2 + $0xcc] sm:$0xff]
      %v2523 = vld [vmem:[#allocation2 + $0xd4] sm:$0xff]
      %v2524 = vld [vmem:[#allocation2 + $0xdc] sm:$0xff]
      %v2525 = vld [vmem:[#allocation2 + $0xe4] sm:$0xff]
      %v2526 = vld [vmem:[#allocation2 + $0xec] sm:$0xff]
      %v2527 = vld [vmem:[#allocation2 + $0xf4] sm:$0xff]
      %v2528 = vld [vmem:[#allocation2 + $0xfc] sm:$0xff]
      %v2529 = vld [vmem:[#allocation2 + $0x104] sm:$0xff]
      %v2530 = vld [vmem:[#allocation2 + $0x10c] sm:$0xff]
      %v2531 = vld [vmem:[#allocation2 + $0x114] sm:$0xff]
      %v2532 = vld [vmem:[#allocation2 + $0x11c] sm:$0xff]
      %v2533 = vld [vmem:[#allocation2 + $0x124] sm:$0xff]
      %v2534 = vld [vmem:[#allocation2 + $0x12c] sm:$0xff]
      %v2535 = vld [vmem:[#allocation2 + $0x134] sm:$0xff]
      %v2536 = vld [vmem:[#allocation2 + $0x13c] sm:$0xff]
      %v2537 = vpack.c.bf16 %v2502, %v2501
      %v2538 = vpack.c.bf16 %v2504, %v2503
      %v2539 = vpack.c.bf16 %v2506, %v2505
      %v2540 = vpack.c.bf16 %v2508, %v2507
      %v2541 = vpack.c.bf16 %v2510, %v2509
      %v2542 = vpack.c.bf16 %v2512, %v2511
      %v2543 = vpack.c.bf16 %v2514, %v2513
      %v2544 = vpack.c.bf16 %v2516, %v2515
      %v2545 = vpack.c.bf16 %v2518, %v2517
      %v2546 = vpack.c.bf16 %v2520, %v2519
      %v2547 = vpack.c.bf16 %v2522, %v2521
      %v2548 = vpack.c.bf16 %v2524, %v2523
      %v2549 = vpack.c.bf16 %v2526, %v2525
      %v2550 = vpack.c.bf16 %v2528, %v2527
      %v2551 = vpack.c.bf16 %v2530, %v2529
      %v2552 = vpack.c.bf16 %v2532, %v2531
      %v2553 = vpack.c.bf16 %v2534, %v2533
      %v2554 = vpack.c.bf16 %v2536, %v2535
      %v2555 = vld [vmem:[#allocation3] sm:$0xff]
      %v2556 = vld [vmem:[#allocation3 + $0x8] sm:$0xff]
      %v2557 = vld [vmem:[#allocation3 + $0x10] sm:$0xff]
      %v2558 = vld [vmem:[#allocation3 + $0x18] sm:$0xff]
      %v2559 = vld [vmem:[#allocation3 + $0x20] sm:$0xff]
      %v2560 = vld [vmem:[#allocation3 + $0x28] sm:$0xff]
      %v2561 = vld [vmem:[#allocation3 + $0x30] sm:$0xff]
      %v2562 = vld [vmem:[#allocation3 + $0x38] sm:$0xff]
      %v2563 = vld [vmem:[#allocation3 + $0x40] sm:$0xff]
      %v2564 = vld [vmem:[#allocation3 + $0x48] sm:$0xff]
      %v2565 = vld [vmem:[#allocation3 + $0x50] sm:$0xff]
      %v2566 = vld [vmem:[#allocation3 + $0x58] sm:$0xff]
      %v2567 = vld [vmem:[#allocation3 + $0x60] sm:$0xff]
      %v2568 = vld [vmem:[#allocation3 + $0x68] sm:$0xff]
      %v2569 = vld [vmem:[#allocation3 + $0x70] sm:$0xff]
      %v2570 = vld [vmem:[#allocation3 + $0x78] sm:$0xff]
      %v2571 = vld [vmem:[#allocation3 + $0x80] sm:$0xff]
      %v2572 = vld [vmem:[#allocation3 + $0x88] sm:$0xff]
      %v2573 = vld [vmem:[#allocation3 + $0x90] sm:$0xff]
      %v2574 = vld [vmem:[#allocation3 + $0x98] sm:$0xff]
      %v2575 = vld [vmem:[#allocation3 + $0xa0] sm:$0xff]
      %v2576 = vld [vmem:[#allocation3 + $0xa8] sm:$0xff]
      %v2577 = vld [vmem:[#allocation3 + $0xb0] sm:$0xff]
      %v2578 = vld [vmem:[#allocation3 + $0xb8] sm:$0xff]
      %v2579 = vld [vmem:[#allocation3 + $0xc0] sm:$0xff]
      %v2580 = vld [vmem:[#allocation3 + $0xc8] sm:$0xff]
      %v2581 = vld [vmem:[#allocation3 + $0xd0] sm:$0xff]
      %v2582 = vld [vmem:[#allocation3 + $0xd8] sm:$0xff]
      %v2583 = vld [vmem:[#allocation3 + $0xe0] sm:$0xff]
      %v2584 = vld [vmem:[#allocation3 + $0xe8] sm:$0xff]
      %v2585 = vld [vmem:[#allocation3 + $0xf0] sm:$0xff]
      %v2586 = vld [vmem:[#allocation3 + $0xf8] sm:$0xff]
      %v2587 = vld [vmem:[#allocation3 + $0x100] sm:$0xff]
      %v2588 = vld [vmem:[#allocation3 + $0x108] sm:$0xff]
      %v2589 = vld [vmem:[#allocation3 + $0x110] sm:$0xff]
      %v2590 = vld [vmem:[#allocation3 + $0x118] sm:$0xff]
      %s2591 = scalar_lea.vmem %s4, 384
      %v2592 = vld [vmem:[%s2591] sm:$0xf]
      %v2593 = vld [vmem:[%s2591 + $0x4] sm:$0xf]
      %v2594 = vld [vmem:[%s2591 + $0x8] sm:$0xf]
      %v2595 = vld [vmem:[%s2591 + $0xc] sm:$0xf]
      %v2596 = vld [vmem:[%s2591 + $0x10] sm:$0xf]
      %v2597 = vld [vmem:[%s2591 + $0x14] sm:$0xf]
      %v2598 = vld [vmem:[%s2591 + $0x18] sm:$0xf]
      %v2599 = vld [vmem:[%s2591 + $0x1c] sm:$0xf]
      %v2600 = vld [vmem:[%s2591 + $0x20] sm:$0xf]
      %v2601 = vld [vmem:[%s2591 + $0x24] sm:$0xf]
      %v2602 = vld [vmem:[%s2591 + $0x28] sm:$0xf]
      %v2603 = vld [vmem:[%s2591 + $0x2c] sm:$0xf]
      %v2604 = vld [vmem:[%s2591 + $0x30] sm:$0xf]
      %v2605 = vld [vmem:[%s2591 + $0x34] sm:$0xf]
      %v2606 = vld [vmem:[%s2591 + $0x38] sm:$0xf]
      %v2607 = vld [vmem:[%s2591 + $0x3c] sm:$0xf]
      %v2624 = vunpack.c.l.b16 %v2592
      %v2625 = vunpack.c.l.b16 %v2593
      %v2626 = vunpack.c.l.b16 %v2594
      %v2627 = vunpack.c.l.b16 %v2595
      %v2628 = vunpack.c.l.b16 %v2596
      %v2629 = vunpack.c.l.b16 %v2597
      %v2630 = vunpack.c.l.b16 %v2598
      %v2631 = vunpack.c.l.b16 %v2599
      %v2632 = vunpack.c.l.b16 %v2600
      %v2633 = vunpack.c.l.b16 %v2601
      %v2634 = vunpack.c.l.b16 %v2602
      %v2635 = vunpack.c.l.b16 %v2603
      %v2636 = vunpack.c.l.b16 %v2604
      %v2637 = vunpack.c.l.b16 %v2605
      %v2638 = vunpack.c.l.b16 %v2606
      %v2639 = vunpack.c.l.b16 %v2607
      %v2640 = vpack.c.b16 %v2625, %v2624
      %v2641 = vpack.c.b16 %v2627, %v2626
      %v2642 = vpack.c.b16 %v2629, %v2628
      %v2643 = vpack.c.b16 %v2631, %v2630
      %v2644 = vpack.c.b16 %v2633, %v2632
      %v2645 = vpack.c.b16 %v2635, %v2634
      %v2646 = vpack.c.b16 %v2637, %v2636
      %v2647 = vpack.c.b16 %v2639, %v2638
      %2656 = vmatpush.bf16.msra.mxu0 %v2647
      %2657 = vmatpush.bf16.msra.mxu0 %v2646
      %2658 = vmatpush.bf16.msra.mxu0 %v2645
      %2659 = vmatpush.bf16.msra.mxu0 %v2644
      %2660 = vmatpush.bf16.msra.mxu0 %v2643
      %2661 = vmatpush.bf16.msra.mxu0 %v2642
      %2662 = vmatpush.bf16.msra.mxu0 %v2641
      %2663 = vmatpush.bf16.msra.mxu0 %v2640
      %2664 = vmatmul.bf16.gmra.mxu0 %v2537
      %v2665 = vpop.f32.mrf.mxu0
      %v2666 = vadd.f32 0.0, %v2665
      %v2667 = vpop.f32.mrf.mxu0
      %v2668 = vadd.f32 0.0, %v2667
      %2669 = vmatmul.bf16.gmra.mxu0 %v2538
      %v2670 = vpop.f32.mrf.mxu0
      %v2671 = vadd.f32 0.0, %v2670
      %v2672 = vpop.f32.mrf.mxu0
      %v2673 = vadd.f32 0.0, %v2672
      %2674 = vmatmul.bf16.gmra.mxu0 %v2539
      %v2675 = vpop.f32.mrf.mxu0
      %v2676 = vadd.f32 0.0, %v2675
      %v2677 = vpop.f32.mrf.mxu0
      %v2678 = vadd.f32 0.0, %v2677
      %2679 = vmatmul.bf16.gmra.mxu0 %v2540
      %v2680 = vpop.f32.mrf.mxu0
      %v2681 = vadd.f32 0.0, %v2680
      %v2682 = vpop.f32.mrf.mxu0
      %v2683 = vadd.f32 0.0, %v2682
      %2684 = vmatmul.bf16.gmra.mxu0 %v2541
      %v2685 = vpop.f32.mrf.mxu0
      %v2686 = vadd.f32 0.0, %v2685
      %v2687 = vpop.f32.mrf.mxu0
      %v2688 = vadd.f32 0.0, %v2687
      %2689 = vmatmul.bf16.gmra.mxu0 %v2542
      %v2690 = vpop.f32.mrf.mxu0
      %v2691 = vadd.f32 0.0, %v2690
      %v2692 = vpop.f32.mrf.mxu0
      %v2693 = vadd.f32 0.0, %v2692
      %2694 = vmatmul.bf16.gmra.mxu0 %v2543
      %v2695 = vpop.f32.mrf.mxu0
      %v2696 = vadd.f32 0.0, %v2695
      %v2697 = vpop.f32.mrf.mxu0
      %v2698 = vadd.f32 0.0, %v2697
      %2699 = vmatmul.bf16.gmra.mxu0 %v2544
      %v2700 = vpop.f32.mrf.mxu0
      %v2701 = vadd.f32 0.0, %v2700
      %v2702 = vpop.f32.mrf.mxu0
      %v2703 = vadd.f32 0.0, %v2702
      %2704 = vmatmul.bf16.gmra.mxu0 %v2545
      %v2705 = vpop.f32.mrf.mxu0
      %v2706 = vadd.f32 0.0, %v2705
      %v2707 = vpop.f32.mrf.mxu0
      %v2708 = vadd.f32 0.0, %v2707
      %2709 = vmatmul.bf16.gmra.mxu0 %v2546
      %v2710 = vpop.f32.mrf.mxu0
      %v2711 = vadd.f32 0.0, %v2710
      %v2712 = vpop.f32.mrf.mxu0
      %v2713 = vadd.f32 0.0, %v2712
      %2714 = vmatmul.bf16.gmra.mxu0 %v2547
      %v2715 = vpop.f32.mrf.mxu0
      %v2716 = vadd.f32 0.0, %v2715
      %v2717 = vpop.f32.mrf.mxu0
      %v2718 = vadd.f32 0.0, %v2717
      %2719 = vmatmul.bf16.gmra.mxu0 %v2548
      %v2720 = vpop.f32.mrf.mxu0
      %v2721 = vadd.f32 0.0, %v2720
      %v2722 = vpop.f32.mrf.mxu0
      %v2723 = vadd.f32 0.0, %v2722
      %2724 = vmatmul.bf16.gmra.mxu0 %v2549
      %v2725 = vpop.f32.mrf.mxu0
      %v2726 = vadd.f32 0.0, %v2725
      %v2727 = vpop.f32.mrf.mxu0
      %v2728 = vadd.f32 0.0, %v2727
      %2729 = vmatmul.bf16.gmra.mxu0 %v2550
      %v2730 = vpop.f32.mrf.mxu0
      %v2731 = vadd.f32 0.0, %v2730
      %v2732 = vpop.f32.mrf.mxu0
      %v2733 = vadd.f32 0.0, %v2732
      %2734 = vmatmul.bf16.gmra.mxu0 %v2551
      %v2735 = vpop.f32.mrf.mxu0
      %v2736 = vadd.f32 0.0, %v2735
      %v2737 = vpop.f32.mrf.mxu0
      %v2738 = vadd.f32 0.0, %v2737
      %2739 = vmatmul.bf16.gmra.mxu0 %v2552
      %v2740 = vpop.f32.mrf.mxu0
      %v2741 = vadd.f32 0.0, %v2740
      %v2742 = vpop.f32.mrf.mxu0
      %v2743 = vadd.f32 0.0, %v2742
      %2744 = vmatmul.bf16.gmra.mxu0 %v2553
      %v2745 = vpop.f32.mrf.mxu0
      %v2746 = vadd.f32 0.0, %v2745
      %v2747 = vpop.f32.mrf.mxu0
      %v2748 = vadd.f32 0.0, %v2747
      %2749 = vmatmul.bf16.gmra.mxu0 %v2554
      %v2750 = vpop.f32.mrf.mxu0
      %v2751 = vadd.f32 0.0, %v2750
      %v2752 = vpop.f32.mrf.mxu0
      %v2753 = vadd.f32 0.0, %v2752
      %2754 = vdwg.mxu0
      %v2755 = vadd.f32 %v2555, %v2666
      %v2756 = vadd.f32 %v2556, %v2668
      %v2757 = vadd.f32 %v2557, %v2671
      %v2758 = vadd.f32 %v2558, %v2673
      %v2759 = vadd.f32 %v2559, %v2676
      %v2760 = vadd.f32 %v2560, %v2678
      %v2761 = vadd.f32 %v2561, %v2681
      %v2762 = vadd.f32 %v2562, %v2683
      %v2763 = vadd.f32 %v2563, %v2686
      %v2764 = vadd.f32 %v2564, %v2688
      %v2765 = vadd.f32 %v2565, %v2691
      %v2766 = vadd.f32 %v2566, %v2693
      %v2767 = vadd.f32 %v2567, %v2696
      %v2768 = vadd.f32 %v2568, %v2698
      %v2769 = vadd.f32 %v2569, %v2701
      %v2770 = vadd.f32 %v2570, %v2703
      %v2771 = vadd.f32 %v2571, %v2706
      %v2772 = vadd.f32 %v2572, %v2708
      %v2773 = vadd.f32 %v2573, %v2711
      %v2774 = vadd.f32 %v2574, %v2713
      %v2775 = vadd.f32 %v2575, %v2716
      %v2776 = vadd.f32 %v2576, %v2718
      %v2777 = vadd.f32 %v2577, %v2721
      %v2778 = vadd.f32 %v2578, %v2723
      %v2779 = vadd.f32 %v2579, %v2726
      %v2780 = vadd.f32 %v2580, %v2728
      %v2781 = vadd.f32 %v2581, %v2731
      %v2782 = vadd.f32 %v2582, %v2733
      %v2783 = vadd.f32 %v2583, %v2736
      %v2784 = vadd.f32 %v2584, %v2738
      %v2785 = vadd.f32 %v2585, %v2741
      %v2786 = vadd.f32 %v2586, %v2743
      %v2787 = vadd.f32 %v2587, %v2746
      %v2788 = vadd.f32 %v2588, %v2748
      %v2789 = vadd.f32 %v2589, %v2751
      %v2790 = vadd.f32 %v2590, %v2753
      %2791 = vst [vmem:[#allocation3] sm:$0xff] %v2755
      %2792 = vst [vmem:[#allocation3 + $0x8] sm:$0xff] %v2756
      %2793 = vst [vmem:[#allocation3 + $0x10] sm:$0xff] %v2757
      %2794 = vst [vmem:[#allocation3 + $0x18] sm:$0xff] %v2758
      %2795 = vst [vmem:[#allocation3 + $0x20] sm:$0xff] %v2759
      %2796 = vst [vmem:[#allocation3 + $0x28] sm:$0xff] %v2760
      %2797 = vst [vmem:[#allocation3 + $0x30] sm:$0xff] %v2761
      %2798 = vst [vmem:[#allocation3 + $0x38] sm:$0xff] %v2762
      %2799 = vst [vmem:[#allocation3 + $0x40] sm:$0xff] %v2763
      %2800 = vst [vmem:[#allocation3 + $0x48] sm:$0xff] %v2764
      %2801 = vst [vmem:[#allocation3 + $0x50] sm:$0xff] %v2765
      %2802 = vst [vmem:[#allocation3 + $0x58] sm:$0xff] %v2766
      %2803 = vst [vmem:[#allocation3 + $0x60] sm:$0xff] %v2767
      %2804 = vst [vmem:[#allocation3 + $0x68] sm:$0xff] %v2768
      %2805 = vst [vmem:[#allocation3 + $0x70] sm:$0xff] %v2769
      %2806 = vst [vmem:[#allocation3 + $0x78] sm:$0xff] %v2770
      %2807 = vst [vmem:[#allocation3 + $0x80] sm:$0xff] %v2771
      %2808 = vst [vmem:[#allocation3 + $0x88] sm:$0xff] %v2772
      %2809 = vst [vmem:[#allocation3 + $0x90] sm:$0xff] %v2773
      %2810 = vst [vmem:[#allocation3 + $0x98] sm:$0xff] %v2774
      %2811 = vst [vmem:[#allocation3 + $0xa0] sm:$0xff] %v2775
      %2812 = vst [vmem:[#allocation3 + $0xa8] sm:$0xff] %v2776
      %2813 = vst [vmem:[#allocation3 + $0xb0] sm:$0xff] %v2777
      %2814 = vst [vmem:[#allocation3 + $0xb8] sm:$0xff] %v2778
      %2815 = vst [vmem:[#allocation3 + $0xc0] sm:$0xff] %v2779
      %2816 = vst [vmem:[#allocation3 + $0xc8] sm:$0xff] %v2780
      %2817 = vst [vmem:[#allocation3 + $0xd0] sm:$0xff] %v2781
      %2818 = vst [vmem:[#allocation3 + $0xd8] sm:$0xff] %v2782
      %2819 = vst [vmem:[#allocation3 + $0xe0] sm:$0xff] %v2783
      %2820 = vst [vmem:[#allocation3 + $0xe8] sm:$0xff] %v2784
      %2821 = vst [vmem:[#allocation3 + $0xf0] sm:$0xff] %v2785
      %2822 = vst [vmem:[#allocation3 + $0xf8] sm:$0xff] %v2786
      %2823 = vst [vmem:[#allocation3 + $0x100] sm:$0xff] %v2787
      %2824 = vst [vmem:[#allocation3 + $0x108] sm:$0xff] %v2788
      %2825 = vst [vmem:[#allocation3 + $0x110] sm:$0xff] %v2789
      %2826 = vst [vmem:[#allocation3 + $0x118] sm:$0xff] %v2790
      %v2827 = vld [vmem:[#allocation2 + $0x25] sm:$0xff]
      %v2828 = vld [vmem:[#allocation2 + $0x2d] sm:$0xff]
      %v2829 = vld [vmem:[#allocation2 + $0x35] sm:$0xff]
      %v2830 = vld [vmem:[#allocation2 + $0x3d] sm:$0xff]
      %v2831 = vld [vmem:[#allocation2 + $0x45] sm:$0xff]
      %v2832 = vld [vmem:[#allocation2 + $0x4d] sm:$0xff]
      %v2833 = vld [vmem:[#allocation2 + $0x55] sm:$0xff]
      %v2834 = vld [vmem:[#allocation2 + $0x5d] sm:$0xff]
      %v2835 = vld [vmem:[#allocation2 + $0x65] sm:$0xff]
      %v2836 = vld [vmem:[#allocation2 + $0x6d] sm:$0xff]
      %v2837 = vld [vmem:[#allocation2 + $0x75] sm:$0xff]
      %v2838 = vld [vmem:[#allocation2 + $0x7d] sm:$0xff]
      %v2839 = vld [vmem:[#allocation2 + $0x85] sm:$0xff]
      %v2840 = vld [vmem:[#allocation2 + $0x8d] sm:$0xff]
      %v2841 = vld [vmem:[#allocation2 + $0x95] sm:$0xff]
      %v2842 = vld [vmem:[#allocation2 + $0x9d] sm:$0xff]
      %v2843 = vld [vmem:[#allocation2 + $0xa5] sm:$0xff]
      %v2844 = vld [vmem:[#allocation2 + $0xad] sm:$0xff]
      %v2845 = vld [vmem:[#allocation2 + $0xb5] sm:$0xff]
      %v2846 = vld [vmem:[#allocation2 + $0xbd] sm:$0xff]
      %v2847 = vld [vmem:[#allocation2 + $0xc5] sm:$0xff]
      %v2848 = vld [vmem:[#allocation2 + $0xcd] sm:$0xff]
      %v2849 = vld [vmem:[#allocation2 + $0xd5] sm:$0xff]
      %v2850 = vld [vmem:[#allocation2 + $0xdd] sm:$0xff]
      %v2851 = vld [vmem:[#allocation2 + $0xe5] sm:$0xff]
      %v2852 = vld [vmem:[#allocation2 + $0xed] sm:$0xff]
      %v2853 = vld [vmem:[#allocation2 + $0xf5] sm:$0xff]
      %v2854 = vld [vmem:[#allocation2 + $0xfd] sm:$0xff]
      %v2855 = vld [vmem:[#allocation2 + $0x105] sm:$0xff]
      %v2856 = vld [vmem:[#allocation2 + $0x10d] sm:$0xff]
      %v2857 = vld [vmem:[#allocation2 + $0x115] sm:$0xff]
      %v2858 = vld [vmem:[#allocation2 + $0x11d] sm:$0xff]
      %v2859 = vld [vmem:[#allocation2 + $0x125] sm:$0xff]
      %v2860 = vld [vmem:[#allocation2 + $0x12d] sm:$0xff]
      %v2861 = vld [vmem:[#allocation2 + $0x135] sm:$0xff]
      %v2862 = vld [vmem:[#allocation2 + $0x13d] sm:$0xff]
      %v2863 = vpack.c.bf16 %v2828, %v2827
      %v2864 = vpack.c.bf16 %v2830, %v2829
      %v2865 = vpack.c.bf16 %v2832, %v2831
      %v2866 = vpack.c.bf16 %v2834, %v2833
      %v2867 = vpack.c.bf16 %v2836, %v2835
      %v2868 = vpack.c.bf16 %v2838, %v2837
      %v2869 = vpack.c.bf16 %v2840, %v2839
      %v2870 = vpack.c.bf16 %v2842, %v2841
      %v2871 = vpack.c.bf16 %v2844, %v2843
      %v2872 = vpack.c.bf16 %v2846, %v2845
      %v2873 = vpack.c.bf16 %v2848, %v2847
      %v2874 = vpack.c.bf16 %v2850, %v2849
      %v2875 = vpack.c.bf16 %v2852, %v2851
      %v2876 = vpack.c.bf16 %v2854, %v2853
      %v2877 = vpack.c.bf16 %v2856, %v2855
      %v2878 = vpack.c.bf16 %v2858, %v2857
      %v2879 = vpack.c.bf16 %v2860, %v2859
      %v2880 = vpack.c.bf16 %v2862, %v2861
      %v2881 = vld [vmem:[#allocation3] sm:$0xff]
      %v2882 = vld [vmem:[#allocation3 + $0x8] sm:$0xff]
      %v2883 = vld [vmem:[#allocation3 + $0x10] sm:$0xff]
      %v2884 = vld [vmem:[#allocation3 + $0x18] sm:$0xff]
      %v2885 = vld [vmem:[#allocation3 + $0x20] sm:$0xff]
      %v2886 = vld [vmem:[#allocation3 + $0x28] sm:$0xff]
      %v2887 = vld [vmem:[#allocation3 + $0x30] sm:$0xff]
      %v2888 = vld [vmem:[#allocation3 + $0x38] sm:$0xff]
      %v2889 = vld [vmem:[#allocation3 + $0x40] sm:$0xff]
      %v2890 = vld [vmem:[#allocation3 + $0x48] sm:$0xff]
      %v2891 = vld [vmem:[#allocation3 + $0x50] sm:$0xff]
      %v2892 = vld [vmem:[#allocation3 + $0x58] sm:$0xff]
      %v2893 = vld [vmem:[#allocation3 + $0x60] sm:$0xff]
      %v2894 = vld [vmem:[#allocation3 + $0x68] sm:$0xff]
      %v2895 = vld [vmem:[#allocation3 + $0x70] sm:$0xff]
      %v2896 = vld [vmem:[#allocation3 + $0x78] sm:$0xff]
      %v2897 = vld [vmem:[#allocation3 + $0x80] sm:$0xff]
      %v2898 = vld [vmem:[#allocation3 + $0x88] sm:$0xff]
      %v2899 = vld [vmem:[#allocation3 + $0x90] sm:$0xff]
      %v2900 = vld [vmem:[#allocation3 + $0x98] sm:$0xff]
      %v2901 = vld [vmem:[#allocation3 + $0xa0] sm:$0xff]
      %v2902 = vld [vmem:[#allocation3 + $0xa8] sm:$0xff]
      %v2903 = vld [vmem:[#allocation3 + $0xb0] sm:$0xff]
      %v2904 = vld [vmem:[#allocation3 + $0xb8] sm:$0xff]
      %v2905 = vld [vmem:[#allocation3 + $0xc0] sm:$0xff]
      %v2906 = vld [vmem:[#allocation3 + $0xc8] sm:$0xff]
      %v2907 = vld [vmem:[#allocation3 + $0xd0] sm:$0xff]
      %v2908 = vld [vmem:[#allocation3 + $0xd8] sm:$0xff]
      %v2909 = vld [vmem:[#allocation3 + $0xe0] sm:$0xff]
      %v2910 = vld [vmem:[#allocation3 + $0xe8] sm:$0xff]
      %v2911 = vld [vmem:[#allocation3 + $0xf0] sm:$0xff]
      %v2912 = vld [vmem:[#allocation3 + $0xf8] sm:$0xff]
      %v2913 = vld [vmem:[#allocation3 + $0x100] sm:$0xff]
      %v2914 = vld [vmem:[#allocation3 + $0x108] sm:$0xff]
      %v2915 = vld [vmem:[#allocation3 + $0x110] sm:$0xff]
      %v2916 = vld [vmem:[#allocation3 + $0x118] sm:$0xff]
      %s2917 = scalar_lea.vmem %s4, 448
      %v2918 = vld [vmem:[%s2917] sm:$0xf]
      %v2919 = vld [vmem:[%s2917 + $0x4] sm:$0xf]
      %v2920 = vld [vmem:[%s2917 + $0x8] sm:$0xf]
      %v2921 = vld [vmem:[%s2917 + $0xc] sm:$0xf]
      %v2922 = vld [vmem:[%s2917 + $0x10] sm:$0xf]
      %v2923 = vld [vmem:[%s2917 + $0x14] sm:$0xf]
      %v2924 = vld [vmem:[%s2917 + $0x18] sm:$0xf]
      %v2925 = vld [vmem:[%s2917 + $0x1c] sm:$0xf]
      %v2926 = vld [vmem:[%s2917 + $0x20] sm:$0xf]
      %v2927 = vld [vmem:[%s2917 + $0x24] sm:$0xf]
      %v2928 = vld [vmem:[%s2917 + $0x28] sm:$0xf]
      %v2929 = vld [vmem:[%s2917 + $0x2c] sm:$0xf]
      %v2930 = vld [vmem:[%s2917 + $0x30] sm:$0xf]
      %v2931 = vld [vmem:[%s2917 + $0x34] sm:$0xf]
      %v2932 = vld [vmem:[%s2917 + $0x38] sm:$0xf]
      %v2933 = vld [vmem:[%s2917 + $0x3c] sm:$0xf]
      %v2950 = vunpack.c.l.b16 %v2918
      %v2951 = vunpack.c.l.b16 %v2919
      %v2952 = vunpack.c.l.b16 %v2920
      %v2953 = vunpack.c.l.b16 %v2921
      %v2954 = vunpack.c.l.b16 %v2922
      %v2955 = vunpack.c.l.b16 %v2923
      %v2956 = vunpack.c.l.b16 %v2924
      %v2957 = vunpack.c.l.b16 %v2925
      %v2958 = vunpack.c.l.b16 %v2926
      %v2959 = vunpack.c.l.b16 %v2927
      %v2960 = vunpack.c.l.b16 %v2928
      %v2961 = vunpack.c.l.b16 %v2929
      %v2962 = vunpack.c.l.b16 %v2930
      %v2963 = vunpack.c.l.b16 %v2931
      %v2964 = vunpack.c.l.b16 %v2932
      %v2965 = vunpack.c.l.b16 %v2933
      %v2966 = vpack.c.b16 %v2951, %v2950
      %v2967 = vpack.c.b16 %v2953, %v2952
      %v2968 = vpack.c.b16 %v2955, %v2954
      %v2969 = vpack.c.b16 %v2957, %v2956
      %v2970 = vpack.c.b16 %v2959, %v2958
      %v2971 = vpack.c.b16 %v2961, %v2960
      %v2972 = vpack.c.b16 %v2963, %v2962
      %v2973 = vpack.c.b16 %v2965, %v2964
      %2982 = vmatpush.bf16.msra.mxu0 %v2973
      %2983 = vmatpush.bf16.msra.mxu0 %v2972
      %2984 = vmatpush.bf16.msra.mxu0 %v2971
      %2985 = vmatpush.bf16.msra.mxu0 %v2970
      %2986 = vmatpush.bf16.msra.mxu0 %v2969
      %2987 = vmatpush.bf16.msra.mxu0 %v2968
      %2988 = vmatpush.bf16.msra.mxu0 %v2967
      %2989 = vmatpush.bf16.msra.mxu0 %v2966
      %2990 = vmatmul.bf16.gmra.mxu0 %v2863
      %v2991 = vpop.f32.mrf.mxu0
      %v2992 = vadd.f32 0.0, %v2991
      %v2993 = vpop.f32.mrf.mxu0
      %v2994 = vadd.f32 0.0, %v2993
      %2995 = vmatmul.bf16.gmra.mxu0 %v2864
      %v2996 = vpop.f32.mrf.mxu0
      %v2997 = vadd.f32 0.0, %v2996
      %v2998 = vpop.f32.mrf.mxu0
      %v2999 = vadd.f32 0.0, %v2998
      %3000 = vmatmul.bf16.gmra.mxu0 %v2865
      %v3001 = vpop.f32.mrf.mxu0
      %v3002 = vadd.f32 0.0, %v3001
      %v3003 = vpop.f32.mrf.mxu0
      %v3004 = vadd.f32 0.0, %v3003
      %3005 = vmatmul.bf16.gmra.mxu0 %v2866
      %v3006 = vpop.f32.mrf.mxu0
      %v3007 = vadd.f32 0.0, %v3006
      %v3008 = vpop.f32.mrf.mxu0
      %v3009 = vadd.f32 0.0, %v3008
      %3010 = vmatmul.bf16.gmra.mxu0 %v2867
      %v3011 = vpop.f32.mrf.mxu0
      %v3012 = vadd.f32 0.0, %v3011
      %v3013 = vpop.f32.mrf.mxu0
      %v3014 = vadd.f32 0.0, %v3013
      %3015 = vmatmul.bf16.gmra.mxu0 %v2868
      %v3016 = vpop.f32.mrf.mxu0
      %v3017 = vadd.f32 0.0, %v3016
      %v3018 = vpop.f32.mrf.mxu0
      %v3019 = vadd.f32 0.0, %v3018
      %3020 = vmatmul.bf16.gmra.mxu0 %v2869
      %v3021 = vpop.f32.mrf.mxu0
      %v3022 = vadd.f32 0.0, %v3021
      %v3023 = vpop.f32.mrf.mxu0
      %v3024 = vadd.f32 0.0, %v3023
      %3025 = vmatmul.bf16.gmra.mxu0 %v2870
      %v3026 = vpop.f32.mrf.mxu0
      %v3027 = vadd.f32 0.0, %v3026
      %v3028 = vpop.f32.mrf.mxu0
      %v3029 = vadd.f32 0.0, %v3028
      %3030 = vmatmul.bf16.gmra.mxu0 %v2871
      %v3031 = vpop.f32.mrf.mxu0
      %v3032 = vadd.f32 0.0, %v3031
      %v3033 = vpop.f32.mrf.mxu0
      %v3034 = vadd.f32 0.0, %v3033
      %3035 = vmatmul.bf16.gmra.mxu0 %v2872
      %v3036 = vpop.f32.mrf.mxu0
      %v3037 = vadd.f32 0.0, %v3036
      %v3038 = vpop.f32.mrf.mxu0
      %v3039 = vadd.f32 0.0, %v3038
      %3040 = vmatmul.bf16.gmra.mxu0 %v2873
      %v3041 = vpop.f32.mrf.mxu0
      %v3042 = vadd.f32 0.0, %v3041
      %v3043 = vpop.f32.mrf.mxu0
      %v3044 = vadd.f32 0.0, %v3043
      %3045 = vmatmul.bf16.gmra.mxu0 %v2874
      %v3046 = vpop.f32.mrf.mxu0
      %v3047 = vadd.f32 0.0, %v3046
      %v3048 = vpop.f32.mrf.mxu0
      %v3049 = vadd.f32 0.0, %v3048
      %3050 = vmatmul.bf16.gmra.mxu0 %v2875
      %v3051 = vpop.f32.mrf.mxu0
      %v3052 = vadd.f32 0.0, %v3051
      %v3053 = vpop.f32.mrf.mxu0
      %v3054 = vadd.f32 0.0, %v3053
      %3055 = vmatmul.bf16.gmra.mxu0 %v2876
      %v3056 = vpop.f32.mrf.mxu0
      %v3057 = vadd.f32 0.0, %v3056
      %v3058 = vpop.f32.mrf.mxu0
      %v3059 = vadd.f32 0.0, %v3058
      %3060 = vmatmul.bf16.gmra.mxu0 %v2877
      %v3061 = vpop.f32.mrf.mxu0
      %v3062 = vadd.f32 0.0, %v3061
      %v3063 = vpop.f32.mrf.mxu0
      %v3064 = vadd.f32 0.0, %v3063
      %3065 = vmatmul.bf16.gmra.mxu0 %v2878
      %v3066 = vpop.f32.mrf.mxu0
      %v3067 = vadd.f32 0.0, %v3066
      %v3068 = vpop.f32.mrf.mxu0
      %v3069 = vadd.f32 0.0, %v3068
      %3070 = vmatmul.bf16.gmra.mxu0 %v2879
      %v3071 = vpop.f32.mrf.mxu0
      %v3072 = vadd.f32 0.0, %v3071
      %v3073 = vpop.f32.mrf.mxu0
      %v3074 = vadd.f32 0.0, %v3073
      %3075 = vmatmul.bf16.gmra.mxu0 %v2880
      %v3076 = vpop.f32.mrf.mxu0
      %v3077 = vadd.f32 0.0, %v3076
      %v3078 = vpop.f32.mrf.mxu0
      %v3079 = vadd.f32 0.0, %v3078
      %3080 = vdwg.mxu0
      %v3081 = vadd.f32 %v2881, %v2992
      %v3082 = vadd.f32 %v2882, %v2994
      %v3083 = vadd.f32 %v2883, %v2997
      %v3084 = vadd.f32 %v2884, %v2999
      %v3085 = vadd.f32 %v2885, %v3002
      %v3086 = vadd.f32 %v2886, %v3004
      %v3087 = vadd.f32 %v2887, %v3007
      %v3088 = vadd.f32 %v2888, %v3009
      %v3089 = vadd.f32 %v2889, %v3012
      %v3090 = vadd.f32 %v2890, %v3014
      %v3091 = vadd.f32 %v2891, %v3017
      %v3092 = vadd.f32 %v2892, %v3019
      %v3093 = vadd.f32 %v2893, %v3022
      %v3094 = vadd.f32 %v2894, %v3024
      %v3095 = vadd.f32 %v2895, %v3027
      %v3096 = vadd.f32 %v2896, %v3029
      %v3097 = vadd.f32 %v2897, %v3032
      %v3098 = vadd.f32 %v2898, %v3034
      %v3099 = vadd.f32 %v2899, %v3037
      %v3100 = vadd.f32 %v2900, %v3039
      %v3101 = vadd.f32 %v2901, %v3042
      %v3102 = vadd.f32 %v2902, %v3044
      %v3103 = vadd.f32 %v2903, %v3047
      %v3104 = vadd.f32 %v2904, %v3049
      %v3105 = vadd.f32 %v2905, %v3052
      %v3106 = vadd.f32 %v2906, %v3054
      %v3107 = vadd.f32 %v2907, %v3057
      %v3108 = vadd.f32 %v2908, %v3059
      %v3109 = vadd.f32 %v2909, %v3062
      %v3110 = vadd.f32 %v2910, %v3064
      %v3111 = vadd.f32 %v2911, %v3067
      %v3112 = vadd.f32 %v2912, %v3069
      %v3113 = vadd.f32 %v2913, %v3072
      %v3114 = vadd.f32 %v2914, %v3074
      %v3115 = vadd.f32 %v2915, %v3077
      %v3116 = vadd.f32 %v2916, %v3079
      %3117 = vst [vmem:[#allocation3] sm:$0xff] %v3081
      %3118 = vst [vmem:[#allocation3 + $0x8] sm:$0xff] %v3082
      %3119 = vst [vmem:[#allocation3 + $0x10] sm:$0xff] %v3083
      %3120 = vst [vmem:[#allocation3 + $0x18] sm:$0xff] %v3084
      %3121 = vst [vmem:[#allocation3 + $0x20] sm:$0xff] %v3085
      %3122 = vst [vmem:[#allocation3 + $0x28] sm:$0xff] %v3086
      %3123 = vst [vmem:[#allocation3 + $0x30] sm:$0xff] %v3087
      %3124 = vst [vmem:[#allocation3 + $0x38] sm:$0xff] %v3088
      %3125 = vst [vmem:[#allocation3 + $0x40] sm:$0xff] %v3089
      %3126 = vst [vmem:[#allocation3 + $0x48] sm:$0xff] %v3090
      %3127 = vst [vmem:[#allocation3 + $0x50] sm:$0xff] %v3091
      %3128 = vst [vmem:[#allocation3 + $0x58] sm:$0xff] %v3092
      %3129 = vst [vmem:[#allocation3 + $0x60] sm:$0xff] %v3093
      %3130 = vst [vmem:[#allocation3 + $0x68] sm:$0xff] %v3094
      %3131 = vst [vmem:[#allocation3 + $0x70] sm:$0xff] %v3095
      %3132 = vst [vmem:[#allocation3 + $0x78] sm:$0xff] %v3096
      %3133 = vst [vmem:[#allocation3 + $0x80] sm:$0xff] %v3097
      %3134 = vst [vmem:[#allocation3 + $0x88] sm:$0xff] %v3098
      %3135 = vst [vmem:[#allocation3 + $0x90] sm:$0xff] %v3099
      %3136 = vst [vmem:[#allocation3 + $0x98] sm:$0xff] %v3100
      %3137 = vst [vmem:[#allocation3 + $0xa0] sm:$0xff] %v3101
      %3138 = vst [vmem:[#allocation3 + $0xa8] sm:$0xff] %v3102
      %3139 = vst [vmem:[#allocation3 + $0xb0] sm:$0xff] %v3103
      %3140 = vst [vmem:[#allocation3 + $0xb8] sm:$0xff] %v3104
      %3141 = vst [vmem:[#allocation3 + $0xc0] sm:$0xff] %v3105
      %3142 = vst [vmem:[#allocation3 + $0xc8] sm:$0xff] %v3106
      %3143 = vst [vmem:[#allocation3 + $0xd0] sm:$0xff] %v3107
      %3144 = vst [vmem:[#allocation3 + $0xd8] sm:$0xff] %v3108
      %3145 = vst [vmem:[#allocation3 + $0xe0] sm:$0xff] %v3109
      %3146 = vst [vmem:[#allocation3 + $0xe8] sm:$0xff] %v3110
      %3147 = vst [vmem:[#allocation3 + $0xf0] sm:$0xff] %v3111
      %3148 = vst [vmem:[#allocation3 + $0xf8] sm:$0xff] %v3112
      %3149 = vst [vmem:[#allocation3 + $0x100] sm:$0xff] %v3113
      %3150 = vst [vmem:[#allocation3 + $0x108] sm:$0xff] %v3114
      %3151 = vst [vmem:[#allocation3 + $0x110] sm:$0xff] %v3115
      %3152 = vst [vmem:[#allocation3 + $0x118] sm:$0xff] %v3116
      %v3153 = vld [vmem:[#allocation2 + $0x26] sm:$0xff]
      %v3154 = vld [vmem:[#allocation2 + $0x2e] sm:$0xff]
      %v3155 = vld [vmem:[#allocation2 + $0x36] sm:$0xff]
      %v3156 = vld [vmem:[#allocation2 + $0x3e] sm:$0xff]
      %v3157 = vld [vmem:[#allocation2 + $0x46] sm:$0xff]
      %v3158 = vld [vmem:[#allocation2 + $0x4e] sm:$0xff]
      %v3159 = vld [vmem:[#allocation2 + $0x56] sm:$0xff]
      %v3160 = vld [vmem:[#allocation2 + $0x5e] sm:$0xff]
      %v3161 = vld [vmem:[#allocation2 + $0x66] sm:$0xff]
      %v3162 = vld [vmem:[#allocation2 + $0x6e] sm:$0xff]
      %v3163 = vld [vmem:[#allocation2 + $0x76] sm:$0xff]
      %v3164 = vld [vmem:[#allocation2 + $0x7e] sm:$0xff]
      %v3165 = vld [vmem:[#allocation2 + $0x86] sm:$0xff]
      %v3166 = vld [vmem:[#allocation2 + $0x8e] sm:$0xff]
      %v3167 = vld [vmem:[#allocation2 + $0x96] sm:$0xff]
      %v3168 = vld [vmem:[#allocation2 + $0x9e] sm:$0xff]
      %v3169 = vld [vmem:[#allocation2 + $0xa6] sm:$0xff]
      %v3170 = vld [vmem:[#allocation2 + $0xae] sm:$0xff]
      %v3171 = vld [vmem:[#allocation2 + $0xb6] sm:$0xff]
      %v3172 = vld [vmem:[#allocation2 + $0xbe] sm:$0xff]
      %v3173 = vld [vmem:[#allocation2 + $0xc6] sm:$0xff]
      %v3174 = vld [vmem:[#allocation2 + $0xce] sm:$0xff]
      %v3175 = vld [vmem:[#allocation2 + $0xd6] sm:$0xff]
      %v3176 = vld [vmem:[#allocation2 + $0xde] sm:$0xff]
      %v3177 = vld [vmem:[#allocation2 + $0xe6] sm:$0xff]
      %v3178 = vld [vmem:[#allocation2 + $0xee] sm:$0xff]
      %v3179 = vld [vmem:[#allocation2 + $0xf6] sm:$0xff]
      %v3180 = vld [vmem:[#allocation2 + $0xfe] sm:$0xff]
      %v3181 = vld [vmem:[#allocation2 + $0x106] sm:$0xff]
      %v3182 = vld [vmem:[#allocation2 + $0x10e] sm:$0xff]
      %v3183 = vld [vmem:[#allocation2 + $0x116] sm:$0xff]
      %v3184 = vld [vmem:[#allocation2 + $0x11e] sm:$0xff]
      %v3185 = vld [vmem:[#allocation2 + $0x126] sm:$0xff]
      %v3186 = vld [vmem:[#allocation2 + $0x12e] sm:$0xff]
      %v3187 = vld [vmem:[#allocation2 + $0x136] sm:$0xff]
      %v3188 = vld [vmem:[#allocation2 + $0x13e] sm:$0xff]
      %v3189 = vpack.c.bf16 %v3154, %v3153
      %v3190 = vpack.c.bf16 %v3156, %v3155
      %v3191 = vpack.c.bf16 %v3158, %v3157
      %v3192 = vpack.c.bf16 %v3160, %v3159
      %v3193 = vpack.c.bf16 %v3162, %v3161
      %v3194 = vpack.c.bf16 %v3164, %v3163
      %v3195 = vpack.c.bf16 %v3166, %v3165
      %v3196 = vpack.c.bf16 %v3168, %v3167
      %v3197 = vpack.c.bf16 %v3170, %v3169
      %v3198 = vpack.c.bf16 %v3172, %v3171
      %v3199 = vpack.c.bf16 %v3174, %v3173
      %v3200 = vpack.c.bf16 %v3176, %v3175
      %v3201 = vpack.c.bf16 %v3178, %v3177
      %v3202 = vpack.c.bf16 %v3180, %v3179
      %v3203 = vpack.c.bf16 %v3182, %v3181
      %v3204 = vpack.c.bf16 %v3184, %v3183
      %v3205 = vpack.c.bf16 %v3186, %v3185
      %v3206 = vpack.c.bf16 %v3188, %v3187
      %v3207 = vld [vmem:[#allocation3] sm:$0xff]
      %v3208 = vld [vmem:[#allocation3 + $0x8] sm:$0xff]
      %v3209 = vld [vmem:[#allocation3 + $0x10] sm:$0xff]
      %v3210 = vld [vmem:[#allocation3 + $0x18] sm:$0xff]
      %v3211 = vld [vmem:[#allocation3 + $0x20] sm:$0xff]
      %v3212 = vld [vmem:[#allocation3 + $0x28] sm:$0xff]
      %v3213 = vld [vmem:[#allocation3 + $0x30] sm:$0xff]
      %v3214 = vld [vmem:[#allocation3 + $0x38] sm:$0xff]
      %v3215 = vld [vmem:[#allocation3 + $0x40] sm:$0xff]
      %v3216 = vld [vmem:[#allocation3 + $0x48] sm:$0xff]
      %v3217 = vld [vmem:[#allocation3 + $0x50] sm:$0xff]
      %v3218 = vld [vmem:[#allocation3 + $0x58] sm:$0xff]
      %v3219 = vld [vmem:[#allocation3 + $0x60] sm:$0xff]
      %v3220 = vld [vmem:[#allocation3 + $0x68] sm:$0xff]
      %v3221 = vld [vmem:[#allocation3 + $0x70] sm:$0xff]
      %v3222 = vld [vmem:[#allocation3 + $0x78] sm:$0xff]
      %v3223 = vld [vmem:[#allocation3 + $0x80] sm:$0xff]
      %v3224 = vld [vmem:[#allocation3 + $0x88] sm:$0xff]
      %v3225 = vld [vmem:[#allocation3 + $0x90] sm:$0xff]
      %v3226 = vld [vmem:[#allocation3 + $0x98] sm:$0xff]
      %v3227 = vld [vmem:[#allocation3 + $0xa0] sm:$0xff]
      %v3228 = vld [vmem:[#allocation3 + $0xa8] sm:$0xff]
      %v3229 = vld [vmem:[#allocation3 + $0xb0] sm:$0xff]
      %v3230 = vld [vmem:[#allocation3 + $0xb8] sm:$0xff]
      %v3231 = vld [vmem:[#allocation3 + $0xc0] sm:$0xff]
      %v3232 = vld [vmem:[#allocation3 + $0xc8] sm:$0xff]
      %v3233 = vld [vmem:[#allocation3 + $0xd0] sm:$0xff]
      %v3234 = vld [vmem:[#allocation3 + $0xd8] sm:$0xff]
      %v3235 = vld [vmem:[#allocation3 + $0xe0] sm:$0xff]
      %v3236 = vld [vmem:[#allocation3 + $0xe8] sm:$0xff]
      %v3237 = vld [vmem:[#allocation3 + $0xf0] sm:$0xff]
      %v3238 = vld [vmem:[#allocation3 + $0xf8] sm:$0xff]
      %v3239 = vld [vmem:[#allocation3 + $0x100] sm:$0xff]
      %v3240 = vld [vmem:[#allocation3 + $0x108] sm:$0xff]
      %v3241 = vld [vmem:[#allocation3 + $0x110] sm:$0xff]
      %v3242 = vld [vmem:[#allocation3 + $0x118] sm:$0xff]
      %s3243 = scalar_lea.vmem %s4, 512
      %v3244 = vld [vmem:[%s3243] sm:$0xf]
      %v3245 = vld [vmem:[%s3243 + $0x4] sm:$0xf]
      %v3246 = vld [vmem:[%s3243 + $0x8] sm:$0xf]
      %v3247 = vld [vmem:[%s3243 + $0xc] sm:$0xf]
      %v3248 = vld [vmem:[%s3243 + $0x10] sm:$0xf]
      %v3249 = vld [vmem:[%s3243 + $0x14] sm:$0xf]
      %v3250 = vld [vmem:[%s3243 + $0x18] sm:$0xf]
      %v3251 = vld [vmem:[%s3243 + $0x1c] sm:$0xf]
      %v3252 = vld [vmem:[%s3243 + $0x20] sm:$0xf]
      %v3253 = vld [vmem:[%s3243 + $0x24] sm:$0xf]
      %v3254 = vld [vmem:[%s3243 + $0x28] sm:$0xf]
      %v3255 = vld [vmem:[%s3243 + $0x2c] sm:$0xf]
      %v3256 = vld [vmem:[%s3243 + $0x30] sm:$0xf]
      %v3257 = vld [vmem:[%s3243 + $0x34] sm:$0xf]
      %v3258 = vld [vmem:[%s3243 + $0x38] sm:$0xf]
      %v3259 = vld [vmem:[%s3243 + $0x3c] sm:$0xf]
      %v3276 = vunpack.c.l.b16 %v3244
      %v3277 = vunpack.c.l.b16 %v3245
      %v3278 = vunpack.c.l.b16 %v3246
      %v3279 = vunpack.c.l.b16 %v3247
      %v3280 = vunpack.c.l.b16 %v3248
      %v3281 = vunpack.c.l.b16 %v3249
      %v3282 = vunpack.c.l.b16 %v3250
      %v3283 = vunpack.c.l.b16 %v3251
      %v3284 = vunpack.c.l.b16 %v3252
      %v3285 = vunpack.c.l.b16 %v3253
      %v3286 = vunpack.c.l.b16 %v3254
      %v3287 = vunpack.c.l.b16 %v3255
      %v3288 = vunpack.c.l.b16 %v3256
      %v3289 = vunpack.c.l.b16 %v3257
      %v3290 = vunpack.c.l.b16 %v3258
      %v3291 = vunpack.c.l.b16 %v3259
      %v3292 = vpack.c.b16 %v3277, %v3276
      %v3293 = vpack.c.b16 %v3279, %v3278
      %v3294 = vpack.c.b16 %v3281, %v3280
      %v3295 = vpack.c.b16 %v3283, %v3282
      %v3296 = vpack.c.b16 %v3285, %v3284
      %v3297 = vpack.c.b16 %v3287, %v3286
      %v3298 = vpack.c.b16 %v3289, %v3288
      %v3299 = vpack.c.b16 %v3291, %v3290
      %3308 = vmatpush.bf16.msra.mxu0 %v3299
      %3309 = vmatpush.bf16.msra.mxu0 %v3298
      %3310 = vmatpush.bf16.msra.mxu0 %v3297
      %3311 = vmatpush.bf16.msra.mxu0 %v3296
      %3312 = vmatpush.bf16.msra.mxu0 %v3295
      %3313 = vmatpush.bf16.msra.mxu0 %v3294
      %3314 = vmatpush.bf16.msra.mxu0 %v3293
      %3315 = vmatpush.bf16.msra.mxu0 %v3292
      %3316 = vmatmul.bf16.gmra.mxu0 %v3189
      %v3317 = vpop.f32.mrf.mxu0
      %v3318 = vadd.f32 0.0, %v3317
      %v3319 = vpop.f32.mrf.mxu0
      %v3320 = vadd.f32 0.0, %v3319
      %3321 = vmatmul.bf16.gmra.mxu0 %v3190
      %v3322 = vpop.f32.mrf.mxu0
      %v3323 = vadd.f32 0.0, %v3322
      %v3324 = vpop.f32.mrf.mxu0
      %v3325 = vadd.f32 0.0, %v3324
      %3326 = vmatmul.bf16.gmra.mxu0 %v3191
      %v3327 = vpop.f32.mrf.mxu0
      %v3328 = vadd.f32 0.0, %v3327
      %v3329 = vpop.f32.mrf.mxu0
      %v3330 = vadd.f32 0.0, %v3329
      %3331 = vmatmul.bf16.gmra.mxu0 %v3192
      %v3332 = vpop.f32.mrf.mxu0
      %v3333 = vadd.f32 0.0, %v3332
      %v3334 = vpop.f32.mrf.mxu0
      %v3335 = vadd.f32 0.0, %v3334
      %3336 = vmatmul.bf16.gmra.mxu0 %v3193
      %v3337 = vpop.f32.mrf.mxu0
      %v3338 = vadd.f32 0.0, %v3337
      %v3339 = vpop.f32.mrf.mxu0
      %v3340 = vadd.f32 0.0, %v3339
      %3341 = vmatmul.bf16.gmra.mxu0 %v3194
      %v3342 = vpop.f32.mrf.mxu0
      %v3343 = vadd.f32 0.0, %v3342
      %v3344 = vpop.f32.mrf.mxu0
      %v3345 = vadd.f32 0.0, %v3344
      %3346 = vmatmul.bf16.gmra.mxu0 %v3195
      %v3347 = vpop.f32.mrf.mxu0
      %v3348 = vadd.f32 0.0, %v3347
      %v3349 = vpop.f32.mrf.mxu0
      %v3350 = vadd.f32 0.0, %v3349
      %3351 = vmatmul.bf16.gmra.mxu0 %v3196
      %v3352 = vpop.f32.mrf.mxu0
      %v3353 = vadd.f32 0.0, %v3352
      %v3354 = vpop.f32.mrf.mxu0
      %v3355 = vadd.f32 0.0, %v3354
      %3356 = vmatmul.bf16.gmra.mxu0 %v3197
      %v3357 = vpop.f32.mrf.mxu0
      %v3358 = vadd.f32 0.0, %v3357
      %v3359 = vpop.f32.mrf.mxu0
      %v3360 = vadd.f32 0.0, %v3359
      %3361 = vmatmul.bf16.gmra.mxu0 %v3198
      %v3362 = vpop.f32.mrf.mxu0
      %v3363 = vadd.f32 0.0, %v3362
      %v3364 = vpop.f32.mrf.mxu0
      %v3365 = vadd.f32 0.0, %v3364
      %3366 = vmatmul.bf16.gmra.mxu0 %v3199
      %v3367 = vpop.f32.mrf.mxu0
      %v3368 = vadd.f32 0.0, %v3367
      %v3369 = vpop.f32.mrf.mxu0
      %v3370 = vadd.f32 0.0, %v3369
      %3371 = vmatmul.bf16.gmra.mxu0 %v3200
      %v3372 = vpop.f32.mrf.mxu0
      %v3373 = vadd.f32 0.0, %v3372
      %v3374 = vpop.f32.mrf.mxu0
      %v3375 = vadd.f32 0.0, %v3374
      %3376 = vmatmul.bf16.gmra.mxu0 %v3201
      %v3377 = vpop.f32.mrf.mxu0
      %v3378 = vadd.f32 0.0, %v3377
      %v3379 = vpop.f32.mrf.mxu0
      %v3380 = vadd.f32 0.0, %v3379
      %3381 = vmatmul.bf16.gmra.mxu0 %v3202
      %v3382 = vpop.f32.mrf.mxu0
      %v3383 = vadd.f32 0.0, %v3382
      %v3384 = vpop.f32.mrf.mxu0
      %v3385 = vadd.f32 0.0, %v3384
      %3386 = vmatmul.bf16.gmra.mxu0 %v3203
      %v3387 = vpop.f32.mrf.mxu0
      %v3388 = vadd.f32 0.0, %v3387
      %v3389 = vpop.f32.mrf.mxu0
      %v3390 = vadd.f32 0.0, %v3389
      %3391 = vmatmul.bf16.gmra.mxu0 %v3204
      %v3392 = vpop.f32.mrf.mxu0
      %v3393 = vadd.f32 0.0, %v3392
      %v3394 = vpop.f32.mrf.mxu0
      %v3395 = vadd.f32 0.0, %v3394
      %3396 = vmatmul.bf16.gmra.mxu0 %v3205
      %v3397 = vpop.f32.mrf.mxu0
      %v3398 = vadd.f32 0.0, %v3397
      %v3399 = vpop.f32.mrf.mxu0
      %v3400 = vadd.f32 0.0, %v3399
      %3401 = vmatmul.bf16.gmra.mxu0 %v3206
      %v3402 = vpop.f32.mrf.mxu0
      %v3403 = vadd.f32 0.0, %v3402
      %v3404 = vpop.f32.mrf.mxu0
      %v3405 = vadd.f32 0.0, %v3404
      %3406 = vdwg.mxu0
      %v3407 = vadd.f32 %v3207, %v3318
      %v3408 = vadd.f32 %v3208, %v3320
      %v3409 = vadd.f32 %v3209, %v3323
      %v3410 = vadd.f32 %v3210, %v3325
      %v3411 = vadd.f32 %v3211, %v3328
      %v3412 = vadd.f32 %v3212, %v3330
      %v3413 = vadd.f32 %v3213, %v3333
      %v3414 = vadd.f32 %v3214, %v3335
      %v3415 = vadd.f32 %v3215, %v3338
      %v3416 = vadd.f32 %v3216, %v3340
      %v3417 = vadd.f32 %v3217, %v3343
      %v3418 = vadd.f32 %v3218, %v3345
      %v3419 = vadd.f32 %v3219, %v3348
      %v3420 = vadd.f32 %v3220, %v3350
      %v3421 = vadd.f32 %v3221, %v3353
      %v3422 = vadd.f32 %v3222, %v3355
      %v3423 = vadd.f32 %v3223, %v3358
      %v3424 = vadd.f32 %v3224, %v3360
      %v3425 = vadd.f32 %v3225, %v3363
      %v3426 = vadd.f32 %v3226, %v3365
      %v3427 = vadd.f32 %v3227, %v3368
      %v3428 = vadd.f32 %v3228, %v3370
      %v3429 = vadd.f32 %v3229, %v3373
      %v3430 = vadd.f32 %v3230, %v3375
      %v3431 = vadd.f32 %v3231, %v3378
      %v3432 = vadd.f32 %v3232, %v3380
      %v3433 = vadd.f32 %v3233, %v3383
      %v3434 = vadd.f32 %v3234, %v3385
      %v3435 = vadd.f32 %v3235, %v3388
      %v3436 = vadd.f32 %v3236, %v3390
      %v3437 = vadd.f32 %v3237, %v3393
      %v3438 = vadd.f32 %v3238, %v3395
      %v3439 = vadd.f32 %v3239, %v3398
      %v3440 = vadd.f32 %v3240, %v3400
      %v3441 = vadd.f32 %v3241, %v3403
      %v3442 = vadd.f32 %v3242, %v3405
      %3443 = vst [vmem:[#allocation3] sm:$0xff] %v3407
      %3444 = vst [vmem:[#allocation3 + $0x8] sm:$0xff] %v3408
      %3445 = vst [vmem:[#allocation3 + $0x10] sm:$0xff] %v3409
      %3446 = vst [vmem:[#allocation3 + $0x18] sm:$0xff] %v3410
      %3447 = vst [vmem:[#allocation3 + $0x20] sm:$0xff] %v3411
      %3448 = vst [vmem:[#allocation3 + $0x28] sm:$0xff] %v3412
      %3449 = vst [vmem:[#allocation3 + $0x30] sm:$0xff] %v3413
      %3450 = vst [vmem:[#allocation3 + $0x38] sm:$0xff] %v3414
      %3451 = vst [vmem:[#allocation3 + $0x40] sm:$0xff] %v3415
      %3452 = vst [vmem:[#allocation3 + $0x48] sm:$0xff] %v3416
      %3453 = vst [vmem:[#allocation3 + $0x50] sm:$0xff] %v3417
      %3454 = vst [vmem:[#allocation3 + $0x58] sm:$0xff] %v3418
      %3455 = vst [vmem:[#allocation3 + $0x60] sm:$0xff] %v3419
      %3456 = vst [vmem:[#allocation3 + $0x68] sm:$0xff] %v3420
      %3457 = vst [vmem:[#allocation3 + $0x70] sm:$0xff] %v3421
      %3458 = vst [vmem:[#allocation3 + $0x78] sm:$0xff] %v3422
      %3459 = vst [vmem:[#allocation3 + $0x80] sm:$0xff] %v3423
      %3460 = vst [vmem:[#allocation3 + $0x88] sm:$0xff] %v3424
      %3461 = vst [vmem:[#allocation3 + $0x90] sm:$0xff] %v3425
      %3462 = vst [vmem:[#allocation3 + $0x98] sm:$0xff] %v3426
      %3463 = vst [vmem:[#allocation3 + $0xa0] sm:$0xff] %v3427
      %3464 = vst [vmem:[#allocation3 + $0xa8] sm:$0xff] %v3428
      %3465 = vst [vmem:[#allocation3 + $0xb0] sm:$0xff] %v3429
      %3466 = vst [vmem:[#allocation3 + $0xb8] sm:$0xff] %v3430
      %3467 = vst [vmem:[#allocation3 + $0xc0] sm:$0xff] %v3431
      %3468 = vst [vmem:[#allocation3 + $0xc8] sm:$0xff] %v3432
      %3469 = vst [vmem:[#allocation3 + $0xd0] sm:$0xff] %v3433
      %3470 = vst [vmem:[#allocation3 + $0xd8] sm:$0xff] %v3434
      %3471 = vst [vmem:[#allocation3 + $0xe0] sm:$0xff] %v3435
      %3472 = vst [vmem:[#allocation3 + $0xe8] sm:$0xff] %v3436
      %3473 = vst [vmem:[#allocation3 + $0xf0] sm:$0xff] %v3437
      %3474 = vst [vmem:[#allocation3 + $0xf8] sm:$0xff] %v3438
      %3475 = vst [vmem:[#allocation3 + $0x100] sm:$0xff] %v3439
      %3476 = vst [vmem:[#allocation3 + $0x108] sm:$0xff] %v3440
      %3477 = vst [vmem:[#allocation3 + $0x110] sm:$0xff] %v3441
      %3478 = vst [vmem:[#allocation3 + $0x118] sm:$0xff] %v3442
      %v3479 = vld [vmem:[#allocation3] sm:$0xff]
      %v3480 = vld [vmem:[#allocation3 + $0x8] sm:$0xff]
      %v3481 = vld [vmem:[#allocation3 + $0x10] sm:$0xff]
      %v3482 = vld [vmem:[#allocation3 + $0x18] sm:$0xff]
      %v3483 = vld [vmem:[#allocation3 + $0x20] sm:$0xff]
      %v3484 = vld [vmem:[#allocation3 + $0x28] sm:$0xff]
      %v3485 = vld [vmem:[#allocation3 + $0x30] sm:$0xff]
      %v3486 = vld [vmem:[#allocation3 + $0x38] sm:$0xff]
      %v3487 = vld [vmem:[#allocation3 + $0x40] sm:$0xff]
      %v3488 = vld [vmem:[#allocation3 + $0x48] sm:$0xff]
      %v3489 = vld [vmem:[#allocation3 + $0x50] sm:$0xff]
      %v3490 = vld [vmem:[#allocation3 + $0x58] sm:$0xff]
      %v3491 = vld [vmem:[#allocation3 + $0x60] sm:$0xff]
      %v3492 = vld [vmem:[#allocation3 + $0x68] sm:$0xff]
      %v3493 = vld [vmem:[#allocation3 + $0x70] sm:$0xff]
      %v3494 = vld [vmem:[#allocation3 + $0x78] sm:$0xff]
      %v3495 = vld [vmem:[#allocation3 + $0x80] sm:$0xff]
      %v3496 = vld [vmem:[#allocation3 + $0x88] sm:$0xff]
      %v3497 = vld [vmem:[#allocation3 + $0x90] sm:$0xff]
      %v3498 = vld [vmem:[#allocation3 + $0x98] sm:$0xff]
      %v3499 = vld [vmem:[#allocation3 + $0xa0] sm:$0xff]
      %v3500 = vld [vmem:[#allocation3 + $0xa8] sm:$0xff]
      %v3501 = vld [vmem:[#allocation3 + $0xb0] sm:$0xff]
      %v3502 = vld [vmem:[#allocation3 + $0xb8] sm:$0xff]
      %v3503 = vld [vmem:[#allocation3 + $0xc0] sm:$0xff]
      %v3504 = vld [vmem:[#allocation3 + $0xc8] sm:$0xff]
      %v3505 = vld [vmem:[#allocation3 + $0xd0] sm:$0xff]
      %v3506 = vld [vmem:[#allocation3 + $0xd8] sm:$0xff]
      %v3507 = vld [vmem:[#allocation3 + $0xe0] sm:$0xff]
      %v3508 = vld [vmem:[#allocation3 + $0xe8] sm:$0xff]
      %v3509 = vld [vmem:[#allocation3 + $0xf0] sm:$0xff]
      %v3510 = vld [vmem:[#allocation3 + $0xf8] sm:$0xff]
      %v3511 = vld [vmem:[#allocation3 + $0x100] sm:$0xff]
      %v3512 = vld [vmem:[#allocation3 + $0x108] sm:$0xff]
      %v3513 = vld [vmem:[#allocation3 + $0x110] sm:$0xff]
      %v3514 = vld [vmem:[#allocation3 + $0x118] sm:$0xff]
      %v3515 = vld [vmem:[%s2] sm:$0xff]
      %v3516 = vld [vmem:[%s2 + $0x8] sm:$0xff]
      %v3517 = vld [vmem:[%s2 + $0x10] sm:$0xff]
      %v3518 = vld [vmem:[%s2 + $0x18] sm:$0xff]
      %v3519 = vld [vmem:[%s2 + $0x20] sm:$0xff]
      %v3520 = vld [vmem:[%s2 + $0x28] sm:$0xff]
      %v3521 = vld [vmem:[%s2 + $0x30] sm:$0xff]
      %v3522 = vld [vmem:[%s2 + $0x38] sm:$0xff]
      %v3523 = vld [vmem:[%s2 + $0x40] sm:$0xff]
      %v3524 = vld [vmem:[%s2 + $0x48] sm:$0xff]
      %v3525 = vld [vmem:[%s2 + $0x50] sm:$0xff]
      %v3526 = vld [vmem:[%s2 + $0x58] sm:$0xff]
      %v3527 = vld [vmem:[%s2 + $0x60] sm:$0xff]
      %v3528 = vld [vmem:[%s2 + $0x68] sm:$0xff]
      %v3529 = vld [vmem:[%s2 + $0x70] sm:$0xff]
      %v3530 = vld [vmem:[%s2 + $0x78] sm:$0xff]
      %v3531 = vld [vmem:[%s2 + $0x80] sm:$0xff]
      %v3532 = vld [vmem:[%s2 + $0x88] sm:$0xff]
      %v3533 = vld [vmem:[%s2 + $0x90] sm:$0xff]
      %v3534 = vld [vmem:[%s2 + $0x98] sm:$0xff]
      %v3535 = vld [vmem:[%s2 + $0xa0] sm:$0xff]
      %v3536 = vld [vmem:[%s2 + $0xa8] sm:$0xff]
      %v3537 = vld [vmem:[%s2 + $0xb0] sm:$0xff]
      %v3538 = vld [vmem:[%s2 + $0xb8] sm:$0xff]
      %v3539 = vld [vmem:[%s2 + $0xc0] sm:$0xff]
      %v3540 = vld [vmem:[%s2 + $0xc8] sm:$0xff]
      %v3541 = vld [vmem:[%s2 + $0xd0] sm:$0xff]
      %v3542 = vld [vmem:[%s2 + $0xd8] sm:$0xff]
      %v3543 = vld [vmem:[%s2 + $0xe0] sm:$0xff]
      %v3544 = vld [vmem:[%s2 + $0xe8] sm:$0xff]
      %v3545 = vld [vmem:[%s2 + $0xf0] sm:$0xff]
      %v3546 = vld [vmem:[%s2 + $0xf8] sm:$0xff]
      %v3547 = vld [vmem:[%s2 + $0x100] sm:$0xff]
      %v3548 = vld [vmem:[%s2 + $0x108] sm:$0xff]
      %v3549 = vld [vmem:[%s2 + $0x110] sm:$0xff]
      %v3550 = vld [vmem:[%s2 + $0x118] sm:$0xff]
      %3552 = vset.pattern.permute.xlu0 0
      %3553 = vperm.xlu0 %3552, %v3515
      %v3554 = vpop.permute.xlu0 %3553
      %3557 = vset.pattern.permute.xlu0 0
      %3558 = vperm.xlu0 %3557, %v3516
      %v3559 = vpop.permute.xlu0 %3558
      %3562 = vset.pattern.permute.xlu0 0
      %3563 = vperm.xlu0 %3562, %v3517
      %v3564 = vpop.permute.xlu0 %3563
      %3567 = vset.pattern.permute.xlu0 0
      %3568 = vperm.xlu0 %3567, %v3518
      %v3569 = vpop.permute.xlu0 %3568
      %3572 = vset.pattern.permute.xlu0 0
      %3573 = vperm.xlu0 %3572, %v3519
      %v3574 = vpop.permute.xlu0 %3573
      %3577 = vset.pattern.permute.xlu0 0
      %3578 = vperm.xlu0 %3577, %v3520
      %v3579 = vpop.permute.xlu0 %3578
      %3582 = vset.pattern.permute.xlu0 0
      %3583 = vperm.xlu0 %3582, %v3521
      %v3584 = vpop.permute.xlu0 %3583
      %3587 = vset.pattern.permute.xlu0 0
      %3588 = vperm.xlu0 %3587, %v3522
      %v3589 = vpop.permute.xlu0 %3588
      %3592 = vset.pattern.permute.xlu0 0
      %3593 = vperm.xlu0 %3592, %v3523
      %v3594 = vpop.permute.xlu0 %3593
      %3597 = vset.pattern.permute.xlu0 0
      %3598 = vperm.xlu0 %3597, %v3524
      %v3599 = vpop.permute.xlu0 %3598
      %3602 = vset.pattern.permute.xlu0 0
      %3603 = vperm.xlu0 %3602, %v3525
      %v3604 = vpop.permute.xlu0 %3603
      %3607 = vset.pattern.permute.xlu0 0
      %3608 = vperm.xlu0 %3607, %v3526
      %v3609 = vpop.permute.xlu0 %3608
      %3612 = vset.pattern.permute.xlu0 0
      %3613 = vperm.xlu0 %3612, %v3527
      %v3614 = vpop.permute.xlu0 %3613
      %3617 = vset.pattern.permute.xlu0 0
      %3618 = vperm.xlu0 %3617, %v3528
      %v3619 = vpop.permute.xlu0 %3618
      %3622 = vset.pattern.permute.xlu0 0
      %3623 = vperm.xlu0 %3622, %v3529
      %v3624 = vpop.permute.xlu0 %3623
      %3627 = vset.pattern.permute.xlu0 0
      %3628 = vperm.xlu0 %3627, %v3530
      %v3629 = vpop.permute.xlu0 %3628
      %3632 = vset.pattern.permute.xlu0 0
      %3633 = vperm.xlu0 %3632, %v3531
      %v3634 = vpop.permute.xlu0 %3633
      %3637 = vset.pattern.permute.xlu0 0
      %3638 = vperm.xlu0 %3637, %v3532
      %v3639 = vpop.permute.xlu0 %3638
      %3642 = vset.pattern.permute.xlu0 0
      %3643 = vperm.xlu0 %3642, %v3533
      %v3644 = vpop.permute.xlu0 %3643
      %3647 = vset.pattern.permute.xlu0 0
      %3648 = vperm.xlu0 %3647, %v3534
      %v3649 = vpop.permute.xlu0 %3648
      %3652 = vset.pattern.permute.xlu0 0
      %3653 = vperm.xlu0 %3652, %v3535
      %v3654 = vpop.permute.xlu0 %3653
      %3657 = vset.pattern.permute.xlu0 0
      %3658 = vperm.xlu0 %3657, %v3536
      %v3659 = vpop.permute.xlu0 %3658
      %3662 = vset.pattern.permute.xlu0 0
      %3663 = vperm.xlu0 %3662, %v3537
      %v3664 = vpop.permute.xlu0 %3663
      %3667 = vset.pattern.permute.xlu0 0
      %3668 = vperm.xlu0 %3667, %v3538
      %v3669 = vpop.permute.xlu0 %3668
      %3672 = vset.pattern.permute.xlu0 0
      %3673 = vperm.xlu0 %3672, %v3539
      %v3674 = vpop.permute.xlu0 %3673
      %3677 = vset.pattern.permute.xlu0 0
      %3678 = vperm.xlu0 %3677, %v3540
      %v3679 = vpop.permute.xlu0 %3678
      %3682 = vset.pattern.permute.xlu0 0
      %3683 = vperm.xlu0 %3682, %v3541
      %v3684 = vpop.permute.xlu0 %3683
      %3687 = vset.pattern.permute.xlu0 0
      %3688 = vperm.xlu0 %3687, %v3542
      %v3689 = vpop.permute.xlu0 %3688
      %3692 = vset.pattern.permute.xlu0 0
      %3693 = vperm.xlu0 %3692, %v3543
      %v3694 = vpop.permute.xlu0 %3693
      %3697 = vset.pattern.permute.xlu0 0
      %3698 = vperm.xlu0 %3697, %v3544
      %v3699 = vpop.permute.xlu0 %3698
      %3702 = vset.pattern.permute.xlu0 0
      %3703 = vperm.xlu0 %3702, %v3545
      %v3704 = vpop.permute.xlu0 %3703
      %3707 = vset.pattern.permute.xlu0 0
      %3708 = vperm.xlu0 %3707, %v3546
      %v3709 = vpop.permute.xlu0 %3708
      %3712 = vset.pattern.permute.xlu0 0
      %3713 = vperm.xlu0 %3712, %v3547
      %v3714 = vpop.permute.xlu0 %3713
      %3717 = vset.pattern.permute.xlu0 0
      %3718 = vperm.xlu0 %3717, %v3548
      %v3719 = vpop.permute.xlu0 %3718
      %3722 = vset.pattern.permute.xlu0 0
      %3723 = vperm.xlu0 %3722, %v3549
      %v3724 = vpop.permute.xlu0 %3723
      %3727 = vset.pattern.permute.xlu0 0
      %3728 = vperm.xlu0 %3727, %v3550
      %v3729 = vpop.permute.xlu0 %3728
      %v3731 = vmul.f32 %v3479, %v3554
      %v3732 = vmul.f32 %v3480, %v3559
      %v3733 = vmul.f32 %v3481, %v3564
      %v3734 = vmul.f32 %v3482, %v3569
      %v3735 = vmul.f32 %v3483, %v3574
      %v3736 = vmul.f32 %v3484, %v3579
      %v3737 = vmul.f32 %v3485, %v3584
      %v3738 = vmul.f32 %v3486, %v3589
      %v3739 = vmul.f32 %v3487, %v3594
      %v3740 = vmul.f32 %v3488, %v3599
      %v3741 = vmul.f32 %v3489, %v3604
      %v3742 = vmul.f32 %v3490, %v3609
      %v3743 = vmul.f32 %v3491, %v3614
      %v3744 = vmul.f32 %v3492, %v3619
      %v3745 = vmul.f32 %v3493, %v3624
      %v3746 = vmul.f32 %v3494, %v3629
      %v3747 = vmul.f32 %v3495, %v3634
      %v3748 = vmul.f32 %v3496, %v3639
      %v3749 = vmul.f32 %v3497, %v3644
      %v3750 = vmul.f32 %v3498, %v3649
      %v3751 = vmul.f32 %v3499, %v3654
      %v3752 = vmul.f32 %v3500, %v3659
      %v3753 = vmul.f32 %v3501, %v3664
      %v3754 = vmul.f32 %v3502, %v3669
      %v3755 = vmul.f32 %v3503, %v3674
      %v3756 = vmul.f32 %v3504, %v3679
      %v3757 = vmul.f32 %v3505, %v3684
      %v3758 = vmul.f32 %v3506, %v3689
      %v3759 = vmul.f32 %v3507, %v3694
      %v3760 = vmul.f32 %v3508, %v3699
      %v3761 = vmul.f32 %v3509, %v3704
      %v3762 = vmul.f32 %v3510, %v3709
      %v3763 = vmul.f32 %v3511, %v3714
      %v3764 = vmul.f32 %v3512, %v3719
      %v3765 = vmul.f32 %v3513, %v3724
      %v3766 = vmul.f32 %v3514, %v3729
      %v3767 = vadd.f32 %v3731, %v3732
      %v3768 = vadd.f32 %v3767, %v3733
      %v3769 = vadd.f32 %v3768, %v3734
      %v3770 = vadd.f32 %v3769, %v3735
      %v3771 = vadd.f32 %v3770, %v3736
      %v3772 = vadd.f32 %v3771, %v3737
      %v3773 = vadd.f32 %v3772, %v3738
      %v3774 = vadd.f32 %v3773, %v3739
      %v3775 = vadd.f32 %v3774, %v3740
      %v3776 = vadd.f32 %v3775, %v3741
      %v3777 = vadd.f32 %v3776, %v3742
      %v3778 = vadd.f32 %v3777, %v3743
      %v3779 = vadd.f32 %v3778, %v3744
      %v3780 = vadd.f32 %v3779, %v3745
      %v3781 = vadd.f32 %v3780, %v3746
      %v3782 = vadd.f32 %v3781, %v3747
      %v3783 = vadd.f32 %v3782, %v3748
      %v3784 = vadd.f32 %v3783, %v3749
      %v3785 = vadd.f32 %v3784, %v3750
      %v3786 = vadd.f32 %v3785, %v3751
      %v3787 = vadd.f32 %v3786, %v3752
      %v3788 = vadd.f32 %v3787, %v3753
      %v3789 = vadd.f32 %v3788, %v3754
      %v3790 = vadd.f32 %v3789, %v3755
      %v3791 = vadd.f32 %v3790, %v3756
      %v3792 = vadd.f32 %v3791, %v3757
      %v3793 = vadd.f32 %v3792, %v3758
      %v3794 = vadd.f32 %v3793, %v3759
      %v3795 = vadd.f32 %v3794, %v3760
      %v3796 = vadd.f32 %v3795, %v3761
      %v3797 = vadd.f32 %v3796, %v3762
      %v3798 = vadd.f32 %v3797, %v3763
      %v3799 = vadd.f32 %v3798, %v3764
      %v3800 = vadd.f32 %v3799, %v3765
      %v3801 = vadd.f32 %v3800, %v3766
      %v3802 = vrot.slane %v3801, 4
      %v3803 = vadd.f32 %v3801, %v3802
      %v3804 = vrot.slane %v3803, 2
      %v3805 = vadd.f32 %v3803, %v3804
      %v3806 = vrot.slane %v3805, 1
      %v3807 = vadd.f32 %v3805, %v3806
      %3808 = vst [vmem:[%s295] sm:$0x1] %v3807
      %v3809 = vmul.f32 %v3731, %v3479
      %v3810 = vmul.f32 %v3732, %v3480
      %v3811 = vmul.f32 %v3733, %v3481
      %v3812 = vmul.f32 %v3734, %v3482
      %v3813 = vmul.f32 %v3735, %v3483
      %v3814 = vmul.f32 %v3736, %v3484
      %v3815 = vmul.f32 %v3737, %v3485
      %v3816 = vmul.f32 %v3738, %v3486
      %v3817 = vmul.f32 %v3739, %v3487
      %v3818 = vmul.f32 %v3740, %v3488
      %v3819 = vmul.f32 %v3741, %v3489
      %v3820 = vmul.f32 %v3742, %v3490
      %v3821 = vmul.f32 %v3743, %v3491
      %v3822 = vmul.f32 %v3744, %v3492
      %v3823 = vmul.f32 %v3745, %v3493
      %v3824 = vmul.f32 %v3746, %v3494
      %v3825 = vmul.f32 %v3747, %v3495
      %v3826 = vmul.f32 %v3748, %v3496
      %v3827 = vmul.f32 %v3749, %v3497
      %v3828 = vmul.f32 %v3750, %v3498
      %v3829 = vmul.f32 %v3751, %v3499
      %v3830 = vmul.f32 %v3752, %v3500
      %v3831 = vmul.f32 %v3753, %v3501
      %v3832 = vmul.f32 %v3754, %v3502
      %v3833 = vmul.f32 %v3755, %v3503
      %v3834 = vmul.f32 %v3756, %v3504
      %v3835 = vmul.f32 %v3757, %v3505
      %v3836 = vmul.f32 %v3758, %v3506
      %v3837 = vmul.f32 %v3759, %v3507
      %v3838 = vmul.f32 %v3760, %v3508
      %v3839 = vmul.f32 %v3761, %v3509
      %v3840 = vmul.f32 %v3762, %v3510
      %v3841 = vmul.f32 %v3763, %v3511
      %v3842 = vmul.f32 %v3764, %v3512
      %v3843 = vmul.f32 %v3765, %v3513
      %v3844 = vmul.f32 %v3766, %v3514
      %v3845 = vadd.f32 %v3809, %v3810
      %v3846 = vadd.f32 %v3845, %v3811
      %v3847 = vadd.f32 %v3846, %v3812
      %v3848 = vadd.f32 %v3847, %v3813
      %v3849 = vadd.f32 %v3848, %v3814
      %v3850 = vadd.f32 %v3849, %v3815
      %v3851 = vadd.f32 %v3850, %v3816
      %v3852 = vadd.f32 %v3851, %v3817
      %v3853 = vadd.f32 %v3852, %v3818
      %v3854 = vadd.f32 %v3853, %v3819
      %v3855 = vadd.f32 %v3854, %v3820
      %v3856 = vadd.f32 %v3855, %v3821
      %v3857 = vadd.f32 %v3856, %v3822
      %v3858 = vadd.f32 %v3857, %v3823
      %v3859 = vadd.f32 %v3858, %v3824
      %v3860 = vadd.f32 %v3859, %v3825
      %v3861 = vadd.f32 %v3860, %v3826
      %v3862 = vadd.f32 %v3861, %v3827
      %v3863 = vadd.f32 %v3862, %v3828
      %v3864 = vadd.f32 %v3863, %v3829
      %v3865 = vadd.f32 %v3864, %v3830
      %v3866 = vadd.f32 %v3865, %v3831
      %v3867 = vadd.f32 %v3866, %v3832
      %v3868 = vadd.f32 %v3867, %v3833
      %v3869 = vadd.f32 %v3868, %v3834
      %v3870 = vadd.f32 %v3869, %v3835
      %v3871 = vadd.f32 %v3870, %v3836
      %v3872 = vadd.f32 %v3871, %v3837
      %v3873 = vadd.f32 %v3872, %v3838
      %v3874 = vadd.f32 %v3873, %v3839
      %v3875 = vadd.f32 %v3874, %v3840
      %v3876 = vadd.f32 %v3875, %v3841
      %v3877 = vadd.f32 %v3876, %v3842
      %v3878 = vadd.f32 %v3877, %v3843
      %v3879 = vadd.f32 %v3878, %v3844
      %v3880 = vrot.slane %v3879, 4
      %v3881 = vadd.f32 %v3879, %v3880
      %v3882 = vrot.slane %v3881, 2
      %v3883 = vadd.f32 %v3881, %v3882
      %v3884 = vrot.slane %v3883, 1
      %v3885 = vadd.f32 %v3883, %v3884
      %3886 = vst [vmem:[%s298] sm:$0x1] %v3885
      %v3887 = vld [vmem:[#allocation3] sm:$0xff]
      %v3888 = vld [vmem:[#allocation3 + $0x8] sm:$0xff]
      %3889 = vst [vmem:[%s291] sm:$0xff] %v3887
      %3890 = vst [vmem:[%s291 + $0x8] sm:$0xff] %v3888
      %v3891 = vld [vmem:[#allocation3 + $0x12] sm:$0xff]
      %v3892 = vld [vmem:[#allocation3 + $0x1a] sm:$0xff]
      %3893 = vst [vmem:[%s291 + $0x10] sm:$0xff] %v3891
      %3894 = vst [vmem:[%s291 + $0x18] sm:$0xff] %v3892
      %v3895 = vld [vmem:[#allocation3 + $0x24] sm:$0xff]
      %v3896 = vld [vmem:[#allocation3 + $0x2c] sm:$0xff]
      %3897 = vst [vmem:[%s291 + $0x20] sm:$0xff] %v3895
      %3898 = vst [vmem:[%s291 + $0x28] sm:$0xff] %v3896
      %v3899 = vld [vmem:[#allocation3 + $0x36] sm:$0xff]
      %v3900 = vld [vmem:[#allocation3 + $0x3e] sm:$0xff]
      %3901 = vst [vmem:[%s291 + $0x30] sm:$0xff] %v3899
      %3902 = vst [vmem:[%s291 + $0x38] sm:$0xff] %v3900
      %v3903 = vld [vmem:[#allocation3 + $0x48] sm:$0xff]
      %v3904 = vld [vmem:[#allocation3 + $0x50] sm:$0xff]
      %3905 = vst [vmem:[%s291 + $0x40] sm:$0xff] %v3903
      %3906 = vst [vmem:[%s291 + $0x48] sm:$0xff] %v3904
      %v3907 = vld [vmem:[#allocation3 + $0x5a] sm:$0xff]
      %v3908 = vld [vmem:[#allocation3 + $0x62] sm:$0xff]
      %3909 = vst [vmem:[%s291 + $0x50] sm:$0xff] %v3907
      %3910 = vst [vmem:[%s291 + $0x58] sm:$0xff] %v3908
      %v3911 = vld [vmem:[#allocation3 + $0x6c] sm:$0xff]
      %v3912 = vld [vmem:[#allocation3 + $0x74] sm:$0xff]
      %3913 = vst [vmem:[%s291 + $0x60] sm:$0xff] %v3911
      %3914 = vst [vmem:[%s291 + $0x68] sm:$0xff] %v3912
      %v3915 = vld [vmem:[#allocation3 + $0x7e] sm:$0xff]
      %v3916 = vld [vmem:[#allocation3 + $0x86] sm:$0xff]
      %3917 = vst [vmem:[%s291 + $0x70] sm:$0xff] %v3915
      %3918 = vst [vmem:[%s291 + $0x78] sm:$0xff] %v3916
      %v3919 = vld [vmem:[#allocation3 + $0x90] sm:$0xff]
      %v3920 = vld [vmem:[#allocation3 + $0x98] sm:$0xff]
      %3921 = vst [vmem:[%s291 + $0x80] sm:$0xff] %v3919
      %3922 = vst [vmem:[%s291 + $0x88] sm:$0xff] %v3920
      %v3923 = vld [vmem:[#allocation3 + $0xa2] sm:$0xff]
      %v3924 = vld [vmem:[#allocation3 + $0xaa] sm:$0xff]
      %3925 = vst [vmem:[%s291 + $0x90] sm:$0xff] %v3923
      %3926 = vst [vmem:[%s291 + $0x98] sm:$0xff] %v3924
      %v3927 = vld [vmem:[#allocation3 + $0xb4] sm:$0xff]
      %v3928 = vld [vmem:[#allocation3 + $0xbc] sm:$0xff]
      %3929 = vst [vmem:[%s291 + $0xa0] sm:$0xff] %v3927
      %3930 = vst [vmem:[%s291 + $0xa8] sm:$0xff] %v3928
      %v3931 = vld [vmem:[#allocation3 + $0xc6] sm:$0xff]
      %v3932 = vld [vmem:[#allocation3 + $0xce] sm:$0xff]
      %3933 = vst [vmem:[%s291 + $0xb0] sm:$0xff] %v3931
      %3934 = vst [vmem:[%s291 + $0xb8] sm:$0xff] %v3932
      %v3935 = vld [vmem:[#allocation3 + $0xd8] sm:$0xff]
      %v3936 = vld [vmem:[#allocation3 + $0xe0] sm:$0xff]
      %3937 = vst [vmem:[%s291 + $0xc0] sm:$0xff] %v3935
      %3938 = vst [vmem:[%s291 + $0xc8] sm:$0xff] %v3936
      %v3939 = vld [vmem:[#allocation3 + $0xea] sm:$0xff]
      %v3940 = vld [vmem:[#allocation3 + $0xf2] sm:$0xff]
      %3941 = vst [vmem:[%s291 + $0xd0] sm:$0xff] %v3939
      %3942 = vst [vmem:[%s291 + $0xd8] sm:$0xff] %v3940
      %v3943 = vld [vmem:[#allocation3 + $0xfc] sm:$0xff]
      %v3944 = vld [vmem:[#allocation3 + $0x104] sm:$0xff]
      %3945 = vst [vmem:[%s291 + $0xe0] sm:$0xff] %v3943
      %3946 = vst [vmem:[%s291 + $0xe8] sm:$0xff] %v3944
      %v3947 = vld [vmem:[#allocation3 + $0x10e] sm:$0xff]
      %v3948 = vld [vmem:[#allocation3 + $0x116] sm:$0xff]
      %3949 = vst [vmem:[%s291 + $0xf0] sm:$0xff] %v3947
      %3950 = vst [vmem:[%s291 + $0xf8] sm:$0xff] %v3948
      %s3951 = smul.u32 32, %s19
      %p3952 = scmp.lt.s32.totalorder %s3951, 63
      %s3953 = scalar_select %p3952, %s3951, 63
      %s3954 = smul.addr %s3953, 8
      %s3955 = scalar_lea.vmem %s5, %s3954
      %p3956 = scmp.lt.s32.totalorder %s19, 1
      %s3957 = scalar_select %p3956, %s19, 1
      %s3958 = scalar_lea.vmem %s6, %s3957
      %p3959 = scmp.lt.s32.totalorder %s19, 1
      %s3960 = scalar_select %p3959, %s19, 1
      %s3961 = scalar_lea.vmem %s7, %s3960
      // Predicated region
      $region41: #{bottleneck_forward.6} parent=39 // pred_check
        %p3962 = pneg %p147
      $region42: #{bottleneck_forward.6} parent=39 // pred_check_branch
        %3964 = sbr.rel (%p3962) target = $region44
      $region43: #{bottleneck_forward.6} parent=39 // pred_region
        %s3965 = smul.u32 32, %s19
      $region44: #{bottleneck_forward.6} parent=39 // pred_fallthru
        _
      // Predicated region
      $region45: #{bottleneck_forward.6} parent=39 // pred_check
        %p3966 = pneg %p173
      $region46: #{bottleneck_forward.6} parent=39 // pred_check_branch
        %3968 = sbr.rel (%p3966) target = $region48
      $region47: #{bottleneck_forward.6} parent=39 // pred_region
        _
      $region48: #{bottleneck_forward.6} parent=39 // pred_fallthru
        _
      // Predicated region
      $region49: #{bottleneck_forward.6} parent=39 // pred_check
        %p3969 = pneg %p199
      $region50: #{bottleneck_forward.6} parent=39 // pred_check_branch
        %3971 = sbr.rel (%p3969) target = $region52
      $region51: #{bottleneck_forward.6} parent=39 // pred_region
        _
      $region52: #{bottleneck_forward.6} parent=39 // pred_fallthru
        _
    $region40: #{bottleneck_forward.6} parent=5 // pred_fallthru
      _
    %p3972 = scmp.le.s32.totalorder 2, %s14
    // Predicated region
    $region53: #{bottleneck_forward.6} parent=5 // pred_check
      %p3973 = pneg %p3972
    $region54: #{bottleneck_forward.6} parent=5 // pred_check_branch
      %3975 = sbr.rel (%p3973) target = $region56
    $region55: #{bottleneck_forward.6} parent=5 // pred_region
      %s3976 = ssub.s32 %s14, 2
      // Predicated region
      $region57: #{bottleneck_forward.6} parent=55 // pred_check
        %p3977 = pneg %p153
      $region58: #{bottleneck_forward.6} parent=55 // pred_check_branch
        %3979 = sbr.rel (%p3977) target = $region60
      $region59: #{bottleneck_forward.6} parent=55 // pred_region
        %s3980 = smul.u32 32, %s20
        %p3981 = scmp.lt.s32.totalorder %s3980, 63
        %s3982 = scalar_select %p3981, %s3980, 63
        %s3983 = smul.addr %s3982, 8
        %s3984 = scalar_lea.vmem %s5, %s3983
      $region60: #{bottleneck_forward.6} parent=55 // pred_fallthru
        _
      // Predicated region
      $region61: #{bottleneck_forward.6} parent=55 // pred_check
        %p3985 = pneg %p179
      $region62: #{bottleneck_forward.6} parent=55 // pred_check_branch
        %3987 = sbr.rel (%p3985) target = $region64
      $region63: #{bottleneck_forward.6} parent=55 // pred_region
        %p3988 = scmp.lt.s32.totalorder %s20, 1
        %s3989 = scalar_select %p3988, %s20, 1
        %s3990 = scalar_lea.vmem %s6, %s3989
      $region64: #{bottleneck_forward.6} parent=55 // pred_fallthru
        _
      // Predicated region
      $region65: #{bottleneck_forward.6} parent=55 // pred_check
        %p3991 = pneg %p205
      $region66: #{bottleneck_forward.6} parent=55 // pred_check_branch
        %3993 = sbr.rel (%p3991) target = $region68
      $region67: #{bottleneck_forward.6} parent=55 // pred_region
        %p3994 = scmp.lt.s32.totalorder %s20, 1
        %s3995 = scalar_select %p3994, %s20, 1
        %s3996 = scalar_lea.vmem %s7, %s3995
      $region68: #{bottleneck_forward.6} parent=55 // pred_fallthru
        _
    $region56: #{bottleneck_forward.6} parent=5 // pred_fallthru
      _
  $region6: #{bottleneck_forward.6} parent=0 // loop_footer
    %s18 = sadd.s32 1, %s14
  $region7: #{bottleneck_forward.6} parent=0 // loop_footer_branch
    %13 = sbr.rel target = $region3
  $region8: #{bottleneck_forward.6} parent=0 // loop_exit
    _

</llo_original>
